<compile_context>
chip_gen: v7x
topology: tpu7x:2x2x1
jax: 0.10.0
libtpu: 0.0.40
codegen_flags: <defaults>
</compile_context>

<pallas_src>
import jax
import jax.numpy as jnp
import numpy as np
from jax import lax
from jax.experimental import pallas as pl
from jax.experimental.pallas import tpu as pltpu

K = 7          # conv kernel size
PAD = 3        # spatial padding on each side
WLEFT = 8      # left padding of the mid scratch on the W (sublane) axis:
               # multiple of 8 so the interior write is sublane-aligned.
WOFF = WLEFT - PAD   # W column of the conv3 window for kw == 0


def _fused_conv_kernel(p_ref, w12_ref, b12_ref, w3_ref, b3_ref, o_ref, mid_ref):
    # p_ref:   (N*H*W, K*K*C)  bf16  im2col patches of the zero-padded input
    # w12_ref: (K*K*C, 2*C)    bf16  [w1 | w2] flattened as (kh, kw, ci) x Cout
    # b12_ref: (1, 2*C)        f32   [b1 | b2]
    # w3_ref:  (K, K*C, C)     bf16  w3, per-kh slabs of shape (KW*Cin, Cout)
    # b3_ref:  (1, C)          f32
    # o_ref:   (N*H*W, C)      f32   conv3 output rows (n, y, x), C on lanes
    # mid_ref: (N, Hp, Wpa, C) bf16  zero-padded relu(v1 + v2) scratch
    n_rows = o_ref.shape[0]
    n, hp, wpa, c = mid_ref.shape
    h = hp - 2 * PAD
    w = wpa - WLEFT - PAD

    # ---- conv1 + conv2 + bias + add + relu: one big MXU matmul ----
    acc12 = jnp.dot(p_ref[...], w12_ref[...],
                    preferred_element_type=jnp.float32)          # (NHW, 2C)
    acc12 = acc12 + b12_ref[...]
    mid = jnp.maximum(acc12[:, :c] + acc12[:, c:], 0.0)          # (NHW, C)

    # ---- store relu(v1+v2) into the padded scratch (aligned interior) ----
    mid_ref[...] = jnp.zeros(mid_ref.shape, mid_ref.dtype)
    mid_ref[:, PAD:PAD + h, WLEFT:WLEFT + w, :] = (
        mid.reshape(n, h, w, c).astype(mid_ref.dtype))

    # ---- conv3: 7 matmuls, contraction depth KW*C = 112 each ----
    def kh_body(kh, acc):
        row = mid_ref[:, pl.ds(kh, h), :, :]                     # (N, H, Wpa, C)
        pieces = [row[:, :, WOFF + kw:WOFF + kw + w, :].reshape(n_rows, c)
                  for kw in range(K)]
        patch = jnp.concatenate(pieces, axis=-1)                 # (NHW, KW*C)
        return acc + jnp.dot(patch, w3_ref[kh],
                             preferred_element_type=jnp.float32)

    acc3 = lax.fori_loop(0, K, kh_body,
                         jnp.zeros((n_rows, c), jnp.float32))
    o_ref[...] = (acc3 + b3_ref[...]).astype(o_ref.dtype)


def model_forward(x_nchw, params):
    """x_nchw: (N, 16, H, W) float32 -> (N, 16, H, W) float32."""
    w1, b1, w2, b2, w3, b3 = params
    n, c, h, w = x_nchw.shape
    nhw = n * h * w
    kkc = K * K * c

    # ---- layout glue: NCHW -> NHWC, zero-pad, im2col (order = kh, kw, ci) ----
    x = jnp.transpose(x_nchw, (0, 2, 3, 1))
    x_pad = jnp.pad(x, ((0, 0), (PAD, PAD), (PAD, PAD), (0, 0)))
    cols = [x_pad[:, kh:kh + h, kw:kw + w, :]
            for kh in range(K) for kw in range(K)]
    patches = (jnp.concatenate(cols, axis=-1)
               .reshape(nhw, kkc).astype(jnp.bfloat16))

    # ---- weights: PyTorch OIHW -> (KH*KW*Cin, Cout); conv1/conv2 concat ----
    def flat_w(wt):
        return jnp.transpose(wt, (2, 3, 1, 0)).reshape(kkc, c)

    w12 = jnp.concatenate([flat_w(w1), flat_w(w2)], axis=1).astype(jnp.bfloat16)
    b12 = jnp.concatenate([b1, b2]).reshape(1, 2 * c).astype(jnp.float32)
    w3k = (jnp.transpose(w3, (2, 3, 1, 0))
           .reshape(K, K * c, c).astype(jnp.bfloat16))
    b3k = b3.reshape(1, c).astype(jnp.float32)

    hp = h + 2 * PAD
    wpa = WLEFT + w + PAD      # scratch W extent (aligned interior + right pad)

    out2d = pl.pallas_call(
        _fused_conv_kernel,
        out_shape=jax.ShapeDtypeStruct((nhw, c), jnp.float32),
        grid=(1,),
        in_specs=[
            pl.BlockSpec((nhw, kkc), lambda i: (0, 0)),
            pl.BlockSpec((kkc, 2 * c), lambda i: (0, 0)),
            pl.BlockSpec((1, 2 * c), lambda i: (0, 0)),
            pl.BlockSpec((K, K * c, c), lambda i: (0, 0, 0)),
            pl.BlockSpec((1, c), lambda i: (0, 0)),
        ],
        out_specs=pl.BlockSpec((nhw, c), lambda i: (0, 0)),
        scratch_shapes=[pltpu.VMEM((n, hp, wpa, c), jnp.bfloat16)],
        compiler_params=pltpu.CompilerParams(
            dimension_semantics=("arbitrary",)),
    )(patches, w12, b12, w3k, b3k)

    out_nhwc = out2d.reshape(n, h, w, c)
    return jnp.transpose(out_nhwc, (0, 3, 1, 2)).astype(x_nchw.dtype)


def reference_forward(x, params):
    """Plain-JAX f32 reference (NCHW), mirrors the PyTorch module."""
    w1, b1, w2, b2, w3, b3 = params

    def conv(inp, wt, b):
        y = lax.conv_general_dilated(
            inp, wt, window_strides=(1, 1),
            padding=[(PAD, PAD), (PAD, PAD)],
            dimension_numbers=("NCHW", "OIHW", "NCHW"))
        return y + b[None, :, None, None]

    v1 = conv(x, w1, b1)
    v2 = conv(x, w2, b2)
    v4 = jnp.maximum(v1 + v2, 0.0)
    return conv(v4, w3, b3)


def init_params(key, c=16):
    ks = jax.random.split(key, 6)
    fan_in = c * K * K
    bound = 1.0 / np.sqrt(fan_in)

    def wu(k):  # weight, PyTorch OIHW layout
        return jax.random.uniform(k, (c, c, K, K), jnp.float32, -bound, bound)

    def bu(k):
        return jax.random.uniform(k, (c,), jnp.float32, -bound, bound)

    return (wu(ks[0]), bu(ks[1]), wu(ks[2]), bu(ks[3]), wu(ks[4]), bu(ks[5]))


if __name__ == "__main__":
    key = jax.random.PRNGKey(0)
    k_param, k_x = jax.random.split(key)

    # Small shapes consistent with the module (channels must stay 16).
    N, C, H, W = 2, 16, 16, 16
    params = init_params(k_param, C)
    x = jax.random.normal(k_x, (N, C, H, W), jnp.float32)

    fwd = jax.jit(model_forward)
    out = jax.block_until_ready(fwd(x, params))
    ref = jax.block_until_ready(reference_forward(x, params))

    assert out.shape == (N, C, H, W)
    out_np, ref_np = np.asarray(out), np.asarray(ref)
    # bf16 MXU operands (f32 accumulation): tolerance scaled for bf16 rounding.
    np.testing.assert_allclose(out_np, ref_np, rtol=1e-2, atol=1e-2)
    assert float(np.mean(np.abs(out_np - ref_np))) < 2e-3
    print("KERNEL_OK")
</pallas_src>

<mosaic_0001>
module attributes {stable_mosaic.version = 11 : i64} {
  func.func @_fused_conv_kernel(%arg0: i32, %arg1: memref<512x784xbf16, #tpu.memory_space<vmem>>, %arg2: memref<784x32xbf16, #tpu.memory_space<vmem>>, %arg3: memref<1x32xf32, #tpu.memory_space<vmem>>, %arg4: memref<7x112x16xbf16, #tpu.memory_space<vmem>>, %arg5: memref<1x16xf32, #tpu.memory_space<vmem>>, %arg6: memref<512x16xf32, #tpu.memory_space<vmem>>, %arg7: memref<2x22x27x16xbf16, #tpu.memory_space<vmem>>) attributes {dimension_semantics = [#tpu.dimension_semantics<arbitrary>], iteration_bounds = array<i64: 1>, scalar_prefetch = 0 : i64, scratch_operands = 1 : i64, tpu.core_type = #tpu.core_type<tc>, window_params = [{pipeline_mode = #tpu.pipeline_mode<synchronous>, transform_indices = @transform_0, window_bounds = array<i64: 512, 784>}, {pipeline_mode = #tpu.pipeline_mode<synchronous>, transform_indices = @transform_1, window_bounds = array<i64: 784, 32>}, {pipeline_mode = #tpu.pipeline_mode<synchronous>, transform_indices = @transform_2, window_bounds = array<i64: 1, 32>}, {pipeline_mode = #tpu.pipeline_mode<synchronous>, transform_indices = @transform_3, window_bounds = array<i64: 7, 112, 16>}, {pipeline_mode = #tpu.pipeline_mode<synchronous>, transform_indices = @transform_4, window_bounds = array<i64: 1, 16>}, {pipeline_mode = #tpu.pipeline_mode<synchronous>, transform_indices = @transform_5, window_bounds = array<i64: 512, 16>}]} {
    %c0 = arith.constant 0 : index
    %c0_0 = arith.constant 0 : index
    %0 = vector.load %arg1[%c0, %c0_0] : memref<512x784xbf16, #tpu.memory_space<vmem>>, vector<512x784xbf16>
    %c0_1 = arith.constant 0 : index
    %c0_2 = arith.constant 0 : index
    %1 = vector.load %arg2[%c0_1, %c0_2] : memref<784x32xbf16, #tpu.memory_space<vmem>>, vector<784x32xbf16>
    %cst = arith.constant dense<0.000000e+00> : vector<512x32xf32>
    %2 = tpu.matmul %0, %1, %cst {dimension_numbers = #tpu.dot_dimension_numbers<[1], [0], [0], [1], [0, 0, 1, 1], [], []>} : vector<512x784xbf16>, vector<784x32xbf16>, vector<512x32xf32> -> vector<512x32xf32>
    %c0_3 = arith.constant 0 : index
    %c0_4 = arith.constant 0 : index
    %3 = vector.load %arg3[%c0_3, %c0_4] : memref<1x32xf32, #tpu.memory_space<vmem>>, vector<1x32xf32>
    %4 = vector.broadcast %3 : vector<1x32xf32> to vector<512x32xf32>
    %5 = arith.addf %2, %4 : vector<512x32xf32>
    %6 = vector.extract_strided_slice %5 {offsets = [0, 0], sizes = [512, 16], strides = [1, 1]} : vector<512x32xf32> to vector<512x16xf32>
    %7 = vector.extract_strided_slice %5 {offsets = [0, 16], sizes = [512, 16], strides = [1, 1]} : vector<512x32xf32> to vector<512x16xf32>
    %8 = arith.addf %6, %7 : vector<512x16xf32>
    %cst_5 = arith.constant 0.000000e+00 : f32
    %9 = vector.broadcast %cst_5 : f32 to vector<512x16xf32>
    %10 = arith.maximumf %8, %9 : vector<512x16xf32>
    %cst_6 = arith.constant 0.000000e+00 : bf16
    %11 = vector.broadcast %cst_6 : bf16 to vector<2x22x27x16xbf16>
    %c0_7 = arith.constant 0 : index
    %c0_8 = arith.constant 0 : index
    %c0_9 = arith.constant 0 : index
    %c0_10 = arith.constant 0 : index
    %12 = vector.load %arg7[%c0_7, %c0_8, %c0_9, %c0_10] : memref<2x22x27x16xbf16, #tpu.memory_space<vmem>>, vector<2x22x27x16xbf16>
    tpu.vector_store %arg7[%c0_7, %c0_8, %c0_9, %c0_10], %11 {strides = array<i32>} : memref<2x22x27x16xbf16, #tpu.memory_space<vmem>>, vector<2x22x27x16xbf16>,
    %13 = vector.shape_cast %10 : vector<512x16xf32> to vector<2x16x16x16xf32>
    %14 = arith.truncf %13 : vector<2x16x16x16xf32> to vector<2x16x16x16xbf16>
    %c0_11 = arith.constant 0 : index
    %c3 = arith.constant 3 : index
    %c8 = arith.constant 8 : index
    %c0_12 = arith.constant 0 : index
    %15 = vector.load %arg7[%c0_11, %c3, %c8, %c0_12] : memref<2x22x27x16xbf16, #tpu.memory_space<vmem>>, vector<2x16x16x16xbf16>
    tpu.vector_store %arg7[%c0_11, %c3, %c8, %c0_12], %14 {strides = array<i32>} : memref<2x22x27x16xbf16, #tpu.memory_space<vmem>>, vector<2x16x16x16xbf16>,
    %cst_13 = arith.constant 0.000000e+00 : f32
    %16 = vector.broadcast %cst_13 : f32 to vector<512x16xf32>
    %c0_i32 = arith.constant 0 : i32
    %c7_i32 = arith.constant 7 : i32
    %17 = arith.addi %c0_i32, %c7_i32 : i32
    %c1_i32 = arith.constant 1 : i32
    %18 = scf.for %arg8 = %c0_i32 to %17 step %c1_i32 iter_args(%arg9 = %16) -> (vector<512x16xf32>)  : i32 {
      %c0_19 = arith.constant 0 : index
      %23 = arith.index_cast %arg8 : i32 to index
      %c0_20 = arith.constant 0 : index
      %c0_21 = arith.constant 0 : index
      %24 = vector.load %arg7[%c0_19, %23, %c0_20, %c0_21] : memref<2x22x27x16xbf16, #tpu.memory_space<vmem>>, vector<2x16x27x16xbf16>
      %25 = vector.extract_strided_slice %24 {offsets = [0, 0, 5, 0], sizes = [2, 16, 16, 16], strides = [1, 1, 1, 1]} : vector<2x16x27x16xbf16> to vector<2x16x16x16xbf16>
      %26 = vector.shape_cast %25 : vector<2x16x16x16xbf16> to vector<512x16xbf16>
      %27 = vector.extract_strided_slice %24 {offsets = [0, 0, 6, 0], sizes = [2, 16, 16, 16], strides = [1, 1, 1, 1]} : vector<2x16x27x16xbf16> to vector<2x16x16x16xbf16>
      %28 = vector.shape_cast %27 : vector<2x16x16x16xbf16> to vector<512x16xbf16>
      %29 = vector.extract_strided_slice %24 {offsets = [0, 0, 7, 0], sizes = [2, 16, 16, 16], strides = [1, 1, 1, 1]} : vector<2x16x27x16xbf16> to vector<2x16x16x16xbf16>
      %30 = vector.shape_cast %29 : vector<2x16x16x16xbf16> to vector<512x16xbf16>
      %31 = vector.extract_strided_slice %24 {offsets = [0, 0, 8, 0], sizes = [2, 16, 16, 16], strides = [1, 1, 1, 1]} : vector<2x16x27x16xbf16> to vector<2x16x16x16xbf16>
      %32 = vector.shape_cast %31 : vector<2x16x16x16xbf16> to vector<512x16xbf16>
      %33 = vector.extract_strided_slice %24 {offsets = [0, 0, 9, 0], sizes = [2, 16, 16, 16], strides = [1, 1, 1, 1]} : vector<2x16x27x16xbf16> to vector<2x16x16x16xbf16>
      %34 = vector.shape_cast %33 : vector<2x16x16x16xbf16> to vector<512x16xbf16>
      %35 = vector.extract_strided_slice %24 {offsets = [0, 0, 10, 0], sizes = [2, 16, 16, 16], strides = [1, 1, 1, 1]} : vector<2x16x27x16xbf16> to vector<2x16x16x16xbf16>
      %36 = vector.shape_cast %35 : vector<2x16x16x16xbf16> to vector<512x16xbf16>
      %37 = vector.extract_strided_slice %24 {offsets = [0, 0, 11, 0], sizes = [2, 16, 16, 16], strides = [1, 1, 1, 1]} : vector<2x16x27x16xbf16> to vector<2x16x16x16xbf16>
      %38 = vector.shape_cast %37 : vector<2x16x16x16xbf16> to vector<512x16xbf16>
      %39 = tpu.concatenate %26, %28, %30, %32, %34, %36, %38 in 1 : vector<512x16xbf16>, vector<512x16xbf16>, vector<512x16xbf16>, vector<512x16xbf16>, vector<512x16xbf16>, vector<512x16xbf16>, vector<512x16xbf16> -> vector<512x112xbf16>
      %40 = arith.index_cast %arg8 : i32 to index
      %c0_22 = arith.constant 0 : index
      %c0_23 = arith.constant 0 : index
      %41 = vector.load %arg4[%40, %c0_22, %c0_23] : memref<7x112x16xbf16, #tpu.memory_space<vmem>>, vector<1x112x16xbf16>
      %42 = vector.shape_cast %41 : vector<1x112x16xbf16> to vector<112x16xbf16>
      %cst_24 = arith.constant dense<0.000000e+00> : vector<512x16xf32>
      %43 = tpu.matmul %39, %42, %cst_24 {dimension_numbers = #tpu.dot_dimension_numbers<[1], [0], [0], [1], [0, 0, 1, 1], [], []>} : vector<512x112xbf16>, vector<112x16xbf16>, vector<512x16xf32> -> vector<512x16xf32>
      %44 = arith.addf %arg9, %43 : vector<512x16xf32>
      scf.yield %44 : vector<512x16xf32>
    }
    %c7_i32_14 = arith.constant 7 : i32
    %c0_15 = arith.constant 0 : index
    %c0_16 = arith.constant 0 : index
    %19 = vector.load %arg5[%c0_15, %c0_16] : memref<1x16xf32, #tpu.memory_space<vmem>>, vector<1x16xf32>
    %20 = vector.broadcast %19 : vector<1x16xf32> to vector<512x16xf32>
    %21 = arith.addf %18, %20 : vector<512x16xf32>
    %c0_17 = arith.constant 0 : index
    %c0_18 = arith.constant 0 : index
    %22 = vector.load %arg6[%c0_17, %c0_18] : memref<512x16xf32, #tpu.memory_space<vmem>>, vector<512x16xf32>
    tpu.vector_store %arg6[%c0_17, %c0_18], %21 {strides = array<i32>} : memref<512x16xf32, #tpu.memory_space<vmem>>, vector<512x16xf32>,
    return
  }
  func.func @transform_0(%arg0: i32) -> (i32, i32) {
    %c0_i32 = arith.constant 0 : i32
    %c0_i32_0 = arith.constant 0 : i32
    %c0_i32_1 = arith.constant 0 : i32
    return %c0_i32, %c0_i32_0 : i32, i32
  }
  func.func @transform_1(%arg0: i32) -> (i32, i32) {
    %c0_i32 = arith.constant 0 : i32
    %c0_i32_0 = arith.constant 0 : i32
    %c0_i32_1 = arith.constant 0 : i32
    return %c0_i32, %c0_i32_0 : i32, i32
  }
  func.func @transform_2(%arg0: i32) -> (i32, i32) {
    %c0_i32 = arith.constant 0 : i32
    %c0_i32_0 = arith.constant 0 : i32
    %c0_i32_1 = arith.constant 0 : i32
    return %c0_i32, %c0_i32_0 : i32, i32
  }
  func.func @transform_3(%arg0: i32) -> (i32, i32, i32) {
    %c0_i32 = arith.constant 0 : i32
    %c0_i32_0 = arith.constant 0 : i32
    %c0_i32_1 = arith.constant 0 : i32
    %c0_i32_2 = arith.constant 0 : i32
    return %c0_i32, %c0_i32_0, %c0_i32_1 : i32, i32, i32
  }
  func.func @transform_4(%arg0: i32) -> (i32, i32) {
    %c0_i32 = arith.constant 0 : i32
    %c0_i32_0 = arith.constant 0 : i32
    %c0_i32_1 = arith.constant 0 : i32
    return %c0_i32, %c0_i32_0 : i32, i32
  }
  func.func @transform_5(%arg0: i32) -> (i32, i32) {
    %c0_i32 = arith.constant 0 : i32
    %c0_i32_0 = arith.constant 0 : i32
    %c0_i32_1 = arith.constant 0 : i32
    return %c0_i32, %c0_i32_0 : i32, i32
  }
}

</mosaic_0001>

<llo_original>
// kernel: model_forward.1
$region0: #{model_forward.1}
  #allocation0 [shape = 'u32[]', space=smem, size = 0x4, offset = 0x4, fixed_abs, tag = 'smem constant byte address 0x4 - core index']
  #allocation1 [shape = 'u32[144,128]{1,0:T(1,128)}', space=vmem, size = 0x12000, scoped, tag = 'internal scratch']
  #allocation2 [shape = 'bf16[2,22,27,16]{3,2,1,0:T(8,128)(2,1)}', space=vmem, size = 0x58000, scoped, tag = 'scratch operand']
  %s0 = inlined_call_operand.vmem [shape: bf16[512,784], index: 0, kind: input, shape index: {}]
  %s1 = inlined_call_operand.vmem [shape: bf16[784,32], index: 1, kind: input, shape index: {}]
  %s2 = inlined_call_operand.vmem [shape: f32[1,32], index: 2, kind: input, shape index: {}]
  %s3 = inlined_call_operand.vmem [shape: bf16[7,112,16], index: 3, kind: input, shape index: {}]
  %s4 = inlined_call_operand.vmem [shape: f32[1,16], index: 4, kind: input, shape index: {}]
  %s5 = inlined_call_operand.vmem [shape: f32[512,16], index: 5, kind: output, shape index: {}]
  %s6 = sld [smem:[#allocation0]]
  $region37: #{model_forward.1} parent=0
    _
  %s8 = ssub.s32 1, %s6
  %s9 = scalar_select 0, %s8, %s6
  // Predicated region
  $region2: #{model_forward.1} parent=0 // pred_check
    _
  $region3: #{model_forward.1} parent=0 // pred_check_branch
    %11 = sbr.rel (0) target = $region5
  $region4: #{model_forward.1} parent=0 // pred_region
    _
  $region5: #{model_forward.1} parent=0 // pred_fallthru
    _
  // Predicated region
  $region6: #{model_forward.1} parent=0 // pred_check
    _
  $region7: #{model_forward.1} parent=0 // pred_check_branch
    %13 = sbr.rel (0) target = $region9
  $region8: #{model_forward.1} parent=0 // pred_region
    _
  $region9: #{model_forward.1} parent=0 // pred_fallthru
    _
  // Predicated region
  $region10: #{model_forward.1} parent=0 // pred_check
    _
  $region11: #{model_forward.1} parent=0 // pred_check_branch
    %15 = sbr.rel (0) target = $region13
  $region12: #{model_forward.1} parent=0 // pred_region
    _
  $region13: #{model_forward.1} parent=0 // pred_fallthru
    _
  // Predicated region
  $region14: #{model_forward.1} parent=0 // pred_check
    _
  $region15: #{model_forward.1} parent=0 // pred_check_branch
    %17 = sbr.rel (0) target = $region17
  $region16: #{model_forward.1} parent=0 // pred_region
    _
  $region17: #{model_forward.1} parent=0 // pred_fallthru
    _
  // Predicated region
  $region18: #{model_forward.1} parent=0 // pred_check
    _
  $region19: #{model_forward.1} parent=0 // pred_check_branch
    %19 = sbr.rel (0) target = $region21
  $region20: #{model_forward.1} parent=0 // pred_region
    _
  $region21: #{model_forward.1} parent=0 // pred_fallthru
    _
  %v21 = vld [vmem:[%s0] sm:$0xff]
  %v22 = vld [vmem:[%s0 + $0x8] sm:$0xff]
  %v23 = vld [vmem:[%s0 + $0x10] sm:$0xff]
  %v24 = vld [vmem:[%s0 + $0x18] sm:$0xf]
  %v25 = vld [vmem:[%s0 + $0x1c] sm:$0xff]
  %v26 = vld [vmem:[%s0 + $0x24] sm:$0xff]
  %v27 = vld [vmem:[%s0 + $0x2c] sm:$0xff]
  %v28 = vld [vmem:[%s0 + $0x34] sm:$0xf]
  %v29 = vld [vmem:[%s0 + $0x38] sm:$0xff]
  %v30 = vld [vmem:[%s0 + $0x40] sm:$0xff]
  %v31 = vld [vmem:[%s0 + $0x48] sm:$0xff]
  %v32 = vld [vmem:[%s0 + $0x50] sm:$0xf]
  %v33 = vld [vmem:[%s0 + $0x54] sm:$0xff]
  %v34 = vld [vmem:[%s0 + $0x5c] sm:$0xff]
  %v35 = vld [vmem:[%s0 + $0x64] sm:$0xff]
  %v36 = vld [vmem:[%s0 + $0x6c] sm:$0xf]
  %v37 = vld [vmem:[%s0 + $0x70] sm:$0xff]
  %v38 = vld [vmem:[%s0 + $0x78] sm:$0xff]
  %v39 = vld [vmem:[%s0 + $0x80] sm:$0xff]
  %v40 = vld [vmem:[%s0 + $0x88] sm:$0xf]
  %v41 = vld [vmem:[%s0 + $0x8c] sm:$0xff]
  %v42 = vld [vmem:[%s0 + $0x94] sm:$0xff]
  %v43 = vld [vmem:[%s0 + $0x9c] sm:$0xff]
  %v44 = vld [vmem:[%s0 + $0xa4] sm:$0xf]
  %v45 = vld [vmem:[%s0 + $0xa8] sm:$0xff]
  %v46 = vld [vmem:[%s0 + $0xb0] sm:$0xff]
  %v47 = vld [vmem:[%s0 + $0xb8] sm:$0xff]
  %v48 = vld [vmem:[%s0 + $0xc0] sm:$0xf]
  %v49 = vld [vmem:[%s0 + $0xc4] sm:$0xff]
  %v50 = vld [vmem:[%s0 + $0xcc] sm:$0xff]
  %v51 = vld [vmem:[%s0 + $0xd4] sm:$0xff]
  %v52 = vld [vmem:[%s0 + $0xdc] sm:$0xf]
  %v53 = vld [vmem:[%s0 + $0xe0] sm:$0xff]
  %v54 = vld [vmem:[%s0 + $0xe8] sm:$0xff]
  %v55 = vld [vmem:[%s0 + $0xf0] sm:$0xff]
  %v56 = vld [vmem:[%s0 + $0xf8] sm:$0xf]
  %v57 = vld [vmem:[%s0 + $0xfc] sm:$0xff]
  %v58 = vld [vmem:[%s0 + $0x104] sm:$0xff]
  %v59 = vld [vmem:[%s0 + $0x10c] sm:$0xff]
  %v60 = vld [vmem:[%s0 + $0x114] sm:$0xf]
  %v61 = vld [vmem:[%s0 + $0x118] sm:$0xff]
  %v62 = vld [vmem:[%s0 + $0x120] sm:$0xff]
  %v63 = vld [vmem:[%s0 + $0x128] sm:$0xff]
  %v64 = vld [vmem:[%s0 + $0x130] sm:$0xf]
  %v65 = vld [vmem:[%s0 + $0x134] sm:$0xff]
  %v66 = vld [vmem:[%s0 + $0x13c] sm:$0xff]
  %v67 = vld [vmem:[%s0 + $0x144] sm:$0xff]
  %v68 = vld [vmem:[%s0 + $0x14c] sm:$0xf]
  %v69 = vld [vmem:[%s0 + $0x150] sm:$0xff]
  %v70 = vld [vmem:[%s0 + $0x158] sm:$0xff]
  %v71 = vld [vmem:[%s0 + $0x160] sm:$0xff]
  %v72 = vld [vmem:[%s0 + $0x168] sm:$0xf]
  %v73 = vld [vmem:[%s0 + $0x16c] sm:$0xff]
  %v74 = vld [vmem:[%s0 + $0x174] sm:$0xff]
  %v75 = vld [vmem:[%s0 + $0x17c] sm:$0xff]
  %v76 = vld [vmem:[%s0 + $0x184] sm:$0xf]
  %v77 = vld [vmem:[%s0 + $0x188] sm:$0xff]
  %v78 = vld [vmem:[%s0 + $0x190] sm:$0xff]
  %v79 = vld [vmem:[%s0 + $0x198] sm:$0xff]
  %v80 = vld [vmem:[%s0 + $0x1a0] sm:$0xf]
  %v81 = vld [vmem:[%s0 + $0x1a4] sm:$0xff]
  %v82 = vld [vmem:[%s0 + $0x1ac] sm:$0xff]
  %v83 = vld [vmem:[%s0 + $0x1b4] sm:$0xff]
  %v84 = vld [vmem:[%s0 + $0x1bc] sm:$0xf]
  %v85 = vld [vmem:[%s0 + $0x1c0] sm:$0xff]
  %v86 = vld [vmem:[%s0 + $0x1c8] sm:$0xff]
  %v87 = vld [vmem:[%s0 + $0x1d0] sm:$0xff]
  %v88 = vld [vmem:[%s0 + $0x1d8] sm:$0xf]
  %v89 = vld [vmem:[%s0 + $0x1dc] sm:$0xff]
  %v90 = vld [vmem:[%s0 + $0x1e4] sm:$0xff]
  %v91 = vld [vmem:[%s0 + $0x1ec] sm:$0xff]
  %v92 = vld [vmem:[%s0 + $0x1f4] sm:$0xf]
  %v93 = vld [vmem:[%s0 + $0x1f8] sm:$0xff]
  %v94 = vld [vmem:[%s0 + $0x200] sm:$0xff]
  %v95 = vld [vmem:[%s0 + $0x208] sm:$0xff]
  %v96 = vld [vmem:[%s0 + $0x210] sm:$0xf]
  %v97 = vld [vmem:[%s0 + $0x214] sm:$0xff]
  %v98 = vld [vmem:[%s0 + $0x21c] sm:$0xff]
  %v99 = vld [vmem:[%s0 + $0x224] sm:$0xff]
  %v100 = vld [vmem:[%s0 + $0x22c] sm:$0xf]
  %v101 = vld [vmem:[%s0 + $0x230] sm:$0xff]
  %v102 = vld [vmem:[%s0 + $0x238] sm:$0xff]
  %v103 = vld [vmem:[%s0 + $0x240] sm:$0xff]
  %v104 = vld [vmem:[%s0 + $0x248] sm:$0xf]
  %v105 = vld [vmem:[%s0 + $0x24c] sm:$0xff]
  %v106 = vld [vmem:[%s0 + $0x254] sm:$0xff]
  %v107 = vld [vmem:[%s0 + $0x25c] sm:$0xff]
  %v108 = vld [vmem:[%s0 + $0x264] sm:$0xf]
  %v109 = vld [vmem:[%s0 + $0x268] sm:$0xff]
  %v110 = vld [vmem:[%s0 + $0x270] sm:$0xff]
  %v111 = vld [vmem:[%s0 + $0x278] sm:$0xff]
  %v112 = vld [vmem:[%s0 + $0x280] sm:$0xf]
  %v113 = vld [vmem:[%s0 + $0x284] sm:$0xff]
  %v114 = vld [vmem:[%s0 + $0x28c] sm:$0xff]
  %v115 = vld [vmem:[%s0 + $0x294] sm:$0xff]
  %v116 = vld [vmem:[%s0 + $0x29c] sm:$0xf]
  %v117 = vld [vmem:[%s0 + $0x2a0] sm:$0xff]
  %v118 = vld [vmem:[%s0 + $0x2a8] sm:$0xff]
  %v119 = vld [vmem:[%s0 + $0x2b0] sm:$0xff]
  %v120 = vld [vmem:[%s0 + $0x2b8] sm:$0xf]
  %v121 = vld [vmem:[%s0 + $0x2bc] sm:$0xff]
  %v122 = vld [vmem:[%s0 + $0x2c4] sm:$0xff]
  %v123 = vld [vmem:[%s0 + $0x2cc] sm:$0xff]
  %v124 = vld [vmem:[%s0 + $0x2d4] sm:$0xf]
  %v125 = vld [vmem:[%s0 + $0x2d8] sm:$0xff]
  %v126 = vld [vmem:[%s0 + $0x2e0] sm:$0xff]
  %v127 = vld [vmem:[%s0 + $0x2e8] sm:$0xff]
  %v128 = vld [vmem:[%s0 + $0x2f0] sm:$0xf]
  %v129 = vld [vmem:[%s0 + $0x2f4] sm:$0xff]
  %v130 = vld [vmem:[%s0 + $0x2fc] sm:$0xff]
  %v131 = vld [vmem:[%s0 + $0x304] sm:$0xff]
  %v132 = vld [vmem:[%s0 + $0x30c] sm:$0xf]
  %v133 = vld [vmem:[%s0 + $0x310] sm:$0xff]
  %v134 = vld [vmem:[%s0 + $0x318] sm:$0xff]
  %v135 = vld [vmem:[%s0 + $0x320] sm:$0xff]
  %v136 = vld [vmem:[%s0 + $0x328] sm:$0xf]
  %v137 = vld [vmem:[%s0 + $0x32c] sm:$0xff]
  %v138 = vld [vmem:[%s0 + $0x334] sm:$0xff]
  %v139 = vld [vmem:[%s0 + $0x33c] sm:$0xff]
  %v140 = vld [vmem:[%s0 + $0x344] sm:$0xf]
  %v141 = vld [vmem:[%s0 + $0x348] sm:$0xff]
  %v142 = vld [vmem:[%s0 + $0x350] sm:$0xff]
  %v143 = vld [vmem:[%s0 + $0x358] sm:$0xff]
  %v144 = vld [vmem:[%s0 + $0x360] sm:$0xf]
  %v145 = vld [vmem:[%s0 + $0x364] sm:$0xff]
  %v146 = vld [vmem:[%s0 + $0x36c] sm:$0xff]
  %v147 = vld [vmem:[%s0 + $0x374] sm:$0xff]
  %v148 = vld [vmem:[%s0 + $0x37c] sm:$0xf]
  %v149 = vld [vmem:[%s0 + $0x380] sm:$0xff]
  %v150 = vld [vmem:[%s0 + $0x388] sm:$0xff]
  %v151 = vld [vmem:[%s0 + $0x390] sm:$0xff]
  %v152 = vld [vmem:[%s0 + $0x398] sm:$0xf]
  %v153 = vld [vmem:[%s0 + $0x39c] sm:$0xff]
  %v154 = vld [vmem:[%s0 + $0x3a4] sm:$0xff]
  %v155 = vld [vmem:[%s0 + $0x3ac] sm:$0xff]
  %v156 = vld [vmem:[%s0 + $0x3b4] sm:$0xf]
  %v157 = vld [vmem:[%s0 + $0x3b8] sm:$0xff]
  %v158 = vld [vmem:[%s0 + $0x3c0] sm:$0xff]
  %v159 = vld [vmem:[%s0 + $0x3c8] sm:$0xff]
  %v160 = vld [vmem:[%s0 + $0x3d0] sm:$0xf]
  %v161 = vld [vmem:[%s0 + $0x3d4] sm:$0xff]
  %v162 = vld [vmem:[%s0 + $0x3dc] sm:$0xff]
  %v163 = vld [vmem:[%s0 + $0x3e4] sm:$0xff]
  %v164 = vld [vmem:[%s0 + $0x3ec] sm:$0xf]
  %v165 = vld [vmem:[%s0 + $0x3f0] sm:$0xff]
  %v166 = vld [vmem:[%s0 + $0x3f8] sm:$0xff]
  %v167 = vld [vmem:[%s0 + $0x400] sm:$0xff]
  %v168 = vld [vmem:[%s0 + $0x408] sm:$0xf]
  %v169 = vld [vmem:[%s0 + $0x40c] sm:$0xff]
  %v170 = vld [vmem:[%s0 + $0x414] sm:$0xff]
  %v171 = vld [vmem:[%s0 + $0x41c] sm:$0xff]
  %v172 = vld [vmem:[%s0 + $0x424] sm:$0xf]
  %v173 = vld [vmem:[%s0 + $0x428] sm:$0xff]
  %v174 = vld [vmem:[%s0 + $0x430] sm:$0xff]
  %v175 = vld [vmem:[%s0 + $0x438] sm:$0xff]
  %v176 = vld [vmem:[%s0 + $0x440] sm:$0xf]
  %v177 = vld [vmem:[%s0 + $0x444] sm:$0xff]
  %v178 = vld [vmem:[%s0 + $0x44c] sm:$0xff]
  %v179 = vld [vmem:[%s0 + $0x454] sm:$0xff]
  %v180 = vld [vmem:[%s0 + $0x45c] sm:$0xf]
  %v181 = vld [vmem:[%s0 + $0x460] sm:$0xff]
  %v182 = vld [vmem:[%s0 + $0x468] sm:$0xff]
  %v183 = vld [vmem:[%s0 + $0x470] sm:$0xff]
  %v184 = vld [vmem:[%s0 + $0x478] sm:$0xf]
  %v185 = vld [vmem:[%s0 + $0x47c] sm:$0xff]
  %v186 = vld [vmem:[%s0 + $0x484] sm:$0xff]
  %v187 = vld [vmem:[%s0 + $0x48c] sm:$0xff]
  %v188 = vld [vmem:[%s0 + $0x494] sm:$0xf]
  %v189 = vld [vmem:[%s0 + $0x498] sm:$0xff]
  %v190 = vld [vmem:[%s0 + $0x4a0] sm:$0xff]
  %v191 = vld [vmem:[%s0 + $0x4a8] sm:$0xff]
  %v192 = vld [vmem:[%s0 + $0x4b0] sm:$0xf]
  %v193 = vld [vmem:[%s0 + $0x4b4] sm:$0xff]
  %v194 = vld [vmem:[%s0 + $0x4bc] sm:$0xff]
  %v195 = vld [vmem:[%s0 + $0x4c4] sm:$0xff]
  %v196 = vld [vmem:[%s0 + $0x4cc] sm:$0xf]
  %v197 = vld [vmem:[%s0 + $0x4d0] sm:$0xff]
  %v198 = vld [vmem:[%s0 + $0x4d8] sm:$0xff]
  %v199 = vld [vmem:[%s0 + $0x4e0] sm:$0xff]
  %v200 = vld [vmem:[%s0 + $0x4e8] sm:$0xf]
  %v201 = vld [vmem:[%s0 + $0x4ec] sm:$0xff]
  %v202 = vld [vmem:[%s0 + $0x4f4] sm:$0xff]
  %v203 = vld [vmem:[%s0 + $0x4fc] sm:$0xff]
  %v204 = vld [vmem:[%s0 + $0x504] sm:$0xf]
  %v205 = vld [vmem:[%s0 + $0x508] sm:$0xff]
  %v206 = vld [vmem:[%s0 + $0x510] sm:$0xff]
  %v207 = vld [vmem:[%s0 + $0x518] sm:$0xff]
  %v208 = vld [vmem:[%s0 + $0x520] sm:$0xf]
  %v209 = vld [vmem:[%s0 + $0x524] sm:$0xff]
  %v210 = vld [vmem:[%s0 + $0x52c] sm:$0xff]
  %v211 = vld [vmem:[%s0 + $0x534] sm:$0xff]
  %v212 = vld [vmem:[%s0 + $0x53c] sm:$0xf]
  %v213 = vld [vmem:[%s0 + $0x540] sm:$0xff]
  %v214 = vld [vmem:[%s0 + $0x548] sm:$0xff]
  %v215 = vld [vmem:[%s0 + $0x550] sm:$0xff]
  %v216 = vld [vmem:[%s0 + $0x558] sm:$0xf]
  %v217 = vld [vmem:[%s0 + $0x55c] sm:$0xff]
  %v218 = vld [vmem:[%s0 + $0x564] sm:$0xff]
  %v219 = vld [vmem:[%s0 + $0x56c] sm:$0xff]
  %v220 = vld [vmem:[%s0 + $0x574] sm:$0xf]
  %v221 = vld [vmem:[%s0 + $0x578] sm:$0xff]
  %v222 = vld [vmem:[%s0 + $0x580] sm:$0xff]
  %v223 = vld [vmem:[%s0 + $0x588] sm:$0xff]
  %v224 = vld [vmem:[%s0 + $0x590] sm:$0xf]
  %v225 = vld [vmem:[%s0 + $0x594] sm:$0xff]
  %v226 = vld [vmem:[%s0 + $0x59c] sm:$0xff]
  %v227 = vld [vmem:[%s0 + $0x5a4] sm:$0xff]
  %v228 = vld [vmem:[%s0 + $0x5ac] sm:$0xf]
  %v229 = vld [vmem:[%s0 + $0x5b0] sm:$0xff]
  %v230 = vld [vmem:[%s0 + $0x5b8] sm:$0xff]
  %v231 = vld [vmem:[%s0 + $0x5c0] sm:$0xff]
  %v232 = vld [vmem:[%s0 + $0x5c8] sm:$0xf]
  %v233 = vld [vmem:[%s0 + $0x5cc] sm:$0xff]
  %v234 = vld [vmem:[%s0 + $0x5d4] sm:$0xff]
  %v235 = vld [vmem:[%s0 + $0x5dc] sm:$0xff]
  %v236 = vld [vmem:[%s0 + $0x5e4] sm:$0xf]
  %v237 = vld [vmem:[%s0 + $0x5e8] sm:$0xff]
  %v238 = vld [vmem:[%s0 + $0x5f0] sm:$0xff]
  %v239 = vld [vmem:[%s0 + $0x5f8] sm:$0xff]
  %v240 = vld [vmem:[%s0 + $0x600] sm:$0xf]
  %v241 = vld [vmem:[%s0 + $0x604] sm:$0xff]
  %v242 = vld [vmem:[%s0 + $0x60c] sm:$0xff]
  %v243 = vld [vmem:[%s0 + $0x614] sm:$0xff]
  %v244 = vld [vmem:[%s0 + $0x61c] sm:$0xf]
  %v245 = vld [vmem:[%s0 + $0x620] sm:$0xff]
  %v246 = vld [vmem:[%s0 + $0x628] sm:$0xff]
  %v247 = vld [vmem:[%s0 + $0x630] sm:$0xff]
  %v248 = vld [vmem:[%s0 + $0x638] sm:$0xf]
  %v249 = vld [vmem:[%s0 + $0x63c] sm:$0xff]
  %v250 = vld [vmem:[%s0 + $0x644] sm:$0xff]
  %v251 = vld [vmem:[%s0 + $0x64c] sm:$0xff]
  %v252 = vld [vmem:[%s0 + $0x654] sm:$0xf]
  %v253 = vld [vmem:[%s0 + $0x658] sm:$0xff]
  %v254 = vld [vmem:[%s0 + $0x660] sm:$0xff]
  %v255 = vld [vmem:[%s0 + $0x668] sm:$0xff]
  %v256 = vld [vmem:[%s0 + $0x670] sm:$0xf]
  %v257 = vld [vmem:[%s0 + $0x674] sm:$0xff]
  %v258 = vld [vmem:[%s0 + $0x67c] sm:$0xff]
  %v259 = vld [vmem:[%s0 + $0x684] sm:$0xff]
  %v260 = vld [vmem:[%s0 + $0x68c] sm:$0xf]
  %v261 = vld [vmem:[%s0 + $0x690] sm:$0xff]
  %v262 = vld [vmem:[%s0 + $0x698] sm:$0xff]
  %v263 = vld [vmem:[%s0 + $0x6a0] sm:$0xff]
  %v264 = vld [vmem:[%s0 + $0x6a8] sm:$0xf]
  %v265 = vld [vmem:[%s0 + $0x6ac] sm:$0xff]
  %v266 = vld [vmem:[%s0 + $0x6b4] sm:$0xff]
  %v267 = vld [vmem:[%s0 + $0x6bc] sm:$0xff]
  %v268 = vld [vmem:[%s0 + $0x6c4] sm:$0xf]
  %v269 = vld [vmem:[%s0 + $0x6c8] sm:$0xff]
  %v270 = vld [vmem:[%s0 + $0x6d0] sm:$0xff]
  %v271 = vld [vmem:[%s0 + $0x6d8] sm:$0xff]
  %v272 = vld [vmem:[%s0 + $0x6e0] sm:$0xf]
  %v273 = vld [vmem:[%s0 + $0x6e4] sm:$0xff]
  %v274 = vld [vmem:[%s0 + $0x6ec] sm:$0xff]
  %v275 = vld [vmem:[%s0 + $0x6f4] sm:$0xff]
  %v276 = vld [vmem:[%s0 + $0x6fc] sm:$0xf]
  %v277 = vld [vmem:[%s1] sm:$0xf]
  %v278 = vld [vmem:[%s1 + $0x4] sm:$0xf]
  %v279 = vld [vmem:[%s1 + $0x8] sm:$0xf]
  %v280 = vld [vmem:[%s1 + $0xc] sm:$0xf]
  %v281 = vld [vmem:[%s1 + $0x10] sm:$0xf]
  %v282 = vld [vmem:[%s1 + $0x14] sm:$0xf]
  %v283 = vld [vmem:[%s1 + $0x18] sm:$0xf]
  %v284 = vld [vmem:[%s1 + $0x1c] sm:$0xf]
  %v285 = vld [vmem:[%s1 + $0x20] sm:$0xf]
  %v286 = vld [vmem:[%s1 + $0x24] sm:$0xf]
  %v287 = vld [vmem:[%s1 + $0x28] sm:$0xf]
  %v288 = vld [vmem:[%s1 + $0x2c] sm:$0xf]
  %v289 = vld [vmem:[%s1 + $0x30] sm:$0xf]
  %v290 = vld [vmem:[%s1 + $0x34] sm:$0xf]
  %v291 = vld [vmem:[%s1 + $0x38] sm:$0xf]
  %v292 = vld [vmem:[%s1 + $0x3c] sm:$0xf]
  %v293 = vld [vmem:[%s1 + $0x40] sm:$0xf]
  %v294 = vld [vmem:[%s1 + $0x44] sm:$0xf]
  %v295 = vld [vmem:[%s1 + $0x48] sm:$0xf]
  %v296 = vld [vmem:[%s1 + $0x4c] sm:$0xf]
  %v297 = vld [vmem:[%s1 + $0x50] sm:$0xf]
  %v298 = vld [vmem:[%s1 + $0x54] sm:$0xf]
  %v299 = vld [vmem:[%s1 + $0x58] sm:$0xf]
  %v300 = vld [vmem:[%s1 + $0x5c] sm:$0xf]
  %v301 = vld [vmem:[%s1 + $0x60] sm:$0xf]
  %v302 = vld [vmem:[%s1 + $0x64] sm:$0xf]
  %v303 = vld [vmem:[%s1 + $0x68] sm:$0xf]
  %v304 = vld [vmem:[%s1 + $0x6c] sm:$0xf]
  %v305 = vld [vmem:[%s1 + $0x70] sm:$0xf]
  %v306 = vld [vmem:[%s1 + $0x74] sm:$0xf]
  %v307 = vld [vmem:[%s1 + $0x78] sm:$0xf]
  %v308 = vld [vmem:[%s1 + $0x7c] sm:$0xf]
  %v309 = vld [vmem:[%s1 + $0x80] sm:$0xf]
  %v310 = vld [vmem:[%s1 + $0x84] sm:$0xf]
  %v311 = vld [vmem:[%s1 + $0x88] sm:$0xf]
  %v312 = vld [vmem:[%s1 + $0x8c] sm:$0xf]
  %v313 = vld [vmem:[%s1 + $0x90] sm:$0xf]
  %v314 = vld [vmem:[%s1 + $0x94] sm:$0xf]
  %v315 = vld [vmem:[%s1 + $0x98] sm:$0xf]
  %v316 = vld [vmem:[%s1 + $0x9c] sm:$0xf]
  %v317 = vld [vmem:[%s1 + $0xa0] sm:$0xf]
  %v318 = vld [vmem:[%s1 + $0xa4] sm:$0xf]
  %v319 = vld [vmem:[%s1 + $0xa8] sm:$0xf]
  %v320 = vld [vmem:[%s1 + $0xac] sm:$0xf]
  %v321 = vld [vmem:[%s1 + $0xb0] sm:$0xf]
  %v322 = vld [vmem:[%s1 + $0xb4] sm:$0xf]
  %v323 = vld [vmem:[%s1 + $0xb8] sm:$0xf]
  %v324 = vld [vmem:[%s1 + $0xbc] sm:$0xf]
  %v325 = vld [vmem:[%s1 + $0xc0] sm:$0xf]
  %v326 = vld [vmem:[%s1 + $0xc4] sm:$0xf]
  %v327 = vld [vmem:[%s1 + $0xc8] sm:$0xf]
  %v328 = vld [vmem:[%s1 + $0xcc] sm:$0xf]
  %v329 = vld [vmem:[%s1 + $0xd0] sm:$0xf]
  %v330 = vld [vmem:[%s1 + $0xd4] sm:$0xf]
  %v331 = vld [vmem:[%s1 + $0xd8] sm:$0xf]
  %v332 = vld [vmem:[%s1 + $0xdc] sm:$0xf]
  %v333 = vld [vmem:[%s1 + $0xe0] sm:$0xf]
  %v334 = vld [vmem:[%s1 + $0xe4] sm:$0xf]
  %v335 = vld [vmem:[%s1 + $0xe8] sm:$0xf]
  %v336 = vld [vmem:[%s1 + $0xec] sm:$0xf]
  %v337 = vld [vmem:[%s1 + $0xf0] sm:$0xf]
  %v338 = vld [vmem:[%s1 + $0xf4] sm:$0xf]
  %v339 = vld [vmem:[%s1 + $0xf8] sm:$0xf]
  %v340 = vld [vmem:[%s1 + $0xfc] sm:$0xf]
  %v341 = vld [vmem:[%s1 + $0x100] sm:$0xf]
  %v342 = vld [vmem:[%s1 + $0x104] sm:$0xf]
  %v343 = vld [vmem:[%s1 + $0x108] sm:$0xf]
  %v344 = vld [vmem:[%s1 + $0x10c] sm:$0xf]
  %v345 = vld [vmem:[%s1 + $0x110] sm:$0xf]
  %v346 = vld [vmem:[%s1 + $0x114] sm:$0xf]
  %v347 = vld [vmem:[%s1 + $0x118] sm:$0xf]
  %v348 = vld [vmem:[%s1 + $0x11c] sm:$0xf]
  %v349 = vld [vmem:[%s1 + $0x120] sm:$0xf]
  %v350 = vld [vmem:[%s1 + $0x124] sm:$0xf]
  %v351 = vld [vmem:[%s1 + $0x128] sm:$0xf]
  %v352 = vld [vmem:[%s1 + $0x12c] sm:$0xf]
  %v353 = vld [vmem:[%s1 + $0x130] sm:$0xf]
  %v354 = vld [vmem:[%s1 + $0x134] sm:$0xf]
  %v355 = vld [vmem:[%s1 + $0x138] sm:$0xf]
  %v356 = vld [vmem:[%s1 + $0x13c] sm:$0xf]
  %v357 = vld [vmem:[%s1 + $0x140] sm:$0xf]
  %v358 = vld [vmem:[%s1 + $0x144] sm:$0xf]
  %v359 = vld [vmem:[%s1 + $0x148] sm:$0xf]
  %v360 = vld [vmem:[%s1 + $0x14c] sm:$0xf]
  %v361 = vld [vmem:[%s1 + $0x150] sm:$0xf]
  %v362 = vld [vmem:[%s1 + $0x154] sm:$0xf]
  %v363 = vld [vmem:[%s1 + $0x158] sm:$0xf]
  %v364 = vld [vmem:[%s1 + $0x15c] sm:$0xf]
  %v365 = vld [vmem:[%s1 + $0x160] sm:$0xf]
  %v366 = vld [vmem:[%s1 + $0x164] sm:$0xf]
  %v367 = vld [vmem:[%s1 + $0x168] sm:$0xf]
  %v368 = vld [vmem:[%s1 + $0x16c] sm:$0xf]
  %v369 = vld [vmem:[%s1 + $0x170] sm:$0xf]
  %v370 = vld [vmem:[%s1 + $0x174] sm:$0xf]
  %v371 = vld [vmem:[%s1 + $0x178] sm:$0xf]
  %v372 = vld [vmem:[%s1 + $0x17c] sm:$0xf]
  %v373 = vld [vmem:[%s1 + $0x180] sm:$0xf]
  %v374 = vld [vmem:[%s1 + $0x184] sm:$0xf]
  %v375 = vld [vmem:[%s2] sm:$0x1]
  %v377 = vlaneseq
  %v378 = vshrl.u32 %v377, 7
  %v379 = vsub.s32 0, %v378
  %v380 = vrot.slane %v375, %v379
  %v638 = vunpack.c.l.b16 %v21
  %v639 = vunpack.c.h.b16 %v21
  %v640 = vunpack.c.l.b16 %v22
  %v641 = vunpack.c.h.b16 %v22
  %v642 = vunpack.c.l.b16 %v23
  %v643 = vunpack.c.h.b16 %v23
  %v644 = vunpack.c.l.b16 %v24
  %v645 = vunpack.c.l.b16 %v25
  %v646 = vunpack.c.h.b16 %v25
  %v647 = vunpack.c.l.b16 %v26
  %v648 = vunpack.c.h.b16 %v26
  %v649 = vunpack.c.l.b16 %v27
  %v650 = vunpack.c.h.b16 %v27
  %v651 = vunpack.c.l.b16 %v28
  %v652 = vunpack.c.l.b16 %v29
  %v653 = vunpack.c.h.b16 %v29
  %v654 = vunpack.c.l.b16 %v30
  %v655 = vunpack.c.h.b16 %v30
  %v656 = vunpack.c.l.b16 %v31
  %v657 = vunpack.c.h.b16 %v31
  %v658 = vunpack.c.l.b16 %v32
  %v659 = vunpack.c.l.b16 %v33
  %v660 = vunpack.c.h.b16 %v33
  %v661 = vunpack.c.l.b16 %v34
  %v662 = vunpack.c.h.b16 %v34
  %v663 = vunpack.c.l.b16 %v35
  %v664 = vunpack.c.h.b16 %v35
  %v665 = vunpack.c.l.b16 %v36
  %v666 = vunpack.c.l.b16 %v37
  %v667 = vunpack.c.h.b16 %v37
  %v668 = vunpack.c.l.b16 %v38
  %v669 = vunpack.c.h.b16 %v38
  %v670 = vunpack.c.l.b16 %v39
  %v671 = vunpack.c.h.b16 %v39
  %v672 = vunpack.c.l.b16 %v40
  %v673 = vunpack.c.l.b16 %v41
  %v674 = vunpack.c.h.b16 %v41
  %v675 = vunpack.c.l.b16 %v42
  %v676 = vunpack.c.h.b16 %v42
  %v677 = vunpack.c.l.b16 %v43
  %v678 = vunpack.c.h.b16 %v43
  %v679 = vunpack.c.l.b16 %v44
  %v680 = vunpack.c.l.b16 %v45
  %v681 = vunpack.c.h.b16 %v45
  %v682 = vunpack.c.l.b16 %v46
  %v683 = vunpack.c.h.b16 %v46
  %v684 = vunpack.c.l.b16 %v47
  %v685 = vunpack.c.h.b16 %v47
  %v686 = vunpack.c.l.b16 %v48
  %v687 = vunpack.c.l.b16 %v49
  %v688 = vunpack.c.h.b16 %v49
  %v689 = vunpack.c.l.b16 %v50
  %v690 = vunpack.c.h.b16 %v50
  %v691 = vunpack.c.l.b16 %v51
  %v692 = vunpack.c.h.b16 %v51
  %v693 = vunpack.c.l.b16 %v52
  %v694 = vunpack.c.l.b16 %v53
  %v695 = vunpack.c.h.b16 %v53
  %v696 = vunpack.c.l.b16 %v54
  %v697 = vunpack.c.h.b16 %v54
  %v698 = vunpack.c.l.b16 %v55
  %v699 = vunpack.c.h.b16 %v55
  %v700 = vunpack.c.l.b16 %v56
  %v701 = vunpack.c.l.b16 %v57
  %v702 = vunpack.c.h.b16 %v57
  %v703 = vunpack.c.l.b16 %v58
  %v704 = vunpack.c.h.b16 %v58
  %v705 = vunpack.c.l.b16 %v59
  %v706 = vunpack.c.h.b16 %v59
  %v707 = vunpack.c.l.b16 %v60
  %v708 = vunpack.c.l.b16 %v61
  %v709 = vunpack.c.h.b16 %v61
  %v710 = vunpack.c.l.b16 %v62
  %v711 = vunpack.c.h.b16 %v62
  %v712 = vunpack.c.l.b16 %v63
  %v713 = vunpack.c.h.b16 %v63
  %v714 = vunpack.c.l.b16 %v64
  %v715 = vunpack.c.l.b16 %v65
  %v716 = vunpack.c.h.b16 %v65
  %v717 = vunpack.c.l.b16 %v66
  %v718 = vunpack.c.h.b16 %v66
  %v719 = vunpack.c.l.b16 %v67
  %v720 = vunpack.c.h.b16 %v67
  %v721 = vunpack.c.l.b16 %v68
  %v722 = vunpack.c.l.b16 %v69
  %v723 = vunpack.c.h.b16 %v69
  %v724 = vunpack.c.l.b16 %v70
  %v725 = vunpack.c.h.b16 %v70
  %v726 = vunpack.c.l.b16 %v71
  %v727 = vunpack.c.h.b16 %v71
  %v728 = vunpack.c.l.b16 %v72
  %v729 = vunpack.c.l.b16 %v73
  %v730 = vunpack.c.h.b16 %v73
  %v731 = vunpack.c.l.b16 %v74
  %v732 = vunpack.c.h.b16 %v74
  %v733 = vunpack.c.l.b16 %v75
  %v734 = vunpack.c.h.b16 %v75
  %v735 = vunpack.c.l.b16 %v76
  %v736 = vunpack.c.l.b16 %v77
  %v737 = vunpack.c.h.b16 %v77
  %v738 = vunpack.c.l.b16 %v78
  %v739 = vunpack.c.h.b16 %v78
  %v740 = vunpack.c.l.b16 %v79
  %v741 = vunpack.c.h.b16 %v79
  %v742 = vunpack.c.l.b16 %v80
  %v743 = vunpack.c.l.b16 %v81
  %v744 = vunpack.c.h.b16 %v81
  %v745 = vunpack.c.l.b16 %v82
  %v746 = vunpack.c.h.b16 %v82
  %v747 = vunpack.c.l.b16 %v83
  %v748 = vunpack.c.h.b16 %v83
  %v749 = vunpack.c.l.b16 %v84
  %v750 = vunpack.c.l.b16 %v85
  %v751 = vunpack.c.h.b16 %v85
  %v752 = vunpack.c.l.b16 %v86
  %v753 = vunpack.c.h.b16 %v86
  %v754 = vunpack.c.l.b16 %v87
  %v755 = vunpack.c.h.b16 %v87
  %v756 = vunpack.c.l.b16 %v88
  %v757 = vunpack.c.l.b16 %v89
  %v758 = vunpack.c.h.b16 %v89
  %v759 = vunpack.c.l.b16 %v90
  %v760 = vunpack.c.h.b16 %v90
  %v761 = vunpack.c.l.b16 %v91
  %v762 = vunpack.c.h.b16 %v91
  %v763 = vunpack.c.l.b16 %v92
  %v764 = vunpack.c.l.b16 %v93
  %v765 = vunpack.c.h.b16 %v93
  %v766 = vunpack.c.l.b16 %v94
  %v767 = vunpack.c.h.b16 %v94
  %v768 = vunpack.c.l.b16 %v95
  %v769 = vunpack.c.h.b16 %v95
  %v770 = vunpack.c.l.b16 %v96
  %v771 = vunpack.c.l.b16 %v97
  %v772 = vunpack.c.h.b16 %v97
  %v773 = vunpack.c.l.b16 %v98
  %v774 = vunpack.c.h.b16 %v98
  %v775 = vunpack.c.l.b16 %v99
  %v776 = vunpack.c.h.b16 %v99
  %v777 = vunpack.c.l.b16 %v100
  %v778 = vunpack.c.l.b16 %v101
  %v779 = vunpack.c.h.b16 %v101
  %v780 = vunpack.c.l.b16 %v102
  %v781 = vunpack.c.h.b16 %v102
  %v782 = vunpack.c.l.b16 %v103
  %v783 = vunpack.c.h.b16 %v103
  %v784 = vunpack.c.l.b16 %v104
  %v785 = vunpack.c.l.b16 %v105
  %v786 = vunpack.c.h.b16 %v105
  %v787 = vunpack.c.l.b16 %v106
  %v788 = vunpack.c.h.b16 %v106
  %v789 = vunpack.c.l.b16 %v107
  %v790 = vunpack.c.h.b16 %v107
  %v791 = vunpack.c.l.b16 %v108
  %v792 = vunpack.c.l.b16 %v109
  %v793 = vunpack.c.h.b16 %v109
  %v794 = vunpack.c.l.b16 %v110
  %v795 = vunpack.c.h.b16 %v110
  %v796 = vunpack.c.l.b16 %v111
  %v797 = vunpack.c.h.b16 %v111
  %v798 = vunpack.c.l.b16 %v112
  %v799 = vunpack.c.l.b16 %v113
  %v800 = vunpack.c.h.b16 %v113
  %v801 = vunpack.c.l.b16 %v114
  %v802 = vunpack.c.h.b16 %v114
  %v803 = vunpack.c.l.b16 %v115
  %v804 = vunpack.c.h.b16 %v115
  %v805 = vunpack.c.l.b16 %v116
  %v806 = vunpack.c.l.b16 %v117
  %v807 = vunpack.c.h.b16 %v117
  %v808 = vunpack.c.l.b16 %v118
  %v809 = vunpack.c.h.b16 %v118
  %v810 = vunpack.c.l.b16 %v119
  %v811 = vunpack.c.h.b16 %v119
  %v812 = vunpack.c.l.b16 %v120
  %v813 = vunpack.c.l.b16 %v121
  %v814 = vunpack.c.h.b16 %v121
  %v815 = vunpack.c.l.b16 %v122
  %v816 = vunpack.c.h.b16 %v122
  %v817 = vunpack.c.l.b16 %v123
  %v818 = vunpack.c.h.b16 %v123
  %v819 = vunpack.c.l.b16 %v124
  %v820 = vunpack.c.l.b16 %v125
  %v821 = vunpack.c.h.b16 %v125
  %v822 = vunpack.c.l.b16 %v126
  %v823 = vunpack.c.h.b16 %v126
  %v824 = vunpack.c.l.b16 %v127
  %v825 = vunpack.c.h.b16 %v127
  %v826 = vunpack.c.l.b16 %v128
  %v827 = vunpack.c.l.b16 %v129
  %v828 = vunpack.c.h.b16 %v129
  %v829 = vunpack.c.l.b16 %v130
  %v830 = vunpack.c.h.b16 %v130
  %v831 = vunpack.c.l.b16 %v131
  %v832 = vunpack.c.h.b16 %v131
  %v833 = vunpack.c.l.b16 %v132
  %v834 = vunpack.c.l.b16 %v133
  %v835 = vunpack.c.h.b16 %v133
  %v836 = vunpack.c.l.b16 %v134
  %v837 = vunpack.c.h.b16 %v134
  %v838 = vunpack.c.l.b16 %v135
  %v839 = vunpack.c.h.b16 %v135
  %v840 = vunpack.c.l.b16 %v136
  %v841 = vunpack.c.l.b16 %v137
  %v842 = vunpack.c.h.b16 %v137
  %v843 = vunpack.c.l.b16 %v138
  %v844 = vunpack.c.h.b16 %v138
  %v845 = vunpack.c.l.b16 %v139
  %v846 = vunpack.c.h.b16 %v139
  %v847 = vunpack.c.l.b16 %v140
  %v848 = vunpack.c.l.b16 %v141
  %v849 = vunpack.c.h.b16 %v141
  %v850 = vunpack.c.l.b16 %v142
  %v851 = vunpack.c.h.b16 %v142
  %v852 = vunpack.c.l.b16 %v143
  %v853 = vunpack.c.h.b16 %v143
  %v854 = vunpack.c.l.b16 %v144
  %v855 = vunpack.c.l.b16 %v145
  %v856 = vunpack.c.h.b16 %v145
  %v857 = vunpack.c.l.b16 %v146
  %v858 = vunpack.c.h.b16 %v146
  %v859 = vunpack.c.l.b16 %v147
  %v860 = vunpack.c.h.b16 %v147
  %v861 = vunpack.c.l.b16 %v148
  %v862 = vunpack.c.l.b16 %v149
  %v863 = vunpack.c.h.b16 %v149
  %v864 = vunpack.c.l.b16 %v150
  %v865 = vunpack.c.h.b16 %v150
  %v866 = vunpack.c.l.b16 %v151
  %v867 = vunpack.c.h.b16 %v151
  %v868 = vunpack.c.l.b16 %v152
  %v869 = vunpack.c.l.b16 %v153
  %v870 = vunpack.c.h.b16 %v153
  %v871 = vunpack.c.l.b16 %v154
  %v872 = vunpack.c.h.b16 %v154
  %v873 = vunpack.c.l.b16 %v155
  %v874 = vunpack.c.h.b16 %v155
  %v875 = vunpack.c.l.b16 %v156
  %v876 = vunpack.c.l.b16 %v157
  %v877 = vunpack.c.h.b16 %v157
  %v878 = vunpack.c.l.b16 %v158
  %v879 = vunpack.c.h.b16 %v158
  %v880 = vunpack.c.l.b16 %v159
  %v881 = vunpack.c.h.b16 %v159
  %v882 = vunpack.c.l.b16 %v160
  %v883 = vunpack.c.l.b16 %v161
  %v884 = vunpack.c.h.b16 %v161
  %v885 = vunpack.c.l.b16 %v162
  %v886 = vunpack.c.h.b16 %v162
  %v887 = vunpack.c.l.b16 %v163
  %v888 = vunpack.c.h.b16 %v163
  %v889 = vunpack.c.l.b16 %v164
  %v890 = vunpack.c.l.b16 %v165
  %v891 = vunpack.c.h.b16 %v165
  %v892 = vunpack.c.l.b16 %v166
  %v893 = vunpack.c.h.b16 %v166
  %v894 = vunpack.c.l.b16 %v167
  %v895 = vunpack.c.h.b16 %v167
  %v896 = vunpack.c.l.b16 %v168
  %v897 = vunpack.c.l.b16 %v169
  %v898 = vunpack.c.h.b16 %v169
  %v899 = vunpack.c.l.b16 %v170
  %v900 = vunpack.c.h.b16 %v170
  %v901 = vunpack.c.l.b16 %v171
  %v902 = vunpack.c.h.b16 %v171
  %v903 = vunpack.c.l.b16 %v172
  %v904 = vunpack.c.l.b16 %v173
  %v905 = vunpack.c.h.b16 %v173
  %v906 = vunpack.c.l.b16 %v174
  %v907 = vunpack.c.h.b16 %v174
  %v908 = vunpack.c.l.b16 %v175
  %v909 = vunpack.c.h.b16 %v175
  %v910 = vunpack.c.l.b16 %v176
  %v911 = vunpack.c.l.b16 %v177
  %v912 = vunpack.c.h.b16 %v177
  %v913 = vunpack.c.l.b16 %v178
  %v914 = vunpack.c.h.b16 %v178
  %v915 = vunpack.c.l.b16 %v179
  %v916 = vunpack.c.h.b16 %v179
  %v917 = vunpack.c.l.b16 %v180
  %v918 = vunpack.c.l.b16 %v181
  %v919 = vunpack.c.h.b16 %v181
  %v920 = vunpack.c.l.b16 %v182
  %v921 = vunpack.c.h.b16 %v182
  %v922 = vunpack.c.l.b16 %v183
  %v923 = vunpack.c.h.b16 %v183
  %v924 = vunpack.c.l.b16 %v184
  %v925 = vunpack.c.l.b16 %v185
  %v926 = vunpack.c.h.b16 %v185
  %v927 = vunpack.c.l.b16 %v186
  %v928 = vunpack.c.h.b16 %v186
  %v929 = vunpack.c.l.b16 %v187
  %v930 = vunpack.c.h.b16 %v187
  %v931 = vunpack.c.l.b16 %v188
  %v932 = vunpack.c.l.b16 %v189
  %v933 = vunpack.c.h.b16 %v189
  %v934 = vunpack.c.l.b16 %v190
  %v935 = vunpack.c.h.b16 %v190
  %v936 = vunpack.c.l.b16 %v191
  %v937 = vunpack.c.h.b16 %v191
  %v938 = vunpack.c.l.b16 %v192
  %v939 = vunpack.c.l.b16 %v193
  %v940 = vunpack.c.h.b16 %v193
  %v941 = vunpack.c.l.b16 %v194
  %v942 = vunpack.c.h.b16 %v194
  %v943 = vunpack.c.l.b16 %v195
  %v944 = vunpack.c.h.b16 %v195
  %v945 = vunpack.c.l.b16 %v196
  %v946 = vunpack.c.l.b16 %v197
  %v947 = vunpack.c.h.b16 %v197
  %v948 = vunpack.c.l.b16 %v198
  %v949 = vunpack.c.h.b16 %v198
  %v950 = vunpack.c.l.b16 %v199
  %v951 = vunpack.c.h.b16 %v199
  %v952 = vunpack.c.l.b16 %v200
  %v953 = vunpack.c.l.b16 %v201
  %v954 = vunpack.c.h.b16 %v201
  %v955 = vunpack.c.l.b16 %v202
  %v956 = vunpack.c.h.b16 %v202
  %v957 = vunpack.c.l.b16 %v203
  %v958 = vunpack.c.h.b16 %v203
  %v959 = vunpack.c.l.b16 %v204
  %v960 = vunpack.c.l.b16 %v205
  %v961 = vunpack.c.h.b16 %v205
  %v962 = vunpack.c.l.b16 %v206
  %v963 = vunpack.c.h.b16 %v206
  %v964 = vunpack.c.l.b16 %v207
  %v965 = vunpack.c.h.b16 %v207
  %v966 = vunpack.c.l.b16 %v208
  %v967 = vunpack.c.l.b16 %v209
  %v968 = vunpack.c.h.b16 %v209
  %v969 = vunpack.c.l.b16 %v210
  %v970 = vunpack.c.h.b16 %v210
  %v971 = vunpack.c.l.b16 %v211
  %v972 = vunpack.c.h.b16 %v211
  %v973 = vunpack.c.l.b16 %v212
  %v974 = vunpack.c.l.b16 %v213
  %v975 = vunpack.c.h.b16 %v213
  %v976 = vunpack.c.l.b16 %v214
  %v977 = vunpack.c.h.b16 %v214
  %v978 = vunpack.c.l.b16 %v215
  %v979 = vunpack.c.h.b16 %v215
  %v980 = vunpack.c.l.b16 %v216
  %v981 = vunpack.c.l.b16 %v217
  %v982 = vunpack.c.h.b16 %v217
  %v983 = vunpack.c.l.b16 %v218
  %v984 = vunpack.c.h.b16 %v218
  %v985 = vunpack.c.l.b16 %v219
  %v986 = vunpack.c.h.b16 %v219
  %v987 = vunpack.c.l.b16 %v220
  %v988 = vunpack.c.l.b16 %v221
  %v989 = vunpack.c.h.b16 %v221
  %v990 = vunpack.c.l.b16 %v222
  %v991 = vunpack.c.h.b16 %v222
  %v992 = vunpack.c.l.b16 %v223
  %v993 = vunpack.c.h.b16 %v223
  %v994 = vunpack.c.l.b16 %v224
  %v995 = vunpack.c.l.b16 %v225
  %v996 = vunpack.c.h.b16 %v225
  %v997 = vunpack.c.l.b16 %v226
  %v998 = vunpack.c.h.b16 %v226
  %v999 = vunpack.c.l.b16 %v227
  %v1000 = vunpack.c.h.b16 %v227
  %v1001 = vunpack.c.l.b16 %v228
  %v1002 = vunpack.c.l.b16 %v229
  %v1003 = vunpack.c.h.b16 %v229
  %v1004 = vunpack.c.l.b16 %v230
  %v1005 = vunpack.c.h.b16 %v230
  %v1006 = vunpack.c.l.b16 %v231
  %v1007 = vunpack.c.h.b16 %v231
  %v1008 = vunpack.c.l.b16 %v232
  %v1009 = vunpack.c.l.b16 %v233
  %v1010 = vunpack.c.h.b16 %v233
  %v1011 = vunpack.c.l.b16 %v234
  %v1012 = vunpack.c.h.b16 %v234
  %v1013 = vunpack.c.l.b16 %v235
  %v1014 = vunpack.c.h.b16 %v235
  %v1015 = vunpack.c.l.b16 %v236
  %v1016 = vunpack.c.l.b16 %v237
  %v1017 = vunpack.c.h.b16 %v237
  %v1018 = vunpack.c.l.b16 %v238
  %v1019 = vunpack.c.h.b16 %v238
  %v1020 = vunpack.c.l.b16 %v239
  %v1021 = vunpack.c.h.b16 %v239
  %v1022 = vunpack.c.l.b16 %v240
  %v1023 = vunpack.c.l.b16 %v241
  %v1024 = vunpack.c.h.b16 %v241
  %v1025 = vunpack.c.l.b16 %v242
  %v1026 = vunpack.c.h.b16 %v242
  %v1027 = vunpack.c.l.b16 %v243
  %v1028 = vunpack.c.h.b16 %v243
  %v1029 = vunpack.c.l.b16 %v244
  %v1030 = vunpack.c.l.b16 %v245
  %v1031 = vunpack.c.h.b16 %v245
  %v1032 = vunpack.c.l.b16 %v246
  %v1033 = vunpack.c.h.b16 %v246
  %v1034 = vunpack.c.l.b16 %v247
  %v1035 = vunpack.c.h.b16 %v247
  %v1036 = vunpack.c.l.b16 %v248
  %v1037 = vunpack.c.l.b16 %v249
  %v1038 = vunpack.c.h.b16 %v249
  %v1039 = vunpack.c.l.b16 %v250
  %v1040 = vunpack.c.h.b16 %v250
  %v1041 = vunpack.c.l.b16 %v251
  %v1042 = vunpack.c.h.b16 %v251
  %v1043 = vunpack.c.l.b16 %v252
  %v1044 = vunpack.c.l.b16 %v253
  %v1045 = vunpack.c.h.b16 %v253
  %v1046 = vunpack.c.l.b16 %v254
  %v1047 = vunpack.c.h.b16 %v254
  %v1048 = vunpack.c.l.b16 %v255
  %v1049 = vunpack.c.h.b16 %v255
  %v1050 = vunpack.c.l.b16 %v256
  %v1051 = vunpack.c.l.b16 %v257
  %v1052 = vunpack.c.h.b16 %v257
  %v1053 = vunpack.c.l.b16 %v258
  %v1054 = vunpack.c.h.b16 %v258
  %v1055 = vunpack.c.l.b16 %v259
  %v1056 = vunpack.c.h.b16 %v259
  %v1057 = vunpack.c.l.b16 %v260
  %v1058 = vunpack.c.l.b16 %v261
  %v1059 = vunpack.c.h.b16 %v261
  %v1060 = vunpack.c.l.b16 %v262
  %v1061 = vunpack.c.h.b16 %v262
  %v1062 = vunpack.c.l.b16 %v263
  %v1063 = vunpack.c.h.b16 %v263
  %v1064 = vunpack.c.l.b16 %v264
  %v1065 = vunpack.c.l.b16 %v265
  %v1066 = vunpack.c.h.b16 %v265
  %v1067 = vunpack.c.l.b16 %v266
  %v1068 = vunpack.c.h.b16 %v266
  %v1069 = vunpack.c.l.b16 %v267
  %v1070 = vunpack.c.h.b16 %v267
  %v1071 = vunpack.c.l.b16 %v268
  %v1072 = vunpack.c.l.b16 %v269
  %v1073 = vunpack.c.h.b16 %v269
  %v1074 = vunpack.c.l.b16 %v270
  %v1075 = vunpack.c.h.b16 %v270
  %v1076 = vunpack.c.l.b16 %v271
  %v1077 = vunpack.c.h.b16 %v271
  %v1078 = vunpack.c.l.b16 %v272
  %v1079 = vunpack.c.l.b16 %v273
  %v1080 = vunpack.c.h.b16 %v273
  %v1081 = vunpack.c.l.b16 %v274
  %v1082 = vunpack.c.h.b16 %v274
  %v1083 = vunpack.c.l.b16 %v275
  %v1084 = vunpack.c.h.b16 %v275
  %v1085 = vunpack.c.l.b16 %v276
  %v1086 = vpack.c.b16 %v645, %v638
  %v1087 = vpack.c.b16 %v646, %v639
  %v1088 = vpack.c.b16 %v647, %v640
  %v1089 = vpack.c.b16 %v648, %v641
  %v1090 = vpack.c.b16 %v649, %v642
  %v1091 = vpack.c.b16 %v650, %v643
  %v1092 = vpack.c.b16 %v651, %v644
  %v1093 = vpack.c.b16 %v659, %v652
  %v1094 = vpack.c.b16 %v660, %v653
  %v1095 = vpack.c.b16 %v661, %v654
  %v1096 = vpack.c.b16 %v662, %v655
  %v1097 = vpack.c.b16 %v663, %v656
  %v1098 = vpack.c.b16 %v664, %v657
  %v1099 = vpack.c.b16 %v665, %v658
  %v1100 = vpack.c.b16 %v673, %v666
  %v1101 = vpack.c.b16 %v674, %v667
  %v1102 = vpack.c.b16 %v675, %v668
  %v1103 = vpack.c.b16 %v676, %v669
  %v1104 = vpack.c.b16 %v677, %v670
  %v1105 = vpack.c.b16 %v678, %v671
  %v1106 = vpack.c.b16 %v679, %v672
  %v1107 = vpack.c.b16 %v687, %v680
  %v1108 = vpack.c.b16 %v688, %v681
  %v1109 = vpack.c.b16 %v689, %v682
  %v1110 = vpack.c.b16 %v690, %v683
  %v1111 = vpack.c.b16 %v691, %v684
  %v1112 = vpack.c.b16 %v692, %v685
  %v1113 = vpack.c.b16 %v693, %v686
  %v1114 = vpack.c.b16 %v701, %v694
  %v1115 = vpack.c.b16 %v702, %v695
  %v1116 = vpack.c.b16 %v703, %v696
  %v1117 = vpack.c.b16 %v704, %v697
  %v1118 = vpack.c.b16 %v705, %v698
  %v1119 = vpack.c.b16 %v706, %v699
  %v1120 = vpack.c.b16 %v707, %v700
  %v1121 = vpack.c.b16 %v715, %v708
  %v1122 = vpack.c.b16 %v716, %v709
  %v1123 = vpack.c.b16 %v717, %v710
  %v1124 = vpack.c.b16 %v718, %v711
  %v1125 = vpack.c.b16 %v719, %v712
  %v1126 = vpack.c.b16 %v720, %v713
  %v1127 = vpack.c.b16 %v721, %v714
  %v1128 = vpack.c.b16 %v729, %v722
  %v1129 = vpack.c.b16 %v730, %v723
  %v1130 = vpack.c.b16 %v731, %v724
  %v1131 = vpack.c.b16 %v732, %v725
  %v1132 = vpack.c.b16 %v733, %v726
  %v1133 = vpack.c.b16 %v734, %v727
  %v1134 = vpack.c.b16 %v735, %v728
  %v1135 = vpack.c.b16 %v743, %v736
  %v1136 = vpack.c.b16 %v744, %v737
  %v1137 = vpack.c.b16 %v745, %v738
  %v1138 = vpack.c.b16 %v746, %v739
  %v1139 = vpack.c.b16 %v747, %v740
  %v1140 = vpack.c.b16 %v748, %v741
  %v1141 = vpack.c.b16 %v749, %v742
  %v1142 = vpack.c.b16 %v757, %v750
  %v1143 = vpack.c.b16 %v758, %v751
  %v1144 = vpack.c.b16 %v759, %v752
  %v1145 = vpack.c.b16 %v760, %v753
  %v1146 = vpack.c.b16 %v761, %v754
  %v1147 = vpack.c.b16 %v762, %v755
  %v1148 = vpack.c.b16 %v763, %v756
  %v1149 = vpack.c.b16 %v771, %v764
  %v1150 = vpack.c.b16 %v772, %v765
  %v1151 = vpack.c.b16 %v773, %v766
  %v1152 = vpack.c.b16 %v774, %v767
  %v1153 = vpack.c.b16 %v775, %v768
  %v1154 = vpack.c.b16 %v776, %v769
  %v1155 = vpack.c.b16 %v777, %v770
  %v1156 = vpack.c.b16 %v785, %v778
  %v1157 = vpack.c.b16 %v786, %v779
  %v1158 = vpack.c.b16 %v787, %v780
  %v1159 = vpack.c.b16 %v788, %v781
  %v1160 = vpack.c.b16 %v789, %v782
  %v1161 = vpack.c.b16 %v790, %v783
  %v1162 = vpack.c.b16 %v791, %v784
  %v1163 = vpack.c.b16 %v799, %v792
  %v1164 = vpack.c.b16 %v800, %v793
  %v1165 = vpack.c.b16 %v801, %v794
  %v1166 = vpack.c.b16 %v802, %v795
  %v1167 = vpack.c.b16 %v803, %v796
  %v1168 = vpack.c.b16 %v804, %v797
  %v1169 = vpack.c.b16 %v805, %v798
  %v1170 = vpack.c.b16 %v813, %v806
  %v1171 = vpack.c.b16 %v814, %v807
  %v1172 = vpack.c.b16 %v815, %v808
  %v1173 = vpack.c.b16 %v816, %v809
  %v1174 = vpack.c.b16 %v817, %v810
  %v1175 = vpack.c.b16 %v818, %v811
  %v1176 = vpack.c.b16 %v819, %v812
  %v1177 = vpack.c.b16 %v827, %v820
  %v1178 = vpack.c.b16 %v828, %v821
  %v1179 = vpack.c.b16 %v829, %v822
  %v1180 = vpack.c.b16 %v830, %v823
  %v1181 = vpack.c.b16 %v831, %v824
  %v1182 = vpack.c.b16 %v832, %v825
  %v1183 = vpack.c.b16 %v833, %v826
  %v1184 = vpack.c.b16 %v841, %v834
  %v1185 = vpack.c.b16 %v842, %v835
  %v1186 = vpack.c.b16 %v843, %v836
  %v1187 = vpack.c.b16 %v844, %v837
  %v1188 = vpack.c.b16 %v845, %v838
  %v1189 = vpack.c.b16 %v846, %v839
  %v1190 = vpack.c.b16 %v847, %v840
  %v1191 = vpack.c.b16 %v855, %v848
  %v1192 = vpack.c.b16 %v856, %v849
  %v1193 = vpack.c.b16 %v857, %v850
  %v1194 = vpack.c.b16 %v858, %v851
  %v1195 = vpack.c.b16 %v859, %v852
  %v1196 = vpack.c.b16 %v860, %v853
  %v1197 = vpack.c.b16 %v861, %v854
  %v1198 = vpack.c.b16 %v869, %v862
  %v1199 = vpack.c.b16 %v870, %v863
  %v1200 = vpack.c.b16 %v871, %v864
  %v1201 = vpack.c.b16 %v872, %v865
  %v1202 = vpack.c.b16 %v873, %v866
  %v1203 = vpack.c.b16 %v874, %v867
  %v1204 = vpack.c.b16 %v875, %v868
  %v1205 = vpack.c.b16 %v883, %v876
  %v1206 = vpack.c.b16 %v884, %v877
  %v1207 = vpack.c.b16 %v885, %v878
  %v1208 = vpack.c.b16 %v886, %v879
  %v1209 = vpack.c.b16 %v887, %v880
  %v1210 = vpack.c.b16 %v888, %v881
  %v1211 = vpack.c.b16 %v889, %v882
  %v1212 = vpack.c.b16 %v897, %v890
  %v1213 = vpack.c.b16 %v898, %v891
  %v1214 = vpack.c.b16 %v899, %v892
  %v1215 = vpack.c.b16 %v900, %v893
  %v1216 = vpack.c.b16 %v901, %v894
  %v1217 = vpack.c.b16 %v902, %v895
  %v1218 = vpack.c.b16 %v903, %v896
  %v1219 = vpack.c.b16 %v911, %v904
  %v1220 = vpack.c.b16 %v912, %v905
  %v1221 = vpack.c.b16 %v913, %v906
  %v1222 = vpack.c.b16 %v914, %v907
  %v1223 = vpack.c.b16 %v915, %v908
  %v1224 = vpack.c.b16 %v916, %v909
  %v1225 = vpack.c.b16 %v917, %v910
  %v1226 = vpack.c.b16 %v925, %v918
  %v1227 = vpack.c.b16 %v926, %v919
  %v1228 = vpack.c.b16 %v927, %v920
  %v1229 = vpack.c.b16 %v928, %v921
  %v1230 = vpack.c.b16 %v929, %v922
  %v1231 = vpack.c.b16 %v930, %v923
  %v1232 = vpack.c.b16 %v931, %v924
  %v1233 = vpack.c.b16 %v939, %v932
  %v1234 = vpack.c.b16 %v940, %v933
  %v1235 = vpack.c.b16 %v941, %v934
  %v1236 = vpack.c.b16 %v942, %v935
  %v1237 = vpack.c.b16 %v943, %v936
  %v1238 = vpack.c.b16 %v944, %v937
  %v1239 = vpack.c.b16 %v945, %v938
  %v1240 = vpack.c.b16 %v953, %v946
  %v1241 = vpack.c.b16 %v954, %v947
  %v1242 = vpack.c.b16 %v955, %v948
  %v1243 = vpack.c.b16 %v956, %v949
  %v1244 = vpack.c.b16 %v957, %v950
  %v1245 = vpack.c.b16 %v958, %v951
  %v1246 = vpack.c.b16 %v959, %v952
  %v1247 = vpack.c.b16 %v967, %v960
  %v1248 = vpack.c.b16 %v968, %v961
  %v1249 = vpack.c.b16 %v969, %v962
  %v1250 = vpack.c.b16 %v970, %v963
  %v1251 = vpack.c.b16 %v971, %v964
  %v1252 = vpack.c.b16 %v972, %v965
  %v1253 = vpack.c.b16 %v973, %v966
  %v1254 = vpack.c.b16 %v981, %v974
  %v1255 = vpack.c.b16 %v982, %v975
  %v1256 = vpack.c.b16 %v983, %v976
  %v1257 = vpack.c.b16 %v984, %v977
  %v1258 = vpack.c.b16 %v985, %v978
  %v1259 = vpack.c.b16 %v986, %v979
  %v1260 = vpack.c.b16 %v987, %v980
  %v1261 = vpack.c.b16 %v995, %v988
  %v1262 = vpack.c.b16 %v996, %v989
  %v1263 = vpack.c.b16 %v997, %v990
  %v1264 = vpack.c.b16 %v998, %v991
  %v1265 = vpack.c.b16 %v999, %v992
  %v1266 = vpack.c.b16 %v1000, %v993
  %v1267 = vpack.c.b16 %v1001, %v994
  %v1268 = vpack.c.b16 %v1009, %v1002
  %v1269 = vpack.c.b16 %v1010, %v1003
  %v1270 = vpack.c.b16 %v1011, %v1004
  %v1271 = vpack.c.b16 %v1012, %v1005
  %v1272 = vpack.c.b16 %v1013, %v1006
  %v1273 = vpack.c.b16 %v1014, %v1007
  %v1274 = vpack.c.b16 %v1015, %v1008
  %v1275 = vpack.c.b16 %v1023, %v1016
  %v1276 = vpack.c.b16 %v1024, %v1017
  %v1277 = vpack.c.b16 %v1025, %v1018
  %v1278 = vpack.c.b16 %v1026, %v1019
  %v1279 = vpack.c.b16 %v1027, %v1020
  %v1280 = vpack.c.b16 %v1028, %v1021
  %v1281 = vpack.c.b16 %v1029, %v1022
  %v1282 = vpack.c.b16 %v1037, %v1030
  %v1283 = vpack.c.b16 %v1038, %v1031
  %v1284 = vpack.c.b16 %v1039, %v1032
  %v1285 = vpack.c.b16 %v1040, %v1033
  %v1286 = vpack.c.b16 %v1041, %v1034
  %v1287 = vpack.c.b16 %v1042, %v1035
  %v1288 = vpack.c.b16 %v1043, %v1036
  %v1289 = vpack.c.b16 %v1051, %v1044
  %v1290 = vpack.c.b16 %v1052, %v1045
  %v1291 = vpack.c.b16 %v1053, %v1046
  %v1292 = vpack.c.b16 %v1054, %v1047
  %v1293 = vpack.c.b16 %v1055, %v1048
  %v1294 = vpack.c.b16 %v1056, %v1049
  %v1295 = vpack.c.b16 %v1057, %v1050
  %v1296 = vpack.c.b16 %v1065, %v1058
  %v1297 = vpack.c.b16 %v1066, %v1059
  %v1298 = vpack.c.b16 %v1067, %v1060
  %v1299 = vpack.c.b16 %v1068, %v1061
  %v1300 = vpack.c.b16 %v1069, %v1062
  %v1301 = vpack.c.b16 %v1070, %v1063
  %v1302 = vpack.c.b16 %v1071, %v1064
  %v1303 = vpack.c.b16 %v1079, %v1072
  %v1304 = vpack.c.b16 %v1080, %v1073
  %v1305 = vpack.c.b16 %v1081, %v1074
  %v1306 = vpack.c.b16 %v1082, %v1075
  %v1307 = vpack.c.b16 %v1083, %v1076
  %v1308 = vpack.c.b16 %v1084, %v1077
  %v1309 = vpack.c.b16 %v1085, %v1078
  %v1600 = vunpack.c.l.b16 %v277
  %v1601 = vunpack.c.l.b16 %v278
  %v1602 = vunpack.c.l.b16 %v279
  %v1603 = vunpack.c.l.b16 %v280
  %v1604 = vunpack.c.l.b16 %v281
  %v1605 = vunpack.c.l.b16 %v282
  %v1606 = vunpack.c.l.b16 %v283
  %v1607 = vunpack.c.l.b16 %v284
  %v1608 = vunpack.c.l.b16 %v285
  %v1609 = vunpack.c.l.b16 %v286
  %v1610 = vunpack.c.l.b16 %v287
  %v1611 = vunpack.c.l.b16 %v288
  %v1612 = vunpack.c.l.b16 %v289
  %v1613 = vunpack.c.l.b16 %v290
  %v1614 = vunpack.c.l.b16 %v291
  %v1615 = vunpack.c.l.b16 %v292
  %v1616 = vunpack.c.l.b16 %v293
  %v1617 = vunpack.c.l.b16 %v294
  %v1618 = vunpack.c.l.b16 %v295
  %v1619 = vunpack.c.l.b16 %v296
  %v1620 = vunpack.c.l.b16 %v297
  %v1621 = vunpack.c.l.b16 %v298
  %v1622 = vunpack.c.l.b16 %v299
  %v1623 = vunpack.c.l.b16 %v300
  %v1624 = vunpack.c.l.b16 %v301
  %v1625 = vunpack.c.l.b16 %v302
  %v1626 = vunpack.c.l.b16 %v303
  %v1627 = vunpack.c.l.b16 %v304
  %v1628 = vunpack.c.l.b16 %v305
  %v1629 = vunpack.c.l.b16 %v306
  %v1630 = vunpack.c.l.b16 %v307
  %v1631 = vunpack.c.l.b16 %v308
  %v1632 = vunpack.c.l.b16 %v309
  %v1633 = vunpack.c.l.b16 %v310
  %v1634 = vunpack.c.l.b16 %v311
  %v1635 = vunpack.c.l.b16 %v312
  %v1636 = vunpack.c.l.b16 %v313
  %v1637 = vunpack.c.l.b16 %v314
  %v1638 = vunpack.c.l.b16 %v315
  %v1639 = vunpack.c.l.b16 %v316
  %v1640 = vunpack.c.l.b16 %v317
  %v1641 = vunpack.c.l.b16 %v318
  %v1642 = vunpack.c.l.b16 %v319
  %v1643 = vunpack.c.l.b16 %v320
  %v1644 = vunpack.c.l.b16 %v321
  %v1645 = vunpack.c.l.b16 %v322
  %v1646 = vunpack.c.l.b16 %v323
  %v1647 = vunpack.c.l.b16 %v324
  %v1648 = vunpack.c.l.b16 %v325
  %v1649 = vunpack.c.l.b16 %v326
  %v1650 = vunpack.c.l.b16 %v327
  %v1651 = vunpack.c.l.b16 %v328
  %v1652 = vunpack.c.l.b16 %v329
  %v1653 = vunpack.c.l.b16 %v330
  %v1654 = vunpack.c.l.b16 %v331
  %v1655 = vunpack.c.l.b16 %v332
  %v1656 = vunpack.c.l.b16 %v333
  %v1657 = vunpack.c.l.b16 %v334
  %v1658 = vunpack.c.l.b16 %v335
  %v1659 = vunpack.c.l.b16 %v336
  %v1660 = vunpack.c.l.b16 %v337
  %v1661 = vunpack.c.l.b16 %v338
  %v1662 = vunpack.c.l.b16 %v339
  %v1663 = vunpack.c.l.b16 %v340
  %v1664 = vunpack.c.l.b16 %v341
  %v1665 = vunpack.c.l.b16 %v342
  %v1666 = vunpack.c.l.b16 %v343
  %v1667 = vunpack.c.l.b16 %v344
  %v1668 = vunpack.c.l.b16 %v345
  %v1669 = vunpack.c.l.b16 %v346
  %v1670 = vunpack.c.l.b16 %v347
  %v1671 = vunpack.c.l.b16 %v348
  %v1672 = vunpack.c.l.b16 %v349
  %v1673 = vunpack.c.l.b16 %v350
  %v1674 = vunpack.c.l.b16 %v351
  %v1675 = vunpack.c.l.b16 %v352
  %v1676 = vunpack.c.l.b16 %v353
  %v1677 = vunpack.c.l.b16 %v354
  %v1678 = vunpack.c.l.b16 %v355
  %v1679 = vunpack.c.l.b16 %v356
  %v1680 = vunpack.c.l.b16 %v357
  %v1681 = vunpack.c.l.b16 %v358
  %v1682 = vunpack.c.l.b16 %v359
  %v1683 = vunpack.c.l.b16 %v360
  %v1684 = vunpack.c.l.b16 %v361
  %v1685 = vunpack.c.l.b16 %v362
  %v1686 = vunpack.c.l.b16 %v363
  %v1687 = vunpack.c.l.b16 %v364
  %v1688 = vunpack.c.l.b16 %v365
  %v1689 = vunpack.c.l.b16 %v366
  %v1690 = vunpack.c.l.b16 %v367
  %v1691 = vunpack.c.l.b16 %v368
  %v1692 = vunpack.c.l.b16 %v369
  %v1693 = vunpack.c.l.b16 %v370
  %v1694 = vunpack.c.l.b16 %v371
  %v1695 = vunpack.c.l.b16 %v372
  %v1696 = vunpack.c.l.b16 %v373
  %v1697 = vunpack.c.l.b16 %v374
  %v1698 = vpack.c.b16 %v1601, %v1600
  %v1699 = vpack.c.b16 %v1603, %v1602
  %v1700 = vpack.c.b16 %v1605, %v1604
  %v1701 = vpack.c.b16 %v1607, %v1606
  %v1702 = vpack.c.b16 %v1609, %v1608
  %v1703 = vpack.c.b16 %v1611, %v1610
  %v1704 = vpack.c.b16 %v1613, %v1612
  %v1705 = vpack.c.b16 %v1615, %v1614
  %v1706 = vpack.c.b16 %v1617, %v1616
  %v1707 = vpack.c.b16 %v1619, %v1618
  %v1708 = vpack.c.b16 %v1621, %v1620
  %v1709 = vpack.c.b16 %v1623, %v1622
  %v1710 = vpack.c.b16 %v1625, %v1624
  %v1711 = vpack.c.b16 %v1627, %v1626
  %v1712 = vpack.c.b16 %v1629, %v1628
  %v1713 = vpack.c.b16 %v1631, %v1630
  %v1714 = vpack.c.b16 %v1633, %v1632
  %v1715 = vpack.c.b16 %v1635, %v1634
  %v1716 = vpack.c.b16 %v1637, %v1636
  %v1717 = vpack.c.b16 %v1639, %v1638
  %v1718 = vpack.c.b16 %v1641, %v1640
  %v1719 = vpack.c.b16 %v1643, %v1642
  %v1720 = vpack.c.b16 %v1645, %v1644
  %v1721 = vpack.c.b16 %v1647, %v1646
  %v1722 = vpack.c.b16 %v1649, %v1648
  %v1723 = vpack.c.b16 %v1651, %v1650
  %v1724 = vpack.c.b16 %v1653, %v1652
  %v1725 = vpack.c.b16 %v1655, %v1654
  %v1726 = vpack.c.b16 %v1657, %v1656
  %v1727 = vpack.c.b16 %v1659, %v1658
  %v1728 = vpack.c.b16 %v1661, %v1660
  %v1729 = vpack.c.b16 %v1663, %v1662
  %v1730 = vpack.c.b16 %v1665, %v1664
  %v1731 = vpack.c.b16 %v1667, %v1666
  %v1732 = vpack.c.b16 %v1669, %v1668
  %v1733 = vpack.c.b16 %v1671, %v1670
  %v1734 = vpack.c.b16 %v1673, %v1672
  %v1735 = vpack.c.b16 %v1675, %v1674
  %v1736 = vpack.c.b16 %v1677, %v1676
  %v1737 = vpack.c.b16 %v1679, %v1678
  %v1738 = vpack.c.b16 %v1681, %v1680
  %v1739 = vpack.c.b16 %v1683, %v1682
  %v1740 = vpack.c.b16 %v1685, %v1684
  %v1741 = vpack.c.b16 %v1687, %v1686
  %v1742 = vpack.c.b16 %v1689, %v1688
  %v1743 = vpack.c.b16 %v1691, %v1690
  %v1744 = vpack.c.b16 %v1693, %v1692
  %v1745 = vpack.c.b16 %v1695, %v1694
  %v1746 = vpack.c.b16 %v1697, %v1696
  %vm1796 = vcmask 130048
  %v1798 = vsel %vm1796, %v1092, 0
  %v1801 = vsel %vm1796, %v1099, 0
  %v1804 = vsel %vm1796, %v1106, 0
  %v1807 = vsel %vm1796, %v1113, 0
  %v1810 = vsel %vm1796, %v1120, 0
  %v1813 = vsel %vm1796, %v1127, 0
  %v1816 = vsel %vm1796, %v1134, 0
  %v1819 = vsel %vm1796, %v1141, 0
  %v1822 = vsel %vm1796, %v1148, 0
  %v1825 = vsel %vm1796, %v1155, 0
  %v1828 = vsel %vm1796, %v1162, 0
  %v1831 = vsel %vm1796, %v1169, 0
  %v1834 = vsel %vm1796, %v1176, 0
  %v1837 = vsel %vm1796, %v1183, 0
  %v1840 = vsel %vm1796, %v1190, 0
  %v1843 = vsel %vm1796, %v1197, 0
  %v1846 = vsel %vm1796, %v1204, 0
  %v1849 = vsel %vm1796, %v1211, 0
  %v1852 = vsel %vm1796, %v1218, 0
  %v1855 = vsel %vm1796, %v1225, 0
  %v1858 = vsel %vm1796, %v1232, 0
  %v1861 = vsel %vm1796, %v1239, 0
  %v1864 = vsel %vm1796, %v1246, 0
  %v1867 = vsel %vm1796, %v1253, 0
  %v1870 = vsel %vm1796, %v1260, 0
  %v1873 = vsel %vm1796, %v1267, 0
  %v1876 = vsel %vm1796, %v1274, 0
  %v1879 = vsel %vm1796, %v1281, 0
  %v1882 = vsel %vm1796, %v1288, 0
  %v1885 = vsel %vm1796, %v1295, 0
  %v1888 = vsel %vm1796, %v1302, 0
  %v1891 = vsel %vm1796, %v1309, 0
  %1893 = vmatprep.subr.bf16.mxu0 0
  %1894 = vmatpush1.bf16.msra.mxu0 %v1698
  %1895 = vmatprep.subr.bf16.mxu0 0
  %1896 = vmatpush1.bf16.msra.mxu0 %v1699
  %1897 = vmatprep.subr.bf16.mxu0 0
  %1898 = vmatpush1.bf16.msra.mxu0 %v1700
  %1899 = vmatprep.subr.bf16.mxu0 0
  %1900 = vmatpush1.bf16.msra.mxu0 %v1701
  %1901 = vmatprep.subr.bf16.mxu0 0
  %1902 = vmatpush1.bf16.msra.mxu0 %v1702
  %1903 = vmatprep.subr.bf16.mxu0 0
  %1904 = vmatpush1.bf16.msra.mxu0 %v1703
  %1905 = vmatprep.subr.bf16.mxu0 0
  %1906 = vmatpush1.bf16.msra.mxu0 %v1704
  %1907 = vmatprep.subr.bf16.mxu0 0
  %1908 = vmatpush1.bf16.msra.mxu0 %v1705
  %1909 = vmatprep.subr.bf16.mxu0 0
  %1910 = vmatpush1.bf16.msra.mxu0 %v1706
  %1911 = vmatprep.subr.bf16.mxu0 0
  %1912 = vmatpush1.bf16.msra.mxu0 %v1707
  %1913 = vmatprep.subr.bf16.mxu0 0
  %1914 = vmatpush1.bf16.msra.mxu0 %v1708
  %1915 = vmatprep.subr.bf16.mxu0 0
  %1916 = vmatpush1.bf16.msra.mxu0 %v1709
  %1917 = vmatprep.subr.bf16.mxu0 0
  %1918 = vmatpush1.bf16.msra.mxu0 %v1710
  %1919 = vmatprep.subr.bf16.mxu0 0
  %1920 = vmatpush1.bf16.msra.mxu0 %v1711
  %1921 = vmatprep.subr.bf16.mxu0 0
  %1922 = vmatpush1.bf16.msra.mxu0 %v1712
  %1923 = vmatprep.subr.bf16.mxu0 0
  %1924 = vmatpush1.bf16.msra.mxu0 %v1713
  %1925 = vmatprep.mubr.bf16.mxu0 %v1087
  %1926 = vmatmul.mubr.bf16.gmra.mrb[0].mxu0 %v1086
  %v1927 = vpop.f32.mrb[0].mxu0
  %v1928 = vadd.f32 %v380, %v1927
  %v1929 = vpop.f32.mrb[0].mxu0
  %v1930 = vpop.f32.mrb[0].mxu0
  %v1931 = vadd.f32 %v380, %v1930
  %v1932 = vpop.f32.mrb[0].mxu0
  %1933 = vmatprep.mubr.bf16.mxu0 %v1094
  %1934 = vmatmul.mubr.bf16.gmra.mrb[0].mxu0 %v1093
  %v1935 = vpop.f32.mrb[0].mxu0
  %v1936 = vadd.f32 %v380, %v1935
  %v1937 = vpop.f32.mrb[0].mxu0
  %v1938 = vpop.f32.mrb[0].mxu0
  %v1939 = vadd.f32 %v380, %v1938
  %v1940 = vpop.f32.mrb[0].mxu0
  %1941 = vmatprep.mubr.bf16.mxu0 %v1101
  %1942 = vmatmul.mubr.bf16.gmra.mrb[0].mxu0 %v1100
  %v1943 = vpop.f32.mrb[0].mxu0
  %v1944 = vadd.f32 %v380, %v1943
  %v1945 = vpop.f32.mrb[0].mxu0
  %v1946 = vpop.f32.mrb[0].mxu0
  %v1947 = vadd.f32 %v380, %v1946
  %v1948 = vpop.f32.mrb[0].mxu0
  %1949 = vmatprep.mubr.bf16.mxu0 %v1108
  %1950 = vmatmul.mubr.bf16.gmra.mrb[0].mxu0 %v1107
  %v1951 = vpop.f32.mrb[0].mxu0
  %v1952 = vadd.f32 %v380, %v1951
  %v1953 = vpop.f32.mrb[0].mxu0
  %v1954 = vpop.f32.mrb[0].mxu0
  %v1955 = vadd.f32 %v380, %v1954
  %v1956 = vpop.f32.mrb[0].mxu0
  %1957 = vmatprep.mubr.bf16.mxu0 %v1115
  %1958 = vmatmul.mubr.bf16.gmra.mrb[0].mxu0 %v1114
  %v1959 = vpop.f32.mrb[0].mxu0
  %v1960 = vadd.f32 %v380, %v1959
  %v1961 = vpop.f32.mrb[0].mxu0
  %v1962 = vpop.f32.mrb[0].mxu0
  %v1963 = vadd.f32 %v380, %v1962
  %v1964 = vpop.f32.mrb[0].mxu0
  %1965 = vmatprep.mubr.bf16.mxu0 %v1122
  %1966 = vmatmul.mubr.bf16.gmra.mrb[0].mxu0 %v1121
  %v1967 = vpop.f32.mrb[0].mxu0
  %v1968 = vadd.f32 %v380, %v1967
  %v1969 = vpop.f32.mrb[0].mxu0
  %v1970 = vpop.f32.mrb[0].mxu0
  %v1971 = vadd.f32 %v380, %v1970
  %v1972 = vpop.f32.mrb[0].mxu0
  %1973 = vmatprep.mubr.bf16.mxu0 %v1129
  %1974 = vmatmul.mubr.bf16.gmra.mrb[0].mxu0 %v1128
  %v1975 = vpop.f32.mrb[0].mxu0
  %v1976 = vadd.f32 %v380, %v1975
  %v1977 = vpop.f32.mrb[0].mxu0
  %v1978 = vpop.f32.mrb[0].mxu0
  %v1979 = vadd.f32 %v380, %v1978
  %v1980 = vpop.f32.mrb[0].mxu0
  %1981 = vmatprep.mubr.bf16.mxu0 %v1136
  %1982 = vmatmul.mubr.bf16.gmra.mrb[0].mxu0 %v1135
  %v1983 = vpop.f32.mrb[0].mxu0
  %v1984 = vadd.f32 %v380, %v1983
  %v1985 = vpop.f32.mrb[0].mxu0
  %v1986 = vpop.f32.mrb[0].mxu0
  %v1987 = vadd.f32 %v380, %v1986
  %v1988 = vpop.f32.mrb[0].mxu0
  %1989 = vmatprep.mubr.bf16.mxu0 %v1143
  %1990 = vmatmul.mubr.bf16.gmra.mrb[0].mxu0 %v1142
  %v1991 = vpop.f32.mrb[0].mxu0
  %v1992 = vadd.f32 %v380, %v1991
  %v1993 = vpop.f32.mrb[0].mxu0
  %v1994 = vpop.f32.mrb[0].mxu0
  %v1995 = vadd.f32 %v380, %v1994
  %v1996 = vpop.f32.mrb[0].mxu0
  %1997 = vmatprep.mubr.bf16.mxu0 %v1150
  %1998 = vmatmul.mubr.bf16.gmra.mrb[0].mxu0 %v1149
  %v1999 = vpop.f32.mrb[0].mxu0
  %v2000 = vadd.f32 %v380, %v1999
  %v2001 = vpop.f32.mrb[0].mxu0
  %v2002 = vpop.f32.mrb[0].mxu0
  %v2003 = vadd.f32 %v380, %v2002
  %v2004 = vpop.f32.mrb[0].mxu0
  %2005 = vmatprep.mubr.bf16.mxu0 %v1157
  %2006 = vmatmul.mubr.bf16.gmra.mrb[0].mxu0 %v1156
  %v2007 = vpop.f32.mrb[0].mxu0
  %v2008 = vadd.f32 %v380, %v2007
  %v2009 = vpop.f32.mrb[0].mxu0
  %v2010 = vpop.f32.mrb[0].mxu0
  %v2011 = vadd.f32 %v380, %v2010
  %v2012 = vpop.f32.mrb[0].mxu0
  %2013 = vmatprep.mubr.bf16.mxu0 %v1164
  %2014 = vmatmul.mubr.bf16.gmra.mrb[0].mxu0 %v1163
  %v2015 = vpop.f32.mrb[0].mxu0
  %v2016 = vadd.f32 %v380, %v2015
  %v2017 = vpop.f32.mrb[0].mxu0
  %v2018 = vpop.f32.mrb[0].mxu0
  %v2019 = vadd.f32 %v380, %v2018
  %v2020 = vpop.f32.mrb[0].mxu0
  %2021 = vmatprep.mubr.bf16.mxu0 %v1171
  %2022 = vmatmul.mubr.bf16.gmra.mrb[0].mxu0 %v1170
  %v2023 = vpop.f32.mrb[0].mxu0
  %v2024 = vadd.f32 %v380, %v2023
  %v2025 = vpop.f32.mrb[0].mxu0
  %v2026 = vpop.f32.mrb[0].mxu0
  %v2027 = vadd.f32 %v380, %v2026
  %v2028 = vpop.f32.mrb[0].mxu0
  %2029 = vmatprep.mubr.bf16.mxu0 %v1178
  %2030 = vmatmul.mubr.bf16.gmra.mrb[0].mxu0 %v1177
  %v2031 = vpop.f32.mrb[0].mxu0
  %v2032 = vadd.f32 %v380, %v2031
  %v2033 = vpop.f32.mrb[0].mxu0
  %v2034 = vpop.f32.mrb[0].mxu0
  %v2035 = vadd.f32 %v380, %v2034
  %v2036 = vpop.f32.mrb[0].mxu0
  %2037 = vmatprep.mubr.bf16.mxu0 %v1185
  %2038 = vmatmul.mubr.bf16.gmra.mrb[0].mxu0 %v1184
  %v2039 = vpop.f32.mrb[0].mxu0
  %v2040 = vadd.f32 %v380, %v2039
  %v2041 = vpop.f32.mrb[0].mxu0
  %v2042 = vpop.f32.mrb[0].mxu0
  %v2043 = vadd.f32 %v380, %v2042
  %v2044 = vpop.f32.mrb[0].mxu0
  %2045 = vmatprep.mubr.bf16.mxu0 %v1192
  %2046 = vmatmul.mubr.bf16.gmra.mrb[0].mxu0 %v1191
  %v2047 = vpop.f32.mrb[0].mxu0
  %v2048 = vadd.f32 %v380, %v2047
  %v2049 = vpop.f32.mrb[0].mxu0
  %v2050 = vpop.f32.mrb[0].mxu0
  %v2051 = vadd.f32 %v380, %v2050
  %v2052 = vpop.f32.mrb[0].mxu0
  %2053 = vmatprep.mubr.bf16.mxu0 %v1199
  %2054 = vmatmul.mubr.bf16.gmra.mrb[0].mxu0 %v1198
  %v2055 = vpop.f32.mrb[0].mxu0
  %v2056 = vadd.f32 %v380, %v2055
  %v2057 = vpop.f32.mrb[0].mxu0
  %v2058 = vpop.f32.mrb[0].mxu0
  %v2059 = vadd.f32 %v380, %v2058
  %v2060 = vpop.f32.mrb[0].mxu0
  %2061 = vmatprep.mubr.bf16.mxu0 %v1206
  %2062 = vmatmul.mubr.bf16.gmra.mrb[0].mxu0 %v1205
  %v2063 = vpop.f32.mrb[0].mxu0
  %v2064 = vadd.f32 %v380, %v2063
  %v2065 = vpop.f32.mrb[0].mxu0
  %v2066 = vpop.f32.mrb[0].mxu0
  %v2067 = vadd.f32 %v380, %v2066
  %v2068 = vpop.f32.mrb[0].mxu0
  %2069 = vmatprep.mubr.bf16.mxu0 %v1213
  %2070 = vmatmul.mubr.bf16.gmra.mrb[0].mxu0 %v1212
  %v2071 = vpop.f32.mrb[0].mxu0
  %v2072 = vadd.f32 %v380, %v2071
  %v2073 = vpop.f32.mrb[0].mxu0
  %v2074 = vpop.f32.mrb[0].mxu0
  %v2075 = vadd.f32 %v380, %v2074
  %v2076 = vpop.f32.mrb[0].mxu0
  %2077 = vmatprep.mubr.bf16.mxu0 %v1220
  %2078 = vmatmul.mubr.bf16.gmra.mrb[0].mxu0 %v1219
  %v2079 = vpop.f32.mrb[0].mxu0
  %v2080 = vadd.f32 %v380, %v2079
  %v2081 = vpop.f32.mrb[0].mxu0
  %v2082 = vpop.f32.mrb[0].mxu0
  %v2083 = vadd.f32 %v380, %v2082
  %v2084 = vpop.f32.mrb[0].mxu0
  %2085 = vmatprep.mubr.bf16.mxu0 %v1227
  %2086 = vmatmul.mubr.bf16.gmra.mrb[0].mxu0 %v1226
  %v2087 = vpop.f32.mrb[0].mxu0
  %v2088 = vadd.f32 %v380, %v2087
  %v2089 = vpop.f32.mrb[0].mxu0
  %v2090 = vpop.f32.mrb[0].mxu0
  %v2091 = vadd.f32 %v380, %v2090
  %v2092 = vpop.f32.mrb[0].mxu0
  %2093 = vmatprep.mubr.bf16.mxu0 %v1234
  %2094 = vmatmul.mubr.bf16.gmra.mrb[0].mxu0 %v1233
  %v2095 = vpop.f32.mrb[0].mxu0
  %v2096 = vadd.f32 %v380, %v2095
  %v2097 = vpop.f32.mrb[0].mxu0
  %v2098 = vpop.f32.mrb[0].mxu0
  %v2099 = vadd.f32 %v380, %v2098
  %v2100 = vpop.f32.mrb[0].mxu0
  %2101 = vmatprep.mubr.bf16.mxu0 %v1241
  %2102 = vmatmul.mubr.bf16.gmra.mrb[0].mxu0 %v1240
  %v2103 = vpop.f32.mrb[0].mxu0
  %v2104 = vadd.f32 %v380, %v2103
  %v2105 = vpop.f32.mrb[0].mxu0
  %v2106 = vpop.f32.mrb[0].mxu0
  %v2107 = vadd.f32 %v380, %v2106
  %v2108 = vpop.f32.mrb[0].mxu0
  %2109 = vmatprep.mubr.bf16.mxu0 %v1248
  %2110 = vmatmul.mubr.bf16.gmra.mrb[0].mxu0 %v1247
  %v2111 = vpop.f32.mrb[0].mxu0
  %v2112 = vadd.f32 %v380, %v2111
  %v2113 = vpop.f32.mrb[0].mxu0
  %v2114 = vpop.f32.mrb[0].mxu0
  %v2115 = vadd.f32 %v380, %v2114
  %v2116 = vpop.f32.mrb[0].mxu0
  %2117 = vmatprep.mubr.bf16.mxu0 %v1255
  %2118 = vmatmul.mubr.bf16.gmra.mrb[0].mxu0 %v1254
  %v2119 = vpop.f32.mrb[0].mxu0
  %v2120 = vadd.f32 %v380, %v2119
  %v2121 = vpop.f32.mrb[0].mxu0
  %v2122 = vpop.f32.mrb[0].mxu0
  %v2123 = vadd.f32 %v380, %v2122
  %v2124 = vpop.f32.mrb[0].mxu0
  %2125 = vmatprep.mubr.bf16.mxu0 %v1262
  %2126 = vmatmul.mubr.bf16.gmra.mrb[0].mxu0 %v1261
  %v2127 = vpop.f32.mrb[0].mxu0
  %v2128 = vadd.f32 %v380, %v2127
  %v2129 = vpop.f32.mrb[0].mxu0
  %v2130 = vpop.f32.mrb[0].mxu0
  %v2131 = vadd.f32 %v380, %v2130
  %v2132 = vpop.f32.mrb[0].mxu0
  %2133 = vmatprep.mubr.bf16.mxu0 %v1269
  %2134 = vmatmul.mubr.bf16.gmra.mrb[0].mxu0 %v1268
  %v2135 = vpop.f32.mrb[0].mxu0
  %v2136 = vadd.f32 %v380, %v2135
  %v2137 = vpop.f32.mrb[0].mxu0
  %v2138 = vpop.f32.mrb[0].mxu0
  %v2139 = vadd.f32 %v380, %v2138
  %v2140 = vpop.f32.mrb[0].mxu0
  %2141 = vmatprep.mubr.bf16.mxu0 %v1276
  %2142 = vmatmul.mubr.bf16.gmra.mrb[0].mxu0 %v1275
  %v2143 = vpop.f32.mrb[0].mxu0
  %v2144 = vadd.f32 %v380, %v2143
  %v2145 = vpop.f32.mrb[0].mxu0
  %v2146 = vpop.f32.mrb[0].mxu0
  %v2147 = vadd.f32 %v380, %v2146
  %v2148 = vpop.f32.mrb[0].mxu0
  %2149 = vmatprep.mubr.bf16.mxu0 %v1283
  %2150 = vmatmul.mubr.bf16.gmra.mrb[0].mxu0 %v1282
  %v2151 = vpop.f32.mrb[0].mxu0
  %v2152 = vadd.f32 %v380, %v2151
  %v2153 = vpop.f32.mrb[0].mxu0
  %v2154 = vpop.f32.mrb[0].mxu0
  %v2155 = vadd.f32 %v380, %v2154
  %v2156 = vpop.f32.mrb[0].mxu0
  %2157 = vmatprep.mubr.bf16.mxu0 %v1290
  %2158 = vmatmul.mubr.bf16.gmra.mrb[0].mxu0 %v1289
  %v2159 = vpop.f32.mrb[0].mxu0
  %v2160 = vadd.f32 %v380, %v2159
  %v2161 = vpop.f32.mrb[0].mxu0
  %v2162 = vpop.f32.mrb[0].mxu0
  %v2163 = vadd.f32 %v380, %v2162
  %v2164 = vpop.f32.mrb[0].mxu0
  %2165 = vmatprep.mubr.bf16.mxu0 %v1297
  %2166 = vmatmul.mubr.bf16.gmra.mrb[0].mxu0 %v1296
  %v2167 = vpop.f32.mrb[0].mxu0
  %v2168 = vadd.f32 %v380, %v2167
  %v2169 = vpop.f32.mrb[0].mxu0
  %v2170 = vpop.f32.mrb[0].mxu0
  %v2171 = vadd.f32 %v380, %v2170
  %v2172 = vpop.f32.mrb[0].mxu0
  %2173 = vmatprep.mubr.bf16.mxu0 %v1304
  %2174 = vmatmul.mubr.bf16.gmra.mrb[0].mxu0 %v1303
  %v2175 = vpop.f32.mrb[0].mxu0
  %v2176 = vadd.f32 %v380, %v2175
  %v2177 = vpop.f32.mrb[0].mxu0
  %v2178 = vpop.f32.mrb[0].mxu0
  %v2179 = vadd.f32 %v380, %v2178
  %v2180 = vpop.f32.mrb[0].mxu0
  %2181 = vdwg.mxu0
  %2182 = vmatprep.subr.bf16.mxu0 0
  %2183 = vmatpush1.bf16.msra.mxu0 %v1714
  %2184 = vmatprep.subr.bf16.mxu0 0
  %2185 = vmatpush1.bf16.msra.mxu0 %v1715
  %2186 = vmatprep.subr.bf16.mxu0 0
  %2187 = vmatpush1.bf16.msra.mxu0 %v1716
  %2188 = vmatprep.subr.bf16.mxu0 0
  %2189 = vmatpush1.bf16.msra.mxu0 %v1717
  %2190 = vmatprep.subr.bf16.mxu0 0
  %2191 = vmatpush1.bf16.msra.mxu0 %v1718
  %2192 = vmatprep.subr.bf16.mxu0 0
  %2193 = vmatpush1.bf16.msra.mxu0 %v1719
  %2194 = vmatprep.subr.bf16.mxu0 0
  %2195 = vmatpush1.bf16.msra.mxu0 %v1720
  %2196 = vmatprep.subr.bf16.mxu0 0
  %2197 = vmatpush1.bf16.msra.mxu0 %v1721
  %2198 = vmatprep.subr.bf16.mxu0 0
  %2199 = vmatpush1.bf16.msra.mxu0 %v1722
  %2200 = vmatprep.subr.bf16.mxu0 0
  %2201 = vmatpush1.bf16.msra.mxu0 %v1723
  %2202 = vmatprep.subr.bf16.mxu0 0
  %2203 = vmatpush1.bf16.msra.mxu0 %v1724
  %2204 = vmatprep.subr.bf16.mxu0 0
  %2205 = vmatpush1.bf16.msra.mxu0 %v1725
  %2206 = vmatprep.subr.bf16.mxu0 0
  %2207 = vmatpush1.bf16.msra.mxu0 %v1726
  %2208 = vmatprep.subr.bf16.mxu0 0
  %2209 = vmatpush1.bf16.msra.mxu0 %v1727
  %2210 = vmatprep.subr.bf16.mxu0 0
  %2211 = vmatpush1.bf16.msra.mxu0 %v1728
  %2212 = vmatprep.subr.bf16.mxu0 0
  %2213 = vmatpush1.bf16.msra.mxu0 %v1729
  %2214 = vmatprep.mubr.bf16.mxu0 %v1089
  %2215 = vmatmul.mubr.bf16.gmra.mrb[0].mxu0 %v1088
  %v2216 = vpop.f32.mrb[0].mxu0
  %v2217 = vadd.f32 %v1928, %v2216
  %v2218 = vpop.f32.mrb[0].mxu0
  %v2219 = vpop.f32.mrb[0].mxu0
  %v2220 = vadd.f32 %v1931, %v2219
  %v2221 = vpop.f32.mrb[0].mxu0
  %2222 = vmatprep.mubr.bf16.mxu0 %v1096
  %2223 = vmatmul.mubr.bf16.gmra.mrb[0].mxu0 %v1095
  %v2224 = vpop.f32.mrb[0].mxu0
  %v2225 = vadd.f32 %v1936, %v2224
  %v2226 = vpop.f32.mrb[0].mxu0
  %v2227 = vpop.f32.mrb[0].mxu0
  %v2228 = vadd.f32 %v1939, %v2227
  %v2229 = vpop.f32.mrb[0].mxu0
  %2230 = vmatprep.mubr.bf16.mxu0 %v1103
  %2231 = vmatmul.mubr.bf16.gmra.mrb[0].mxu0 %v1102
  %v2232 = vpop.f32.mrb[0].mxu0
  %v2233 = vadd.f32 %v1944, %v2232
  %v2234 = vpop.f32.mrb[0].mxu0
  %v2235 = vpop.f32.mrb[0].mxu0
  %v2236 = vadd.f32 %v1947, %v2235
  %v2237 = vpop.f32.mrb[0].mxu0
  %2238 = vmatprep.mubr.bf16.mxu0 %v1110
  %2239 = vmatmul.mubr.bf16.gmra.mrb[0].mxu0 %v1109
  %v2240 = vpop.f32.mrb[0].mxu0
  %v2241 = vadd.f32 %v1952, %v2240
  %v2242 = vpop.f32.mrb[0].mxu0
  %v2243 = vpop.f32.mrb[0].mxu0
  %v2244 = vadd.f32 %v1955, %v2243
  %v2245 = vpop.f32.mrb[0].mxu0
  %2246 = vmatprep.mubr.bf16.mxu0 %v1117
  %2247 = vmatmul.mubr.bf16.gmra.mrb[0].mxu0 %v1116
  %v2248 = vpop.f32.mrb[0].mxu0
  %v2249 = vadd.f32 %v1960, %v2248
  %v2250 = vpop.f32.mrb[0].mxu0
  %v2251 = vpop.f32.mrb[0].mxu0
  %v2252 = vadd.f32 %v1963, %v2251
  %v2253 = vpop.f32.mrb[0].mxu0
  %2254 = vmatprep.mubr.bf16.mxu0 %v1124
  %2255 = vmatmul.mubr.bf16.gmra.mrb[0].mxu0 %v1123
  %v2256 = vpop.f32.mrb[0].mxu0
  %v2257 = vadd.f32 %v1968, %v2256
  %v2258 = vpop.f32.mrb[0].mxu0
  %v2259 = vpop.f32.mrb[0].mxu0
  %v2260 = vadd.f32 %v1971, %v2259
  %v2261 = vpop.f32.mrb[0].mxu0
  %2262 = vmatprep.mubr.bf16.mxu0 %v1131
  %2263 = vmatmul.mubr.bf16.gmra.mrb[0].mxu0 %v1130
  %v2264 = vpop.f32.mrb[0].mxu0
  %v2265 = vadd.f32 %v1976, %v2264
  %v2266 = vpop.f32.mrb[0].mxu0
  %v2267 = vpop.f32.mrb[0].mxu0
  %v2268 = vadd.f32 %v1979, %v2267
  %v2269 = vpop.f32.mrb[0].mxu0
  %2270 = vmatprep.mubr.bf16.mxu0 %v1138
  %2271 = vmatmul.mubr.bf16.gmra.mrb[0].mxu0 %v1137
  %v2272 = vpop.f32.mrb[0].mxu0
  %v2273 = vadd.f32 %v1984, %v2272
  %v2274 = vpop.f32.mrb[0].mxu0
  %v2275 = vpop.f32.mrb[0].mxu0
  %v2276 = vadd.f32 %v1987, %v2275
  %v2277 = vpop.f32.mrb[0].mxu0
  %2278 = vmatprep.mubr.bf16.mxu0 %v1145
  %2279 = vmatmul.mubr.bf16.gmra.mrb[0].mxu0 %v1144
  %v2280 = vpop.f32.mrb[0].mxu0
  %v2281 = vadd.f32 %v1992, %v2280
  %v2282 = vpop.f32.mrb[0].mxu0
  %v2283 = vpop.f32.mrb[0].mxu0
  %v2284 = vadd.f32 %v1995, %v2283
  %v2285 = vpop.f32.mrb[0].mxu0
  %2286 = vmatprep.mubr.bf16.mxu0 %v1152
  %2287 = vmatmul.mubr.bf16.gmra.mrb[0].mxu0 %v1151
  %v2288 = vpop.f32.mrb[0].mxu0
  %v2289 = vadd.f32 %v2000, %v2288
  %v2290 = vpop.f32.mrb[0].mxu0
  %v2291 = vpop.f32.mrb[0].mxu0
  %v2292 = vadd.f32 %v2003, %v2291
  %v2293 = vpop.f32.mrb[0].mxu0
  %2294 = vmatprep.mubr.bf16.mxu0 %v1159
  %2295 = vmatmul.mubr.bf16.gmra.mrb[0].mxu0 %v1158
  %v2296 = vpop.f32.mrb[0].mxu0
  %v2297 = vadd.f32 %v2008, %v2296
  %v2298 = vpop.f32.mrb[0].mxu0
  %v2299 = vpop.f32.mrb[0].mxu0
  %v2300 = vadd.f32 %v2011, %v2299
  %v2301 = vpop.f32.mrb[0].mxu0
  %2302 = vmatprep.mubr.bf16.mxu0 %v1166
  %2303 = vmatmul.mubr.bf16.gmra.mrb[0].mxu0 %v1165
  %v2304 = vpop.f32.mrb[0].mxu0
  %v2305 = vadd.f32 %v2016, %v2304
  %v2306 = vpop.f32.mrb[0].mxu0
  %v2307 = vpop.f32.mrb[0].mxu0
  %v2308 = vadd.f32 %v2019, %v2307
  %v2309 = vpop.f32.mrb[0].mxu0
  %2310 = vmatprep.mubr.bf16.mxu0 %v1173
  %2311 = vmatmul.mubr.bf16.gmra.mrb[0].mxu0 %v1172
  %v2312 = vpop.f32.mrb[0].mxu0
  %v2313 = vadd.f32 %v2024, %v2312
  %v2314 = vpop.f32.mrb[0].mxu0
  %v2315 = vpop.f32.mrb[0].mxu0
  %v2316 = vadd.f32 %v2027, %v2315
  %v2317 = vpop.f32.mrb[0].mxu0
  %2318 = vmatprep.mubr.bf16.mxu0 %v1180
  %2319 = vmatmul.mubr.bf16.gmra.mrb[0].mxu0 %v1179
  %v2320 = vpop.f32.mrb[0].mxu0
  %v2321 = vadd.f32 %v2032, %v2320
  %v2322 = vpop.f32.mrb[0].mxu0
  %v2323 = vpop.f32.mrb[0].mxu0
  %v2324 = vadd.f32 %v2035, %v2323
  %v2325 = vpop.f32.mrb[0].mxu0
  %2326 = vmatprep.mubr.bf16.mxu0 %v1187
  %2327 = vmatmul.mubr.bf16.gmra.mrb[0].mxu0 %v1186
  %v2328 = vpop.f32.mrb[0].mxu0
  %v2329 = vadd.f32 %v2040, %v2328
  %v2330 = vpop.f32.mrb[0].mxu0
  %v2331 = vpop.f32.mrb[0].mxu0
  %v2332 = vadd.f32 %v2043, %v2331
  %v2333 = vpop.f32.mrb[0].mxu0
  %2334 = vmatprep.mubr.bf16.mxu0 %v1194
  %2335 = vmatmul.mubr.bf16.gmra.mrb[0].mxu0 %v1193
  %v2336 = vpop.f32.mrb[0].mxu0
  %v2337 = vadd.f32 %v2048, %v2336
  %v2338 = vpop.f32.mrb[0].mxu0
  %v2339 = vpop.f32.mrb[0].mxu0
  %v2340 = vadd.f32 %v2051, %v2339
  %v2341 = vpop.f32.mrb[0].mxu0
  %2342 = vmatprep.mubr.bf16.mxu0 %v1201
  %2343 = vmatmul.mubr.bf16.gmra.mrb[0].mxu0 %v1200
  %v2344 = vpop.f32.mrb[0].mxu0
  %v2345 = vadd.f32 %v2056, %v2344
  %v2346 = vpop.f32.mrb[0].mxu0
  %v2347 = vpop.f32.mrb[0].mxu0
  %v2348 = vadd.f32 %v2059, %v2347
  %v2349 = vpop.f32.mrb[0].mxu0
  %2350 = vmatprep.mubr.bf16.mxu0 %v1208
  %2351 = vmatmul.mubr.bf16.gmra.mrb[0].mxu0 %v1207
  %v2352 = vpop.f32.mrb[0].mxu0
  %v2353 = vadd.f32 %v2064, %v2352
  %v2354 = vpop.f32.mrb[0].mxu0
  %v2355 = vpop.f32.mrb[0].mxu0
  %v2356 = vadd.f32 %v2067, %v2355
  %v2357 = vpop.f32.mrb[0].mxu0
  %2358 = vmatprep.mubr.bf16.mxu0 %v1215
  %2359 = vmatmul.mubr.bf16.gmra.mrb[0].mxu0 %v1214
  %v2360 = vpop.f32.mrb[0].mxu0
  %v2361 = vadd.f32 %v2072, %v2360
  %v2362 = vpop.f32.mrb[0].mxu0
  %v2363 = vpop.f32.mrb[0].mxu0
  %v2364 = vadd.f32 %v2075, %v2363
  %v2365 = vpop.f32.mrb[0].mxu0
  %2366 = vmatprep.mubr.bf16.mxu0 %v1222
  %2367 = vmatmul.mubr.bf16.gmra.mrb[0].mxu0 %v1221
  %v2368 = vpop.f32.mrb[0].mxu0
  %v2369 = vadd.f32 %v2080, %v2368
  %v2370 = vpop.f32.mrb[0].mxu0
  %v2371 = vpop.f32.mrb[0].mxu0
  %v2372 = vadd.f32 %v2083, %v2371
  %v2373 = vpop.f32.mrb[0].mxu0
  %2374 = vmatprep.mubr.bf16.mxu0 %v1229
  %2375 = vmatmul.mubr.bf16.gmra.mrb[0].mxu0 %v1228
  %v2376 = vpop.f32.mrb[0].mxu0
  %v2377 = vadd.f32 %v2088, %v2376
  %v2378 = vpop.f32.mrb[0].mxu0
  %v2379 = vpop.f32.mrb[0].mxu0
  %v2380 = vadd.f32 %v2091, %v2379
  %v2381 = vpop.f32.mrb[0].mxu0
  %2382 = vmatprep.mubr.bf16.mxu0 %v1236
  %2383 = vmatmul.mubr.bf16.gmra.mrb[0].mxu0 %v1235
  %v2384 = vpop.f32.mrb[0].mxu0
  %v2385 = vadd.f32 %v2096, %v2384
  %v2386 = vpop.f32.mrb[0].mxu0
  %v2387 = vpop.f32.mrb[0].mxu0
  %v2388 = vadd.f32 %v2099, %v2387
  %v2389 = vpop.f32.mrb[0].mxu0
  %2390 = vmatprep.mubr.bf16.mxu0 %v1243
  %2391 = vmatmul.mubr.bf16.gmra.mrb[0].mxu0 %v1242
  %v2392 = vpop.f32.mrb[0].mxu0
  %v2393 = vadd.f32 %v2104, %v2392
  %v2394 = vpop.f32.mrb[0].mxu0
  %v2395 = vpop.f32.mrb[0].mxu0
  %v2396 = vadd.f32 %v2107, %v2395
  %v2397 = vpop.f32.mrb[0].mxu0
  %2398 = vmatprep.mubr.bf16.mxu0 %v1250
  %2399 = vmatmul.mubr.bf16.gmra.mrb[0].mxu0 %v1249
  %v2400 = vpop.f32.mrb[0].mxu0
  %v2401 = vadd.f32 %v2112, %v2400
  %v2402 = vpop.f32.mrb[0].mxu0
  %v2403 = vpop.f32.mrb[0].mxu0
  %v2404 = vadd.f32 %v2115, %v2403
  %v2405 = vpop.f32.mrb[0].mxu0
  %2406 = vmatprep.mubr.bf16.mxu0 %v1257
  %2407 = vmatmul.mubr.bf16.gmra.mrb[0].mxu0 %v1256
  %v2408 = vpop.f32.mrb[0].mxu0
  %v2409 = vadd.f32 %v2120, %v2408
  %v2410 = vpop.f32.mrb[0].mxu0
  %v2411 = vpop.f32.mrb[0].mxu0
  %v2412 = vadd.f32 %v2123, %v2411
  %v2413 = vpop.f32.mrb[0].mxu0
  %2414 = vmatprep.mubr.bf16.mxu0 %v1264
  %2415 = vmatmul.mubr.bf16.gmra.mrb[0].mxu0 %v1263
  %v2416 = vpop.f32.mrb[0].mxu0
  %v2417 = vadd.f32 %v2128, %v2416
  %v2418 = vpop.f32.mrb[0].mxu0
  %v2419 = vpop.f32.mrb[0].mxu0
  %v2420 = vadd.f32 %v2131, %v2419
  %v2421 = vpop.f32.mrb[0].mxu0
  %2422 = vmatprep.mubr.bf16.mxu0 %v1271
  %2423 = vmatmul.mubr.bf16.gmra.mrb[0].mxu0 %v1270
  %v2424 = vpop.f32.mrb[0].mxu0
  %v2425 = vadd.f32 %v2136, %v2424
  %v2426 = vpop.f32.mrb[0].mxu0
  %v2427 = vpop.f32.mrb[0].mxu0
  %v2428 = vadd.f32 %v2139, %v2427
  %v2429 = vpop.f32.mrb[0].mxu0
  %2430 = vmatprep.mubr.bf16.mxu0 %v1278
  %2431 = vmatmul.mubr.bf16.gmra.mrb[0].mxu0 %v1277
  %v2432 = vpop.f32.mrb[0].mxu0
  %v2433 = vadd.f32 %v2144, %v2432
  %v2434 = vpop.f32.mrb[0].mxu0
  %v2435 = vpop.f32.mrb[0].mxu0
  %v2436 = vadd.f32 %v2147, %v2435
  %v2437 = vpop.f32.mrb[0].mxu0
  %2438 = vmatprep.mubr.bf16.mxu0 %v1285
  %2439 = vmatmul.mubr.bf16.gmra.mrb[0].mxu0 %v1284
  %v2440 = vpop.f32.mrb[0].mxu0
  %v2441 = vadd.f32 %v2152, %v2440
  %v2442 = vpop.f32.mrb[0].mxu0
  %v2443 = vpop.f32.mrb[0].mxu0
  %v2444 = vadd.f32 %v2155, %v2443
  %v2445 = vpop.f32.mrb[0].mxu0
  %2446 = vmatprep.mubr.bf16.mxu0 %v1292
  %2447 = vmatmul.mubr.bf16.gmra.mrb[0].mxu0 %v1291
  %v2448 = vpop.f32.mrb[0].mxu0
  %v2449 = vadd.f32 %v2160, %v2448
  %v2450 = vpop.f32.mrb[0].mxu0
  %v2451 = vpop.f32.mrb[0].mxu0
  %v2452 = vadd.f32 %v2163, %v2451
  %v2453 = vpop.f32.mrb[0].mxu0
  %2454 = vmatprep.mubr.bf16.mxu0 %v1299
  %2455 = vmatmul.mubr.bf16.gmra.mrb[0].mxu0 %v1298
  %v2456 = vpop.f32.mrb[0].mxu0
  %v2457 = vadd.f32 %v2168, %v2456
  %v2458 = vpop.f32.mrb[0].mxu0
  %v2459 = vpop.f32.mrb[0].mxu0
  %v2460 = vadd.f32 %v2171, %v2459
  %v2461 = vpop.f32.mrb[0].mxu0
  %2462 = vmatprep.mubr.bf16.mxu0 %v1306
  %2463 = vmatmul.mubr.bf16.gmra.mrb[0].mxu0 %v1305
  %v2464 = vpop.f32.mrb[0].mxu0
  %v2465 = vadd.f32 %v2176, %v2464
  %v2466 = vpop.f32.mrb[0].mxu0
  %v2467 = vpop.f32.mrb[0].mxu0
  %v2468 = vadd.f32 %v2179, %v2467
  %v2469 = vpop.f32.mrb[0].mxu0
  %2470 = vdwg.mxu0
  %2471 = vmatprep.subr.bf16.mxu0 0
  %2472 = vmatpush1.bf16.msra.mxu0 %v1730
  %2473 = vmatprep.subr.bf16.mxu0 0
  %2474 = vmatpush1.bf16.msra.mxu0 %v1731
  %2475 = vmatprep.subr.bf16.mxu0 0
  %2476 = vmatpush1.bf16.msra.mxu0 %v1732
  %2477 = vmatprep.subr.bf16.mxu0 0
  %2478 = vmatpush1.bf16.msra.mxu0 %v1733
  %2479 = vmatprep.subr.bf16.mxu0 0
  %2480 = vmatpush1.bf16.msra.mxu0 %v1734
  %2481 = vmatprep.subr.bf16.mxu0 0
  %2482 = vmatpush1.bf16.msra.mxu0 %v1735
  %2483 = vmatprep.subr.bf16.mxu0 0
  %2484 = vmatpush1.bf16.msra.mxu0 %v1736
  %2485 = vmatprep.subr.bf16.mxu0 0
  %2486 = vmatpush1.bf16.msra.mxu0 %v1737
  %2487 = vmatprep.subr.bf16.mxu0 0
  %2488 = vmatpush1.bf16.msra.mxu0 %v1738
  %2489 = vmatprep.subr.bf16.mxu0 0
  %2490 = vmatpush1.bf16.msra.mxu0 %v1739
  %2491 = vmatprep.subr.bf16.mxu0 0
  %2492 = vmatpush1.bf16.msra.mxu0 %v1740
  %2493 = vmatprep.subr.bf16.mxu0 0
  %2494 = vmatpush1.bf16.msra.mxu0 %v1741
  %2495 = vmatprep.subr.bf16.mxu0 0
  %2496 = vmatpush1.bf16.msra.mxu0 %v1742
  %2497 = vmatprep.subr.bf16.mxu0 0
  %2498 = vmatpush1.bf16.msra.mxu0 %v1743
  %2499 = vmatprep.subr.bf16.mxu0 0
  %2500 = vmatpush1.bf16.msra.mxu0 %v1744
  %2501 = vmatprep.subr.bf16.mxu0 0
  %2502 = vmatpush1.bf16.msra.mxu0 %v1745
  %2503 = vmatprep.mubr.bf16.mxu0 %v1091
  %2504 = vmatmul.mubr.bf16.gmra.mrb[0].mxu0 %v1090
  %v2505 = vpop.f32.mrb[0].mxu0
  %v2506 = vadd.f32 %v2217, %v2505
  %v2507 = vpop.f32.mrb[0].mxu0
  %v2508 = vpop.f32.mrb[0].mxu0
  %v2509 = vadd.f32 %v2220, %v2508
  %v2510 = vpop.f32.mrb[0].mxu0
  %2511 = vmatprep.mubr.bf16.mxu0 %v1098
  %2512 = vmatmul.mubr.bf16.gmra.mrb[0].mxu0 %v1097
  %v2513 = vpop.f32.mrb[0].mxu0
  %v2514 = vadd.f32 %v2225, %v2513
  %v2515 = vpop.f32.mrb[0].mxu0
  %v2516 = vpop.f32.mrb[0].mxu0
  %v2517 = vadd.f32 %v2228, %v2516
  %v2518 = vpop.f32.mrb[0].mxu0
  %2519 = vmatprep.mubr.bf16.mxu0 %v1105
  %2520 = vmatmul.mubr.bf16.gmra.mrb[0].mxu0 %v1104
  %v2521 = vpop.f32.mrb[0].mxu0
  %v2522 = vadd.f32 %v2233, %v2521
  %v2523 = vpop.f32.mrb[0].mxu0
  %v2524 = vpop.f32.mrb[0].mxu0
  %v2525 = vadd.f32 %v2236, %v2524
  %v2526 = vpop.f32.mrb[0].mxu0
  %2527 = vmatprep.mubr.bf16.mxu0 %v1112
  %2528 = vmatmul.mubr.bf16.gmra.mrb[0].mxu0 %v1111
  %v2529 = vpop.f32.mrb[0].mxu0
  %v2530 = vadd.f32 %v2241, %v2529
  %v2531 = vpop.f32.mrb[0].mxu0
  %v2532 = vpop.f32.mrb[0].mxu0
  %v2533 = vadd.f32 %v2244, %v2532
  %v2534 = vpop.f32.mrb[0].mxu0
  %2535 = vmatprep.mubr.bf16.mxu0 %v1119
  %2536 = vmatmul.mubr.bf16.gmra.mrb[0].mxu0 %v1118
  %v2537 = vpop.f32.mrb[0].mxu0
  %v2538 = vadd.f32 %v2249, %v2537
  %v2539 = vpop.f32.mrb[0].mxu0
  %v2540 = vpop.f32.mrb[0].mxu0
  %v2541 = vadd.f32 %v2252, %v2540
  %v2542 = vpop.f32.mrb[0].mxu0
  %2543 = vmatprep.mubr.bf16.mxu0 %v1126
  %2544 = vmatmul.mubr.bf16.gmra.mrb[0].mxu0 %v1125
  %v2545 = vpop.f32.mrb[0].mxu0
  %v2546 = vadd.f32 %v2257, %v2545
  %v2547 = vpop.f32.mrb[0].mxu0
  %v2548 = vpop.f32.mrb[0].mxu0
  %v2549 = vadd.f32 %v2260, %v2548
  %v2550 = vpop.f32.mrb[0].mxu0
  %2551 = vmatprep.mubr.bf16.mxu0 %v1133
  %2552 = vmatmul.mubr.bf16.gmra.mrb[0].mxu0 %v1132
  %v2553 = vpop.f32.mrb[0].mxu0
  %v2554 = vadd.f32 %v2265, %v2553
  %v2555 = vpop.f32.mrb[0].mxu0
  %v2556 = vpop.f32.mrb[0].mxu0
  %v2557 = vadd.f32 %v2268, %v2556
  %v2558 = vpop.f32.mrb[0].mxu0
  %2559 = vmatprep.mubr.bf16.mxu0 %v1140
  %2560 = vmatmul.mubr.bf16.gmra.mrb[0].mxu0 %v1139
  %v2561 = vpop.f32.mrb[0].mxu0
  %v2562 = vadd.f32 %v2273, %v2561
  %v2563 = vpop.f32.mrb[0].mxu0
  %v2564 = vpop.f32.mrb[0].mxu0
  %v2565 = vadd.f32 %v2276, %v2564
  %v2566 = vpop.f32.mrb[0].mxu0
  %2567 = vmatprep.mubr.bf16.mxu0 %v1147
  %2568 = vmatmul.mubr.bf16.gmra.mrb[0].mxu0 %v1146
  %v2569 = vpop.f32.mrb[0].mxu0
  %v2570 = vadd.f32 %v2281, %v2569
  %v2571 = vpop.f32.mrb[0].mxu0
  %v2572 = vpop.f32.mrb[0].mxu0
  %v2573 = vadd.f32 %v2284, %v2572
  %v2574 = vpop.f32.mrb[0].mxu0
  %2575 = vmatprep.mubr.bf16.mxu0 %v1154
  %2576 = vmatmul.mubr.bf16.gmra.mrb[0].mxu0 %v1153
  %v2577 = vpop.f32.mrb[0].mxu0
  %v2578 = vadd.f32 %v2289, %v2577
  %v2579 = vpop.f32.mrb[0].mxu0
  %v2580 = vpop.f32.mrb[0].mxu0
  %v2581 = vadd.f32 %v2292, %v2580
  %v2582 = vpop.f32.mrb[0].mxu0
  %2583 = vmatprep.mubr.bf16.mxu0 %v1161
  %2584 = vmatmul.mubr.bf16.gmra.mrb[0].mxu0 %v1160
  %v2585 = vpop.f32.mrb[0].mxu0
  %v2586 = vadd.f32 %v2297, %v2585
  %v2587 = vpop.f32.mrb[0].mxu0
  %v2588 = vpop.f32.mrb[0].mxu0
  %v2589 = vadd.f32 %v2300, %v2588
  %v2590 = vpop.f32.mrb[0].mxu0
  %2591 = vmatprep.mubr.bf16.mxu0 %v1168
  %2592 = vmatmul.mubr.bf16.gmra.mrb[0].mxu0 %v1167
  %v2593 = vpop.f32.mrb[0].mxu0
  %v2594 = vadd.f32 %v2305, %v2593
  %v2595 = vpop.f32.mrb[0].mxu0
  %v2596 = vpop.f32.mrb[0].mxu0
  %v2597 = vadd.f32 %v2308, %v2596
  %v2598 = vpop.f32.mrb[0].mxu0
  %2599 = vmatprep.mubr.bf16.mxu0 %v1175
  %2600 = vmatmul.mubr.bf16.gmra.mrb[0].mxu0 %v1174
  %v2601 = vpop.f32.mrb[0].mxu0
  %v2602 = vadd.f32 %v2313, %v2601
  %v2603 = vpop.f32.mrb[0].mxu0
  %v2604 = vpop.f32.mrb[0].mxu0
  %v2605 = vadd.f32 %v2316, %v2604
  %v2606 = vpop.f32.mrb[0].mxu0
  %2607 = vmatprep.mubr.bf16.mxu0 %v1182
  %2608 = vmatmul.mubr.bf16.gmra.mrb[0].mxu0 %v1181
  %v2609 = vpop.f32.mrb[0].mxu0
  %v2610 = vadd.f32 %v2321, %v2609
  %v2611 = vpop.f32.mrb[0].mxu0
  %v2612 = vpop.f32.mrb[0].mxu0
  %v2613 = vadd.f32 %v2324, %v2612
  %v2614 = vpop.f32.mrb[0].mxu0
  %2615 = vmatprep.mubr.bf16.mxu0 %v1189
  %2616 = vmatmul.mubr.bf16.gmra.mrb[0].mxu0 %v1188
  %v2617 = vpop.f32.mrb[0].mxu0
  %v2618 = vadd.f32 %v2329, %v2617
  %v2619 = vpop.f32.mrb[0].mxu0
  %v2620 = vpop.f32.mrb[0].mxu0
  %v2621 = vadd.f32 %v2332, %v2620
  %v2622 = vpop.f32.mrb[0].mxu0
  %2623 = vmatprep.mubr.bf16.mxu0 %v1196
  %2624 = vmatmul.mubr.bf16.gmra.mrb[0].mxu0 %v1195
  %v2625 = vpop.f32.mrb[0].mxu0
  %v2626 = vadd.f32 %v2337, %v2625
  %v2627 = vpop.f32.mrb[0].mxu0
  %v2628 = vpop.f32.mrb[0].mxu0
  %v2629 = vadd.f32 %v2340, %v2628
  %v2630 = vpop.f32.mrb[0].mxu0
  %2631 = vmatprep.mubr.bf16.mxu0 %v1203
  %2632 = vmatmul.mubr.bf16.gmra.mrb[0].mxu0 %v1202
  %v2633 = vpop.f32.mrb[0].mxu0
  %v2634 = vadd.f32 %v2345, %v2633
  %v2635 = vpop.f32.mrb[0].mxu0
  %v2636 = vpop.f32.mrb[0].mxu0
  %v2637 = vadd.f32 %v2348, %v2636
  %v2638 = vpop.f32.mrb[0].mxu0
  %2639 = vmatprep.mubr.bf16.mxu0 %v1210
  %2640 = vmatmul.mubr.bf16.gmra.mrb[0].mxu0 %v1209
  %v2641 = vpop.f32.mrb[0].mxu0
  %v2642 = vadd.f32 %v2353, %v2641
  %v2643 = vpop.f32.mrb[0].mxu0
  %v2644 = vpop.f32.mrb[0].mxu0
  %v2645 = vadd.f32 %v2356, %v2644
  %v2646 = vpop.f32.mrb[0].mxu0
  %2647 = vmatprep.mubr.bf16.mxu0 %v1217
  %2648 = vmatmul.mubr.bf16.gmra.mrb[0].mxu0 %v1216
  %v2649 = vpop.f32.mrb[0].mxu0
  %v2650 = vadd.f32 %v2361, %v2649
  %v2651 = vpop.f32.mrb[0].mxu0
  %v2652 = vpop.f32.mrb[0].mxu0
  %v2653 = vadd.f32 %v2364, %v2652
  %v2654 = vpop.f32.mrb[0].mxu0
  %2655 = vmatprep.mubr.bf16.mxu0 %v1224
  %2656 = vmatmul.mubr.bf16.gmra.mrb[0].mxu0 %v1223
  %v2657 = vpop.f32.mrb[0].mxu0
  %v2658 = vadd.f32 %v2369, %v2657
  %v2659 = vpop.f32.mrb[0].mxu0
  %v2660 = vpop.f32.mrb[0].mxu0
  %v2661 = vadd.f32 %v2372, %v2660
  %v2662 = vpop.f32.mrb[0].mxu0
  %2663 = vmatprep.mubr.bf16.mxu0 %v1231
  %2664 = vmatmul.mubr.bf16.gmra.mrb[0].mxu0 %v1230
  %v2665 = vpop.f32.mrb[0].mxu0
  %v2666 = vadd.f32 %v2377, %v2665
  %v2667 = vpop.f32.mrb[0].mxu0
  %v2668 = vpop.f32.mrb[0].mxu0
  %v2669 = vadd.f32 %v2380, %v2668
  %v2670 = vpop.f32.mrb[0].mxu0
  %2671 = vmatprep.mubr.bf16.mxu0 %v1238
  %2672 = vmatmul.mubr.bf16.gmra.mrb[0].mxu0 %v1237
  %v2673 = vpop.f32.mrb[0].mxu0
  %v2674 = vadd.f32 %v2385, %v2673
  %v2675 = vpop.f32.mrb[0].mxu0
  %v2676 = vpop.f32.mrb[0].mxu0
  %v2677 = vadd.f32 %v2388, %v2676
  %v2678 = vpop.f32.mrb[0].mxu0
  %2679 = vmatprep.mubr.bf16.mxu0 %v1245
  %2680 = vmatmul.mubr.bf16.gmra.mrb[0].mxu0 %v1244
  %v2681 = vpop.f32.mrb[0].mxu0
  %v2682 = vadd.f32 %v2393, %v2681
  %v2683 = vpop.f32.mrb[0].mxu0
  %v2684 = vpop.f32.mrb[0].mxu0
  %v2685 = vadd.f32 %v2396, %v2684
  %v2686 = vpop.f32.mrb[0].mxu0
  %2687 = vmatprep.mubr.bf16.mxu0 %v1252
  %2688 = vmatmul.mubr.bf16.gmra.mrb[0].mxu0 %v1251
  %v2689 = vpop.f32.mrb[0].mxu0
  %v2690 = vadd.f32 %v2401, %v2689
  %v2691 = vpop.f32.mrb[0].mxu0
  %v2692 = vpop.f32.mrb[0].mxu0
  %v2693 = vadd.f32 %v2404, %v2692
  %v2694 = vpop.f32.mrb[0].mxu0
  %2695 = vmatprep.mubr.bf16.mxu0 %v1259
  %2696 = vmatmul.mubr.bf16.gmra.mrb[0].mxu0 %v1258
  %v2697 = vpop.f32.mrb[0].mxu0
  %v2698 = vadd.f32 %v2409, %v2697
  %v2699 = vpop.f32.mrb[0].mxu0
  %v2700 = vpop.f32.mrb[0].mxu0
  %v2701 = vadd.f32 %v2412, %v2700
  %v2702 = vpop.f32.mrb[0].mxu0
  %2703 = vmatprep.mubr.bf16.mxu0 %v1266
  %2704 = vmatmul.mubr.bf16.gmra.mrb[0].mxu0 %v1265
  %v2705 = vpop.f32.mrb[0].mxu0
  %v2706 = vadd.f32 %v2417, %v2705
  %v2707 = vpop.f32.mrb[0].mxu0
  %v2708 = vpop.f32.mrb[0].mxu0
  %v2709 = vadd.f32 %v2420, %v2708
  %v2710 = vpop.f32.mrb[0].mxu0
  %2711 = vmatprep.mubr.bf16.mxu0 %v1273
  %2712 = vmatmul.mubr.bf16.gmra.mrb[0].mxu0 %v1272
  %v2713 = vpop.f32.mrb[0].mxu0
  %v2714 = vadd.f32 %v2425, %v2713
  %v2715 = vpop.f32.mrb[0].mxu0
  %v2716 = vpop.f32.mrb[0].mxu0
  %v2717 = vadd.f32 %v2428, %v2716
  %v2718 = vpop.f32.mrb[0].mxu0
  %2719 = vmatprep.mubr.bf16.mxu0 %v1280
  %2720 = vmatmul.mubr.bf16.gmra.mrb[0].mxu0 %v1279
  %v2721 = vpop.f32.mrb[0].mxu0
  %v2722 = vadd.f32 %v2433, %v2721
  %v2723 = vpop.f32.mrb[0].mxu0
  %v2724 = vpop.f32.mrb[0].mxu0
  %v2725 = vadd.f32 %v2436, %v2724
  %v2726 = vpop.f32.mrb[0].mxu0
  %2727 = vmatprep.mubr.bf16.mxu0 %v1287
  %2728 = vmatmul.mubr.bf16.gmra.mrb[0].mxu0 %v1286
  %v2729 = vpop.f32.mrb[0].mxu0
  %v2730 = vadd.f32 %v2441, %v2729
  %v2731 = vpop.f32.mrb[0].mxu0
  %v2732 = vpop.f32.mrb[0].mxu0
  %v2733 = vadd.f32 %v2444, %v2732
  %v2734 = vpop.f32.mrb[0].mxu0
  %2735 = vmatprep.mubr.bf16.mxu0 %v1294
  %2736 = vmatmul.mubr.bf16.gmra.mrb[0].mxu0 %v1293
  %v2737 = vpop.f32.mrb[0].mxu0
  %v2738 = vadd.f32 %v2449, %v2737
  %v2739 = vpop.f32.mrb[0].mxu0
  %v2740 = vpop.f32.mrb[0].mxu0
  %v2741 = vadd.f32 %v2452, %v2740
  %v2742 = vpop.f32.mrb[0].mxu0
  %2743 = vmatprep.mubr.bf16.mxu0 %v1301
  %2744 = vmatmul.mubr.bf16.gmra.mrb[0].mxu0 %v1300
  %v2745 = vpop.f32.mrb[0].mxu0
  %v2746 = vadd.f32 %v2457, %v2745
  %v2747 = vpop.f32.mrb[0].mxu0
  %v2748 = vpop.f32.mrb[0].mxu0
  %v2749 = vadd.f32 %v2460, %v2748
  %v2750 = vpop.f32.mrb[0].mxu0
  %2751 = vmatprep.mubr.bf16.mxu0 %v1308
  %2752 = vmatmul.mubr.bf16.gmra.mrb[0].mxu0 %v1307
  %v2753 = vpop.f32.mrb[0].mxu0
  %v2754 = vadd.f32 %v2465, %v2753
  %v2755 = vpop.f32.mrb[0].mxu0
  %v2756 = vpop.f32.mrb[0].mxu0
  %v2757 = vadd.f32 %v2468, %v2756
  %v2758 = vpop.f32.mrb[0].mxu0
  %2759 = vdwg.mxu0
  %2760 = vmatprep.subr.bf16.mxu0 0
  %2761 = vmatpush1.bf16.msra.mxu0 %v1746
  %2762 = vmatprep.subr.bf16.mxu0 0
  %2763 = vmatpush1.bf16.msra.mxu0 0
  %2764 = vmatprep.subr.bf16.mxu0 0
  %2765 = vmatpush1.bf16.msra.mxu0 0
  %2766 = vmatprep.subr.bf16.mxu0 0
  %2767 = vmatpush1.bf16.msra.mxu0 0
  %2768 = vmatprep.subr.bf16.mxu0 0
  %2769 = vmatpush1.bf16.msra.mxu0 0
  %2770 = vmatprep.subr.bf16.mxu0 0
  %2771 = vmatpush1.bf16.msra.mxu0 0
  %2772 = vmatprep.subr.bf16.mxu0 0
  %2773 = vmatpush1.bf16.msra.mxu0 0
  %2774 = vmatprep.subr.bf16.mxu0 0
  %2775 = vmatpush1.bf16.msra.mxu0 0
  %2776 = vmatprep.subr.bf16.mxu0 0
  %2777 = vmatpush1.bf16.msra.mxu0 0
  %2778 = vmatprep.subr.bf16.mxu0 0
  %2779 = vmatpush1.bf16.msra.mxu0 0
  %2780 = vmatprep.subr.bf16.mxu0 0
  %2781 = vmatpush1.bf16.msra.mxu0 0
  %2782 = vmatprep.subr.bf16.mxu0 0
  %2783 = vmatpush1.bf16.msra.mxu0 0
  %2784 = vmatprep.subr.bf16.mxu0 0
  %2785 = vmatpush1.bf16.msra.mxu0 0
  %2786 = vmatprep.subr.bf16.mxu0 0
  %2787 = vmatpush1.bf16.msra.mxu0 0
  %2788 = vmatprep.subr.bf16.mxu0 0
  %2789 = vmatpush1.bf16.msra.mxu0 0
  %2790 = vmatprep.subr.bf16.mxu0 0
  %2791 = vmatpush1.bf16.msra.mxu0 0
  %2792 = vmatprep.mubr.bf16.mxu0 0
  %2793 = vmatmul.mubr.bf16.gmra.mrb[0].mxu0 %v1798
  %v2794 = vpop.f32.mrb[0].mxu0
  %v2795 = vadd.f32 %v2506, %v2794
  %v2796 = vpop.f32.mrb[0].mxu0
  %v2797 = vpop.f32.mrb[0].mxu0
  %v2798 = vadd.f32 %v2509, %v2797
  %v2799 = vpop.f32.mrb[0].mxu0
  %2800 = vmatprep.mubr.bf16.mxu0 0
  %2801 = vmatmul.mubr.bf16.gmra.mrb[0].mxu0 %v1801
  %v2802 = vpop.f32.mrb[0].mxu0
  %v2803 = vadd.f32 %v2514, %v2802
  %v2804 = vpop.f32.mrb[0].mxu0
  %v2805 = vpop.f32.mrb[0].mxu0
  %v2806 = vadd.f32 %v2517, %v2805
  %v2807 = vpop.f32.mrb[0].mxu0
  %2808 = vmatprep.mubr.bf16.mxu0 0
  %2809 = vmatmul.mubr.bf16.gmra.mrb[0].mxu0 %v1804
  %v2810 = vpop.f32.mrb[0].mxu0
  %v2811 = vadd.f32 %v2522, %v2810
  %v2812 = vpop.f32.mrb[0].mxu0
  %v2813 = vpop.f32.mrb[0].mxu0
  %v2814 = vadd.f32 %v2525, %v2813
  %v2815 = vpop.f32.mrb[0].mxu0
  %2816 = vmatprep.mubr.bf16.mxu0 0
  %2817 = vmatmul.mubr.bf16.gmra.mrb[0].mxu0 %v1807
  %v2818 = vpop.f32.mrb[0].mxu0
  %v2819 = vadd.f32 %v2530, %v2818
  %v2820 = vpop.f32.mrb[0].mxu0
  %v2821 = vpop.f32.mrb[0].mxu0
  %v2822 = vadd.f32 %v2533, %v2821
  %v2823 = vpop.f32.mrb[0].mxu0
  %2824 = vmatprep.mubr.bf16.mxu0 0
  %2825 = vmatmul.mubr.bf16.gmra.mrb[0].mxu0 %v1810
  %v2826 = vpop.f32.mrb[0].mxu0
  %v2827 = vadd.f32 %v2538, %v2826
  %v2828 = vpop.f32.mrb[0].mxu0
  %v2829 = vpop.f32.mrb[0].mxu0
  %v2830 = vadd.f32 %v2541, %v2829
  %v2831 = vpop.f32.mrb[0].mxu0
  %2832 = vmatprep.mubr.bf16.mxu0 0
  %2833 = vmatmul.mubr.bf16.gmra.mrb[0].mxu0 %v1813
  %v2834 = vpop.f32.mrb[0].mxu0
  %v2835 = vadd.f32 %v2546, %v2834
  %v2836 = vpop.f32.mrb[0].mxu0
  %v2837 = vpop.f32.mrb[0].mxu0
  %v2838 = vadd.f32 %v2549, %v2837
  %v2839 = vpop.f32.mrb[0].mxu0
  %2840 = vmatprep.mubr.bf16.mxu0 0
  %2841 = vmatmul.mubr.bf16.gmra.mrb[0].mxu0 %v1816
  %v2842 = vpop.f32.mrb[0].mxu0
  %v2843 = vadd.f32 %v2554, %v2842
  %v2844 = vpop.f32.mrb[0].mxu0
  %v2845 = vpop.f32.mrb[0].mxu0
  %v2846 = vadd.f32 %v2557, %v2845
  %v2847 = vpop.f32.mrb[0].mxu0
  %2848 = vmatprep.mubr.bf16.mxu0 0
  %2849 = vmatmul.mubr.bf16.gmra.mrb[0].mxu0 %v1819
  %v2850 = vpop.f32.mrb[0].mxu0
  %v2851 = vadd.f32 %v2562, %v2850
  %v2852 = vpop.f32.mrb[0].mxu0
  %v2853 = vpop.f32.mrb[0].mxu0
  %v2854 = vadd.f32 %v2565, %v2853
  %v2855 = vpop.f32.mrb[0].mxu0
  %2856 = vmatprep.mubr.bf16.mxu0 0
  %2857 = vmatmul.mubr.bf16.gmra.mrb[0].mxu0 %v1822
  %v2858 = vpop.f32.mrb[0].mxu0
  %v2859 = vadd.f32 %v2570, %v2858
  %v2860 = vpop.f32.mrb[0].mxu0
  %v2861 = vpop.f32.mrb[0].mxu0
  %v2862 = vadd.f32 %v2573, %v2861
  %v2863 = vpop.f32.mrb[0].mxu0
  %2864 = vmatprep.mubr.bf16.mxu0 0
  %2865 = vmatmul.mubr.bf16.gmra.mrb[0].mxu0 %v1825
  %v2866 = vpop.f32.mrb[0].mxu0
  %v2867 = vadd.f32 %v2578, %v2866
  %v2868 = vpop.f32.mrb[0].mxu0
  %v2869 = vpop.f32.mrb[0].mxu0
  %v2870 = vadd.f32 %v2581, %v2869
  %v2871 = vpop.f32.mrb[0].mxu0
  %2872 = vmatprep.mubr.bf16.mxu0 0
  %2873 = vmatmul.mubr.bf16.gmra.mrb[0].mxu0 %v1828
  %v2874 = vpop.f32.mrb[0].mxu0
  %v2875 = vadd.f32 %v2586, %v2874
  %v2876 = vpop.f32.mrb[0].mxu0
  %v2877 = vpop.f32.mrb[0].mxu0
  %v2878 = vadd.f32 %v2589, %v2877
  %v2879 = vpop.f32.mrb[0].mxu0
  %2880 = vmatprep.mubr.bf16.mxu0 0
  %2881 = vmatmul.mubr.bf16.gmra.mrb[0].mxu0 %v1831
  %v2882 = vpop.f32.mrb[0].mxu0
  %v2883 = vadd.f32 %v2594, %v2882
  %v2884 = vpop.f32.mrb[0].mxu0
  %v2885 = vpop.f32.mrb[0].mxu0
  %v2886 = vadd.f32 %v2597, %v2885
  %v2887 = vpop.f32.mrb[0].mxu0
  %2888 = vmatprep.mubr.bf16.mxu0 0
  %2889 = vmatmul.mubr.bf16.gmra.mrb[0].mxu0 %v1834
  %v2890 = vpop.f32.mrb[0].mxu0
  %v2891 = vadd.f32 %v2602, %v2890
  %v2892 = vpop.f32.mrb[0].mxu0
  %v2893 = vpop.f32.mrb[0].mxu0
  %v2894 = vadd.f32 %v2605, %v2893
  %v2895 = vpop.f32.mrb[0].mxu0
  %2896 = vmatprep.mubr.bf16.mxu0 0
  %2897 = vmatmul.mubr.bf16.gmra.mrb[0].mxu0 %v1837
  %v2898 = vpop.f32.mrb[0].mxu0
  %v2899 = vadd.f32 %v2610, %v2898
  %v2900 = vpop.f32.mrb[0].mxu0
  %v2901 = vpop.f32.mrb[0].mxu0
  %v2902 = vadd.f32 %v2613, %v2901
  %v2903 = vpop.f32.mrb[0].mxu0
  %2904 = vmatprep.mubr.bf16.mxu0 0
  %2905 = vmatmul.mubr.bf16.gmra.mrb[0].mxu0 %v1840
  %v2906 = vpop.f32.mrb[0].mxu0
  %v2907 = vadd.f32 %v2618, %v2906
  %v2908 = vpop.f32.mrb[0].mxu0
  %v2909 = vpop.f32.mrb[0].mxu0
  %v2910 = vadd.f32 %v2621, %v2909
  %v2911 = vpop.f32.mrb[0].mxu0
  %2912 = vmatprep.mubr.bf16.mxu0 0
  %2913 = vmatmul.mubr.bf16.gmra.mrb[0].mxu0 %v1843
  %v2914 = vpop.f32.mrb[0].mxu0
  %v2915 = vadd.f32 %v2626, %v2914
  %v2916 = vpop.f32.mrb[0].mxu0
  %v2917 = vpop.f32.mrb[0].mxu0
  %v2918 = vadd.f32 %v2629, %v2917
  %v2919 = vpop.f32.mrb[0].mxu0
  %2920 = vmatprep.mubr.bf16.mxu0 0
  %2921 = vmatmul.mubr.bf16.gmra.mrb[0].mxu0 %v1846
  %v2922 = vpop.f32.mrb[0].mxu0
  %v2923 = vadd.f32 %v2634, %v2922
  %v2924 = vpop.f32.mrb[0].mxu0
  %v2925 = vpop.f32.mrb[0].mxu0
  %v2926 = vadd.f32 %v2637, %v2925
  %v2927 = vpop.f32.mrb[0].mxu0
  %2928 = vmatprep.mubr.bf16.mxu0 0
  %2929 = vmatmul.mubr.bf16.gmra.mrb[0].mxu0 %v1849
  %v2930 = vpop.f32.mrb[0].mxu0
  %v2931 = vadd.f32 %v2642, %v2930
  %v2932 = vpop.f32.mrb[0].mxu0
  %v2933 = vpop.f32.mrb[0].mxu0
  %v2934 = vadd.f32 %v2645, %v2933
  %v2935 = vpop.f32.mrb[0].mxu0
  %2936 = vmatprep.mubr.bf16.mxu0 0
  %2937 = vmatmul.mubr.bf16.gmra.mrb[0].mxu0 %v1852
  %v2938 = vpop.f32.mrb[0].mxu0
  %v2939 = vadd.f32 %v2650, %v2938
  %v2940 = vpop.f32.mrb[0].mxu0
  %v2941 = vpop.f32.mrb[0].mxu0
  %v2942 = vadd.f32 %v2653, %v2941
  %v2943 = vpop.f32.mrb[0].mxu0
  %2944 = vmatprep.mubr.bf16.mxu0 0
  %2945 = vmatmul.mubr.bf16.gmra.mrb[0].mxu0 %v1855
  %v2946 = vpop.f32.mrb[0].mxu0
  %v2947 = vadd.f32 %v2658, %v2946
  %v2948 = vpop.f32.mrb[0].mxu0
  %v2949 = vpop.f32.mrb[0].mxu0
  %v2950 = vadd.f32 %v2661, %v2949
  %v2951 = vpop.f32.mrb[0].mxu0
  %2952 = vmatprep.mubr.bf16.mxu0 0
  %2953 = vmatmul.mubr.bf16.gmra.mrb[0].mxu0 %v1858
  %v2954 = vpop.f32.mrb[0].mxu0
  %v2955 = vadd.f32 %v2666, %v2954
  %v2956 = vpop.f32.mrb[0].mxu0
  %v2957 = vpop.f32.mrb[0].mxu0
  %v2958 = vadd.f32 %v2669, %v2957
  %v2959 = vpop.f32.mrb[0].mxu0
  %2960 = vmatprep.mubr.bf16.mxu0 0
  %2961 = vmatmul.mubr.bf16.gmra.mrb[0].mxu0 %v1861
  %v2962 = vpop.f32.mrb[0].mxu0
  %v2963 = vadd.f32 %v2674, %v2962
  %v2964 = vpop.f32.mrb[0].mxu0
  %v2965 = vpop.f32.mrb[0].mxu0
  %v2966 = vadd.f32 %v2677, %v2965
  %v2967 = vpop.f32.mrb[0].mxu0
  %2968 = vmatprep.mubr.bf16.mxu0 0
  %2969 = vmatmul.mubr.bf16.gmra.mrb[0].mxu0 %v1864
  %v2970 = vpop.f32.mrb[0].mxu0
  %v2971 = vadd.f32 %v2682, %v2970
  %v2972 = vpop.f32.mrb[0].mxu0
  %v2973 = vpop.f32.mrb[0].mxu0
  %v2974 = vadd.f32 %v2685, %v2973
  %v2975 = vpop.f32.mrb[0].mxu0
  %2976 = vmatprep.mubr.bf16.mxu0 0
  %2977 = vmatmul.mubr.bf16.gmra.mrb[0].mxu0 %v1867
  %v2978 = vpop.f32.mrb[0].mxu0
  %v2979 = vadd.f32 %v2690, %v2978
  %v2980 = vpop.f32.mrb[0].mxu0
  %v2981 = vpop.f32.mrb[0].mxu0
  %v2982 = vadd.f32 %v2693, %v2981
  %v2983 = vpop.f32.mrb[0].mxu0
  %2984 = vmatprep.mubr.bf16.mxu0 0
  %2985 = vmatmul.mubr.bf16.gmra.mrb[0].mxu0 %v1870
  %v2986 = vpop.f32.mrb[0].mxu0
  %v2987 = vadd.f32 %v2698, %v2986
  %v2988 = vpop.f32.mrb[0].mxu0
  %v2989 = vpop.f32.mrb[0].mxu0
  %v2990 = vadd.f32 %v2701, %v2989
  %v2991 = vpop.f32.mrb[0].mxu0
  %2992 = vmatprep.mubr.bf16.mxu0 0
  %2993 = vmatmul.mubr.bf16.gmra.mrb[0].mxu0 %v1873
  %v2994 = vpop.f32.mrb[0].mxu0
  %v2995 = vadd.f32 %v2706, %v2994
  %v2996 = vpop.f32.mrb[0].mxu0
  %v2997 = vpop.f32.mrb[0].mxu0
  %v2998 = vadd.f32 %v2709, %v2997
  %v2999 = vpop.f32.mrb[0].mxu0
  %3000 = vmatprep.mubr.bf16.mxu0 0
  %3001 = vmatmul.mubr.bf16.gmra.mrb[0].mxu0 %v1876
  %v3002 = vpop.f32.mrb[0].mxu0
  %v3003 = vadd.f32 %v2714, %v3002
  %v3004 = vpop.f32.mrb[0].mxu0
  %v3005 = vpop.f32.mrb[0].mxu0
  %v3006 = vadd.f32 %v2717, %v3005
  %v3007 = vpop.f32.mrb[0].mxu0
  %3008 = vmatprep.mubr.bf16.mxu0 0
  %3009 = vmatmul.mubr.bf16.gmra.mrb[0].mxu0 %v1879
  %v3010 = vpop.f32.mrb[0].mxu0
  %v3011 = vadd.f32 %v2722, %v3010
  %v3012 = vpop.f32.mrb[0].mxu0
  %v3013 = vpop.f32.mrb[0].mxu0
  %v3014 = vadd.f32 %v2725, %v3013
  %v3015 = vpop.f32.mrb[0].mxu0
  %3016 = vmatprep.mubr.bf16.mxu0 0
  %3017 = vmatmul.mubr.bf16.gmra.mrb[0].mxu0 %v1882
  %v3018 = vpop.f32.mrb[0].mxu0
  %v3019 = vadd.f32 %v2730, %v3018
  %v3020 = vpop.f32.mrb[0].mxu0
  %v3021 = vpop.f32.mrb[0].mxu0
  %v3022 = vadd.f32 %v2733, %v3021
  %v3023 = vpop.f32.mrb[0].mxu0
  %3024 = vmatprep.mubr.bf16.mxu0 0
  %3025 = vmatmul.mubr.bf16.gmra.mrb[0].mxu0 %v1885
  %v3026 = vpop.f32.mrb[0].mxu0
  %v3027 = vadd.f32 %v2738, %v3026
  %v3028 = vpop.f32.mrb[0].mxu0
  %v3029 = vpop.f32.mrb[0].mxu0
  %v3030 = vadd.f32 %v2741, %v3029
  %v3031 = vpop.f32.mrb[0].mxu0
  %3032 = vmatprep.mubr.bf16.mxu0 0
  %3033 = vmatmul.mubr.bf16.gmra.mrb[0].mxu0 %v1888
  %v3034 = vpop.f32.mrb[0].mxu0
  %v3035 = vadd.f32 %v2746, %v3034
  %v3036 = vpop.f32.mrb[0].mxu0
  %v3037 = vpop.f32.mrb[0].mxu0
  %v3038 = vadd.f32 %v2749, %v3037
  %v3039 = vpop.f32.mrb[0].mxu0
  %3040 = vmatprep.mubr.bf16.mxu0 0
  %3041 = vmatmul.mubr.bf16.gmra.mrb[0].mxu0 %v1891
  %v3042 = vpop.f32.mrb[0].mxu0
  %v3043 = vadd.f32 %v2754, %v3042
  %v3044 = vpop.f32.mrb[0].mxu0
  %v3045 = vpop.f32.mrb[0].mxu0
  %v3046 = vadd.f32 %v2757, %v3045
  %v3047 = vpop.f32.mrb[0].mxu0
  %3048 = vdwg.mxu0
  %3113 = vrot.lane.b32.xlu0 %v2795, 112
  %v3114 = vpop.permute.xlu0 %3113
  %3115 = vrot.lane.b32.xlu0 %v2798, 112
  %v3116 = vpop.permute.xlu0 %3115
  %3117 = vrot.lane.b32.xlu0 %v2803, 112
  %v3118 = vpop.permute.xlu0 %3117
  %3119 = vrot.lane.b32.xlu0 %v2806, 112
  %v3120 = vpop.permute.xlu0 %3119
  %3121 = vrot.lane.b32.xlu0 %v2811, 112
  %v3122 = vpop.permute.xlu0 %3121
  %3123 = vrot.lane.b32.xlu0 %v2814, 112
  %v3124 = vpop.permute.xlu0 %3123
  %3125 = vrot.lane.b32.xlu0 %v2819, 112
  %v3126 = vpop.permute.xlu0 %3125
  %3127 = vrot.lane.b32.xlu0 %v2822, 112
  %v3128 = vpop.permute.xlu0 %3127
  %3129 = vrot.lane.b32.xlu0 %v2827, 112
  %v3130 = vpop.permute.xlu0 %3129
  %3131 = vrot.lane.b32.xlu0 %v2830, 112
  %v3132 = vpop.permute.xlu0 %3131
  %3133 = vrot.lane.b32.xlu0 %v2835, 112
  %v3134 = vpop.permute.xlu0 %3133
  %3135 = vrot.lane.b32.xlu0 %v2838, 112
  %v3136 = vpop.permute.xlu0 %3135
  %3137 = vrot.lane.b32.xlu0 %v2843, 112
  %v3138 = vpop.permute.xlu0 %3137
  %3139 = vrot.lane.b32.xlu0 %v2846, 112
  %v3140 = vpop.permute.xlu0 %3139
  %3141 = vrot.lane.b32.xlu0 %v2851, 112
  %v3142 = vpop.permute.xlu0 %3141
  %3143 = vrot.lane.b32.xlu0 %v2854, 112
  %v3144 = vpop.permute.xlu0 %3143
  %3145 = vrot.lane.b32.xlu0 %v2859, 112
  %v3146 = vpop.permute.xlu0 %3145
  %3147 = vrot.lane.b32.xlu0 %v2862, 112
  %v3148 = vpop.permute.xlu0 %3147
  %3149 = vrot.lane.b32.xlu0 %v2867, 112
  %v3150 = vpop.permute.xlu0 %3149
  %3151 = vrot.lane.b32.xlu0 %v2870, 112
  %v3152 = vpop.permute.xlu0 %3151
  %3153 = vrot.lane.b32.xlu0 %v2875, 112
  %v3154 = vpop.permute.xlu0 %3153
  %3155 = vrot.lane.b32.xlu0 %v2878, 112
  %v3156 = vpop.permute.xlu0 %3155
  %3157 = vrot.lane.b32.xlu0 %v2883, 112
  %v3158 = vpop.permute.xlu0 %3157
  %3159 = vrot.lane.b32.xlu0 %v2886, 112
  %v3160 = vpop.permute.xlu0 %3159
  %3161 = vrot.lane.b32.xlu0 %v2891, 112
  %v3162 = vpop.permute.xlu0 %3161
  %3163 = vrot.lane.b32.xlu0 %v2894, 112
  %v3164 = vpop.permute.xlu0 %3163
  %3165 = vrot.lane.b32.xlu0 %v2899, 112
  %v3166 = vpop.permute.xlu0 %3165
  %3167 = vrot.lane.b32.xlu0 %v2902, 112
  %v3168 = vpop.permute.xlu0 %3167
  %3169 = vrot.lane.b32.xlu0 %v2907, 112
  %v3170 = vpop.permute.xlu0 %3169
  %3171 = vrot.lane.b32.xlu0 %v2910, 112
  %v3172 = vpop.permute.xlu0 %3171
  %3173 = vrot.lane.b32.xlu0 %v2915, 112
  %v3174 = vpop.permute.xlu0 %3173
  %3175 = vrot.lane.b32.xlu0 %v2918, 112
  %v3176 = vpop.permute.xlu0 %3175
  %3177 = vrot.lane.b32.xlu0 %v2923, 112
  %v3178 = vpop.permute.xlu0 %3177
  %3179 = vrot.lane.b32.xlu0 %v2926, 112
  %v3180 = vpop.permute.xlu0 %3179
  %3181 = vrot.lane.b32.xlu0 %v2931, 112
  %v3182 = vpop.permute.xlu0 %3181
  %3183 = vrot.lane.b32.xlu0 %v2934, 112
  %v3184 = vpop.permute.xlu0 %3183
  %3185 = vrot.lane.b32.xlu0 %v2939, 112
  %v3186 = vpop.permute.xlu0 %3185
  %3187 = vrot.lane.b32.xlu0 %v2942, 112
  %v3188 = vpop.permute.xlu0 %3187
  %3189 = vrot.lane.b32.xlu0 %v2947, 112
  %v3190 = vpop.permute.xlu0 %3189
  %3191 = vrot.lane.b32.xlu0 %v2950, 112
  %v3192 = vpop.permute.xlu0 %3191
  %3193 = vrot.lane.b32.xlu0 %v2955, 112
  %v3194 = vpop.permute.xlu0 %3193
  %3195 = vrot.lane.b32.xlu0 %v2958, 112
  %v3196 = vpop.permute.xlu0 %3195
  %3197 = vrot.lane.b32.xlu0 %v2963, 112
  %v3198 = vpop.permute.xlu0 %3197
  %3199 = vrot.lane.b32.xlu0 %v2966, 112
  %v3200 = vpop.permute.xlu0 %3199
  %3201 = vrot.lane.b32.xlu0 %v2971, 112
  %v3202 = vpop.permute.xlu0 %3201
  %3203 = vrot.lane.b32.xlu0 %v2974, 112
  %v3204 = vpop.permute.xlu0 %3203
  %3205 = vrot.lane.b32.xlu0 %v2979, 112
  %v3206 = vpop.permute.xlu0 %3205
  %3207 = vrot.lane.b32.xlu0 %v2982, 112
  %v3208 = vpop.permute.xlu0 %3207
  %3209 = vrot.lane.b32.xlu0 %v2987, 112
  %v3210 = vpop.permute.xlu0 %3209
  %3211 = vrot.lane.b32.xlu0 %v2990, 112
  %v3212 = vpop.permute.xlu0 %3211
  %3213 = vrot.lane.b32.xlu0 %v2995, 112
  %v3214 = vpop.permute.xlu0 %3213
  %3215 = vrot.lane.b32.xlu0 %v2998, 112
  %v3216 = vpop.permute.xlu0 %3215
  %3217 = vrot.lane.b32.xlu0 %v3003, 112
  %v3218 = vpop.permute.xlu0 %3217
  %3219 = vrot.lane.b32.xlu0 %v3006, 112
  %v3220 = vpop.permute.xlu0 %3219
  %3221 = vrot.lane.b32.xlu0 %v3011, 112
  %v3222 = vpop.permute.xlu0 %3221
  %3223 = vrot.lane.b32.xlu0 %v3014, 112
  %v3224 = vpop.permute.xlu0 %3223
  %3225 = vrot.lane.b32.xlu0 %v3019, 112
  %v3226 = vpop.permute.xlu0 %3225
  %3227 = vrot.lane.b32.xlu0 %v3022, 112
  %v3228 = vpop.permute.xlu0 %3227
  %3229 = vrot.lane.b32.xlu0 %v3027, 112
  %v3230 = vpop.permute.xlu0 %3229
  %3231 = vrot.lane.b32.xlu0 %v3030, 112
  %v3232 = vpop.permute.xlu0 %3231
  %3233 = vrot.lane.b32.xlu0 %v3035, 112
  %v3234 = vpop.permute.xlu0 %3233
  %3235 = vrot.lane.b32.xlu0 %v3038, 112
  %v3236 = vpop.permute.xlu0 %3235
  %3237 = vrot.lane.b32.xlu0 %v3043, 112
  %v3238 = vpop.permute.xlu0 %3237
  %3239 = vrot.lane.b32.xlu0 %v3046, 112
  %v3240 = vpop.permute.xlu0 %3239
  %v3305 = vadd.f32 %v2795, %v3114
  %v3306 = vadd.f32 %v2798, %v3116
  %v3307 = vadd.f32 %v2803, %v3118
  %v3308 = vadd.f32 %v2806, %v3120
  %v3309 = vadd.f32 %v2811, %v3122
  %v3310 = vadd.f32 %v2814, %v3124
  %v3311 = vadd.f32 %v2819, %v3126
  %v3312 = vadd.f32 %v2822, %v3128
  %v3313 = vadd.f32 %v2827, %v3130
  %v3314 = vadd.f32 %v2830, %v3132
  %v3315 = vadd.f32 %v2835, %v3134
  %v3316 = vadd.f32 %v2838, %v3136
  %v3317 = vadd.f32 %v2843, %v3138
  %v3318 = vadd.f32 %v2846, %v3140
  %v3319 = vadd.f32 %v2851, %v3142
  %v3320 = vadd.f32 %v2854, %v3144
  %v3321 = vadd.f32 %v2859, %v3146
  %v3322 = vadd.f32 %v2862, %v3148
  %v3323 = vadd.f32 %v2867, %v3150
  %v3324 = vadd.f32 %v2870, %v3152
  %v3325 = vadd.f32 %v2875, %v3154
  %v3326 = vadd.f32 %v2878, %v3156
  %v3327 = vadd.f32 %v2883, %v3158
  %v3328 = vadd.f32 %v2886, %v3160
  %v3329 = vadd.f32 %v2891, %v3162
  %v3330 = vadd.f32 %v2894, %v3164
  %v3331 = vadd.f32 %v2899, %v3166
  %v3332 = vadd.f32 %v2902, %v3168
  %v3333 = vadd.f32 %v2907, %v3170
  %v3334 = vadd.f32 %v2910, %v3172
  %v3335 = vadd.f32 %v2915, %v3174
  %v3336 = vadd.f32 %v2918, %v3176
  %v3337 = vadd.f32 %v2923, %v3178
  %v3338 = vadd.f32 %v2926, %v3180
  %v3339 = vadd.f32 %v2931, %v3182
  %v3340 = vadd.f32 %v2934, %v3184
  %v3341 = vadd.f32 %v2939, %v3186
  %v3342 = vadd.f32 %v2942, %v3188
  %v3343 = vadd.f32 %v2947, %v3190
  %v3344 = vadd.f32 %v2950, %v3192
  %v3345 = vadd.f32 %v2955, %v3194
  %v3346 = vadd.f32 %v2958, %v3196
  %v3347 = vadd.f32 %v2963, %v3198
  %v3348 = vadd.f32 %v2966, %v3200
  %v3349 = vadd.f32 %v2971, %v3202
  %v3350 = vadd.f32 %v2974, %v3204
  %v3351 = vadd.f32 %v2979, %v3206
  %v3352 = vadd.f32 %v2982, %v3208
  %v3353 = vadd.f32 %v2987, %v3210
  %v3354 = vadd.f32 %v2990, %v3212
  %v3355 = vadd.f32 %v2995, %v3214
  %v3356 = vadd.f32 %v2998, %v3216
  %v3357 = vadd.f32 %v3003, %v3218
  %v3358 = vadd.f32 %v3006, %v3220
  %v3359 = vadd.f32 %v3011, %v3222
  %v3360 = vadd.f32 %v3014, %v3224
  %v3361 = vadd.f32 %v3019, %v3226
  %v3362 = vadd.f32 %v3022, %v3228
  %v3363 = vadd.f32 %v3027, %v3230
  %v3364 = vadd.f32 %v3030, %v3232
  %v3365 = vadd.f32 %v3035, %v3234
  %v3366 = vadd.f32 %v3038, %v3236
  %v3367 = vadd.f32 %v3043, %v3238
  %v3368 = vadd.f32 %v3046, %v3240
  %v3369 = vmax.f32 %v3305, 0.0
  %v3370 = vmax.f32 %v3306, 0.0
  %v3371 = vmax.f32 %v3307, 0.0
  %v3372 = vmax.f32 %v3308, 0.0
  %v3373 = vmax.f32 %v3309, 0.0
  %v3374 = vmax.f32 %v3310, 0.0
  %v3375 = vmax.f32 %v3311, 0.0
  %v3376 = vmax.f32 %v3312, 0.0
  %v3377 = vmax.f32 %v3313, 0.0
  %v3378 = vmax.f32 %v3314, 0.0
  %v3379 = vmax.f32 %v3315, 0.0
  %v3380 = vmax.f32 %v3316, 0.0
  %v3381 = vmax.f32 %v3317, 0.0
  %v3382 = vmax.f32 %v3318, 0.0
  %v3383 = vmax.f32 %v3319, 0.0
  %v3384 = vmax.f32 %v3320, 0.0
  %v3385 = vmax.f32 %v3321, 0.0
  %v3386 = vmax.f32 %v3322, 0.0
  %v3387 = vmax.f32 %v3323, 0.0
  %v3388 = vmax.f32 %v3324, 0.0
  %v3389 = vmax.f32 %v3325, 0.0
  %v3390 = vmax.f32 %v3326, 0.0
  %v3391 = vmax.f32 %v3327, 0.0
  %v3392 = vmax.f32 %v3328, 0.0
  %v3393 = vmax.f32 %v3329, 0.0
  %v3394 = vmax.f32 %v3330, 0.0
  %v3395 = vmax.f32 %v3331, 0.0
  %v3396 = vmax.f32 %v3332, 0.0
  %v3397 = vmax.f32 %v3333, 0.0
  %v3398 = vmax.f32 %v3334, 0.0
  %v3399 = vmax.f32 %v3335, 0.0
  %v3400 = vmax.f32 %v3336, 0.0
  %v3401 = vmax.f32 %v3337, 0.0
  %v3402 = vmax.f32 %v3338, 0.0
  %v3403 = vmax.f32 %v3339, 0.0
  %v3404 = vmax.f32 %v3340, 0.0
  %v3405 = vmax.f32 %v3341, 0.0
  %v3406 = vmax.f32 %v3342, 0.0
  %v3407 = vmax.f32 %v3343, 0.0
  %v3408 = vmax.f32 %v3344, 0.0
  %v3409 = vmax.f32 %v3345, 0.0
  %v3410 = vmax.f32 %v3346, 0.0
  %v3411 = vmax.f32 %v3347, 0.0
  %v3412 = vmax.f32 %v3348, 0.0
  %v3413 = vmax.f32 %v3349, 0.0
  %v3414 = vmax.f32 %v3350, 0.0
  %v3415 = vmax.f32 %v3351, 0.0
  %v3416 = vmax.f32 %v3352, 0.0
  %v3417 = vmax.f32 %v3353, 0.0
  %v3418 = vmax.f32 %v3354, 0.0
  %v3419 = vmax.f32 %v3355, 0.0
  %v3420 = vmax.f32 %v3356, 0.0
  %v3421 = vmax.f32 %v3357, 0.0
  %v3422 = vmax.f32 %v3358, 0.0
  %v3423 = vmax.f32 %v3359, 0.0
  %v3424 = vmax.f32 %v3360, 0.0
  %v3425 = vmax.f32 %v3361, 0.0
  %v3426 = vmax.f32 %v3362, 0.0
  %v3427 = vmax.f32 %v3363, 0.0
  %v3428 = vmax.f32 %v3364, 0.0
  %v3429 = vmax.f32 %v3365, 0.0
  %v3430 = vmax.f32 %v3366, 0.0
  %v3431 = vmax.f32 %v3367, 0.0
  %v3432 = vmax.f32 %v3368, 0.0
  %vm3433 = vcmask 125952
  %3434 = vst.msk [vmem:[#allocation2] sm:$0xf] %vm3433, 0
  %3435 = vst.msk [vmem:[#allocation2 + $0x4] sm:$0xf] %vm3433, 0
  %3436 = vst.msk [vmem:[#allocation2 + $0x8] sm:$0xf] %vm3433, 0
  %vm3437 = vcmask 123904
  %vm3438 = vsmask.f32 1280
  %vm3439 = vmand %vm3437, %vm3438
  %v3440 = vld [vmem:[#allocation2 + $0xc] sm:$0x3]
  %v3441 = vsel %vm3439, 0, %v3440
  %3442 = vst [vmem:[#allocation2 + $0xc] sm:$0x3] %v3441
  %3443 = vst.msk [vmem:[#allocation2 + $0x10] sm:$0xf] %vm3433, 0
  %3444 = vst.msk [vmem:[#allocation2 + $0x14] sm:$0xf] %vm3433, 0
  %3445 = vst.msk [vmem:[#allocation2 + $0x18] sm:$0xf] %vm3433, 0
  %v3446 = vld [vmem:[#allocation2 + $0x1c] sm:$0x3]
  %v3447 = vsel %vm3439, 0, %v3446
  %3448 = vst [vmem:[#allocation2 + $0x1c] sm:$0x3] %v3447
  %3449 = vst.msk [vmem:[#allocation2 + $0x20] sm:$0xf] %vm3433, 0
  %3450 = vst.msk [vmem:[#allocation2 + $0x24] sm:$0xf] %vm3433, 0
  %3451 = vst.msk [vmem:[#allocation2 + $0x28] sm:$0xf] %vm3433, 0
  %v3452 = vld [vmem:[#allocation2 + $0x2c] sm:$0x3]
  %v3453 = vsel %vm3439, 0, %v3452
  %3454 = vst [vmem:[#allocation2 + $0x2c] sm:$0x3] %v3453
  %3455 = vst.msk [vmem:[#allocation2 + $0x30] sm:$0xf] %vm3433, 0
  %3456 = vst.msk [vmem:[#allocation2 + $0x34] sm:$0xf] %vm3433, 0
  %3457 = vst.msk [vmem:[#allocation2 + $0x38] sm:$0xf] %vm3433, 0
  %v3458 = vld [vmem:[#allocation2 + $0x3c] sm:$0x3]
  %v3459 = vsel %vm3439, 0, %v3458
  %3460 = vst [vmem:[#allocation2 + $0x3c] sm:$0x3] %v3459
  %3461 = vst.msk [vmem:[#allocation2 + $0x40] sm:$0xf] %vm3433, 0
  %3462 = vst.msk [vmem:[#allocation2 + $0x44] sm:$0xf] %vm3433, 0
  %3463 = vst.msk [vmem:[#allocation2 + $0x48] sm:$0xf] %vm3433, 0
  %v3464 = vld [vmem:[#allocation2 + $0x4c] sm:$0x3]
  %v3465 = vsel %vm3439, 0, %v3464
  %3466 = vst [vmem:[#allocation2 + $0x4c] sm:$0x3] %v3465
  %3467 = vst.msk [vmem:[#allocation2 + $0x50] sm:$0xf] %vm3433, 0
  %3468 = vst.msk [vmem:[#allocation2 + $0x54] sm:$0xf] %vm3433, 0
  %3469 = vst.msk [vmem:[#allocation2 + $0x58] sm:$0xf] %vm3433, 0
  %v3470 = vld [vmem:[#allocation2 + $0x5c] sm:$0x3]
  %v3471 = vsel %vm3439, 0, %v3470
  %3472 = vst [vmem:[#allocation2 + $0x5c] sm:$0x3] %v3471
  %3473 = vst.msk [vmem:[#allocation2 + $0x60] sm:$0xf] %vm3433, 0
  %3474 = vst.msk [vmem:[#allocation2 + $0x64] sm:$0xf] %vm3433, 0
  %3475 = vst.msk [vmem:[#allocation2 + $0x68] sm:$0xf] %vm3433, 0
  %v3476 = vld [vmem:[#allocation2 + $0x6c] sm:$0x3]
  %v3477 = vsel %vm3439, 0, %v3476
  %3478 = vst [vmem:[#allocation2 + $0x6c] sm:$0x3] %v3477
  %3479 = vst.msk [vmem:[#allocation2 + $0x70] sm:$0xf] %vm3433, 0
  %3480 = vst.msk [vmem:[#allocation2 + $0x74] sm:$0xf] %vm3433, 0
  %3481 = vst.msk [vmem:[#allocation2 + $0x78] sm:$0xf] %vm3433, 0
  %v3482 = vld [vmem:[#allocation2 + $0x7c] sm:$0x3]
  %v3483 = vsel %vm3439, 0, %v3482
  %3484 = vst [vmem:[#allocation2 + $0x7c] sm:$0x3] %v3483
  %3485 = vst.msk [vmem:[#allocation2 + $0x80] sm:$0xf] %vm3433, 0
  %3486 = vst.msk [vmem:[#allocation2 + $0x84] sm:$0xf] %vm3433, 0
  %3487 = vst.msk [vmem:[#allocation2 + $0x88] sm:$0xf] %vm3433, 0
  %v3488 = vld [vmem:[#allocation2 + $0x8c] sm:$0x3]
  %v3489 = vsel %vm3439, 0, %v3488
  %3490 = vst [vmem:[#allocation2 + $0x8c] sm:$0x3] %v3489
  %3491 = vst.msk [vmem:[#allocation2 + $0x90] sm:$0xf] %vm3433, 0
  %3492 = vst.msk [vmem:[#allocation2 + $0x94] sm:$0xf] %vm3433, 0
  %3493 = vst.msk [vmem:[#allocation2 + $0x98] sm:$0xf] %vm3433, 0
  %v3494 = vld [vmem:[#allocation2 + $0x9c] sm:$0x3]
  %v3495 = vsel %vm3439, 0, %v3494
  %3496 = vst [vmem:[#allocation2 + $0x9c] sm:$0x3] %v3495
  %3497 = vst.msk [vmem:[#allocation2 + $0xa0] sm:$0xf] %vm3433, 0
  %3498 = vst.msk [vmem:[#allocation2 + $0xa4] sm:$0xf] %vm3433, 0
  %3499 = vst.msk [vmem:[#allocation2 + $0xa8] sm:$0xf] %vm3433, 0
  %v3500 = vld [vmem:[#allocation2 + $0xac] sm:$0x3]
  %v3501 = vsel %vm3439, 0, %v3500
  %3502 = vst [vmem:[#allocation2 + $0xac] sm:$0x3] %v3501
  %3503 = vst.msk [vmem:[#allocation2 + $0xb0] sm:$0xf] %vm3433, 0
  %3504 = vst.msk [vmem:[#allocation2 + $0xb4] sm:$0xf] %vm3433, 0
  %3505 = vst.msk [vmem:[#allocation2 + $0xb8] sm:$0xf] %vm3433, 0
  %v3506 = vld [vmem:[#allocation2 + $0xbc] sm:$0x3]
  %v3507 = vsel %vm3439, 0, %v3506
  %3508 = vst [vmem:[#allocation2 + $0xbc] sm:$0x3] %v3507
  %3509 = vst.msk [vmem:[#allocation2 + $0xc0] sm:$0xf] %vm3433, 0
  %3510 = vst.msk [vmem:[#allocation2 + $0xc4] sm:$0xf] %vm3433, 0
  %3511 = vst.msk [vmem:[#allocation2 + $0xc8] sm:$0xf] %vm3433, 0
  %v3512 = vld [vmem:[#allocation2 + $0xcc] sm:$0x3]
  %v3513 = vsel %vm3439, 0, %v3512
  %3514 = vst [vmem:[#allocation2 + $0xcc] sm:$0x3] %v3513
  %3515 = vst.msk [vmem:[#allocation2 + $0xd0] sm:$0xf] %vm3433, 0
  %3516 = vst.msk [vmem:[#allocation2 + $0xd4] sm:$0xf] %vm3433, 0
  %3517 = vst.msk [vmem:[#allocation2 + $0xd8] sm:$0xf] %vm3433, 0
  %v3518 = vld [vmem:[#allocation2 + $0xdc] sm:$0x3]
  %v3519 = vsel %vm3439, 0, %v3518
  %3520 = vst [vmem:[#allocation2 + $0xdc] sm:$0x3] %v3519
  %3521 = vst.msk [vmem:[#allocation2 + $0xe0] sm:$0xf] %vm3433, 0
  %3522 = vst.msk [vmem:[#allocation2 + $0xe4] sm:$0xf] %vm3433, 0
  %3523 = vst.msk [vmem:[#allocation2 + $0xe8] sm:$0xf] %vm3433, 0
  %v3524 = vld [vmem:[#allocation2 + $0xec] sm:$0x3]
  %v3525 = vsel %vm3439, 0, %v3524
  %3526 = vst [vmem:[#allocation2 + $0xec] sm:$0x3] %v3525
  %3527 = vst.msk [vmem:[#allocation2 + $0xf0] sm:$0xf] %vm3433, 0
  %3528 = vst.msk [vmem:[#allocation2 + $0xf4] sm:$0xf] %vm3433, 0
  %3529 = vst.msk [vmem:[#allocation2 + $0xf8] sm:$0xf] %vm3433, 0
  %v3530 = vld [vmem:[#allocation2 + $0xfc] sm:$0x3]
  %v3531 = vsel %vm3439, 0, %v3530
  %3532 = vst [vmem:[#allocation2 + $0xfc] sm:$0x3] %v3531
  %3533 = vst.msk [vmem:[#allocation2 + $0x100] sm:$0xf] %vm3433, 0
  %3534 = vst.msk [vmem:[#allocation2 + $0x104] sm:$0xf] %vm3433, 0
  %3535 = vst.msk [vmem:[#allocation2 + $0x108] sm:$0xf] %vm3433, 0
  %v3536 = vld [vmem:[#allocation2 + $0x10c] sm:$0x3]
  %v3537 = vsel %vm3439, 0, %v3536
  %3538 = vst [vmem:[#allocation2 + $0x10c] sm:$0x3] %v3537
  %3539 = vst.msk [vmem:[#allocation2 + $0x110] sm:$0xf] %vm3433, 0
  %3540 = vst.msk [vmem:[#allocation2 + $0x114] sm:$0xf] %vm3433, 0
  %3541 = vst.msk [vmem:[#allocation2 + $0x118] sm:$0xf] %vm3433, 0
  %v3542 = vld [vmem:[#allocation2 + $0x11c] sm:$0x3]
  %v3543 = vsel %vm3439, 0, %v3542
  %3544 = vst [vmem:[#allocation2 + $0x11c] sm:$0x3] %v3543
  %3545 = vst.msk [vmem:[#allocation2 + $0x120] sm:$0xf] %vm3433, 0
  %3546 = vst.msk [vmem:[#allocation2 + $0x124] sm:$0xf] %vm3433, 0
  %3547 = vst.msk [vmem:[#allocation2 + $0x128] sm:$0xf] %vm3433, 0
  %v3548 = vld [vmem:[#allocation2 + $0x12c] sm:$0x3]
  %v3549 = vsel %vm3439, 0, %v3548
  %3550 = vst [vmem:[#allocation2 + $0x12c] sm:$0x3] %v3549
  %3551 = vst.msk [vmem:[#allocation2 + $0x130] sm:$0xf] %vm3433, 0
  %3552 = vst.msk [vmem:[#allocation2 + $0x134] sm:$0xf] %vm3433, 0
  %3553 = vst.msk [vmem:[#allocation2 + $0x138] sm:$0xf] %vm3433, 0
  %v3554 = vld [vmem:[#allocation2 + $0x13c] sm:$0x3]
  %v3555 = vsel %vm3439, 0, %v3554
  %3556 = vst [vmem:[#allocation2 + $0x13c] sm:$0x3] %v3555
  %3557 = vst.msk [vmem:[#allocation2 + $0x140] sm:$0xf] %vm3433, 0
  %3558 = vst.msk [vmem:[#allocation2 + $0x144] sm:$0xf] %vm3433, 0
  %3559 = vst.msk [vmem:[#allocation2 + $0x148] sm:$0xf] %vm3433, 0
  %v3560 = vld [vmem:[#allocation2 + $0x14c] sm:$0x3]
  %v3561 = vsel %vm3439, 0, %v3560
  %3562 = vst [vmem:[#allocation2 + $0x14c] sm:$0x3] %v3561
  %3563 = vst.msk [vmem:[#allocation2 + $0x150] sm:$0xf] %vm3433, 0
  %3564 = vst.msk [vmem:[#allocation2 + $0x154] sm:$0xf] %vm3433, 0
  %3565 = vst.msk [vmem:[#allocation2 + $0x158] sm:$0xf] %vm3433, 0
  %v3566 = vld [vmem:[#allocation2 + $0x15c] sm:$0x3]
  %v3567 = vsel %vm3439, 0, %v3566
  %3568 = vst [vmem:[#allocation2 + $0x15c] sm:$0x3] %v3567
  %3569 = vst.msk [vmem:[#allocation2 + $0x160] sm:$0xf] %vm3433, 0
  %3570 = vst.msk [vmem:[#allocation2 + $0x164] sm:$0xf] %vm3433, 0
  %3571 = vst.msk [vmem:[#allocation2 + $0x168] sm:$0xf] %vm3433, 0
  %v3572 = vld [vmem:[#allocation2 + $0x16c] sm:$0x3]
  %v3573 = vsel %vm3439, 0, %v3572
  %3574 = vst [vmem:[#allocation2 + $0x16c] sm:$0x3] %v3573
  %3575 = vst.msk [vmem:[#allocation2 + $0x170] sm:$0xf] %vm3433, 0
  %3576 = vst.msk [vmem:[#allocation2 + $0x174] sm:$0xf] %vm3433, 0
  %3577 = vst.msk [vmem:[#allocation2 + $0x178] sm:$0xf] %vm3433, 0
  %v3578 = vld [vmem:[#allocation2 + $0x17c] sm:$0x3]
  %v3579 = vsel %vm3439, 0, %v3578
  %3580 = vst [vmem:[#allocation2 + $0x17c] sm:$0x3] %v3579
  %3581 = vst.msk [vmem:[#allocation2 + $0x180] sm:$0xf] %vm3433, 0
  %3582 = vst.msk [vmem:[#allocation2 + $0x184] sm:$0xf] %vm3433, 0
  %3583 = vst.msk [vmem:[#allocation2 + $0x188] sm:$0xf] %vm3433, 0
  %v3584 = vld [vmem:[#allocation2 + $0x18c] sm:$0x3]
  %v3585 = vsel %vm3439, 0, %v3584
  %3586 = vst [vmem:[#allocation2 + $0x18c] sm:$0x3] %v3585
  %3587 = vst.msk [vmem:[#allocation2 + $0x190] sm:$0xf] %vm3433, 0
  %3588 = vst.msk [vmem:[#allocation2 + $0x194] sm:$0xf] %vm3433, 0
  %3589 = vst.msk [vmem:[#allocation2 + $0x198] sm:$0xf] %vm3433, 0
  %v3590 = vld [vmem:[#allocation2 + $0x19c] sm:$0x3]
  %v3591 = vsel %vm3439, 0, %v3590
  %3592 = vst [vmem:[#allocation2 + $0x19c] sm:$0x3] %v3591
  %3593 = vst.msk [vmem:[#allocation2 + $0x1a0] sm:$0xf] %vm3433, 0
  %3594 = vst.msk [vmem:[#allocation2 + $0x1a4] sm:$0xf] %vm3433, 0
  %3595 = vst.msk [vmem:[#allocation2 + $0x1a8] sm:$0xf] %vm3433, 0
  %v3596 = vld [vmem:[#allocation2 + $0x1ac] sm:$0x3]
  %v3597 = vsel %vm3439, 0, %v3596
  %3598 = vst [vmem:[#allocation2 + $0x1ac] sm:$0x3] %v3597
  %3599 = vst.msk [vmem:[#allocation2 + $0x1b0] sm:$0xf] %vm3433, 0
  %3600 = vst.msk [vmem:[#allocation2 + $0x1b4] sm:$0xf] %vm3433, 0
  %3601 = vst.msk [vmem:[#allocation2 + $0x1b8] sm:$0xf] %vm3433, 0
  %v3602 = vld [vmem:[#allocation2 + $0x1bc] sm:$0x3]
  %v3603 = vsel %vm3439, 0, %v3602
  %3604 = vst [vmem:[#allocation2 + $0x1bc] sm:$0x3] %v3603
  %3605 = vst.msk [vmem:[#allocation2 + $0x1c0] sm:$0xf] %vm3433, 0
  %3606 = vst.msk [vmem:[#allocation2 + $0x1c4] sm:$0xf] %vm3433, 0
  %3607 = vst.msk [vmem:[#allocation2 + $0x1c8] sm:$0xf] %vm3433, 0
  %v3608 = vld [vmem:[#allocation2 + $0x1cc] sm:$0x3]
  %v3609 = vsel %vm3439, 0, %v3608
  %3610 = vst [vmem:[#allocation2 + $0x1cc] sm:$0x3] %v3609
  %3611 = vst.msk [vmem:[#allocation2 + $0x1d0] sm:$0xf] %vm3433, 0
  %3612 = vst.msk [vmem:[#allocation2 + $0x1d4] sm:$0xf] %vm3433, 0
  %3613 = vst.msk [vmem:[#allocation2 + $0x1d8] sm:$0xf] %vm3433, 0
  %v3614 = vld [vmem:[#allocation2 + $0x1dc] sm:$0x3]
  %v3615 = vsel %vm3439, 0, %v3614
  %3616 = vst [vmem:[#allocation2 + $0x1dc] sm:$0x3] %v3615
  %3617 = vst.msk [vmem:[#allocation2 + $0x1e0] sm:$0xf] %vm3433, 0
  %3618 = vst.msk [vmem:[#allocation2 + $0x1e4] sm:$0xf] %vm3433, 0
  %3619 = vst.msk [vmem:[#allocation2 + $0x1e8] sm:$0xf] %vm3433, 0
  %v3620 = vld [vmem:[#allocation2 + $0x1ec] sm:$0x3]
  %v3621 = vsel %vm3439, 0, %v3620
  %3622 = vst [vmem:[#allocation2 + $0x1ec] sm:$0x3] %v3621
  %3623 = vst.msk [vmem:[#allocation2 + $0x1f0] sm:$0xf] %vm3433, 0
  %3624 = vst.msk [vmem:[#allocation2 + $0x1f4] sm:$0xf] %vm3433, 0
  %3625 = vst.msk [vmem:[#allocation2 + $0x1f8] sm:$0xf] %vm3433, 0
  %v3626 = vld [vmem:[#allocation2 + $0x1fc] sm:$0x3]
  %v3627 = vsel %vm3439, 0, %v3626
  %3628 = vst [vmem:[#allocation2 + $0x1fc] sm:$0x3] %v3627
  %3629 = vst.msk [vmem:[#allocation2 + $0x200] sm:$0xf] %vm3433, 0
  %3630 = vst.msk [vmem:[#allocation2 + $0x204] sm:$0xf] %vm3433, 0
  %3631 = vst.msk [vmem:[#allocation2 + $0x208] sm:$0xf] %vm3433, 0
  %v3632 = vld [vmem:[#allocation2 + $0x20c] sm:$0x3]
  %v3633 = vsel %vm3439, 0, %v3632
  %3634 = vst [vmem:[#allocation2 + $0x20c] sm:$0x3] %v3633
  %3635 = vst.msk [vmem:[#allocation2 + $0x210] sm:$0xf] %vm3433, 0
  %3636 = vst.msk [vmem:[#allocation2 + $0x214] sm:$0xf] %vm3433, 0
  %3637 = vst.msk [vmem:[#allocation2 + $0x218] sm:$0xf] %vm3433, 0
  %v3638 = vld [vmem:[#allocation2 + $0x21c] sm:$0x3]
  %v3639 = vsel %vm3439, 0, %v3638
  %3640 = vst [vmem:[#allocation2 + $0x21c] sm:$0x3] %v3639
  %3641 = vst.msk [vmem:[#allocation2 + $0x220] sm:$0xf] %vm3433, 0
  %3642 = vst.msk [vmem:[#allocation2 + $0x224] sm:$0xf] %vm3433, 0
  %3643 = vst.msk [vmem:[#allocation2 + $0x228] sm:$0xf] %vm3433, 0
  %v3644 = vld [vmem:[#allocation2 + $0x22c] sm:$0x3]
  %v3645 = vsel %vm3439, 0, %v3644
  %3646 = vst [vmem:[#allocation2 + $0x22c] sm:$0x3] %v3645
  %3647 = vst.msk [vmem:[#allocation2 + $0x230] sm:$0xf] %vm3433, 0
  %3648 = vst.msk [vmem:[#allocation2 + $0x234] sm:$0xf] %vm3433, 0
  %3649 = vst.msk [vmem:[#allocation2 + $0x238] sm:$0xf] %vm3433, 0
  %v3650 = vld [vmem:[#allocation2 + $0x23c] sm:$0x3]
  %v3651 = vsel %vm3439, 0, %v3650
  %3652 = vst [vmem:[#allocation2 + $0x23c] sm:$0x3] %v3651
  %3653 = vst.msk [vmem:[#allocation2 + $0x240] sm:$0xf] %vm3433, 0
  %3654 = vst.msk [vmem:[#allocation2 + $0x244] sm:$0xf] %vm3433, 0
  %3655 = vst.msk [vmem:[#allocation2 + $0x248] sm:$0xf] %vm3433, 0
  %v3656 = vld [vmem:[#allocation2 + $0x24c] sm:$0x3]
  %v3657 = vsel %vm3439, 0, %v3656
  %3658 = vst [vmem:[#allocation2 + $0x24c] sm:$0x3] %v3657
  %3659 = vst.msk [vmem:[#allocation2 + $0x250] sm:$0xf] %vm3433, 0
  %3660 = vst.msk [vmem:[#allocation2 + $0x254] sm:$0xf] %vm3433, 0
  %3661 = vst.msk [vmem:[#allocation2 + $0x258] sm:$0xf] %vm3433, 0
  %v3662 = vld [vmem:[#allocation2 + $0x25c] sm:$0x3]
  %v3663 = vsel %vm3439, 0, %v3662
  %3664 = vst [vmem:[#allocation2 + $0x25c] sm:$0x3] %v3663
  %3665 = vst.msk [vmem:[#allocation2 + $0x260] sm:$0xf] %vm3433, 0
  %3666 = vst.msk [vmem:[#allocation2 + $0x264] sm:$0xf] %vm3433, 0
  %3667 = vst.msk [vmem:[#allocation2 + $0x268] sm:$0xf] %vm3433, 0
  %v3668 = vld [vmem:[#allocation2 + $0x26c] sm:$0x3]
  %v3669 = vsel %vm3439, 0, %v3668
  %3670 = vst [vmem:[#allocation2 + $0x26c] sm:$0x3] %v3669
  %3671 = vst.msk [vmem:[#allocation2 + $0x270] sm:$0xf] %vm3433, 0
  %3672 = vst.msk [vmem:[#allocation2 + $0x274] sm:$0xf] %vm3433, 0
  %3673 = vst.msk [vmem:[#allocation2 + $0x278] sm:$0xf] %vm3433, 0
  %v3674 = vld [vmem:[#allocation2 + $0x27c] sm:$0x3]
  %v3675 = vsel %vm3439, 0, %v3674
  %3676 = vst [vmem:[#allocation2 + $0x27c] sm:$0x3] %v3675
  %3677 = vst.msk [vmem:[#allocation2 + $0x280] sm:$0xf] %vm3433, 0
  %3678 = vst.msk [vmem:[#allocation2 + $0x284] sm:$0xf] %vm3433, 0
  %3679 = vst.msk [vmem:[#allocation2 + $0x288] sm:$0xf] %vm3433, 0
  %v3680 = vld [vmem:[#allocation2 + $0x28c] sm:$0x3]
  %v3681 = vsel %vm3439, 0, %v3680
  %3682 = vst [vmem:[#allocation2 + $0x28c] sm:$0x3] %v3681
  %3683 = vst.msk [vmem:[#allocation2 + $0x290] sm:$0xf] %vm3433, 0
  %3684 = vst.msk [vmem:[#allocation2 + $0x294] sm:$0xf] %vm3433, 0
  %3685 = vst.msk [vmem:[#allocation2 + $0x298] sm:$0xf] %vm3433, 0
  %v3686 = vld [vmem:[#allocation2 + $0x29c] sm:$0x3]
  %v3687 = vsel %vm3439, 0, %v3686
  %3688 = vst [vmem:[#allocation2 + $0x29c] sm:$0x3] %v3687
  %3689 = vst.msk [vmem:[#allocation2 + $0x2a0] sm:$0xf] %vm3433, 0
  %3690 = vst.msk [vmem:[#allocation2 + $0x2a4] sm:$0xf] %vm3433, 0
  %3691 = vst.msk [vmem:[#allocation2 + $0x2a8] sm:$0xf] %vm3433, 0
  %v3692 = vld [vmem:[#allocation2 + $0x2ac] sm:$0x3]
  %v3693 = vsel %vm3439, 0, %v3692
  %3694 = vst [vmem:[#allocation2 + $0x2ac] sm:$0x3] %v3693
  %3695 = vst.msk [vmem:[#allocation2 + $0x2b0] sm:$0xf] %vm3433, 0
  %3696 = vst.msk [vmem:[#allocation2 + $0x2b4] sm:$0xf] %vm3433, 0
  %3697 = vst.msk [vmem:[#allocation2 + $0x2b8] sm:$0xf] %vm3433, 0
  %v3698 = vld [vmem:[#allocation2 + $0x2bc] sm:$0x3]
  %v3699 = vsel %vm3439, 0, %v3698
  %3700 = vst [vmem:[#allocation2 + $0x2bc] sm:$0x3] %v3699
  %v3701 = vpack.c.bf16 %v3370, %v3369
  %v3702 = vpack.c.bf16 %v3372, %v3371
  %v3703 = vpack.c.bf16 %v3374, %v3373
  %v3704 = vpack.c.bf16 %v3376, %v3375
  %v3705 = vpack.c.bf16 %v3378, %v3377
  %v3706 = vpack.c.bf16 %v3380, %v3379
  %v3707 = vpack.c.bf16 %v3382, %v3381
  %v3708 = vpack.c.bf16 %v3384, %v3383
  %v3709 = vpack.c.bf16 %v3386, %v3385
  %v3710 = vpack.c.bf16 %v3388, %v3387
  %v3711 = vpack.c.bf16 %v3390, %v3389
  %v3712 = vpack.c.bf16 %v3392, %v3391
  %v3713 = vpack.c.bf16 %v3394, %v3393
  %v3714 = vpack.c.bf16 %v3396, %v3395
  %v3715 = vpack.c.bf16 %v3398, %v3397
  %v3716 = vpack.c.bf16 %v3400, %v3399
  %v3717 = vpack.c.bf16 %v3402, %v3401
  %v3718 = vpack.c.bf16 %v3404, %v3403
  %v3719 = vpack.c.bf16 %v3406, %v3405
  %v3720 = vpack.c.bf16 %v3408, %v3407
  %v3721 = vpack.c.bf16 %v3410, %v3409
  %v3722 = vpack.c.bf16 %v3412, %v3411
  %v3723 = vpack.c.bf16 %v3414, %v3413
  %v3724 = vpack.c.bf16 %v3416, %v3415
  %v3725 = vpack.c.bf16 %v3418, %v3417
  %v3726 = vpack.c.bf16 %v3420, %v3419
  %v3727 = vpack.c.bf16 %v3422, %v3421
  %v3728 = vpack.c.bf16 %v3424, %v3423
  %v3729 = vpack.c.bf16 %v3426, %v3425
  %v3730 = vpack.c.bf16 %v3428, %v3427
  %v3731 = vpack.c.bf16 %v3430, %v3429
  %v3732 = vpack.c.bf16 %v3432, %v3431
  %v3765 = vunpack.c.l.b16 %v3701
  %v3766 = vunpack.c.h.b16 %v3701
  %v3767 = vunpack.c.l.b16 %v3702
  %v3768 = vunpack.c.h.b16 %v3702
  %v3769 = vunpack.c.l.b16 %v3703
  %v3770 = vunpack.c.h.b16 %v3703
  %v3771 = vunpack.c.l.b16 %v3704
  %v3772 = vunpack.c.h.b16 %v3704
  %v3773 = vunpack.c.l.b16 %v3705
  %v3774 = vunpack.c.h.b16 %v3705
  %v3775 = vunpack.c.l.b16 %v3706
  %v3776 = vunpack.c.h.b16 %v3706
  %v3777 = vunpack.c.l.b16 %v3707
  %v3778 = vunpack.c.h.b16 %v3707
  %v3779 = vunpack.c.l.b16 %v3708
  %v3780 = vunpack.c.h.b16 %v3708
  %v3781 = vunpack.c.l.b16 %v3709
  %v3782 = vunpack.c.h.b16 %v3709
  %v3783 = vunpack.c.l.b16 %v3710
  %v3784 = vunpack.c.h.b16 %v3710
  %v3785 = vunpack.c.l.b16 %v3711
  %v3786 = vunpack.c.h.b16 %v3711
  %v3787 = vunpack.c.l.b16 %v3712
  %v3788 = vunpack.c.h.b16 %v3712
  %v3789 = vunpack.c.l.b16 %v3713
  %v3790 = vunpack.c.h.b16 %v3713
  %v3791 = vunpack.c.l.b16 %v3714
  %v3792 = vunpack.c.h.b16 %v3714
  %v3793 = vunpack.c.l.b16 %v3715
  %v3794 = vunpack.c.h.b16 %v3715
  %v3795 = vunpack.c.l.b16 %v3716
  %v3796 = vunpack.c.h.b16 %v3716
  %v3797 = vunpack.c.l.b16 %v3717
  %v3798 = vunpack.c.h.b16 %v3717
  %v3799 = vunpack.c.l.b16 %v3718
  %v3800 = vunpack.c.h.b16 %v3718
  %v3801 = vunpack.c.l.b16 %v3719
  %v3802 = vunpack.c.h.b16 %v3719
  %v3803 = vunpack.c.l.b16 %v3720
  %v3804 = vunpack.c.h.b16 %v3720
  %v3805 = vunpack.c.l.b16 %v3721
  %v3806 = vunpack.c.h.b16 %v3721
  %v3807 = vunpack.c.l.b16 %v3722
  %v3808 = vunpack.c.h.b16 %v3722
  %v3809 = vunpack.c.l.b16 %v3723
  %v3810 = vunpack.c.h.b16 %v3723
  %v3811 = vunpack.c.l.b16 %v3724
  %v3812 = vunpack.c.h.b16 %v3724
  %v3813 = vunpack.c.l.b16 %v3725
  %v3814 = vunpack.c.h.b16 %v3725
  %v3815 = vunpack.c.l.b16 %v3726
  %v3816 = vunpack.c.h.b16 %v3726
  %v3817 = vunpack.c.l.b16 %v3727
  %v3818 = vunpack.c.h.b16 %v3727
  %v3819 = vunpack.c.l.b16 %v3728
  %v3820 = vunpack.c.h.b16 %v3728
  %v3821 = vunpack.c.l.b16 %v3729
  %v3822 = vunpack.c.h.b16 %v3729
  %v3823 = vunpack.c.l.b16 %v3730
  %v3824 = vunpack.c.h.b16 %v3730
  %v3825 = vunpack.c.l.b16 %v3731
  %v3826 = vunpack.c.h.b16 %v3731
  %v3827 = vunpack.c.l.b16 %v3732
  %v3828 = vunpack.c.h.b16 %v3732
  %v3829 = vpack.c.b16 %v3765, %v3765
  %v3830 = vpack.c.b16 %v3766, %v3766
  %v3831 = vpack.c.b16 %v3767, %v3767
  %v3832 = vpack.c.b16 %v3768, %v3768
  %v3833 = vpack.c.b16 %v3769, %v3769
  %v3834 = vpack.c.b16 %v3770, %v3770
  %v3835 = vpack.c.b16 %v3771, %v3771
  %v3836 = vpack.c.b16 %v3772, %v3772
  %v3837 = vpack.c.b16 %v3773, %v3773
  %v3838 = vpack.c.b16 %v3774, %v3774
  %v3839 = vpack.c.b16 %v3775, %v3775
  %v3840 = vpack.c.b16 %v3776, %v3776
  %v3841 = vpack.c.b16 %v3777, %v3777
  %v3842 = vpack.c.b16 %v3778, %v3778
  %v3843 = vpack.c.b16 %v3779, %v3779
  %v3844 = vpack.c.b16 %v3780, %v3780
  %v3845 = vpack.c.b16 %v3781, %v3781
  %v3846 = vpack.c.b16 %v3782, %v3782
  %v3847 = vpack.c.b16 %v3783, %v3783
  %v3848 = vpack.c.b16 %v3784, %v3784
  %v3849 = vpack.c.b16 %v3785, %v3785
  %v3850 = vpack.c.b16 %v3786, %v3786
  %v3851 = vpack.c.b16 %v3787, %v3787
  %v3852 = vpack.c.b16 %v3788, %v3788
  %v3853 = vpack.c.b16 %v3789, %v3789
  %v3854 = vpack.c.b16 %v3790, %v3790
  %v3855 = vpack.c.b16 %v3791, %v3791
  %v3856 = vpack.c.b16 %v3792, %v3792
  %v3857 = vpack.c.b16 %v3793, %v3793
  %v3858 = vpack.c.b16 %v3794, %v3794
  %v3859 = vpack.c.b16 %v3795, %v3795
  %v3860 = vpack.c.b16 %v3796, %v3796
  %v3861 = vpack.c.b16 %v3797, %v3797
  %v3862 = vpack.c.b16 %v3798, %v3798
  %v3863 = vpack.c.b16 %v3799, %v3799
  %v3864 = vpack.c.b16 %v3800, %v3800
  %v3865 = vpack.c.b16 %v3801, %v3801
  %v3866 = vpack.c.b16 %v3802, %v3802
  %v3867 = vpack.c.b16 %v3803, %v3803
  %v3868 = vpack.c.b16 %v3804, %v3804
  %v3869 = vpack.c.b16 %v3805, %v3805
  %v3870 = vpack.c.b16 %v3806, %v3806
  %v3871 = vpack.c.b16 %v3807, %v3807
  %v3872 = vpack.c.b16 %v3808, %v3808
  %v3873 = vpack.c.b16 %v3809, %v3809
  %v3874 = vpack.c.b16 %v3810, %v3810
  %v3875 = vpack.c.b16 %v3811, %v3811
  %v3876 = vpack.c.b16 %v3812, %v3812
  %v3877 = vpack.c.b16 %v3813, %v3813
  %v3878 = vpack.c.b16 %v3814, %v3814
  %v3879 = vpack.c.b16 %v3815, %v3815
  %v3880 = vpack.c.b16 %v3816, %v3816
  %v3881 = vpack.c.b16 %v3817, %v3817
  %v3882 = vpack.c.b16 %v3818, %v3818
  %v3883 = vpack.c.b16 %v3819, %v3819
  %v3884 = vpack.c.b16 %v3820, %v3820
  %v3885 = vpack.c.b16 %v3821, %v3821
  %v3886 = vpack.c.b16 %v3822, %v3822
  %v3887 = vpack.c.b16 %v3823, %v3823
  %v3888 = vpack.c.b16 %v3824, %v3824
  %v3889 = vpack.c.b16 %v3825, %v3825
  %v3890 = vpack.c.b16 %v3826, %v3826
  %v3891 = vpack.c.b16 %v3827, %v3827
  %v3892 = vpack.c.b16 %v3828, %v3828
  %s3957 = scalar_lea.vmem [#allocation2], 48
  %3958 = vst.msk [vmem:[%s3957 + $0x4] sm:$0xf] %vm3433, %v3829
  %3959 = vst.msk [vmem:[%s3957 + $0x8] sm:$0xf] %vm3433, %v3830
  %3960 = vst.msk [vmem:[%s3957 + $0x14] sm:$0xf] %vm3433, %v3831
  %3961 = vst.msk [vmem:[%s3957 + $0x18] sm:$0xf] %vm3433, %v3832
  %3962 = vst.msk [vmem:[%s3957 + $0x24] sm:$0xf] %vm3433, %v3833
  %3963 = vst.msk [vmem:[%s3957 + $0x28] sm:$0xf] %vm3433, %v3834
  %3964 = vst.msk [vmem:[%s3957 + $0x34] sm:$0xf] %vm3433, %v3835
  %3965 = vst.msk [vmem:[%s3957 + $0x38] sm:$0xf] %vm3433, %v3836
  %3966 = vst.msk [vmem:[%s3957 + $0x44] sm:$0xf] %vm3433, %v3837
  %3967 = vst.msk [vmem:[%s3957 + $0x48] sm:$0xf] %vm3433, %v3838
  %3968 = vst.msk [vmem:[%s3957 + $0x54] sm:$0xf] %vm3433, %v3839
  %3969 = vst.msk [vmem:[%s3957 + $0x58] sm:$0xf] %vm3433, %v3840
  %3970 = vst.msk [vmem:[%s3957 + $0x64] sm:$0xf] %vm3433, %v3841
  %3971 = vst.msk [vmem:[%s3957 + $0x68] sm:$0xf] %vm3433, %v3842
  %3972 = vst.msk [vmem:[%s3957 + $0x74] sm:$0xf] %vm3433, %v3843
  %3973 = vst.msk [vmem:[%s3957 + $0x78] sm:$0xf] %vm3433, %v3844
  %3974 = vst.msk [vmem:[%s3957 + $0x84] sm:$0xf] %vm3433, %v3845
  %3975 = vst.msk [vmem:[%s3957 + $0x88] sm:$0xf] %vm3433, %v3846
  %3976 = vst.msk [vmem:[%s3957 + $0x94] sm:$0xf] %vm3433, %v3847
  %3977 = vst.msk [vmem:[%s3957 + $0x98] sm:$0xf] %vm3433, %v3848
  %3978 = vst.msk [vmem:[%s3957 + $0xa4] sm:$0xf] %vm3433, %v3849
  %3979 = vst.msk [vmem:[%s3957 + $0xa8] sm:$0xf] %vm3433, %v3850
  %3980 = vst.msk [vmem:[%s3957 + $0xb4] sm:$0xf] %vm3433, %v3851
  %3981 = vst.msk [vmem:[%s3957 + $0xb8] sm:$0xf] %vm3433, %v3852
  %3982 = vst.msk [vmem:[%s3957 + $0xc4] sm:$0xf] %vm3433, %v3853
  %3983 = vst.msk [vmem:[%s3957 + $0xc8] sm:$0xf] %vm3433, %v3854
  %3984 = vst.msk [vmem:[%s3957 + $0xd4] sm:$0xf] %vm3433, %v3855
  %3985 = vst.msk [vmem:[%s3957 + $0xd8] sm:$0xf] %vm3433, %v3856
  %3986 = vst.msk [vmem:[%s3957 + $0xe4] sm:$0xf] %vm3433, %v3857
  %3987 = vst.msk [vmem:[%s3957 + $0xe8] sm:$0xf] %vm3433, %v3858
  %3988 = vst.msk [vmem:[%s3957 + $0xf4] sm:$0xf] %vm3433, %v3859
  %3989 = vst.msk [vmem:[%s3957 + $0xf8] sm:$0xf] %vm3433, %v3860
  %3990 = vst.msk [vmem:[%s3957 + $0x164] sm:$0xf] %vm3433, %v3861
  %3991 = vst.msk [vmem:[%s3957 + $0x168] sm:$0xf] %vm3433, %v3862
  %3992 = vst.msk [vmem:[%s3957 + $0x174] sm:$0xf] %vm3433, %v3863
  %3993 = vst.msk [vmem:[%s3957 + $0x178] sm:$0xf] %vm3433, %v3864
  %3994 = vst.msk [vmem:[%s3957 + $0x184] sm:$0xf] %vm3433, %v3865
  %3995 = vst.msk [vmem:[%s3957 + $0x188] sm:$0xf] %vm3433, %v3866
  %3996 = vst.msk [vmem:[%s3957 + $0x194] sm:$0xf] %vm3433, %v3867
  %3997 = vst.msk [vmem:[%s3957 + $0x198] sm:$0xf] %vm3433, %v3868
  %3998 = vst.msk [vmem:[%s3957 + $0x1a4] sm:$0xf] %vm3433, %v3869
  %3999 = vst.msk [vmem:[%s3957 + $0x1a8] sm:$0xf] %vm3433, %v3870
  %4000 = vst.msk [vmem:[%s3957 + $0x1b4] sm:$0xf] %vm3433, %v3871
  %4001 = vst.msk [vmem:[%s3957 + $0x1b8] sm:$0xf] %vm3433, %v3872
  %4002 = vst.msk [vmem:[%s3957 + $0x1c4] sm:$0xf] %vm3433, %v3873
  %4003 = vst.msk [vmem:[%s3957 + $0x1c8] sm:$0xf] %vm3433, %v3874
  %4004 = vst.msk [vmem:[%s3957 + $0x1d4] sm:$0xf] %vm3433, %v3875
  %4005 = vst.msk [vmem:[%s3957 + $0x1d8] sm:$0xf] %vm3433, %v3876
  %4006 = vst.msk [vmem:[%s3957 + $0x1e4] sm:$0xf] %vm3433, %v3877
  %4007 = vst.msk [vmem:[%s3957 + $0x1e8] sm:$0xf] %vm3433, %v3878
  %4008 = vst.msk [vmem:[%s3957 + $0x1f4] sm:$0xf] %vm3433, %v3879
  %4009 = vst.msk [vmem:[%s3957 + $0x1f8] sm:$0xf] %vm3433, %v3880
  %4010 = vst.msk [vmem:[%s3957 + $0x204] sm:$0xf] %vm3433, %v3881
  %4011 = vst.msk [vmem:[%s3957 + $0x208] sm:$0xf] %vm3433, %v3882
  %4012 = vst.msk [vmem:[%s3957 + $0x214] sm:$0xf] %vm3433, %v3883
  %4013 = vst.msk [vmem:[%s3957 + $0x218] sm:$0xf] %vm3433, %v3884
  %4014 = vst.msk [vmem:[%s3957 + $0x224] sm:$0xf] %vm3433, %v3885
  %4015 = vst.msk [vmem:[%s3957 + $0x228] sm:$0xf] %vm3433, %v3886
  %4016 = vst.msk [vmem:[%s3957 + $0x234] sm:$0xf] %vm3433, %v3887
  %4017 = vst.msk [vmem:[%s3957 + $0x238] sm:$0xf] %vm3433, %v3888
  %4018 = vst.msk [vmem:[%s3957 + $0x244] sm:$0xf] %vm3433, %v3889
  %4019 = vst.msk [vmem:[%s3957 + $0x248] sm:$0xf] %vm3433, %v3890
  %4020 = vst.msk [vmem:[%s3957 + $0x254] sm:$0xf] %vm3433, %v3891
  %4021 = vst.msk [vmem:[%s3957 + $0x258] sm:$0xf] %vm3433, %v3892
  loop: start=0, step=1, limit=7
  $region22: #{model_forward.1} parent=0 // loop_pre_header
    _
  $region23: #{model_forward.1} parent=0 // loop_header
    %s4023 = sphi 0, %s4027
    %p4024 = scmp.ge.s32.totalorder %s4023, 7
    %v4028 = vphi 0.0, %v8818
    %v4029 = vphi 0.0, %v8819
    %v4030 = vphi 0.0, %v8820
    %v4031 = vphi 0.0, %v8821
    %v4032 = vphi 0.0, %v8822
    %v4033 = vphi 0.0, %v8823
    %v4034 = vphi 0.0, %v8824
    %v4035 = vphi 0.0, %v8825
    %v4036 = vphi 0.0, %v8826
    %v4037 = vphi 0.0, %v8827
    %v4038 = vphi 0.0, %v8828
    %v4039 = vphi 0.0, %v8829
    %v4040 = vphi 0.0, %v8830
    %v4041 = vphi 0.0, %v8831
    %v4042 = vphi 0.0, %v8832
    %v4043 = vphi 0.0, %v8833
    %v4044 = vphi 0.0, %v8834
    %v4045 = vphi 0.0, %v8835
    %v4046 = vphi 0.0, %v8836
    %v4047 = vphi 0.0, %v8837
    %v4048 = vphi 0.0, %v8838
    %v4049 = vphi 0.0, %v8839
    %v4050 = vphi 0.0, %v8840
    %v4051 = vphi 0.0, %v8841
    %v4052 = vphi 0.0, %v8842
    %v4053 = vphi 0.0, %v8843
    %v4054 = vphi 0.0, %v8844
    %v4055 = vphi 0.0, %v8845
    %v4056 = vphi 0.0, %v8846
    %v4057 = vphi 0.0, %v8847
    %v4058 = vphi 0.0, %v8848
    %v4059 = vphi 0.0, %v8849
    %v4060 = vphi 0.0, %v8850
    %v4061 = vphi 0.0, %v8851
    %v4062 = vphi 0.0, %v8852
    %v4063 = vphi 0.0, %v8853
    %v4064 = vphi 0.0, %v8854
    %v4065 = vphi 0.0, %v8855
    %v4066 = vphi 0.0, %v8856
    %v4067 = vphi 0.0, %v8857
    %v4068 = vphi 0.0, %v8858
    %v4069 = vphi 0.0, %v8859
    %v4070 = vphi 0.0, %v8860
    %v4071 = vphi 0.0, %v8861
    %v4072 = vphi 0.0, %v8862
    %v4073 = vphi 0.0, %v8863
    %v4074 = vphi 0.0, %v8864
    %v4075 = vphi 0.0, %v8865
    %v4076 = vphi 0.0, %v8866
    %v4077 = vphi 0.0, %v8867
    %v4078 = vphi 0.0, %v8868
    %v4079 = vphi 0.0, %v8869
    %v4080 = vphi 0.0, %v8870
    %v4081 = vphi 0.0, %v8871
    %v4082 = vphi 0.0, %v8872
    %v4083 = vphi 0.0, %v8873
    %v4084 = vphi 0.0, %v8874
    %v4085 = vphi 0.0, %v8875
    %v4086 = vphi 0.0, %v8876
    %v4087 = vphi 0.0, %v8877
    %v4088 = vphi 0.0, %v8878
    %v4089 = vphi 0.0, %v8879
    %v4090 = vphi 0.0, %v8880
    %v4091 = vphi 0.0, %v8881
  $region24: #{model_forward.1} parent=0 // loop_header_branch
    %4026 = sbr.rel (%p4024) target = $region28
  $region25: #{model_forward.1} parent=0 // loop_body
    %s4092 = smul.u32 %s4023, 4
    %s4093 = smul.addr %s4092, 4
    %s4094 = scalar_lea.vmem [#allocation2], %s4093
    %v4095 = vld [vmem:[%s4094] sm:$0xf]
    %v4096 = vld [vmem:[%s4094 + $0x4] sm:$0xf]
    %v4097 = vld [vmem:[%s4094 + $0x8] sm:$0xf]
    %v4098 = vld [vmem:[%s4094 + $0xc] sm:$0x3]
    %v4099 = vld [vmem:[%s4094 + $0x10] sm:$0xf]
    %v4100 = vld [vmem:[%s4094 + $0x14] sm:$0xf]
    %v4101 = vld [vmem:[%s4094 + $0x18] sm:$0xf]
    %v4102 = vld [vmem:[%s4094 + $0x1c] sm:$0x3]
    %v4103 = vld [vmem:[%s4094 + $0x20] sm:$0xf]
    %v4104 = vld [vmem:[%s4094 + $0x24] sm:$0xf]
    %v4105 = vld [vmem:[%s4094 + $0x28] sm:$0xf]
    %v4106 = vld [vmem:[%s4094 + $0x2c] sm:$0x3]
    %v4107 = vld [vmem:[%s4094 + $0x30] sm:$0xf]
    %v4108 = vld [vmem:[%s4094 + $0x34] sm:$0xf]
    %v4109 = vld [vmem:[%s4094 + $0x38] sm:$0xf]
    %v4110 = vld [vmem:[%s4094 + $0x3c] sm:$0x3]
    %v4111 = vld [vmem:[%s4094 + $0x40] sm:$0xf]
    %v4112 = vld [vmem:[%s4094 + $0x44] sm:$0xf]
    %v4113 = vld [vmem:[%s4094 + $0x48] sm:$0xf]
    %v4114 = vld [vmem:[%s4094 + $0x4c] sm:$0x3]
    %v4115 = vld [vmem:[%s4094 + $0x50] sm:$0xf]
    %v4116 = vld [vmem:[%s4094 + $0x54] sm:$0xf]
    %v4117 = vld [vmem:[%s4094 + $0x58] sm:$0xf]
    %v4118 = vld [vmem:[%s4094 + $0x5c] sm:$0x3]
    %v4119 = vld [vmem:[%s4094 + $0x60] sm:$0xf]
    %v4120 = vld [vmem:[%s4094 + $0x64] sm:$0xf]
    %v4121 = vld [vmem:[%s4094 + $0x68] sm:$0xf]
    %v4122 = vld [vmem:[%s4094 + $0x6c] sm:$0x3]
    %v4123 = vld [vmem:[%s4094 + $0x70] sm:$0xf]
    %v4124 = vld [vmem:[%s4094 + $0x74] sm:$0xf]
    %v4125 = vld [vmem:[%s4094 + $0x78] sm:$0xf]
    %v4126 = vld [vmem:[%s4094 + $0x7c] sm:$0x3]
    %v4127 = vld [vmem:[%s4094 + $0x80] sm:$0xf]
    %v4128 = vld [vmem:[%s4094 + $0x84] sm:$0xf]
    %v4129 = vld [vmem:[%s4094 + $0x88] sm:$0xf]
    %v4130 = vld [vmem:[%s4094 + $0x8c] sm:$0x3]
    %v4131 = vld [vmem:[%s4094 + $0x90] sm:$0xf]
    %v4132 = vld [vmem:[%s4094 + $0x94] sm:$0xf]
    %v4133 = vld [vmem:[%s4094 + $0x98] sm:$0xf]
    %v4134 = vld [vmem:[%s4094 + $0x9c] sm:$0x3]
    %v4135 = vld [vmem:[%s4094 + $0xa0] sm:$0xf]
    %v4136 = vld [vmem:[%s4094 + $0xa4] sm:$0xf]
    %v4137 = vld [vmem:[%s4094 + $0xa8] sm:$0xf]
    %v4138 = vld [vmem:[%s4094 + $0xac] sm:$0x3]
    %v4139 = vld [vmem:[%s4094 + $0xb0] sm:$0xf]
    %v4140 = vld [vmem:[%s4094 + $0xb4] sm:$0xf]
    %v4141 = vld [vmem:[%s4094 + $0xb8] sm:$0xf]
    %v4142 = vld [vmem:[%s4094 + $0xbc] sm:$0x3]
    %v4143 = vld [vmem:[%s4094 + $0xc0] sm:$0xf]
    %v4144 = vld [vmem:[%s4094 + $0xc4] sm:$0xf]
    %v4145 = vld [vmem:[%s4094 + $0xc8] sm:$0xf]
    %v4146 = vld [vmem:[%s4094 + $0xcc] sm:$0x3]
    %v4147 = vld [vmem:[%s4094 + $0xd0] sm:$0xf]
    %v4148 = vld [vmem:[%s4094 + $0xd4] sm:$0xf]
    %v4149 = vld [vmem:[%s4094 + $0xd8] sm:$0xf]
    %v4150 = vld [vmem:[%s4094 + $0xdc] sm:$0x3]
    %v4151 = vld [vmem:[%s4094 + $0xe0] sm:$0xf]
    %v4152 = vld [vmem:[%s4094 + $0xe4] sm:$0xf]
    %v4153 = vld [vmem:[%s4094 + $0xe8] sm:$0xf]
    %v4154 = vld [vmem:[%s4094 + $0xec] sm:$0x3]
    %v4155 = vld [vmem:[%s4094 + $0xf0] sm:$0xf]
    %v4156 = vld [vmem:[%s4094 + $0xf4] sm:$0xf]
    %v4157 = vld [vmem:[%s4094 + $0xf8] sm:$0xf]
    %v4158 = vld [vmem:[%s4094 + $0xfc] sm:$0x3]
    %v4159 = vld [vmem:[%s4094 + $0x160] sm:$0xf]
    %v4160 = vld [vmem:[%s4094 + $0x164] sm:$0xf]
    %v4161 = vld [vmem:[%s4094 + $0x168] sm:$0xf]
    %v4162 = vld [vmem:[%s4094 + $0x16c] sm:$0x3]
    %v4163 = vld [vmem:[%s4094 + $0x170] sm:$0xf]
    %v4164 = vld [vmem:[%s4094 + $0x174] sm:$0xf]
    %v4165 = vld [vmem:[%s4094 + $0x178] sm:$0xf]
    %v4166 = vld [vmem:[%s4094 + $0x17c] sm:$0x3]
    %v4167 = vld [vmem:[%s4094 + $0x180] sm:$0xf]
    %v4168 = vld [vmem:[%s4094 + $0x184] sm:$0xf]
    %v4169 = vld [vmem:[%s4094 + $0x188] sm:$0xf]
    %v4170 = vld [vmem:[%s4094 + $0x18c] sm:$0x3]
    %v4171 = vld [vmem:[%s4094 + $0x190] sm:$0xf]
    %v4172 = vld [vmem:[%s4094 + $0x194] sm:$0xf]
    %v4173 = vld [vmem:[%s4094 + $0x198] sm:$0xf]
    %v4174 = vld [vmem:[%s4094 + $0x19c] sm:$0x3]
    %v4175 = vld [vmem:[%s4094 + $0x1a0] sm:$0xf]
    %v4176 = vld [vmem:[%s4094 + $0x1a4] sm:$0xf]
    %v4177 = vld [vmem:[%s4094 + $0x1a8] sm:$0xf]
    %v4178 = vld [vmem:[%s4094 + $0x1ac] sm:$0x3]
    %v4179 = vld [vmem:[%s4094 + $0x1b0] sm:$0xf]
    %v4180 = vld [vmem:[%s4094 + $0x1b4] sm:$0xf]
    %v4181 = vld [vmem:[%s4094 + $0x1b8] sm:$0xf]
    %v4182 = vld [vmem:[%s4094 + $0x1bc] sm:$0x3]
    %v4183 = vld [vmem:[%s4094 + $0x1c0] sm:$0xf]
    %v4184 = vld [vmem:[%s4094 + $0x1c4] sm:$0xf]
    %v4185 = vld [vmem:[%s4094 + $0x1c8] sm:$0xf]
    %v4186 = vld [vmem:[%s4094 + $0x1cc] sm:$0x3]
    %v4187 = vld [vmem:[%s4094 + $0x1d0] sm:$0xf]
    %v4188 = vld [vmem:[%s4094 + $0x1d4] sm:$0xf]
    %v4189 = vld [vmem:[%s4094 + $0x1d8] sm:$0xf]
    %v4190 = vld [vmem:[%s4094 + $0x1dc] sm:$0x3]
    %v4191 = vld [vmem:[%s4094 + $0x1e0] sm:$0xf]
    %v4192 = vld [vmem:[%s4094 + $0x1e4] sm:$0xf]
    %v4193 = vld [vmem:[%s4094 + $0x1e8] sm:$0xf]
    %v4194 = vld [vmem:[%s4094 + $0x1ec] sm:$0x3]
    %v4195 = vld [vmem:[%s4094 + $0x1f0] sm:$0xf]
    %v4196 = vld [vmem:[%s4094 + $0x1f4] sm:$0xf]
    %v4197 = vld [vmem:[%s4094 + $0x1f8] sm:$0xf]
    %v4198 = vld [vmem:[%s4094 + $0x1fc] sm:$0x3]
    %v4199 = vld [vmem:[%s4094 + $0x200] sm:$0xf]
    %v4200 = vld [vmem:[%s4094 + $0x204] sm:$0xf]
    %v4201 = vld [vmem:[%s4094 + $0x208] sm:$0xf]
    %v4202 = vld [vmem:[%s4094 + $0x20c] sm:$0x3]
    %v4203 = vld [vmem:[%s4094 + $0x210] sm:$0xf]
    %v4204 = vld [vmem:[%s4094 + $0x214] sm:$0xf]
    %v4205 = vld [vmem:[%s4094 + $0x218] sm:$0xf]
    %v4206 = vld [vmem:[%s4094 + $0x21c] sm:$0x3]
    %v4207 = vld [vmem:[%s4094 + $0x220] sm:$0xf]
    %v4208 = vld [vmem:[%s4094 + $0x224] sm:$0xf]
    %v4209 = vld [vmem:[%s4094 + $0x228] sm:$0xf]
    %v4210 = vld [vmem:[%s4094 + $0x22c] sm:$0x3]
    %v4211 = vld [vmem:[%s4094 + $0x230] sm:$0xf]
    %v4212 = vld [vmem:[%s4094 + $0x234] sm:$0xf]
    %v4213 = vld [vmem:[%s4094 + $0x238] sm:$0xf]
    %v4214 = vld [vmem:[%s4094 + $0x23c] sm:$0x3]
    %v4215 = vld [vmem:[%s4094 + $0x240] sm:$0xf]
    %v4216 = vld [vmem:[%s4094 + $0x244] sm:$0xf]
    %v4217 = vld [vmem:[%s4094 + $0x248] sm:$0xf]
    %v4218 = vld [vmem:[%s4094 + $0x24c] sm:$0x3]
    %v4219 = vld [vmem:[%s4094 + $0x250] sm:$0xf]
    %v4220 = vld [vmem:[%s4094 + $0x254] sm:$0xf]
    %v4221 = vld [vmem:[%s4094 + $0x258] sm:$0xf]
    %v4222 = vld [vmem:[%s4094 + $0x25c] sm:$0x3]
    %vm4223 = vsmask.f32 5392
    %vm4224 = vmor %vm3438, %vm4223
    %v4226 = vshrl.u32 %v4095, 16
    %v4228 = vrot.slane %v4226, 6
    %v4229 = vshll.u32 %v4095, 16
    %v4231 = vrot.slane %v4229, 7
    %v4232 = vor.u32 %v4228, %v4231
    %v4233 = vrot.slane %v4232, 4
    %v4235 = vshrl.u32 %v4096, 16
    %v4237 = vrot.slane %v4235, 6
    %v4238 = vshll.u32 %v4096, 16
    %v4240 = vrot.slane %v4238, 7
    %v4241 = vor.u32 %v4237, %v4240
    %v4242 = vsel %vm4224, %v4233, %v4241
    %v4243 = vrot.slane %v4241, 4
    %v4245 = vshrl.u32 %v4097, 16
    %v4247 = vrot.slane %v4245, 6
    %v4248 = vshll.u32 %v4097, 16
    %v4250 = vrot.slane %v4248, 7
    %v4251 = vor.u32 %v4247, %v4250
    %v4252 = vsel %vm4224, %v4243, %v4251
    %v4254 = vshrl.u32 %v4099, 16
    %v4256 = vrot.slane %v4254, 6
    %v4257 = vshll.u32 %v4099, 16
    %v4259 = vrot.slane %v4257, 7
    %v4260 = vor.u32 %v4256, %v4259
    %v4261 = vrot.slane %v4260, 4
    %v4263 = vshrl.u32 %v4100, 16
    %v4265 = vrot.slane %v4263, 6
    %v4266 = vshll.u32 %v4100, 16
    %v4268 = vrot.slane %v4266, 7
    %v4269 = vor.u32 %v4265, %v4268
    %v4270 = vsel %vm4224, %v4261, %v4269
    %v4271 = vrot.slane %v4269, 4
    %v4273 = vshrl.u32 %v4101, 16
    %v4275 = vrot.slane %v4273, 6
    %v4276 = vshll.u32 %v4101, 16
    %v4278 = vrot.slane %v4276, 7
    %v4279 = vor.u32 %v4275, %v4278
    %v4280 = vsel %vm4224, %v4271, %v4279
    %v4282 = vshrl.u32 %v4103, 16
    %v4284 = vrot.slane %v4282, 6
    %v4285 = vshll.u32 %v4103, 16
    %v4287 = vrot.slane %v4285, 7
    %v4288 = vor.u32 %v4284, %v4287
    %v4289 = vrot.slane %v4288, 4
    %v4291 = vshrl.u32 %v4104, 16
    %v4293 = vrot.slane %v4291, 6
    %v4294 = vshll.u32 %v4104, 16
    %v4296 = vrot.slane %v4294, 7
    %v4297 = vor.u32 %v4293, %v4296
    %v4298 = vsel %vm4224, %v4289, %v4297
    %v4299 = vrot.slane %v4297, 4
    %v4301 = vshrl.u32 %v4105, 16
    %v4303 = vrot.slane %v4301, 6
    %v4304 = vshll.u32 %v4105, 16
    %v4306 = vrot.slane %v4304, 7
    %v4307 = vor.u32 %v4303, %v4306
    %v4308 = vsel %vm4224, %v4299, %v4307
    %v4310 = vshrl.u32 %v4107, 16
    %v4312 = vrot.slane %v4310, 6
    %v4313 = vshll.u32 %v4107, 16
    %v4315 = vrot.slane %v4313, 7
    %v4316 = vor.u32 %v4312, %v4315
    %v4317 = vrot.slane %v4316, 4
    %v4319 = vshrl.u32 %v4108, 16
    %v4321 = vrot.slane %v4319, 6
    %v4322 = vshll.u32 %v4108, 16
    %v4324 = vrot.slane %v4322, 7
    %v4325 = vor.u32 %v4321, %v4324
    %v4326 = vsel %vm4224, %v4317, %v4325
    %v4327 = vrot.slane %v4325, 4
    %v4329 = vshrl.u32 %v4109, 16
    %v4331 = vrot.slane %v4329, 6
    %v4332 = vshll.u32 %v4109, 16
    %v4334 = vrot.slane %v4332, 7
    %v4335 = vor.u32 %v4331, %v4334
    %v4336 = vsel %vm4224, %v4327, %v4335
    %v4338 = vshrl.u32 %v4111, 16
    %v4340 = vrot.slane %v4338, 6
    %v4341 = vshll.u32 %v4111, 16
    %v4343 = vrot.slane %v4341, 7
    %v4344 = vor.u32 %v4340, %v4343
    %v4345 = vrot.slane %v4344, 4
    %v4347 = vshrl.u32 %v4112, 16
    %v4349 = vrot.slane %v4347, 6
    %v4350 = vshll.u32 %v4112, 16
    %v4352 = vrot.slane %v4350, 7
    %v4353 = vor.u32 %v4349, %v4352
    %v4354 = vsel %vm4224, %v4345, %v4353
    %v4355 = vrot.slane %v4353, 4
    %v4357 = vshrl.u32 %v4113, 16
    %v4359 = vrot.slane %v4357, 6
    %v4360 = vshll.u32 %v4113, 16
    %v4362 = vrot.slane %v4360, 7
    %v4363 = vor.u32 %v4359, %v4362
    %v4364 = vsel %vm4224, %v4355, %v4363
    %v4366 = vshrl.u32 %v4115, 16
    %v4368 = vrot.slane %v4366, 6
    %v4369 = vshll.u32 %v4115, 16
    %v4371 = vrot.slane %v4369, 7
    %v4372 = vor.u32 %v4368, %v4371
    %v4373 = vrot.slane %v4372, 4
    %v4375 = vshrl.u32 %v4116, 16
    %v4377 = vrot.slane %v4375, 6
    %v4378 = vshll.u32 %v4116, 16
    %v4380 = vrot.slane %v4378, 7
    %v4381 = vor.u32 %v4377, %v4380
    %v4382 = vsel %vm4224, %v4373, %v4381
    %v4383 = vrot.slane %v4381, 4
    %v4385 = vshrl.u32 %v4117, 16
    %v4387 = vrot.slane %v4385, 6
    %v4388 = vshll.u32 %v4117, 16
    %v4390 = vrot.slane %v4388, 7
    %v4391 = vor.u32 %v4387, %v4390
    %v4392 = vsel %vm4224, %v4383, %v4391
    %v4394 = vshrl.u32 %v4119, 16
    %v4396 = vrot.slane %v4394, 6
    %v4397 = vshll.u32 %v4119, 16
    %v4399 = vrot.slane %v4397, 7
    %v4400 = vor.u32 %v4396, %v4399
    %v4401 = vrot.slane %v4400, 4
    %v4403 = vshrl.u32 %v4120, 16
    %v4405 = vrot.slane %v4403, 6
    %v4406 = vshll.u32 %v4120, 16
    %v4408 = vrot.slane %v4406, 7
    %v4409 = vor.u32 %v4405, %v4408
    %v4410 = vsel %vm4224, %v4401, %v4409
    %v4411 = vrot.slane %v4409, 4
    %v4413 = vshrl.u32 %v4121, 16
    %v4415 = vrot.slane %v4413, 6
    %v4416 = vshll.u32 %v4121, 16
    %v4418 = vrot.slane %v4416, 7
    %v4419 = vor.u32 %v4415, %v4418
    %v4420 = vsel %vm4224, %v4411, %v4419
    %v4422 = vshrl.u32 %v4123, 16
    %v4424 = vrot.slane %v4422, 6
    %v4425 = vshll.u32 %v4123, 16
    %v4427 = vrot.slane %v4425, 7
    %v4428 = vor.u32 %v4424, %v4427
    %v4429 = vrot.slane %v4428, 4
    %v4431 = vshrl.u32 %v4124, 16
    %v4433 = vrot.slane %v4431, 6
    %v4434 = vshll.u32 %v4124, 16
    %v4436 = vrot.slane %v4434, 7
    %v4437 = vor.u32 %v4433, %v4436
    %v4438 = vsel %vm4224, %v4429, %v4437
    %v4439 = vrot.slane %v4437, 4
    %v4441 = vshrl.u32 %v4125, 16
    %v4443 = vrot.slane %v4441, 6
    %v4444 = vshll.u32 %v4125, 16
    %v4446 = vrot.slane %v4444, 7
    %v4447 = vor.u32 %v4443, %v4446
    %v4448 = vsel %vm4224, %v4439, %v4447
    %v4450 = vshrl.u32 %v4127, 16
    %v4452 = vrot.slane %v4450, 6
    %v4453 = vshll.u32 %v4127, 16
    %v4455 = vrot.slane %v4453, 7
    %v4456 = vor.u32 %v4452, %v4455
    %v4457 = vrot.slane %v4456, 4
    %v4459 = vshrl.u32 %v4128, 16
    %v4461 = vrot.slane %v4459, 6
    %v4462 = vshll.u32 %v4128, 16
    %v4464 = vrot.slane %v4462, 7
    %v4465 = vor.u32 %v4461, %v4464
    %v4466 = vsel %vm4224, %v4457, %v4465
    %v4467 = vrot.slane %v4465, 4
    %v4469 = vshrl.u32 %v4129, 16
    %v4471 = vrot.slane %v4469, 6
    %v4472 = vshll.u32 %v4129, 16
    %v4474 = vrot.slane %v4472, 7
    %v4475 = vor.u32 %v4471, %v4474
    %v4476 = vsel %vm4224, %v4467, %v4475
    %v4478 = vshrl.u32 %v4131, 16
    %v4480 = vrot.slane %v4478, 6
    %v4481 = vshll.u32 %v4131, 16
    %v4483 = vrot.slane %v4481, 7
    %v4484 = vor.u32 %v4480, %v4483
    %v4485 = vrot.slane %v4484, 4
    %v4487 = vshrl.u32 %v4132, 16
    %v4489 = vrot.slane %v4487, 6
    %v4490 = vshll.u32 %v4132, 16
    %v4492 = vrot.slane %v4490, 7
    %v4493 = vor.u32 %v4489, %v4492
    %v4494 = vsel %vm4224, %v4485, %v4493
    %v4495 = vrot.slane %v4493, 4
    %v4497 = vshrl.u32 %v4133, 16
    %v4499 = vrot.slane %v4497, 6
    %v4500 = vshll.u32 %v4133, 16
    %v4502 = vrot.slane %v4500, 7
    %v4503 = vor.u32 %v4499, %v4502
    %v4504 = vsel %vm4224, %v4495, %v4503
    %v4506 = vshrl.u32 %v4135, 16
    %v4508 = vrot.slane %v4506, 6
    %v4509 = vshll.u32 %v4135, 16
    %v4511 = vrot.slane %v4509, 7
    %v4512 = vor.u32 %v4508, %v4511
    %v4513 = vrot.slane %v4512, 4
    %v4515 = vshrl.u32 %v4136, 16
    %v4517 = vrot.slane %v4515, 6
    %v4518 = vshll.u32 %v4136, 16
    %v4520 = vrot.slane %v4518, 7
    %v4521 = vor.u32 %v4517, %v4520
    %v4522 = vsel %vm4224, %v4513, %v4521
    %v4523 = vrot.slane %v4521, 4
    %v4525 = vshrl.u32 %v4137, 16
    %v4527 = vrot.slane %v4525, 6
    %v4528 = vshll.u32 %v4137, 16
    %v4530 = vrot.slane %v4528, 7
    %v4531 = vor.u32 %v4527, %v4530
    %v4532 = vsel %vm4224, %v4523, %v4531
    %v4534 = vshrl.u32 %v4139, 16
    %v4536 = vrot.slane %v4534, 6
    %v4537 = vshll.u32 %v4139, 16
    %v4539 = vrot.slane %v4537, 7
    %v4540 = vor.u32 %v4536, %v4539
    %v4541 = vrot.slane %v4540, 4
    %v4543 = vshrl.u32 %v4140, 16
    %v4545 = vrot.slane %v4543, 6
    %v4546 = vshll.u32 %v4140, 16
    %v4548 = vrot.slane %v4546, 7
    %v4549 = vor.u32 %v4545, %v4548
    %v4550 = vsel %vm4224, %v4541, %v4549
    %v4551 = vrot.slane %v4549, 4
    %v4553 = vshrl.u32 %v4141, 16
    %v4555 = vrot.slane %v4553, 6
    %v4556 = vshll.u32 %v4141, 16
    %v4558 = vrot.slane %v4556, 7
    %v4559 = vor.u32 %v4555, %v4558
    %v4560 = vsel %vm4224, %v4551, %v4559
    %v4562 = vshrl.u32 %v4143, 16
    %v4564 = vrot.slane %v4562, 6
    %v4565 = vshll.u32 %v4143, 16
    %v4567 = vrot.slane %v4565, 7
    %v4568 = vor.u32 %v4564, %v4567
    %v4569 = vrot.slane %v4568, 4
    %v4571 = vshrl.u32 %v4144, 16
    %v4573 = vrot.slane %v4571, 6
    %v4574 = vshll.u32 %v4144, 16
    %v4576 = vrot.slane %v4574, 7
    %v4577 = vor.u32 %v4573, %v4576
    %v4578 = vsel %vm4224, %v4569, %v4577
    %v4579 = vrot.slane %v4577, 4
    %v4581 = vshrl.u32 %v4145, 16
    %v4583 = vrot.slane %v4581, 6
    %v4584 = vshll.u32 %v4145, 16
    %v4586 = vrot.slane %v4584, 7
    %v4587 = vor.u32 %v4583, %v4586
    %v4588 = vsel %vm4224, %v4579, %v4587
    %v4590 = vshrl.u32 %v4147, 16
    %v4592 = vrot.slane %v4590, 6
    %v4593 = vshll.u32 %v4147, 16
    %v4595 = vrot.slane %v4593, 7
    %v4596 = vor.u32 %v4592, %v4595
    %v4597 = vrot.slane %v4596, 4
    %v4599 = vshrl.u32 %v4148, 16
    %v4601 = vrot.slane %v4599, 6
    %v4602 = vshll.u32 %v4148, 16
    %v4604 = vrot.slane %v4602, 7
    %v4605 = vor.u32 %v4601, %v4604
    %v4606 = vsel %vm4224, %v4597, %v4605
    %v4607 = vrot.slane %v4605, 4
    %v4609 = vshrl.u32 %v4149, 16
    %v4611 = vrot.slane %v4609, 6
    %v4612 = vshll.u32 %v4149, 16
    %v4614 = vrot.slane %v4612, 7
    %v4615 = vor.u32 %v4611, %v4614
    %v4616 = vsel %vm4224, %v4607, %v4615
    %v4618 = vshrl.u32 %v4151, 16
    %v4620 = vrot.slane %v4618, 6
    %v4621 = vshll.u32 %v4151, 16
    %v4623 = vrot.slane %v4621, 7
    %v4624 = vor.u32 %v4620, %v4623
    %v4625 = vrot.slane %v4624, 4
    %v4627 = vshrl.u32 %v4152, 16
    %v4629 = vrot.slane %v4627, 6
    %v4630 = vshll.u32 %v4152, 16
    %v4632 = vrot.slane %v4630, 7
    %v4633 = vor.u32 %v4629, %v4632
    %v4634 = vsel %vm4224, %v4625, %v4633
    %v4635 = vrot.slane %v4633, 4
    %v4637 = vshrl.u32 %v4153, 16
    %v4639 = vrot.slane %v4637, 6
    %v4640 = vshll.u32 %v4153, 16
    %v4642 = vrot.slane %v4640, 7
    %v4643 = vor.u32 %v4639, %v4642
    %v4644 = vsel %vm4224, %v4635, %v4643
    %v4646 = vshrl.u32 %v4155, 16
    %v4648 = vrot.slane %v4646, 6
    %v4649 = vshll.u32 %v4155, 16
    %v4651 = vrot.slane %v4649, 7
    %v4652 = vor.u32 %v4648, %v4651
    %v4653 = vrot.slane %v4652, 4
    %v4655 = vshrl.u32 %v4156, 16
    %v4657 = vrot.slane %v4655, 6
    %v4658 = vshll.u32 %v4156, 16
    %v4660 = vrot.slane %v4658, 7
    %v4661 = vor.u32 %v4657, %v4660
    %v4662 = vsel %vm4224, %v4653, %v4661
    %v4663 = vrot.slane %v4661, 4
    %v4665 = vshrl.u32 %v4157, 16
    %v4667 = vrot.slane %v4665, 6
    %v4668 = vshll.u32 %v4157, 16
    %v4670 = vrot.slane %v4668, 7
    %v4671 = vor.u32 %v4667, %v4670
    %v4672 = vsel %vm4224, %v4663, %v4671
    %v4674 = vshrl.u32 %v4159, 16
    %v4676 = vrot.slane %v4674, 6
    %v4677 = vshll.u32 %v4159, 16
    %v4679 = vrot.slane %v4677, 7
    %v4680 = vor.u32 %v4676, %v4679
    %v4681 = vrot.slane %v4680, 4
    %v4683 = vshrl.u32 %v4160, 16
    %v4685 = vrot.slane %v4683, 6
    %v4686 = vshll.u32 %v4160, 16
    %v4688 = vrot.slane %v4686, 7
    %v4689 = vor.u32 %v4685, %v4688
    %v4690 = vsel %vm4224, %v4681, %v4689
    %v4691 = vrot.slane %v4689, 4
    %v4693 = vshrl.u32 %v4161, 16
    %v4695 = vrot.slane %v4693, 6
    %v4696 = vshll.u32 %v4161, 16
    %v4698 = vrot.slane %v4696, 7
    %v4699 = vor.u32 %v4695, %v4698
    %v4700 = vsel %vm4224, %v4691, %v4699
    %v4702 = vshrl.u32 %v4163, 16
    %v4704 = vrot.slane %v4702, 6
    %v4705 = vshll.u32 %v4163, 16
    %v4707 = vrot.slane %v4705, 7
    %v4708 = vor.u32 %v4704, %v4707
    %v4709 = vrot.slane %v4708, 4
    %v4711 = vshrl.u32 %v4164, 16
    %v4713 = vrot.slane %v4711, 6
    %v4714 = vshll.u32 %v4164, 16
    %v4716 = vrot.slane %v4714, 7
    %v4717 = vor.u32 %v4713, %v4716
    %v4718 = vsel %vm4224, %v4709, %v4717
    %v4719 = vrot.slane %v4717, 4
    %v4721 = vshrl.u32 %v4165, 16
    %v4723 = vrot.slane %v4721, 6
    %v4724 = vshll.u32 %v4165, 16
    %v4726 = vrot.slane %v4724, 7
    %v4727 = vor.u32 %v4723, %v4726
    %v4728 = vsel %vm4224, %v4719, %v4727
    %v4730 = vshrl.u32 %v4167, 16
    %v4732 = vrot.slane %v4730, 6
    %v4733 = vshll.u32 %v4167, 16
    %v4735 = vrot.slane %v4733, 7
    %v4736 = vor.u32 %v4732, %v4735
    %v4737 = vrot.slane %v4736, 4
    %v4739 = vshrl.u32 %v4168, 16
    %v4741 = vrot.slane %v4739, 6
    %v4742 = vshll.u32 %v4168, 16
    %v4744 = vrot.slane %v4742, 7
    %v4745 = vor.u32 %v4741, %v4744
    %v4746 = vsel %vm4224, %v4737, %v4745
    %v4747 = vrot.slane %v4745, 4
    %v4749 = vshrl.u32 %v4169, 16
    %v4751 = vrot.slane %v4749, 6
    %v4752 = vshll.u32 %v4169, 16
    %v4754 = vrot.slane %v4752, 7
    %v4755 = vor.u32 %v4751, %v4754
    %v4756 = vsel %vm4224, %v4747, %v4755
    %v4758 = vshrl.u32 %v4171, 16
    %v4760 = vrot.slane %v4758, 6
    %v4761 = vshll.u32 %v4171, 16
    %v4763 = vrot.slane %v4761, 7
    %v4764 = vor.u32 %v4760, %v4763
    %v4765 = vrot.slane %v4764, 4
    %v4767 = vshrl.u32 %v4172, 16
    %v4769 = vrot.slane %v4767, 6
    %v4770 = vshll.u32 %v4172, 16
    %v4772 = vrot.slane %v4770, 7
    %v4773 = vor.u32 %v4769, %v4772
    %v4774 = vsel %vm4224, %v4765, %v4773
    %v4775 = vrot.slane %v4773, 4
    %v4777 = vshrl.u32 %v4173, 16
    %v4779 = vrot.slane %v4777, 6
    %v4780 = vshll.u32 %v4173, 16
    %v4782 = vrot.slane %v4780, 7
    %v4783 = vor.u32 %v4779, %v4782
    %v4784 = vsel %vm4224, %v4775, %v4783
    %v4786 = vshrl.u32 %v4175, 16
    %v4788 = vrot.slane %v4786, 6
    %v4789 = vshll.u32 %v4175, 16
    %v4791 = vrot.slane %v4789, 7
    %v4792 = vor.u32 %v4788, %v4791
    %v4793 = vrot.slane %v4792, 4
    %v4795 = vshrl.u32 %v4176, 16
    %v4797 = vrot.slane %v4795, 6
    %v4798 = vshll.u32 %v4176, 16
    %v4800 = vrot.slane %v4798, 7
    %v4801 = vor.u32 %v4797, %v4800
    %v4802 = vsel %vm4224, %v4793, %v4801
    %v4803 = vrot.slane %v4801, 4
    %v4805 = vshrl.u32 %v4177, 16
    %v4807 = vrot.slane %v4805, 6
    %v4808 = vshll.u32 %v4177, 16
    %v4810 = vrot.slane %v4808, 7
    %v4811 = vor.u32 %v4807, %v4810
    %v4812 = vsel %vm4224, %v4803, %v4811
    %v4814 = vshrl.u32 %v4179, 16
    %v4816 = vrot.slane %v4814, 6
    %v4817 = vshll.u32 %v4179, 16
    %v4819 = vrot.slane %v4817, 7
    %v4820 = vor.u32 %v4816, %v4819
    %v4821 = vrot.slane %v4820, 4
    %v4823 = vshrl.u32 %v4180, 16
    %v4825 = vrot.slane %v4823, 6
    %v4826 = vshll.u32 %v4180, 16
    %v4828 = vrot.slane %v4826, 7
    %v4829 = vor.u32 %v4825, %v4828
    %v4830 = vsel %vm4224, %v4821, %v4829
    %v4831 = vrot.slane %v4829, 4
    %v4833 = vshrl.u32 %v4181, 16
    %v4835 = vrot.slane %v4833, 6
    %v4836 = vshll.u32 %v4181, 16
    %v4838 = vrot.slane %v4836, 7
    %v4839 = vor.u32 %v4835, %v4838
    %v4840 = vsel %vm4224, %v4831, %v4839
    %v4842 = vshrl.u32 %v4183, 16
    %v4844 = vrot.slane %v4842, 6
    %v4845 = vshll.u32 %v4183, 16
    %v4847 = vrot.slane %v4845, 7
    %v4848 = vor.u32 %v4844, %v4847
    %v4849 = vrot.slane %v4848, 4
    %v4851 = vshrl.u32 %v4184, 16
    %v4853 = vrot.slane %v4851, 6
    %v4854 = vshll.u32 %v4184, 16
    %v4856 = vrot.slane %v4854, 7
    %v4857 = vor.u32 %v4853, %v4856
    %v4858 = vsel %vm4224, %v4849, %v4857
    %v4859 = vrot.slane %v4857, 4
    %v4861 = vshrl.u32 %v4185, 16
    %v4863 = vrot.slane %v4861, 6
    %v4864 = vshll.u32 %v4185, 16
    %v4866 = vrot.slane %v4864, 7
    %v4867 = vor.u32 %v4863, %v4866
    %v4868 = vsel %vm4224, %v4859, %v4867
    %v4870 = vshrl.u32 %v4187, 16
    %v4872 = vrot.slane %v4870, 6
    %v4873 = vshll.u32 %v4187, 16
    %v4875 = vrot.slane %v4873, 7
    %v4876 = vor.u32 %v4872, %v4875
    %v4877 = vrot.slane %v4876, 4
    %v4879 = vshrl.u32 %v4188, 16
    %v4881 = vrot.slane %v4879, 6
    %v4882 = vshll.u32 %v4188, 16
    %v4884 = vrot.slane %v4882, 7
    %v4885 = vor.u32 %v4881, %v4884
    %v4886 = vsel %vm4224, %v4877, %v4885
    %v4887 = vrot.slane %v4885, 4
    %v4889 = vshrl.u32 %v4189, 16
    %v4891 = vrot.slane %v4889, 6
    %v4892 = vshll.u32 %v4189, 16
    %v4894 = vrot.slane %v4892, 7
    %v4895 = vor.u32 %v4891, %v4894
    %v4896 = vsel %vm4224, %v4887, %v4895
    %v4898 = vshrl.u32 %v4191, 16
    %v4900 = vrot.slane %v4898, 6
    %v4901 = vshll.u32 %v4191, 16
    %v4903 = vrot.slane %v4901, 7
    %v4904 = vor.u32 %v4900, %v4903
    %v4905 = vrot.slane %v4904, 4
    %v4907 = vshrl.u32 %v4192, 16
    %v4909 = vrot.slane %v4907, 6
    %v4910 = vshll.u32 %v4192, 16
    %v4912 = vrot.slane %v4910, 7
    %v4913 = vor.u32 %v4909, %v4912
    %v4914 = vsel %vm4224, %v4905, %v4913
    %v4915 = vrot.slane %v4913, 4
    %v4917 = vshrl.u32 %v4193, 16
    %v4919 = vrot.slane %v4917, 6
    %v4920 = vshll.u32 %v4193, 16
    %v4922 = vrot.slane %v4920, 7
    %v4923 = vor.u32 %v4919, %v4922
    %v4924 = vsel %vm4224, %v4915, %v4923
    %v4926 = vshrl.u32 %v4195, 16
    %v4928 = vrot.slane %v4926, 6
    %v4929 = vshll.u32 %v4195, 16
    %v4931 = vrot.slane %v4929, 7
    %v4932 = vor.u32 %v4928, %v4931
    %v4933 = vrot.slane %v4932, 4
    %v4935 = vshrl.u32 %v4196, 16
    %v4937 = vrot.slane %v4935, 6
    %v4938 = vshll.u32 %v4196, 16
    %v4940 = vrot.slane %v4938, 7
    %v4941 = vor.u32 %v4937, %v4940
    %v4942 = vsel %vm4224, %v4933, %v4941
    %v4943 = vrot.slane %v4941, 4
    %v4945 = vshrl.u32 %v4197, 16
    %v4947 = vrot.slane %v4945, 6
    %v4948 = vshll.u32 %v4197, 16
    %v4950 = vrot.slane %v4948, 7
    %v4951 = vor.u32 %v4947, %v4950
    %v4952 = vsel %vm4224, %v4943, %v4951
    %v4954 = vshrl.u32 %v4199, 16
    %v4956 = vrot.slane %v4954, 6
    %v4957 = vshll.u32 %v4199, 16
    %v4959 = vrot.slane %v4957, 7
    %v4960 = vor.u32 %v4956, %v4959
    %v4961 = vrot.slane %v4960, 4
    %v4963 = vshrl.u32 %v4200, 16
    %v4965 = vrot.slane %v4963, 6
    %v4966 = vshll.u32 %v4200, 16
    %v4968 = vrot.slane %v4966, 7
    %v4969 = vor.u32 %v4965, %v4968
    %v4970 = vsel %vm4224, %v4961, %v4969
    %v4971 = vrot.slane %v4969, 4
    %v4973 = vshrl.u32 %v4201, 16
    %v4975 = vrot.slane %v4973, 6
    %v4976 = vshll.u32 %v4201, 16
    %v4978 = vrot.slane %v4976, 7
    %v4979 = vor.u32 %v4975, %v4978
    %v4980 = vsel %vm4224, %v4971, %v4979
    %v4982 = vshrl.u32 %v4203, 16
    %v4984 = vrot.slane %v4982, 6
    %v4985 = vshll.u32 %v4203, 16
    %v4987 = vrot.slane %v4985, 7
    %v4988 = vor.u32 %v4984, %v4987
    %v4989 = vrot.slane %v4988, 4
    %v4991 = vshrl.u32 %v4204, 16
    %v4993 = vrot.slane %v4991, 6
    %v4994 = vshll.u32 %v4204, 16
    %v4996 = vrot.slane %v4994, 7
    %v4997 = vor.u32 %v4993, %v4996
    %v4998 = vsel %vm4224, %v4989, %v4997
    %v4999 = vrot.slane %v4997, 4
    %v5001 = vshrl.u32 %v4205, 16
    %v5003 = vrot.slane %v5001, 6
    %v5004 = vshll.u32 %v4205, 16
    %v5006 = vrot.slane %v5004, 7
    %v5007 = vor.u32 %v5003, %v5006
    %v5008 = vsel %vm4224, %v4999, %v5007
    %v5010 = vshrl.u32 %v4207, 16
    %v5012 = vrot.slane %v5010, 6
    %v5013 = vshll.u32 %v4207, 16
    %v5015 = vrot.slane %v5013, 7
    %v5016 = vor.u32 %v5012, %v5015
    %v5017 = vrot.slane %v5016, 4
    %v5019 = vshrl.u32 %v4208, 16
    %v5021 = vrot.slane %v5019, 6
    %v5022 = vshll.u32 %v4208, 16
    %v5024 = vrot.slane %v5022, 7
    %v5025 = vor.u32 %v5021, %v5024
    %v5026 = vsel %vm4224, %v5017, %v5025
    %v5027 = vrot.slane %v5025, 4
    %v5029 = vshrl.u32 %v4209, 16
    %v5031 = vrot.slane %v5029, 6
    %v5032 = vshll.u32 %v4209, 16
    %v5034 = vrot.slane %v5032, 7
    %v5035 = vor.u32 %v5031, %v5034
    %v5036 = vsel %vm4224, %v5027, %v5035
    %v5038 = vshrl.u32 %v4211, 16
    %v5040 = vrot.slane %v5038, 6
    %v5041 = vshll.u32 %v4211, 16
    %v5043 = vrot.slane %v5041, 7
    %v5044 = vor.u32 %v5040, %v5043
    %v5045 = vrot.slane %v5044, 4
    %v5047 = vshrl.u32 %v4212, 16
    %v5049 = vrot.slane %v5047, 6
    %v5050 = vshll.u32 %v4212, 16
    %v5052 = vrot.slane %v5050, 7
    %v5053 = vor.u32 %v5049, %v5052
    %v5054 = vsel %vm4224, %v5045, %v5053
    %v5055 = vrot.slane %v5053, 4
    %v5057 = vshrl.u32 %v4213, 16
    %v5059 = vrot.slane %v5057, 6
    %v5060 = vshll.u32 %v4213, 16
    %v5062 = vrot.slane %v5060, 7
    %v5063 = vor.u32 %v5059, %v5062
    %v5064 = vsel %vm4224, %v5055, %v5063
    %v5066 = vshrl.u32 %v4215, 16
    %v5068 = vrot.slane %v5066, 6
    %v5069 = vshll.u32 %v4215, 16
    %v5071 = vrot.slane %v5069, 7
    %v5072 = vor.u32 %v5068, %v5071
    %v5073 = vrot.slane %v5072, 4
    %v5075 = vshrl.u32 %v4216, 16
    %v5077 = vrot.slane %v5075, 6
    %v5078 = vshll.u32 %v4216, 16
    %v5080 = vrot.slane %v5078, 7
    %v5081 = vor.u32 %v5077, %v5080
    %v5082 = vsel %vm4224, %v5073, %v5081
    %v5083 = vrot.slane %v5081, 4
    %v5085 = vshrl.u32 %v4217, 16
    %v5087 = vrot.slane %v5085, 6
    %v5088 = vshll.u32 %v4217, 16
    %v5090 = vrot.slane %v5088, 7
    %v5091 = vor.u32 %v5087, %v5090
    %v5092 = vsel %vm4224, %v5083, %v5091
    %v5094 = vshrl.u32 %v4219, 16
    %v5096 = vrot.slane %v5094, 6
    %v5097 = vshll.u32 %v4219, 16
    %v5099 = vrot.slane %v5097, 7
    %v5100 = vor.u32 %v5096, %v5099
    %v5101 = vrot.slane %v5100, 4
    %v5103 = vshrl.u32 %v4220, 16
    %v5105 = vrot.slane %v5103, 6
    %v5106 = vshll.u32 %v4220, 16
    %v5108 = vrot.slane %v5106, 7
    %v5109 = vor.u32 %v5105, %v5108
    %v5110 = vsel %vm4224, %v5101, %v5109
    %v5111 = vrot.slane %v5109, 4
    %v5113 = vshrl.u32 %v4221, 16
    %v5115 = vrot.slane %v5113, 6
    %v5116 = vshll.u32 %v4221, 16
    %v5118 = vrot.slane %v5116, 7
    %v5119 = vor.u32 %v5115, %v5118
    %v5120 = vsel %vm4224, %v5111, %v5119
    %vm5217 = vcmask 1040384
    %vm5218 = vcmask 1044484
    %vm5219 = vmor %vm5217, %vm5218
    %v5220 = vrot.slane %v4095, 7
    %v5221 = vrot.slane %v5220, 4
    %v5222 = vrot.slane %v4096, 7
    %v5223 = vsel %vm5219, %v5221, %v5222
    %v5224 = vrot.slane %v5222, 4
    %v5225 = vrot.slane %v4097, 7
    %v5226 = vsel %vm5219, %v5224, %v5225
    %v5227 = vrot.slane %v4099, 7
    %v5228 = vrot.slane %v5227, 4
    %v5229 = vrot.slane %v4100, 7
    %v5230 = vsel %vm5219, %v5228, %v5229
    %v5231 = vrot.slane %v5229, 4
    %v5232 = vrot.slane %v4101, 7
    %v5233 = vsel %vm5219, %v5231, %v5232
    %v5234 = vrot.slane %v4103, 7
    %v5235 = vrot.slane %v5234, 4
    %v5236 = vrot.slane %v4104, 7
    %v5237 = vsel %vm5219, %v5235, %v5236
    %v5238 = vrot.slane %v5236, 4
    %v5239 = vrot.slane %v4105, 7
    %v5240 = vsel %vm5219, %v5238, %v5239
    %v5241 = vrot.slane %v4107, 7
    %v5242 = vrot.slane %v5241, 4
    %v5243 = vrot.slane %v4108, 7
    %v5244 = vsel %vm5219, %v5242, %v5243
    %v5245 = vrot.slane %v5243, 4
    %v5246 = vrot.slane %v4109, 7
    %v5247 = vsel %vm5219, %v5245, %v5246
    %v5248 = vrot.slane %v4111, 7
    %v5249 = vrot.slane %v5248, 4
    %v5250 = vrot.slane %v4112, 7
    %v5251 = vsel %vm5219, %v5249, %v5250
    %v5252 = vrot.slane %v5250, 4
    %v5253 = vrot.slane %v4113, 7
    %v5254 = vsel %vm5219, %v5252, %v5253
    %v5255 = vrot.slane %v4115, 7
    %v5256 = vrot.slane %v5255, 4
    %v5257 = vrot.slane %v4116, 7
    %v5258 = vsel %vm5219, %v5256, %v5257
    %v5259 = vrot.slane %v5257, 4
    %v5260 = vrot.slane %v4117, 7
    %v5261 = vsel %vm5219, %v5259, %v5260
    %v5262 = vrot.slane %v4119, 7
    %v5263 = vrot.slane %v5262, 4
    %v5264 = vrot.slane %v4120, 7
    %v5265 = vsel %vm5219, %v5263, %v5264
    %v5266 = vrot.slane %v5264, 4
    %v5267 = vrot.slane %v4121, 7
    %v5268 = vsel %vm5219, %v5266, %v5267
    %v5269 = vrot.slane %v4123, 7
    %v5270 = vrot.slane %v5269, 4
    %v5271 = vrot.slane %v4124, 7
    %v5272 = vsel %vm5219, %v5270, %v5271
    %v5273 = vrot.slane %v5271, 4
    %v5274 = vrot.slane %v4125, 7
    %v5275 = vsel %vm5219, %v5273, %v5274
    %v5276 = vrot.slane %v4127, 7
    %v5277 = vrot.slane %v5276, 4
    %v5278 = vrot.slane %v4128, 7
    %v5279 = vsel %vm5219, %v5277, %v5278
    %v5280 = vrot.slane %v5278, 4
    %v5281 = vrot.slane %v4129, 7
    %v5282 = vsel %vm5219, %v5280, %v5281
    %v5283 = vrot.slane %v4131, 7
    %v5284 = vrot.slane %v5283, 4
    %v5285 = vrot.slane %v4132, 7
    %v5286 = vsel %vm5219, %v5284, %v5285
    %v5287 = vrot.slane %v5285, 4
    %v5288 = vrot.slane %v4133, 7
    %v5289 = vsel %vm5219, %v5287, %v5288
    %v5290 = vrot.slane %v4135, 7
    %v5291 = vrot.slane %v5290, 4
    %v5292 = vrot.slane %v4136, 7
    %v5293 = vsel %vm5219, %v5291, %v5292
    %v5294 = vrot.slane %v5292, 4
    %v5295 = vrot.slane %v4137, 7
    %v5296 = vsel %vm5219, %v5294, %v5295
    %v5297 = vrot.slane %v4139, 7
    %v5298 = vrot.slane %v5297, 4
    %v5299 = vrot.slane %v4140, 7
    %v5300 = vsel %vm5219, %v5298, %v5299
    %v5301 = vrot.slane %v5299, 4
    %v5302 = vrot.slane %v4141, 7
    %v5303 = vsel %vm5219, %v5301, %v5302
    %v5304 = vrot.slane %v4143, 7
    %v5305 = vrot.slane %v5304, 4
    %v5306 = vrot.slane %v4144, 7
    %v5307 = vsel %vm5219, %v5305, %v5306
    %v5308 = vrot.slane %v5306, 4
    %v5309 = vrot.slane %v4145, 7
    %v5310 = vsel %vm5219, %v5308, %v5309
    %v5311 = vrot.slane %v4147, 7
    %v5312 = vrot.slane %v5311, 4
    %v5313 = vrot.slane %v4148, 7
    %v5314 = vsel %vm5219, %v5312, %v5313
    %v5315 = vrot.slane %v5313, 4
    %v5316 = vrot.slane %v4149, 7
    %v5317 = vsel %vm5219, %v5315, %v5316
    %v5318 = vrot.slane %v4151, 7
    %v5319 = vrot.slane %v5318, 4
    %v5320 = vrot.slane %v4152, 7
    %v5321 = vsel %vm5219, %v5319, %v5320
    %v5322 = vrot.slane %v5320, 4
    %v5323 = vrot.slane %v4153, 7
    %v5324 = vsel %vm5219, %v5322, %v5323
    %v5325 = vrot.slane %v4155, 7
    %v5326 = vrot.slane %v5325, 4
    %v5327 = vrot.slane %v4156, 7
    %v5328 = vsel %vm5219, %v5326, %v5327
    %v5329 = vrot.slane %v5327, 4
    %v5330 = vrot.slane %v4157, 7
    %v5331 = vsel %vm5219, %v5329, %v5330
    %v5332 = vrot.slane %v4159, 7
    %v5333 = vrot.slane %v5332, 4
    %v5334 = vrot.slane %v4160, 7
    %v5335 = vsel %vm5219, %v5333, %v5334
    %v5336 = vrot.slane %v5334, 4
    %v5337 = vrot.slane %v4161, 7
    %v5338 = vsel %vm5219, %v5336, %v5337
    %v5339 = vrot.slane %v4163, 7
    %v5340 = vrot.slane %v5339, 4
    %v5341 = vrot.slane %v4164, 7
    %v5342 = vsel %vm5219, %v5340, %v5341
    %v5343 = vrot.slane %v5341, 4
    %v5344 = vrot.slane %v4165, 7
    %v5345 = vsel %vm5219, %v5343, %v5344
    %v5346 = vrot.slane %v4167, 7
    %v5347 = vrot.slane %v5346, 4
    %v5348 = vrot.slane %v4168, 7
    %v5349 = vsel %vm5219, %v5347, %v5348
    %v5350 = vrot.slane %v5348, 4
    %v5351 = vrot.slane %v4169, 7
    %v5352 = vsel %vm5219, %v5350, %v5351
    %v5353 = vrot.slane %v4171, 7
    %v5354 = vrot.slane %v5353, 4
    %v5355 = vrot.slane %v4172, 7
    %v5356 = vsel %vm5219, %v5354, %v5355
    %v5357 = vrot.slane %v5355, 4
    %v5358 = vrot.slane %v4173, 7
    %v5359 = vsel %vm5219, %v5357, %v5358
    %v5360 = vrot.slane %v4175, 7
    %v5361 = vrot.slane %v5360, 4
    %v5362 = vrot.slane %v4176, 7
    %v5363 = vsel %vm5219, %v5361, %v5362
    %v5364 = vrot.slane %v5362, 4
    %v5365 = vrot.slane %v4177, 7
    %v5366 = vsel %vm5219, %v5364, %v5365
    %v5367 = vrot.slane %v4179, 7
    %v5368 = vrot.slane %v5367, 4
    %v5369 = vrot.slane %v4180, 7
    %v5370 = vsel %vm5219, %v5368, %v5369
    %v5371 = vrot.slane %v5369, 4
    %v5372 = vrot.slane %v4181, 7
    %v5373 = vsel %vm5219, %v5371, %v5372
    %v5374 = vrot.slane %v4183, 7
    %v5375 = vrot.slane %v5374, 4
    %v5376 = vrot.slane %v4184, 7
    %v5377 = vsel %vm5219, %v5375, %v5376
    %v5378 = vrot.slane %v5376, 4
    %v5379 = vrot.slane %v4185, 7
    %v5380 = vsel %vm5219, %v5378, %v5379
    %v5381 = vrot.slane %v4187, 7
    %v5382 = vrot.slane %v5381, 4
    %v5383 = vrot.slane %v4188, 7
    %v5384 = vsel %vm5219, %v5382, %v5383
    %v5385 = vrot.slane %v5383, 4
    %v5386 = vrot.slane %v4189, 7
    %v5387 = vsel %vm5219, %v5385, %v5386
    %v5388 = vrot.slane %v4191, 7
    %v5389 = vrot.slane %v5388, 4
    %v5390 = vrot.slane %v4192, 7
    %v5391 = vsel %vm5219, %v5389, %v5390
    %v5392 = vrot.slane %v5390, 4
    %v5393 = vrot.slane %v4193, 7
    %v5394 = vsel %vm5219, %v5392, %v5393
    %v5395 = vrot.slane %v4195, 7
    %v5396 = vrot.slane %v5395, 4
    %v5397 = vrot.slane %v4196, 7
    %v5398 = vsel %vm5219, %v5396, %v5397
    %v5399 = vrot.slane %v5397, 4
    %v5400 = vrot.slane %v4197, 7
    %v5401 = vsel %vm5219, %v5399, %v5400
    %v5402 = vrot.slane %v4199, 7
    %v5403 = vrot.slane %v5402, 4
    %v5404 = vrot.slane %v4200, 7
    %v5405 = vsel %vm5219, %v5403, %v5404
    %v5406 = vrot.slane %v5404, 4
    %v5407 = vrot.slane %v4201, 7
    %v5408 = vsel %vm5219, %v5406, %v5407
    %v5409 = vrot.slane %v4203, 7
    %v5410 = vrot.slane %v5409, 4
    %v5411 = vrot.slane %v4204, 7
    %v5412 = vsel %vm5219, %v5410, %v5411
    %v5413 = vrot.slane %v5411, 4
    %v5414 = vrot.slane %v4205, 7
    %v5415 = vsel %vm5219, %v5413, %v5414
    %v5416 = vrot.slane %v4207, 7
    %v5417 = vrot.slane %v5416, 4
    %v5418 = vrot.slane %v4208, 7
    %v5419 = vsel %vm5219, %v5417, %v5418
    %v5420 = vrot.slane %v5418, 4
    %v5421 = vrot.slane %v4209, 7
    %v5422 = vsel %vm5219, %v5420, %v5421
    %v5423 = vrot.slane %v4211, 7
    %v5424 = vrot.slane %v5423, 4
    %v5425 = vrot.slane %v4212, 7
    %v5426 = vsel %vm5219, %v5424, %v5425
    %v5427 = vrot.slane %v5425, 4
    %v5428 = vrot.slane %v4213, 7
    %v5429 = vsel %vm5219, %v5427, %v5428
    %v5430 = vrot.slane %v4215, 7
    %v5431 = vrot.slane %v5430, 4
    %v5432 = vrot.slane %v4216, 7
    %v5433 = vsel %vm5219, %v5431, %v5432
    %v5434 = vrot.slane %v5432, 4
    %v5435 = vrot.slane %v4217, 7
    %v5436 = vsel %vm5219, %v5434, %v5435
    %v5437 = vrot.slane %v4219, 7
    %v5438 = vrot.slane %v5437, 4
    %v5439 = vrot.slane %v4220, 7
    %v5440 = vsel %vm5219, %v5438, %v5439
    %v5441 = vrot.slane %v5439, 4
    %v5442 = vrot.slane %v4221, 7
    %v5443 = vsel %vm5219, %v5441, %v5442
    %vm5444 = vsmask.f32 256
    %vm5445 = vsmask.f32 4368
    %vm5446 = vmor %vm5444, %vm5445
    %v5447 = vrot.slane %v4226, 7
    %v5448 = vrot.slane %v5447, 4
    %v5449 = vrot.slane %v4235, 7
    %v5450 = vor.u32 %v5449, %v4238
    %v5451 = vsel %vm5446, %v5448, %v5450
    %v5452 = vrot.slane %v5449, 4
    %v5453 = vrot.slane %v4245, 7
    %v5454 = vor.u32 %v5453, %v4248
    %v5455 = vsel %vm5446, %v5452, %v5454
    %v5456 = vrot.slane %v4254, 7
    %v5457 = vrot.slane %v5456, 4
    %v5458 = vrot.slane %v4263, 7
    %v5459 = vor.u32 %v5458, %v4266
    %v5460 = vsel %vm5446, %v5457, %v5459
    %v5461 = vrot.slane %v5458, 4
    %v5462 = vrot.slane %v4273, 7
    %v5463 = vor.u32 %v5462, %v4276
    %v5464 = vsel %vm5446, %v5461, %v5463
    %v5465 = vrot.slane %v4282, 7
    %v5466 = vrot.slane %v5465, 4
    %v5467 = vrot.slane %v4291, 7
    %v5468 = vor.u32 %v5467, %v4294
    %v5469 = vsel %vm5446, %v5466, %v5468
    %v5470 = vrot.slane %v5467, 4
    %v5471 = vrot.slane %v4301, 7
    %v5472 = vor.u32 %v5471, %v4304
    %v5473 = vsel %vm5446, %v5470, %v5472
    %v5474 = vrot.slane %v4310, 7
    %v5475 = vrot.slane %v5474, 4
    %v5476 = vrot.slane %v4319, 7
    %v5477 = vor.u32 %v5476, %v4322
    %v5478 = vsel %vm5446, %v5475, %v5477
    %v5479 = vrot.slane %v5476, 4
    %v5480 = vrot.slane %v4329, 7
    %v5481 = vor.u32 %v5480, %v4332
    %v5482 = vsel %vm5446, %v5479, %v5481
    %v5483 = vrot.slane %v4338, 7
    %v5484 = vrot.slane %v5483, 4
    %v5485 = vrot.slane %v4347, 7
    %v5486 = vor.u32 %v5485, %v4350
    %v5487 = vsel %vm5446, %v5484, %v5486
    %v5488 = vrot.slane %v5485, 4
    %v5489 = vrot.slane %v4357, 7
    %v5490 = vor.u32 %v5489, %v4360
    %v5491 = vsel %vm5446, %v5488, %v5490
    %v5492 = vrot.slane %v4366, 7
    %v5493 = vrot.slane %v5492, 4
    %v5494 = vrot.slane %v4375, 7
    %v5495 = vor.u32 %v5494, %v4378
    %v5496 = vsel %vm5446, %v5493, %v5495
    %v5497 = vrot.slane %v5494, 4
    %v5498 = vrot.slane %v4385, 7
    %v5499 = vor.u32 %v5498, %v4388
    %v5500 = vsel %vm5446, %v5497, %v5499
    %v5501 = vrot.slane %v4394, 7
    %v5502 = vrot.slane %v5501, 4
    %v5503 = vrot.slane %v4403, 7
    %v5504 = vor.u32 %v5503, %v4406
    %v5505 = vsel %vm5446, %v5502, %v5504
    %v5506 = vrot.slane %v5503, 4
    %v5507 = vrot.slane %v4413, 7
    %v5508 = vor.u32 %v5507, %v4416
    %v5509 = vsel %vm5446, %v5506, %v5508
    %v5510 = vrot.slane %v4422, 7
    %v5511 = vrot.slane %v5510, 4
    %v5512 = vrot.slane %v4431, 7
    %v5513 = vor.u32 %v5512, %v4434
    %v5514 = vsel %vm5446, %v5511, %v5513
    %v5515 = vrot.slane %v5512, 4
    %v5516 = vrot.slane %v4441, 7
    %v5517 = vor.u32 %v5516, %v4444
    %v5518 = vsel %vm5446, %v5515, %v5517
    %v5519 = vrot.slane %v4450, 7
    %v5520 = vrot.slane %v5519, 4
    %v5521 = vrot.slane %v4459, 7
    %v5522 = vor.u32 %v5521, %v4462
    %v5523 = vsel %vm5446, %v5520, %v5522
    %v5524 = vrot.slane %v5521, 4
    %v5525 = vrot.slane %v4469, 7
    %v5526 = vor.u32 %v5525, %v4472
    %v5527 = vsel %vm5446, %v5524, %v5526
    %v5528 = vrot.slane %v4478, 7
    %v5529 = vrot.slane %v5528, 4
    %v5530 = vrot.slane %v4487, 7
    %v5531 = vor.u32 %v5530, %v4490
    %v5532 = vsel %vm5446, %v5529, %v5531
    %v5533 = vrot.slane %v5530, 4
    %v5534 = vrot.slane %v4497, 7
    %v5535 = vor.u32 %v5534, %v4500
    %v5536 = vsel %vm5446, %v5533, %v5535
    %v5537 = vrot.slane %v4506, 7
    %v5538 = vrot.slane %v5537, 4
    %v5539 = vrot.slane %v4515, 7
    %v5540 = vor.u32 %v5539, %v4518
    %v5541 = vsel %vm5446, %v5538, %v5540
    %v5542 = vrot.slane %v5539, 4
    %v5543 = vrot.slane %v4525, 7
    %v5544 = vor.u32 %v5543, %v4528
    %v5545 = vsel %vm5446, %v5542, %v5544
    %v5546 = vrot.slane %v4534, 7
    %v5547 = vrot.slane %v5546, 4
    %v5548 = vrot.slane %v4543, 7
    %v5549 = vor.u32 %v5548, %v4546
    %v5550 = vsel %vm5446, %v5547, %v5549
    %v5551 = vrot.slane %v5548, 4
    %v5552 = vrot.slane %v4553, 7
    %v5553 = vor.u32 %v5552, %v4556
    %v5554 = vsel %vm5446, %v5551, %v5553
    %v5555 = vrot.slane %v4562, 7
    %v5556 = vrot.slane %v5555, 4
    %v5557 = vrot.slane %v4571, 7
    %v5558 = vor.u32 %v5557, %v4574
    %v5559 = vsel %vm5446, %v5556, %v5558
    %v5560 = vrot.slane %v5557, 4
    %v5561 = vrot.slane %v4581, 7
    %v5562 = vor.u32 %v5561, %v4584
    %v5563 = vsel %vm5446, %v5560, %v5562
    %v5564 = vrot.slane %v4590, 7
    %v5565 = vrot.slane %v5564, 4
    %v5566 = vrot.slane %v4599, 7
    %v5567 = vor.u32 %v5566, %v4602
    %v5568 = vsel %vm5446, %v5565, %v5567
    %v5569 = vrot.slane %v5566, 4
    %v5570 = vrot.slane %v4609, 7
    %v5571 = vor.u32 %v5570, %v4612
    %v5572 = vsel %vm5446, %v5569, %v5571
    %v5573 = vrot.slane %v4618, 7
    %v5574 = vrot.slane %v5573, 4
    %v5575 = vrot.slane %v4627, 7
    %v5576 = vor.u32 %v5575, %v4630
    %v5577 = vsel %vm5446, %v5574, %v5576
    %v5578 = vrot.slane %v5575, 4
    %v5579 = vrot.slane %v4637, 7
    %v5580 = vor.u32 %v5579, %v4640
    %v5581 = vsel %vm5446, %v5578, %v5580
    %v5582 = vrot.slane %v4646, 7
    %v5583 = vrot.slane %v5582, 4
    %v5584 = vrot.slane %v4655, 7
    %v5585 = vor.u32 %v5584, %v4658
    %v5586 = vsel %vm5446, %v5583, %v5585
    %v5587 = vrot.slane %v5584, 4
    %v5588 = vrot.slane %v4665, 7
    %v5589 = vor.u32 %v5588, %v4668
    %v5590 = vsel %vm5446, %v5587, %v5589
    %v5591 = vrot.slane %v4674, 7
    %v5592 = vrot.slane %v5591, 4
    %v5593 = vrot.slane %v4683, 7
    %v5594 = vor.u32 %v5593, %v4686
    %v5595 = vsel %vm5446, %v5592, %v5594
    %v5596 = vrot.slane %v5593, 4
    %v5597 = vrot.slane %v4693, 7
    %v5598 = vor.u32 %v5597, %v4696
    %v5599 = vsel %vm5446, %v5596, %v5598
    %v5600 = vrot.slane %v4702, 7
    %v5601 = vrot.slane %v5600, 4
    %v5602 = vrot.slane %v4711, 7
    %v5603 = vor.u32 %v5602, %v4714
    %v5604 = vsel %vm5446, %v5601, %v5603
    %v5605 = vrot.slane %v5602, 4
    %v5606 = vrot.slane %v4721, 7
    %v5607 = vor.u32 %v5606, %v4724
    %v5608 = vsel %vm5446, %v5605, %v5607
    %v5609 = vrot.slane %v4730, 7
    %v5610 = vrot.slane %v5609, 4
    %v5611 = vrot.slane %v4739, 7
    %v5612 = vor.u32 %v5611, %v4742
    %v5613 = vsel %vm5446, %v5610, %v5612
    %v5614 = vrot.slane %v5611, 4
    %v5615 = vrot.slane %v4749, 7
    %v5616 = vor.u32 %v5615, %v4752
    %v5617 = vsel %vm5446, %v5614, %v5616
    %v5618 = vrot.slane %v4758, 7
    %v5619 = vrot.slane %v5618, 4
    %v5620 = vrot.slane %v4767, 7
    %v5621 = vor.u32 %v5620, %v4770
    %v5622 = vsel %vm5446, %v5619, %v5621
    %v5623 = vrot.slane %v5620, 4
    %v5624 = vrot.slane %v4777, 7
    %v5625 = vor.u32 %v5624, %v4780
    %v5626 = vsel %vm5446, %v5623, %v5625
    %v5627 = vrot.slane %v4786, 7
    %v5628 = vrot.slane %v5627, 4
    %v5629 = vrot.slane %v4795, 7
    %v5630 = vor.u32 %v5629, %v4798
    %v5631 = vsel %vm5446, %v5628, %v5630
    %v5632 = vrot.slane %v5629, 4
    %v5633 = vrot.slane %v4805, 7
    %v5634 = vor.u32 %v5633, %v4808
    %v5635 = vsel %vm5446, %v5632, %v5634
    %v5636 = vrot.slane %v4814, 7
    %v5637 = vrot.slane %v5636, 4
    %v5638 = vrot.slane %v4823, 7
    %v5639 = vor.u32 %v5638, %v4826
    %v5640 = vsel %vm5446, %v5637, %v5639
    %v5641 = vrot.slane %v5638, 4
    %v5642 = vrot.slane %v4833, 7
    %v5643 = vor.u32 %v5642, %v4836
    %v5644 = vsel %vm5446, %v5641, %v5643
    %v5645 = vrot.slane %v4842, 7
    %v5646 = vrot.slane %v5645, 4
    %v5647 = vrot.slane %v4851, 7
    %v5648 = vor.u32 %v5647, %v4854
    %v5649 = vsel %vm5446, %v5646, %v5648
    %v5650 = vrot.slane %v5647, 4
    %v5651 = vrot.slane %v4861, 7
    %v5652 = vor.u32 %v5651, %v4864
    %v5653 = vsel %vm5446, %v5650, %v5652
    %v5654 = vrot.slane %v4870, 7
    %v5655 = vrot.slane %v5654, 4
    %v5656 = vrot.slane %v4879, 7
    %v5657 = vor.u32 %v5656, %v4882
    %v5658 = vsel %vm5446, %v5655, %v5657
    %v5659 = vrot.slane %v5656, 4
    %v5660 = vrot.slane %v4889, 7
    %v5661 = vor.u32 %v5660, %v4892
    %v5662 = vsel %vm5446, %v5659, %v5661
    %v5663 = vrot.slane %v4898, 7
    %v5664 = vrot.slane %v5663, 4
    %v5665 = vrot.slane %v4907, 7
    %v5666 = vor.u32 %v5665, %v4910
    %v5667 = vsel %vm5446, %v5664, %v5666
    %v5668 = vrot.slane %v5665, 4
    %v5669 = vrot.slane %v4917, 7
    %v5670 = vor.u32 %v5669, %v4920
    %v5671 = vsel %vm5446, %v5668, %v5670
    %v5672 = vrot.slane %v4926, 7
    %v5673 = vrot.slane %v5672, 4
    %v5674 = vrot.slane %v4935, 7
    %v5675 = vor.u32 %v5674, %v4938
    %v5676 = vsel %vm5446, %v5673, %v5675
    %v5677 = vrot.slane %v5674, 4
    %v5678 = vrot.slane %v4945, 7
    %v5679 = vor.u32 %v5678, %v4948
    %v5680 = vsel %vm5446, %v5677, %v5679
    %v5681 = vrot.slane %v4954, 7
    %v5682 = vrot.slane %v5681, 4
    %v5683 = vrot.slane %v4963, 7
    %v5684 = vor.u32 %v5683, %v4966
    %v5685 = vsel %vm5446, %v5682, %v5684
    %v5686 = vrot.slane %v5683, 4
    %v5687 = vrot.slane %v4973, 7
    %v5688 = vor.u32 %v5687, %v4976
    %v5689 = vsel %vm5446, %v5686, %v5688
    %v5690 = vrot.slane %v4982, 7
    %v5691 = vrot.slane %v5690, 4
    %v5692 = vrot.slane %v4991, 7
    %v5693 = vor.u32 %v5692, %v4994
    %v5694 = vsel %vm5446, %v5691, %v5693
    %v5695 = vrot.slane %v5692, 4
    %v5696 = vrot.slane %v5001, 7
    %v5697 = vor.u32 %v5696, %v5004
    %v5698 = vsel %vm5446, %v5695, %v5697
    %v5699 = vrot.slane %v5010, 7
    %v5700 = vrot.slane %v5699, 4
    %v5701 = vrot.slane %v5019, 7
    %v5702 = vor.u32 %v5701, %v5022
    %v5703 = vsel %vm5446, %v5700, %v5702
    %v5704 = vrot.slane %v5701, 4
    %v5705 = vrot.slane %v5029, 7
    %v5706 = vor.u32 %v5705, %v5032
    %v5707 = vsel %vm5446, %v5704, %v5706
    %v5708 = vrot.slane %v5038, 7
    %v5709 = vrot.slane %v5708, 4
    %v5710 = vrot.slane %v5047, 7
    %v5711 = vor.u32 %v5710, %v5050
    %v5712 = vsel %vm5446, %v5709, %v5711
    %v5713 = vrot.slane %v5710, 4
    %v5714 = vrot.slane %v5057, 7
    %v5715 = vor.u32 %v5714, %v5060
    %v5716 = vsel %vm5446, %v5713, %v5715
    %v5717 = vrot.slane %v5066, 7
    %v5718 = vrot.slane %v5717, 4
    %v5719 = vrot.slane %v5075, 7
    %v5720 = vor.u32 %v5719, %v5078
    %v5721 = vsel %vm5446, %v5718, %v5720
    %v5722 = vrot.slane %v5719, 4
    %v5723 = vrot.slane %v5085, 7
    %v5724 = vor.u32 %v5723, %v5088
    %v5725 = vsel %vm5446, %v5722, %v5724
    %v5726 = vrot.slane %v5094, 7
    %v5727 = vrot.slane %v5726, 4
    %v5728 = vrot.slane %v5103, 7
    %v5729 = vor.u32 %v5728, %v5106
    %v5730 = vsel %vm5446, %v5727, %v5729
    %v5731 = vrot.slane %v5728, 4
    %v5732 = vrot.slane %v5113, 7
    %v5733 = vor.u32 %v5732, %v5116
    %v5734 = vsel %vm5446, %v5731, %v5733
    %vm5735 = vsmask.f32 3328
    %vm5736 = vsmask.f32 7440
    %vm5737 = vmor %vm5735, %vm5736
    %v5738 = vrot.slane %v4235, 4
    %v5739 = vrot.slane %v4238, 5
    %v5740 = vor.u32 %v5738, %v5739
    %v5741 = vrot.slane %v5740, 4
    %v5742 = vrot.slane %v4248, 5
    %v5743 = vsel %vm5737, %v5741, %v5742
    %v5744 = vrot.slane %v4245, 4
    %v5745 = vor.u32 %v5744, %v5742
    %v5746 = vrot.slane %v5745, 4
    %v5748 = vshll.u32 %v4098, 16
    %v5750 = vrot.slane %v5748, 5
    %v5751 = vsel %vm5737, %v5746, %v5750
    %v5752 = vrot.slane %v4263, 4
    %v5753 = vrot.slane %v4266, 5
    %v5754 = vor.u32 %v5752, %v5753
    %v5755 = vrot.slane %v5754, 4
    %v5756 = vrot.slane %v4276, 5
    %v5757 = vsel %vm5737, %v5755, %v5756
    %v5758 = vrot.slane %v4273, 4
    %v5759 = vor.u32 %v5758, %v5756
    %v5760 = vrot.slane %v5759, 4
    %v5762 = vshll.u32 %v4102, 16
    %v5764 = vrot.slane %v5762, 5
    %v5765 = vsel %vm5737, %v5760, %v5764
    %v5766 = vrot.slane %v4291, 4
    %v5767 = vrot.slane %v4294, 5
    %v5768 = vor.u32 %v5766, %v5767
    %v5769 = vrot.slane %v5768, 4
    %v5770 = vrot.slane %v4304, 5
    %v5771 = vsel %vm5737, %v5769, %v5770
    %v5772 = vrot.slane %v4301, 4
    %v5773 = vor.u32 %v5772, %v5770
    %v5774 = vrot.slane %v5773, 4
    %v5776 = vshll.u32 %v4106, 16
    %v5778 = vrot.slane %v5776, 5
    %v5779 = vsel %vm5737, %v5774, %v5778
    %v5780 = vrot.slane %v4319, 4
    %v5781 = vrot.slane %v4322, 5
    %v5782 = vor.u32 %v5780, %v5781
    %v5783 = vrot.slane %v5782, 4
    %v5784 = vrot.slane %v4332, 5
    %v5785 = vsel %vm5737, %v5783, %v5784
    %v5786 = vrot.slane %v4329, 4
    %v5787 = vor.u32 %v5786, %v5784
    %v5788 = vrot.slane %v5787, 4
    %v5790 = vshll.u32 %v4110, 16
    %v5792 = vrot.slane %v5790, 5
    %v5793 = vsel %vm5737, %v5788, %v5792
    %v5794 = vrot.slane %v4347, 4
    %v5795 = vrot.slane %v4350, 5
    %v5796 = vor.u32 %v5794, %v5795
    %v5797 = vrot.slane %v5796, 4
    %v5798 = vrot.slane %v4360, 5
    %v5799 = vsel %vm5737, %v5797, %v5798
    %v5800 = vrot.slane %v4357, 4
    %v5801 = vor.u32 %v5800, %v5798
    %v5802 = vrot.slane %v5801, 4
    %v5804 = vshll.u32 %v4114, 16
    %v5806 = vrot.slane %v5804, 5
    %v5807 = vsel %vm5737, %v5802, %v5806
    %v5808 = vrot.slane %v4375, 4
    %v5809 = vrot.slane %v4378, 5
    %v5810 = vor.u32 %v5808, %v5809
    %v5811 = vrot.slane %v5810, 4
    %v5812 = vrot.slane %v4388, 5
    %v5813 = vsel %vm5737, %v5811, %v5812
    %v5814 = vrot.slane %v4385, 4
    %v5815 = vor.u32 %v5814, %v5812
    %v5816 = vrot.slane %v5815, 4
    %v5818 = vshll.u32 %v4118, 16
    %v5820 = vrot.slane %v5818, 5
    %v5821 = vsel %vm5737, %v5816, %v5820
    %v5822 = vrot.slane %v4403, 4
    %v5823 = vrot.slane %v4406, 5
    %v5824 = vor.u32 %v5822, %v5823
    %v5825 = vrot.slane %v5824, 4
    %v5826 = vrot.slane %v4416, 5
    %v5827 = vsel %vm5737, %v5825, %v5826
    %v5828 = vrot.slane %v4413, 4
    %v5829 = vor.u32 %v5828, %v5826
    %v5830 = vrot.slane %v5829, 4
    %v5832 = vshll.u32 %v4122, 16
    %v5834 = vrot.slane %v5832, 5
    %v5835 = vsel %vm5737, %v5830, %v5834
    %v5836 = vrot.slane %v4431, 4
    %v5837 = vrot.slane %v4434, 5
    %v5838 = vor.u32 %v5836, %v5837
    %v5839 = vrot.slane %v5838, 4
    %v5840 = vrot.slane %v4444, 5
    %v5841 = vsel %vm5737, %v5839, %v5840
    %v5842 = vrot.slane %v4441, 4
    %v5843 = vor.u32 %v5842, %v5840
    %v5844 = vrot.slane %v5843, 4
    %v5846 = vshll.u32 %v4126, 16
    %v5848 = vrot.slane %v5846, 5
    %v5849 = vsel %vm5737, %v5844, %v5848
    %v5850 = vrot.slane %v4459, 4
    %v5851 = vrot.slane %v4462, 5
    %v5852 = vor.u32 %v5850, %v5851
    %v5853 = vrot.slane %v5852, 4
    %v5854 = vrot.slane %v4472, 5
    %v5855 = vsel %vm5737, %v5853, %v5854
    %v5856 = vrot.slane %v4469, 4
    %v5857 = vor.u32 %v5856, %v5854
    %v5858 = vrot.slane %v5857, 4
    %v5860 = vshll.u32 %v4130, 16
    %v5862 = vrot.slane %v5860, 5
    %v5863 = vsel %vm5737, %v5858, %v5862
    %v5864 = vrot.slane %v4487, 4
    %v5865 = vrot.slane %v4490, 5
    %v5866 = vor.u32 %v5864, %v5865
    %v5867 = vrot.slane %v5866, 4
    %v5868 = vrot.slane %v4500, 5
    %v5869 = vsel %vm5737, %v5867, %v5868
    %v5870 = vrot.slane %v4497, 4
    %v5871 = vor.u32 %v5870, %v5868
    %v5872 = vrot.slane %v5871, 4
    %v5874 = vshll.u32 %v4134, 16
    %v5876 = vrot.slane %v5874, 5
    %v5877 = vsel %vm5737, %v5872, %v5876
    %v5878 = vrot.slane %v4515, 4
    %v5879 = vrot.slane %v4518, 5
    %v5880 = vor.u32 %v5878, %v5879
    %v5881 = vrot.slane %v5880, 4
    %v5882 = vrot.slane %v4528, 5
    %v5883 = vsel %vm5737, %v5881, %v5882
    %v5884 = vrot.slane %v4525, 4
    %v5885 = vor.u32 %v5884, %v5882
    %v5886 = vrot.slane %v5885, 4
    %v5888 = vshll.u32 %v4138, 16
    %v5890 = vrot.slane %v5888, 5
    %v5891 = vsel %vm5737, %v5886, %v5890
    %v5892 = vrot.slane %v4543, 4
    %v5893 = vrot.slane %v4546, 5
    %v5894 = vor.u32 %v5892, %v5893
    %v5895 = vrot.slane %v5894, 4
    %v5896 = vrot.slane %v4556, 5
    %v5897 = vsel %vm5737, %v5895, %v5896
    %v5898 = vrot.slane %v4553, 4
    %v5899 = vor.u32 %v5898, %v5896
    %v5900 = vrot.slane %v5899, 4
    %v5902 = vshll.u32 %v4142, 16
    %v5904 = vrot.slane %v5902, 5
    %v5905 = vsel %vm5737, %v5900, %v5904
    %v5906 = vrot.slane %v4571, 4
    %v5907 = vrot.slane %v4574, 5
    %v5908 = vor.u32 %v5906, %v5907
    %v5909 = vrot.slane %v5908, 4
    %v5910 = vrot.slane %v4584, 5
    %v5911 = vsel %vm5737, %v5909, %v5910
    %v5912 = vrot.slane %v4581, 4
    %v5913 = vor.u32 %v5912, %v5910
    %v5914 = vrot.slane %v5913, 4
    %v5916 = vshll.u32 %v4146, 16
    %v5918 = vrot.slane %v5916, 5
    %v5919 = vsel %vm5737, %v5914, %v5918
    %v5920 = vrot.slane %v4599, 4
    %v5921 = vrot.slane %v4602, 5
    %v5922 = vor.u32 %v5920, %v5921
    %v5923 = vrot.slane %v5922, 4
    %v5924 = vrot.slane %v4612, 5
    %v5925 = vsel %vm5737, %v5923, %v5924
    %v5926 = vrot.slane %v4609, 4
    %v5927 = vor.u32 %v5926, %v5924
    %v5928 = vrot.slane %v5927, 4
    %v5930 = vshll.u32 %v4150, 16
    %v5932 = vrot.slane %v5930, 5
    %v5933 = vsel %vm5737, %v5928, %v5932
    %v5934 = vrot.slane %v4627, 4
    %v5935 = vrot.slane %v4630, 5
    %v5936 = vor.u32 %v5934, %v5935
    %v5937 = vrot.slane %v5936, 4
    %v5938 = vrot.slane %v4640, 5
    %v5939 = vsel %vm5737, %v5937, %v5938
    %v5940 = vrot.slane %v4637, 4
    %v5941 = vor.u32 %v5940, %v5938
    %v5942 = vrot.slane %v5941, 4
    %v5944 = vshll.u32 %v4154, 16
    %v5946 = vrot.slane %v5944, 5
    %v5947 = vsel %vm5737, %v5942, %v5946
    %v5948 = vrot.slane %v4655, 4
    %v5949 = vrot.slane %v4658, 5
    %v5950 = vor.u32 %v5948, %v5949
    %v5951 = vrot.slane %v5950, 4
    %v5952 = vrot.slane %v4668, 5
    %v5953 = vsel %vm5737, %v5951, %v5952
    %v5954 = vrot.slane %v4665, 4
    %v5955 = vor.u32 %v5954, %v5952
    %v5956 = vrot.slane %v5955, 4
    %v5958 = vshll.u32 %v4158, 16
    %v5960 = vrot.slane %v5958, 5
    %v5961 = vsel %vm5737, %v5956, %v5960
    %v5962 = vrot.slane %v4683, 4
    %v5963 = vrot.slane %v4686, 5
    %v5964 = vor.u32 %v5962, %v5963
    %v5965 = vrot.slane %v5964, 4
    %v5966 = vrot.slane %v4696, 5
    %v5967 = vsel %vm5737, %v5965, %v5966
    %v5968 = vrot.slane %v4693, 4
    %v5969 = vor.u32 %v5968, %v5966
    %v5970 = vrot.slane %v5969, 4
    %v5972 = vshll.u32 %v4162, 16
    %v5974 = vrot.slane %v5972, 5
    %v5975 = vsel %vm5737, %v5970, %v5974
    %v5976 = vrot.slane %v4711, 4
    %v5977 = vrot.slane %v4714, 5
    %v5978 = vor.u32 %v5976, %v5977
    %v5979 = vrot.slane %v5978, 4
    %v5980 = vrot.slane %v4724, 5
    %v5981 = vsel %vm5737, %v5979, %v5980
    %v5982 = vrot.slane %v4721, 4
    %v5983 = vor.u32 %v5982, %v5980
    %v5984 = vrot.slane %v5983, 4
    %v5986 = vshll.u32 %v4166, 16
    %v5988 = vrot.slane %v5986, 5
    %v5989 = vsel %vm5737, %v5984, %v5988
    %v5990 = vrot.slane %v4739, 4
    %v5991 = vrot.slane %v4742, 5
    %v5992 = vor.u32 %v5990, %v5991
    %v5993 = vrot.slane %v5992, 4
    %v5994 = vrot.slane %v4752, 5
    %v5995 = vsel %vm5737, %v5993, %v5994
    %v5996 = vrot.slane %v4749, 4
    %v5997 = vor.u32 %v5996, %v5994
    %v5998 = vrot.slane %v5997, 4
    %v6000 = vshll.u32 %v4170, 16
    %v6002 = vrot.slane %v6000, 5
    %v6003 = vsel %vm5737, %v5998, %v6002
    %v6004 = vrot.slane %v4767, 4
    %v6005 = vrot.slane %v4770, 5
    %v6006 = vor.u32 %v6004, %v6005
    %v6007 = vrot.slane %v6006, 4
    %v6008 = vrot.slane %v4780, 5
    %v6009 = vsel %vm5737, %v6007, %v6008
    %v6010 = vrot.slane %v4777, 4
    %v6011 = vor.u32 %v6010, %v6008
    %v6012 = vrot.slane %v6011, 4
    %v6014 = vshll.u32 %v4174, 16
    %v6016 = vrot.slane %v6014, 5
    %v6017 = vsel %vm5737, %v6012, %v6016
    %v6018 = vrot.slane %v4795, 4
    %v6019 = vrot.slane %v4798, 5
    %v6020 = vor.u32 %v6018, %v6019
    %v6021 = vrot.slane %v6020, 4
    %v6022 = vrot.slane %v4808, 5
    %v6023 = vsel %vm5737, %v6021, %v6022
    %v6024 = vrot.slane %v4805, 4
    %v6025 = vor.u32 %v6024, %v6022
    %v6026 = vrot.slane %v6025, 4
    %v6028 = vshll.u32 %v4178, 16
    %v6030 = vrot.slane %v6028, 5
    %v6031 = vsel %vm5737, %v6026, %v6030
    %v6032 = vrot.slane %v4823, 4
    %v6033 = vrot.slane %v4826, 5
    %v6034 = vor.u32 %v6032, %v6033
    %v6035 = vrot.slane %v6034, 4
    %v6036 = vrot.slane %v4836, 5
    %v6037 = vsel %vm5737, %v6035, %v6036
    %v6038 = vrot.slane %v4833, 4
    %v6039 = vor.u32 %v6038, %v6036
    %v6040 = vrot.slane %v6039, 4
    %v6042 = vshll.u32 %v4182, 16
    %v6044 = vrot.slane %v6042, 5
    %v6045 = vsel %vm5737, %v6040, %v6044
    %v6046 = vrot.slane %v4851, 4
    %v6047 = vrot.slane %v4854, 5
    %v6048 = vor.u32 %v6046, %v6047
    %v6049 = vrot.slane %v6048, 4
    %v6050 = vrot.slane %v4864, 5
    %v6051 = vsel %vm5737, %v6049, %v6050
    %v6052 = vrot.slane %v4861, 4
    %v6053 = vor.u32 %v6052, %v6050
    %v6054 = vrot.slane %v6053, 4
    %v6056 = vshll.u32 %v4186, 16
    %v6058 = vrot.slane %v6056, 5
    %v6059 = vsel %vm5737, %v6054, %v6058
    %v6060 = vrot.slane %v4879, 4
    %v6061 = vrot.slane %v4882, 5
    %v6062 = vor.u32 %v6060, %v6061
    %v6063 = vrot.slane %v6062, 4
    %v6064 = vrot.slane %v4892, 5
    %v6065 = vsel %vm5737, %v6063, %v6064
    %v6066 = vrot.slane %v4889, 4
    %v6067 = vor.u32 %v6066, %v6064
    %v6068 = vrot.slane %v6067, 4
    %v6070 = vshll.u32 %v4190, 16
    %v6072 = vrot.slane %v6070, 5
    %v6073 = vsel %vm5737, %v6068, %v6072
    %v6074 = vrot.slane %v4907, 4
    %v6075 = vrot.slane %v4910, 5
    %v6076 = vor.u32 %v6074, %v6075
    %v6077 = vrot.slane %v6076, 4
    %v6078 = vrot.slane %v4920, 5
    %v6079 = vsel %vm5737, %v6077, %v6078
    %v6080 = vrot.slane %v4917, 4
    %v6081 = vor.u32 %v6080, %v6078
    %v6082 = vrot.slane %v6081, 4
    %v6084 = vshll.u32 %v4194, 16
    %v6086 = vrot.slane %v6084, 5
    %v6087 = vsel %vm5737, %v6082, %v6086
    %v6088 = vrot.slane %v4935, 4
    %v6089 = vrot.slane %v4938, 5
    %v6090 = vor.u32 %v6088, %v6089
    %v6091 = vrot.slane %v6090, 4
    %v6092 = vrot.slane %v4948, 5
    %v6093 = vsel %vm5737, %v6091, %v6092
    %v6094 = vrot.slane %v4945, 4
    %v6095 = vor.u32 %v6094, %v6092
    %v6096 = vrot.slane %v6095, 4
    %v6098 = vshll.u32 %v4198, 16
    %v6100 = vrot.slane %v6098, 5
    %v6101 = vsel %vm5737, %v6096, %v6100
    %v6102 = vrot.slane %v4963, 4
    %v6103 = vrot.slane %v4966, 5
    %v6104 = vor.u32 %v6102, %v6103
    %v6105 = vrot.slane %v6104, 4
    %v6106 = vrot.slane %v4976, 5
    %v6107 = vsel %vm5737, %v6105, %v6106
    %v6108 = vrot.slane %v4973, 4
    %v6109 = vor.u32 %v6108, %v6106
    %v6110 = vrot.slane %v6109, 4
    %v6112 = vshll.u32 %v4202, 16
    %v6114 = vrot.slane %v6112, 5
    %v6115 = vsel %vm5737, %v6110, %v6114
    %v6116 = vrot.slane %v4991, 4
    %v6117 = vrot.slane %v4994, 5
    %v6118 = vor.u32 %v6116, %v6117
    %v6119 = vrot.slane %v6118, 4
    %v6120 = vrot.slane %v5004, 5
    %v6121 = vsel %vm5737, %v6119, %v6120
    %v6122 = vrot.slane %v5001, 4
    %v6123 = vor.u32 %v6122, %v6120
    %v6124 = vrot.slane %v6123, 4
    %v6126 = vshll.u32 %v4206, 16
    %v6128 = vrot.slane %v6126, 5
    %v6129 = vsel %vm5737, %v6124, %v6128
    %v6130 = vrot.slane %v5019, 4
    %v6131 = vrot.slane %v5022, 5
    %v6132 = vor.u32 %v6130, %v6131
    %v6133 = vrot.slane %v6132, 4
    %v6134 = vrot.slane %v5032, 5
    %v6135 = vsel %vm5737, %v6133, %v6134
    %v6136 = vrot.slane %v5029, 4
    %v6137 = vor.u32 %v6136, %v6134
    %v6138 = vrot.slane %v6137, 4
    %v6140 = vshll.u32 %v4210, 16
    %v6142 = vrot.slane %v6140, 5
    %v6143 = vsel %vm5737, %v6138, %v6142
    %v6144 = vrot.slane %v5047, 4
    %v6145 = vrot.slane %v5050, 5
    %v6146 = vor.u32 %v6144, %v6145
    %v6147 = vrot.slane %v6146, 4
    %v6148 = vrot.slane %v5060, 5
    %v6149 = vsel %vm5737, %v6147, %v6148
    %v6150 = vrot.slane %v5057, 4
    %v6151 = vor.u32 %v6150, %v6148
    %v6152 = vrot.slane %v6151, 4
    %v6154 = vshll.u32 %v4214, 16
    %v6156 = vrot.slane %v6154, 5
    %v6157 = vsel %vm5737, %v6152, %v6156
    %v6158 = vrot.slane %v5075, 4
    %v6159 = vrot.slane %v5078, 5
    %v6160 = vor.u32 %v6158, %v6159
    %v6161 = vrot.slane %v6160, 4
    %v6162 = vrot.slane %v5088, 5
    %v6163 = vsel %vm5737, %v6161, %v6162
    %v6164 = vrot.slane %v5085, 4
    %v6165 = vor.u32 %v6164, %v6162
    %v6166 = vrot.slane %v6165, 4
    %v6168 = vshll.u32 %v4218, 16
    %v6170 = vrot.slane %v6168, 5
    %v6171 = vsel %vm5737, %v6166, %v6170
    %v6172 = vrot.slane %v5103, 4
    %v6173 = vrot.slane %v5106, 5
    %v6174 = vor.u32 %v6172, %v6173
    %v6175 = vrot.slane %v6174, 4
    %v6176 = vrot.slane %v5116, 5
    %v6177 = vsel %vm5737, %v6175, %v6176
    %v6178 = vrot.slane %v5113, 4
    %v6179 = vor.u32 %v6178, %v6176
    %v6180 = vrot.slane %v6179, 4
    %v6182 = vshll.u32 %v4222, 16
    %v6184 = vrot.slane %v6182, 5
    %v6185 = vsel %vm5737, %v6180, %v6184
    %vm6218 = vcmask 1042432
    %vm6219 = vcmask 1046532
    %vm6220 = vmor %vm6218, %vm6219
    %v6221 = vrot.slane %v4096, 5
    %v6222 = vrot.slane %v6221, 4
    %v6223 = vrot.slane %v4097, 5
    %v6224 = vsel %vm6220, %v6222, %v6223
    %v6225 = vrot.slane %v6223, 4
    %v6226 = vrot.slane %v4098, 5
    %v6227 = vsel %vm6220, %v6225, %v6226
    %v6228 = vrot.slane %v4100, 5
    %v6229 = vrot.slane %v6228, 4
    %v6230 = vrot.slane %v4101, 5
    %v6231 = vsel %vm6220, %v6229, %v6230
    %v6232 = vrot.slane %v6230, 4
    %v6233 = vrot.slane %v4102, 5
    %v6234 = vsel %vm6220, %v6232, %v6233
    %v6235 = vrot.slane %v4104, 5
    %v6236 = vrot.slane %v6235, 4
    %v6237 = vrot.slane %v4105, 5
    %v6238 = vsel %vm6220, %v6236, %v6237
    %v6239 = vrot.slane %v6237, 4
    %v6240 = vrot.slane %v4106, 5
    %v6241 = vsel %vm6220, %v6239, %v6240
    %v6242 = vrot.slane %v4108, 5
    %v6243 = vrot.slane %v6242, 4
    %v6244 = vrot.slane %v4109, 5
    %v6245 = vsel %vm6220, %v6243, %v6244
    %v6246 = vrot.slane %v6244, 4
    %v6247 = vrot.slane %v4110, 5
    %v6248 = vsel %vm6220, %v6246, %v6247
    %v6249 = vrot.slane %v4112, 5
    %v6250 = vrot.slane %v6249, 4
    %v6251 = vrot.slane %v4113, 5
    %v6252 = vsel %vm6220, %v6250, %v6251
    %v6253 = vrot.slane %v6251, 4
    %v6254 = vrot.slane %v4114, 5
    %v6255 = vsel %vm6220, %v6253, %v6254
    %v6256 = vrot.slane %v4116, 5
    %v6257 = vrot.slane %v6256, 4
    %v6258 = vrot.slane %v4117, 5
    %v6259 = vsel %vm6220, %v6257, %v6258
    %v6260 = vrot.slane %v6258, 4
    %v6261 = vrot.slane %v4118, 5
    %v6262 = vsel %vm6220, %v6260, %v6261
    %v6263 = vrot.slane %v4120, 5
    %v6264 = vrot.slane %v6263, 4
    %v6265 = vrot.slane %v4121, 5
    %v6266 = vsel %vm6220, %v6264, %v6265
    %v6267 = vrot.slane %v6265, 4
    %v6268 = vrot.slane %v4122, 5
    %v6269 = vsel %vm6220, %v6267, %v6268
    %v6270 = vrot.slane %v4124, 5
    %v6271 = vrot.slane %v6270, 4
    %v6272 = vrot.slane %v4125, 5
    %v6273 = vsel %vm6220, %v6271, %v6272
    %v6274 = vrot.slane %v6272, 4
    %v6275 = vrot.slane %v4126, 5
    %v6276 = vsel %vm6220, %v6274, %v6275
    %v6277 = vrot.slane %v4128, 5
    %v6278 = vrot.slane %v6277, 4
    %v6279 = vrot.slane %v4129, 5
    %v6280 = vsel %vm6220, %v6278, %v6279
    %v6281 = vrot.slane %v6279, 4
    %v6282 = vrot.slane %v4130, 5
    %v6283 = vsel %vm6220, %v6281, %v6282
    %v6284 = vrot.slane %v4132, 5
    %v6285 = vrot.slane %v6284, 4
    %v6286 = vrot.slane %v4133, 5
    %v6287 = vsel %vm6220, %v6285, %v6286
    %v6288 = vrot.slane %v6286, 4
    %v6289 = vrot.slane %v4134, 5
    %v6290 = vsel %vm6220, %v6288, %v6289
    %v6291 = vrot.slane %v4136, 5
    %v6292 = vrot.slane %v6291, 4
    %v6293 = vrot.slane %v4137, 5
    %v6294 = vsel %vm6220, %v6292, %v6293
    %v6295 = vrot.slane %v6293, 4
    %v6296 = vrot.slane %v4138, 5
    %v6297 = vsel %vm6220, %v6295, %v6296
    %v6298 = vrot.slane %v4140, 5
    %v6299 = vrot.slane %v6298, 4
    %v6300 = vrot.slane %v4141, 5
    %v6301 = vsel %vm6220, %v6299, %v6300
    %v6302 = vrot.slane %v6300, 4
    %v6303 = vrot.slane %v4142, 5
    %v6304 = vsel %vm6220, %v6302, %v6303
    %v6305 = vrot.slane %v4144, 5
    %v6306 = vrot.slane %v6305, 4
    %v6307 = vrot.slane %v4145, 5
    %v6308 = vsel %vm6220, %v6306, %v6307
    %v6309 = vrot.slane %v6307, 4
    %v6310 = vrot.slane %v4146, 5
    %v6311 = vsel %vm6220, %v6309, %v6310
    %v6312 = vrot.slane %v4148, 5
    %v6313 = vrot.slane %v6312, 4
    %v6314 = vrot.slane %v4149, 5
    %v6315 = vsel %vm6220, %v6313, %v6314
    %v6316 = vrot.slane %v6314, 4
    %v6317 = vrot.slane %v4150, 5
    %v6318 = vsel %vm6220, %v6316, %v6317
    %v6319 = vrot.slane %v4152, 5
    %v6320 = vrot.slane %v6319, 4
    %v6321 = vrot.slane %v4153, 5
    %v6322 = vsel %vm6220, %v6320, %v6321
    %v6323 = vrot.slane %v6321, 4
    %v6324 = vrot.slane %v4154, 5
    %v6325 = vsel %vm6220, %v6323, %v6324
    %v6326 = vrot.slane %v4156, 5
    %v6327 = vrot.slane %v6326, 4
    %v6328 = vrot.slane %v4157, 5
    %v6329 = vsel %vm6220, %v6327, %v6328
    %v6330 = vrot.slane %v6328, 4
    %v6331 = vrot.slane %v4158, 5
    %v6332 = vsel %vm6220, %v6330, %v6331
    %v6333 = vrot.slane %v4160, 5
    %v6334 = vrot.slane %v6333, 4
    %v6335 = vrot.slane %v4161, 5
    %v6336 = vsel %vm6220, %v6334, %v6335
    %v6337 = vrot.slane %v6335, 4
    %v6338 = vrot.slane %v4162, 5
    %v6339 = vsel %vm6220, %v6337, %v6338
    %v6340 = vrot.slane %v4164, 5
    %v6341 = vrot.slane %v6340, 4
    %v6342 = vrot.slane %v4165, 5
    %v6343 = vsel %vm6220, %v6341, %v6342
    %v6344 = vrot.slane %v6342, 4
    %v6345 = vrot.slane %v4166, 5
    %v6346 = vsel %vm6220, %v6344, %v6345
    %v6347 = vrot.slane %v4168, 5
    %v6348 = vrot.slane %v6347, 4
    %v6349 = vrot.slane %v4169, 5
    %v6350 = vsel %vm6220, %v6348, %v6349
    %v6351 = vrot.slane %v6349, 4
    %v6352 = vrot.slane %v4170, 5
    %v6353 = vsel %vm6220, %v6351, %v6352
    %v6354 = vrot.slane %v4172, 5
    %v6355 = vrot.slane %v6354, 4
    %v6356 = vrot.slane %v4173, 5
    %v6357 = vsel %vm6220, %v6355, %v6356
    %v6358 = vrot.slane %v6356, 4
    %v6359 = vrot.slane %v4174, 5
    %v6360 = vsel %vm6220, %v6358, %v6359
    %v6361 = vrot.slane %v4176, 5
    %v6362 = vrot.slane %v6361, 4
    %v6363 = vrot.slane %v4177, 5
    %v6364 = vsel %vm6220, %v6362, %v6363
    %v6365 = vrot.slane %v6363, 4
    %v6366 = vrot.slane %v4178, 5
    %v6367 = vsel %vm6220, %v6365, %v6366
    %v6368 = vrot.slane %v4180, 5
    %v6369 = vrot.slane %v6368, 4
    %v6370 = vrot.slane %v4181, 5
    %v6371 = vsel %vm6220, %v6369, %v6370
    %v6372 = vrot.slane %v6370, 4
    %v6373 = vrot.slane %v4182, 5
    %v6374 = vsel %vm6220, %v6372, %v6373
    %v6375 = vrot.slane %v4184, 5
    %v6376 = vrot.slane %v6375, 4
    %v6377 = vrot.slane %v4185, 5
    %v6378 = vsel %vm6220, %v6376, %v6377
    %v6379 = vrot.slane %v6377, 4
    %v6380 = vrot.slane %v4186, 5
    %v6381 = vsel %vm6220, %v6379, %v6380
    %v6382 = vrot.slane %v4188, 5
    %v6383 = vrot.slane %v6382, 4
    %v6384 = vrot.slane %v4189, 5
    %v6385 = vsel %vm6220, %v6383, %v6384
    %v6386 = vrot.slane %v6384, 4
    %v6387 = vrot.slane %v4190, 5
    %v6388 = vsel %vm6220, %v6386, %v6387
    %v6389 = vrot.slane %v4192, 5
    %v6390 = vrot.slane %v6389, 4
    %v6391 = vrot.slane %v4193, 5
    %v6392 = vsel %vm6220, %v6390, %v6391
    %v6393 = vrot.slane %v6391, 4
    %v6394 = vrot.slane %v4194, 5
    %v6395 = vsel %vm6220, %v6393, %v6394
    %v6396 = vrot.slane %v4196, 5
    %v6397 = vrot.slane %v6396, 4
    %v6398 = vrot.slane %v4197, 5
    %v6399 = vsel %vm6220, %v6397, %v6398
    %v6400 = vrot.slane %v6398, 4
    %v6401 = vrot.slane %v4198, 5
    %v6402 = vsel %vm6220, %v6400, %v6401
    %v6403 = vrot.slane %v4200, 5
    %v6404 = vrot.slane %v6403, 4
    %v6405 = vrot.slane %v4201, 5
    %v6406 = vsel %vm6220, %v6404, %v6405
    %v6407 = vrot.slane %v6405, 4
    %v6408 = vrot.slane %v4202, 5
    %v6409 = vsel %vm6220, %v6407, %v6408
    %v6410 = vrot.slane %v4204, 5
    %v6411 = vrot.slane %v6410, 4
    %v6412 = vrot.slane %v4205, 5
    %v6413 = vsel %vm6220, %v6411, %v6412
    %v6414 = vrot.slane %v6412, 4
    %v6415 = vrot.slane %v4206, 5
    %v6416 = vsel %vm6220, %v6414, %v6415
    %v6417 = vrot.slane %v4208, 5
    %v6418 = vrot.slane %v6417, 4
    %v6419 = vrot.slane %v4209, 5
    %v6420 = vsel %vm6220, %v6418, %v6419
    %v6421 = vrot.slane %v6419, 4
    %v6422 = vrot.slane %v4210, 5
    %v6423 = vsel %vm6220, %v6421, %v6422
    %v6424 = vrot.slane %v4212, 5
    %v6425 = vrot.slane %v6424, 4
    %v6426 = vrot.slane %v4213, 5
    %v6427 = vsel %vm6220, %v6425, %v6426
    %v6428 = vrot.slane %v6426, 4
    %v6429 = vrot.slane %v4214, 5
    %v6430 = vsel %vm6220, %v6428, %v6429
    %v6431 = vrot.slane %v4216, 5
    %v6432 = vrot.slane %v6431, 4
    %v6433 = vrot.slane %v4217, 5
    %v6434 = vsel %vm6220, %v6432, %v6433
    %v6435 = vrot.slane %v6433, 4
    %v6436 = vrot.slane %v4218, 5
    %v6437 = vsel %vm6220, %v6435, %v6436
    %v6438 = vrot.slane %v4220, 5
    %v6439 = vrot.slane %v6438, 4
    %v6440 = vrot.slane %v4221, 5
    %v6441 = vsel %vm6220, %v6439, %v6440
    %v6442 = vrot.slane %v6440, 4
    %v6443 = vrot.slane %v4222, 5
    %v6444 = vsel %vm6220, %v6442, %v6443
    %vm6445 = vsmask.f32 2304
    %vm6446 = vsmask.f32 6416
    %vm6447 = vmor %vm6445, %vm6446
    %v6448 = vrot.slane %v4235, 5
    %v6449 = vrot.slane %v4238, 6
    %v6450 = vor.u32 %v6448, %v6449
    %v6451 = vrot.slane %v6450, 4
    %v6452 = vrot.slane %v4245, 5
    %v6453 = vrot.slane %v4248, 6
    %v6454 = vor.u32 %v6452, %v6453
    %v6455 = vsel %vm6447, %v6451, %v6454
    %v6456 = vrot.slane %v6454, 4
    %v6457 = vshrl.u32 %v4098, 16
    %v6459 = vrot.slane %v6457, 5
    %v6460 = vrot.slane %v5748, 6
    %v6461 = vor.u32 %v6459, %v6460
    %v6462 = vsel %vm6447, %v6456, %v6461
    %v6463 = vrot.slane %v4263, 5
    %v6464 = vrot.slane %v4266, 6
    %v6465 = vor.u32 %v6463, %v6464
    %v6466 = vrot.slane %v6465, 4
    %v6467 = vrot.slane %v4273, 5
    %v6468 = vrot.slane %v4276, 6
    %v6469 = vor.u32 %v6467, %v6468
    %v6470 = vsel %vm6447, %v6466, %v6469
    %v6471 = vrot.slane %v6469, 4
    %v6472 = vshrl.u32 %v4102, 16
    %v6474 = vrot.slane %v6472, 5
    %v6475 = vrot.slane %v5762, 6
    %v6476 = vor.u32 %v6474, %v6475
    %v6477 = vsel %vm6447, %v6471, %v6476
    %v6478 = vrot.slane %v4291, 5
    %v6479 = vrot.slane %v4294, 6
    %v6480 = vor.u32 %v6478, %v6479
    %v6481 = vrot.slane %v6480, 4
    %v6482 = vrot.slane %v4301, 5
    %v6483 = vrot.slane %v4304, 6
    %v6484 = vor.u32 %v6482, %v6483
    %v6485 = vsel %vm6447, %v6481, %v6484
    %v6486 = vrot.slane %v6484, 4
    %v6487 = vshrl.u32 %v4106, 16
    %v6489 = vrot.slane %v6487, 5
    %v6490 = vrot.slane %v5776, 6
    %v6491 = vor.u32 %v6489, %v6490
    %v6492 = vsel %vm6447, %v6486, %v6491
    %v6493 = vrot.slane %v4319, 5
    %v6494 = vrot.slane %v4322, 6
    %v6495 = vor.u32 %v6493, %v6494
    %v6496 = vrot.slane %v6495, 4
    %v6497 = vrot.slane %v4329, 5
    %v6498 = vrot.slane %v4332, 6
    %v6499 = vor.u32 %v6497, %v6498
    %v6500 = vsel %vm6447, %v6496, %v6499
    %v6501 = vrot.slane %v6499, 4
    %v6502 = vshrl.u32 %v4110, 16
    %v6504 = vrot.slane %v6502, 5
    %v6505 = vrot.slane %v5790, 6
    %v6506 = vor.u32 %v6504, %v6505
    %v6507 = vsel %vm6447, %v6501, %v6506
    %v6508 = vrot.slane %v4347, 5
    %v6509 = vrot.slane %v4350, 6
    %v6510 = vor.u32 %v6508, %v6509
    %v6511 = vrot.slane %v6510, 4
    %v6512 = vrot.slane %v4357, 5
    %v6513 = vrot.slane %v4360, 6
    %v6514 = vor.u32 %v6512, %v6513
    %v6515 = vsel %vm6447, %v6511, %v6514
    %v6516 = vrot.slane %v6514, 4
    %v6517 = vshrl.u32 %v4114, 16
    %v6519 = vrot.slane %v6517, 5
    %v6520 = vrot.slane %v5804, 6
    %v6521 = vor.u32 %v6519, %v6520
    %v6522 = vsel %vm6447, %v6516, %v6521
    %v6523 = vrot.slane %v4375, 5
    %v6524 = vrot.slane %v4378, 6
    %v6525 = vor.u32 %v6523, %v6524
    %v6526 = vrot.slane %v6525, 4
    %v6527 = vrot.slane %v4385, 5
    %v6528 = vrot.slane %v4388, 6
    %v6529 = vor.u32 %v6527, %v6528
    %v6530 = vsel %vm6447, %v6526, %v6529
    %v6531 = vrot.slane %v6529, 4
    %v6532 = vshrl.u32 %v4118, 16
    %v6534 = vrot.slane %v6532, 5
    %v6535 = vrot.slane %v5818, 6
    %v6536 = vor.u32 %v6534, %v6535
    %v6537 = vsel %vm6447, %v6531, %v6536
    %v6538 = vrot.slane %v4403, 5
    %v6539 = vrot.slane %v4406, 6
    %v6540 = vor.u32 %v6538, %v6539
    %v6541 = vrot.slane %v6540, 4
    %v6542 = vrot.slane %v4413, 5
    %v6543 = vrot.slane %v4416, 6
    %v6544 = vor.u32 %v6542, %v6543
    %v6545 = vsel %vm6447, %v6541, %v6544
    %v6546 = vrot.slane %v6544, 4
    %v6547 = vshrl.u32 %v4122, 16
    %v6549 = vrot.slane %v6547, 5
    %v6550 = vrot.slane %v5832, 6
    %v6551 = vor.u32 %v6549, %v6550
    %v6552 = vsel %vm6447, %v6546, %v6551
    %v6553 = vrot.slane %v4431, 5
    %v6554 = vrot.slane %v4434, 6
    %v6555 = vor.u32 %v6553, %v6554
    %v6556 = vrot.slane %v6555, 4
    %v6557 = vrot.slane %v4441, 5
    %v6558 = vrot.slane %v4444, 6
    %v6559 = vor.u32 %v6557, %v6558
    %v6560 = vsel %vm6447, %v6556, %v6559
    %v6561 = vrot.slane %v6559, 4
    %v6562 = vshrl.u32 %v4126, 16
    %v6564 = vrot.slane %v6562, 5
    %v6565 = vrot.slane %v5846, 6
    %v6566 = vor.u32 %v6564, %v6565
    %v6567 = vsel %vm6447, %v6561, %v6566
    %v6568 = vrot.slane %v4459, 5
    %v6569 = vrot.slane %v4462, 6
    %v6570 = vor.u32 %v6568, %v6569
    %v6571 = vrot.slane %v6570, 4
    %v6572 = vrot.slane %v4469, 5
    %v6573 = vrot.slane %v4472, 6
    %v6574 = vor.u32 %v6572, %v6573
    %v6575 = vsel %vm6447, %v6571, %v6574
    %v6576 = vrot.slane %v6574, 4
    %v6577 = vshrl.u32 %v4130, 16
    %v6579 = vrot.slane %v6577, 5
    %v6580 = vrot.slane %v5860, 6
    %v6581 = vor.u32 %v6579, %v6580
    %v6582 = vsel %vm6447, %v6576, %v6581
    %v6583 = vrot.slane %v4487, 5
    %v6584 = vrot.slane %v4490, 6
    %v6585 = vor.u32 %v6583, %v6584
    %v6586 = vrot.slane %v6585, 4
    %v6587 = vrot.slane %v4497, 5
    %v6588 = vrot.slane %v4500, 6
    %v6589 = vor.u32 %v6587, %v6588
    %v6590 = vsel %vm6447, %v6586, %v6589
    %v6591 = vrot.slane %v6589, 4
    %v6592 = vshrl.u32 %v4134, 16
    %v6594 = vrot.slane %v6592, 5
    %v6595 = vrot.slane %v5874, 6
    %v6596 = vor.u32 %v6594, %v6595
    %v6597 = vsel %vm6447, %v6591, %v6596
    %v6598 = vrot.slane %v4515, 5
    %v6599 = vrot.slane %v4518, 6
    %v6600 = vor.u32 %v6598, %v6599
    %v6601 = vrot.slane %v6600, 4
    %v6602 = vrot.slane %v4525, 5
    %v6603 = vrot.slane %v4528, 6
    %v6604 = vor.u32 %v6602, %v6603
    %v6605 = vsel %vm6447, %v6601, %v6604
    %v6606 = vrot.slane %v6604, 4
    %v6607 = vshrl.u32 %v4138, 16
    %v6609 = vrot.slane %v6607, 5
    %v6610 = vrot.slane %v5888, 6
    %v6611 = vor.u32 %v6609, %v6610
    %v6612 = vsel %vm6447, %v6606, %v6611
    %v6613 = vrot.slane %v4543, 5
    %v6614 = vrot.slane %v4546, 6
    %v6615 = vor.u32 %v6613, %v6614
    %v6616 = vrot.slane %v6615, 4
    %v6617 = vrot.slane %v4553, 5
    %v6618 = vrot.slane %v4556, 6
    %v6619 = vor.u32 %v6617, %v6618
    %v6620 = vsel %vm6447, %v6616, %v6619
    %v6621 = vrot.slane %v6619, 4
    %v6622 = vshrl.u32 %v4142, 16
    %v6624 = vrot.slane %v6622, 5
    %v6625 = vrot.slane %v5902, 6
    %v6626 = vor.u32 %v6624, %v6625
    %v6627 = vsel %vm6447, %v6621, %v6626
    %v6628 = vrot.slane %v4571, 5
    %v6629 = vrot.slane %v4574, 6
    %v6630 = vor.u32 %v6628, %v6629
    %v6631 = vrot.slane %v6630, 4
    %v6632 = vrot.slane %v4581, 5
    %v6633 = vrot.slane %v4584, 6
    %v6634 = vor.u32 %v6632, %v6633
    %v6635 = vsel %vm6447, %v6631, %v6634
    %v6636 = vrot.slane %v6634, 4
    %v6637 = vshrl.u32 %v4146, 16
    %v6639 = vrot.slane %v6637, 5
    %v6640 = vrot.slane %v5916, 6
    %v6641 = vor.u32 %v6639, %v6640
    %v6642 = vsel %vm6447, %v6636, %v6641
    %v6643 = vrot.slane %v4599, 5
    %v6644 = vrot.slane %v4602, 6
    %v6645 = vor.u32 %v6643, %v6644
    %v6646 = vrot.slane %v6645, 4
    %v6647 = vrot.slane %v4609, 5
    %v6648 = vrot.slane %v4612, 6
    %v6649 = vor.u32 %v6647, %v6648
    %v6650 = vsel %vm6447, %v6646, %v6649
    %v6651 = vrot.slane %v6649, 4
    %v6652 = vshrl.u32 %v4150, 16
    %v6654 = vrot.slane %v6652, 5
    %v6655 = vrot.slane %v5930, 6
    %v6656 = vor.u32 %v6654, %v6655
    %v6657 = vsel %vm6447, %v6651, %v6656
    %v6658 = vrot.slane %v4627, 5
    %v6659 = vrot.slane %v4630, 6
    %v6660 = vor.u32 %v6658, %v6659
    %v6661 = vrot.slane %v6660, 4
    %v6662 = vrot.slane %v4637, 5
    %v6663 = vrot.slane %v4640, 6
    %v6664 = vor.u32 %v6662, %v6663
    %v6665 = vsel %vm6447, %v6661, %v6664
    %v6666 = vrot.slane %v6664, 4
    %v6667 = vshrl.u32 %v4154, 16
    %v6669 = vrot.slane %v6667, 5
    %v6670 = vrot.slane %v5944, 6
    %v6671 = vor.u32 %v6669, %v6670
    %v6672 = vsel %vm6447, %v6666, %v6671
    %v6673 = vrot.slane %v4655, 5
    %v6674 = vrot.slane %v4658, 6
    %v6675 = vor.u32 %v6673, %v6674
    %v6676 = vrot.slane %v6675, 4
    %v6677 = vrot.slane %v4665, 5
    %v6678 = vrot.slane %v4668, 6
    %v6679 = vor.u32 %v6677, %v6678
    %v6680 = vsel %vm6447, %v6676, %v6679
    %v6681 = vrot.slane %v6679, 4
    %v6682 = vshrl.u32 %v4158, 16
    %v6684 = vrot.slane %v6682, 5
    %v6685 = vrot.slane %v5958, 6
    %v6686 = vor.u32 %v6684, %v6685
    %v6687 = vsel %vm6447, %v6681, %v6686
    %v6688 = vrot.slane %v4683, 5
    %v6689 = vrot.slane %v4686, 6
    %v6690 = vor.u32 %v6688, %v6689
    %v6691 = vrot.slane %v6690, 4
    %v6692 = vrot.slane %v4693, 5
    %v6693 = vrot.slane %v4696, 6
    %v6694 = vor.u32 %v6692, %v6693
    %v6695 = vsel %vm6447, %v6691, %v6694
    %v6696 = vrot.slane %v6694, 4
    %v6697 = vshrl.u32 %v4162, 16
    %v6699 = vrot.slane %v6697, 5
    %v6700 = vrot.slane %v5972, 6
    %v6701 = vor.u32 %v6699, %v6700
    %v6702 = vsel %vm6447, %v6696, %v6701
    %v6703 = vrot.slane %v4711, 5
    %v6704 = vrot.slane %v4714, 6
    %v6705 = vor.u32 %v6703, %v6704
    %v6706 = vrot.slane %v6705, 4
    %v6707 = vrot.slane %v4721, 5
    %v6708 = vrot.slane %v4724, 6
    %v6709 = vor.u32 %v6707, %v6708
    %v6710 = vsel %vm6447, %v6706, %v6709
    %v6711 = vrot.slane %v6709, 4
    %v6712 = vshrl.u32 %v4166, 16
    %v6714 = vrot.slane %v6712, 5
    %v6715 = vrot.slane %v5986, 6
    %v6716 = vor.u32 %v6714, %v6715
    %v6717 = vsel %vm6447, %v6711, %v6716
    %v6718 = vrot.slane %v4739, 5
    %v6719 = vrot.slane %v4742, 6
    %v6720 = vor.u32 %v6718, %v6719
    %v6721 = vrot.slane %v6720, 4
    %v6722 = vrot.slane %v4749, 5
    %v6723 = vrot.slane %v4752, 6
    %v6724 = vor.u32 %v6722, %v6723
    %v6725 = vsel %vm6447, %v6721, %v6724
    %v6726 = vrot.slane %v6724, 4
    %v6727 = vshrl.u32 %v4170, 16
    %v6729 = vrot.slane %v6727, 5
    %v6730 = vrot.slane %v6000, 6
    %v6731 = vor.u32 %v6729, %v6730
    %v6732 = vsel %vm6447, %v6726, %v6731
    %v6733 = vrot.slane %v4767, 5
    %v6734 = vrot.slane %v4770, 6
    %v6735 = vor.u32 %v6733, %v6734
    %v6736 = vrot.slane %v6735, 4
    %v6737 = vrot.slane %v4777, 5
    %v6738 = vrot.slane %v4780, 6
    %v6739 = vor.u32 %v6737, %v6738
    %v6740 = vsel %vm6447, %v6736, %v6739
    %v6741 = vrot.slane %v6739, 4
    %v6742 = vshrl.u32 %v4174, 16
    %v6744 = vrot.slane %v6742, 5
    %v6745 = vrot.slane %v6014, 6
    %v6746 = vor.u32 %v6744, %v6745
    %v6747 = vsel %vm6447, %v6741, %v6746
    %v6748 = vrot.slane %v4795, 5
    %v6749 = vrot.slane %v4798, 6
    %v6750 = vor.u32 %v6748, %v6749
    %v6751 = vrot.slane %v6750, 4
    %v6752 = vrot.slane %v4805, 5
    %v6753 = vrot.slane %v4808, 6
    %v6754 = vor.u32 %v6752, %v6753
    %v6755 = vsel %vm6447, %v6751, %v6754
    %v6756 = vrot.slane %v6754, 4
    %v6757 = vshrl.u32 %v4178, 16
    %v6759 = vrot.slane %v6757, 5
    %v6760 = vrot.slane %v6028, 6
    %v6761 = vor.u32 %v6759, %v6760
    %v6762 = vsel %vm6447, %v6756, %v6761
    %v6763 = vrot.slane %v4823, 5
    %v6764 = vrot.slane %v4826, 6
    %v6765 = vor.u32 %v6763, %v6764
    %v6766 = vrot.slane %v6765, 4
    %v6767 = vrot.slane %v4833, 5
    %v6768 = vrot.slane %v4836, 6
    %v6769 = vor.u32 %v6767, %v6768
    %v6770 = vsel %vm6447, %v6766, %v6769
    %v6771 = vrot.slane %v6769, 4
    %v6772 = vshrl.u32 %v4182, 16
    %v6774 = vrot.slane %v6772, 5
    %v6775 = vrot.slane %v6042, 6
    %v6776 = vor.u32 %v6774, %v6775
    %v6777 = vsel %vm6447, %v6771, %v6776
    %v6778 = vrot.slane %v4851, 5
    %v6779 = vrot.slane %v4854, 6
    %v6780 = vor.u32 %v6778, %v6779
    %v6781 = vrot.slane %v6780, 4
    %v6782 = vrot.slane %v4861, 5
    %v6783 = vrot.slane %v4864, 6
    %v6784 = vor.u32 %v6782, %v6783
    %v6785 = vsel %vm6447, %v6781, %v6784
    %v6786 = vrot.slane %v6784, 4
    %v6787 = vshrl.u32 %v4186, 16
    %v6789 = vrot.slane %v6787, 5
    %v6790 = vrot.slane %v6056, 6
    %v6791 = vor.u32 %v6789, %v6790
    %v6792 = vsel %vm6447, %v6786, %v6791
    %v6793 = vrot.slane %v4879, 5
    %v6794 = vrot.slane %v4882, 6
    %v6795 = vor.u32 %v6793, %v6794
    %v6796 = vrot.slane %v6795, 4
    %v6797 = vrot.slane %v4889, 5
    %v6798 = vrot.slane %v4892, 6
    %v6799 = vor.u32 %v6797, %v6798
    %v6800 = vsel %vm6447, %v6796, %v6799
    %v6801 = vrot.slane %v6799, 4
    %v6802 = vshrl.u32 %v4190, 16
    %v6804 = vrot.slane %v6802, 5
    %v6805 = vrot.slane %v6070, 6
    %v6806 = vor.u32 %v6804, %v6805
    %v6807 = vsel %vm6447, %v6801, %v6806
    %v6808 = vrot.slane %v4907, 5
    %v6809 = vrot.slane %v4910, 6
    %v6810 = vor.u32 %v6808, %v6809
    %v6811 = vrot.slane %v6810, 4
    %v6812 = vrot.slane %v4917, 5
    %v6813 = vrot.slane %v4920, 6
    %v6814 = vor.u32 %v6812, %v6813
    %v6815 = vsel %vm6447, %v6811, %v6814
    %v6816 = vrot.slane %v6814, 4
    %v6817 = vshrl.u32 %v4194, 16
    %v6819 = vrot.slane %v6817, 5
    %v6820 = vrot.slane %v6084, 6
    %v6821 = vor.u32 %v6819, %v6820
    %v6822 = vsel %vm6447, %v6816, %v6821
    %v6823 = vrot.slane %v4935, 5
    %v6824 = vrot.slane %v4938, 6
    %v6825 = vor.u32 %v6823, %v6824
    %v6826 = vrot.slane %v6825, 4
    %v6827 = vrot.slane %v4945, 5
    %v6828 = vrot.slane %v4948, 6
    %v6829 = vor.u32 %v6827, %v6828
    %v6830 = vsel %vm6447, %v6826, %v6829
    %v6831 = vrot.slane %v6829, 4
    %v6832 = vshrl.u32 %v4198, 16
    %v6834 = vrot.slane %v6832, 5
    %v6835 = vrot.slane %v6098, 6
    %v6836 = vor.u32 %v6834, %v6835
    %v6837 = vsel %vm6447, %v6831, %v6836
    %v6838 = vrot.slane %v4963, 5
    %v6839 = vrot.slane %v4966, 6
    %v6840 = vor.u32 %v6838, %v6839
    %v6841 = vrot.slane %v6840, 4
    %v6842 = vrot.slane %v4973, 5
    %v6843 = vrot.slane %v4976, 6
    %v6844 = vor.u32 %v6842, %v6843
    %v6845 = vsel %vm6447, %v6841, %v6844
    %v6846 = vrot.slane %v6844, 4
    %v6847 = vshrl.u32 %v4202, 16
    %v6849 = vrot.slane %v6847, 5
    %v6850 = vrot.slane %v6112, 6
    %v6851 = vor.u32 %v6849, %v6850
    %v6852 = vsel %vm6447, %v6846, %v6851
    %v6853 = vrot.slane %v4991, 5
    %v6854 = vrot.slane %v4994, 6
    %v6855 = vor.u32 %v6853, %v6854
    %v6856 = vrot.slane %v6855, 4
    %v6857 = vrot.slane %v5001, 5
    %v6858 = vrot.slane %v5004, 6
    %v6859 = vor.u32 %v6857, %v6858
    %v6860 = vsel %vm6447, %v6856, %v6859
    %v6861 = vrot.slane %v6859, 4
    %v6862 = vshrl.u32 %v4206, 16
    %v6864 = vrot.slane %v6862, 5
    %v6865 = vrot.slane %v6126, 6
    %v6866 = vor.u32 %v6864, %v6865
    %v6867 = vsel %vm6447, %v6861, %v6866
    %v6868 = vrot.slane %v5019, 5
    %v6869 = vrot.slane %v5022, 6
    %v6870 = vor.u32 %v6868, %v6869
    %v6871 = vrot.slane %v6870, 4
    %v6872 = vrot.slane %v5029, 5
    %v6873 = vrot.slane %v5032, 6
    %v6874 = vor.u32 %v6872, %v6873
    %v6875 = vsel %vm6447, %v6871, %v6874
    %v6876 = vrot.slane %v6874, 4
    %v6877 = vshrl.u32 %v4210, 16
    %v6879 = vrot.slane %v6877, 5
    %v6880 = vrot.slane %v6140, 6
    %v6881 = vor.u32 %v6879, %v6880
    %v6882 = vsel %vm6447, %v6876, %v6881
    %v6883 = vrot.slane %v5047, 5
    %v6884 = vrot.slane %v5050, 6
    %v6885 = vor.u32 %v6883, %v6884
    %v6886 = vrot.slane %v6885, 4
    %v6887 = vrot.slane %v5057, 5
    %v6888 = vrot.slane %v5060, 6
    %v6889 = vor.u32 %v6887, %v6888
    %v6890 = vsel %vm6447, %v6886, %v6889
    %v6891 = vrot.slane %v6889, 4
    %v6892 = vshrl.u32 %v4214, 16
    %v6894 = vrot.slane %v6892, 5
    %v6895 = vrot.slane %v6154, 6
    %v6896 = vor.u32 %v6894, %v6895
    %v6897 = vsel %vm6447, %v6891, %v6896
    %v6898 = vrot.slane %v5075, 5
    %v6899 = vrot.slane %v5078, 6
    %v6900 = vor.u32 %v6898, %v6899
    %v6901 = vrot.slane %v6900, 4
    %v6902 = vrot.slane %v5085, 5
    %v6903 = vrot.slane %v5088, 6
    %v6904 = vor.u32 %v6902, %v6903
    %v6905 = vsel %vm6447, %v6901, %v6904
    %v6906 = vrot.slane %v6904, 4
    %v6907 = vshrl.u32 %v4218, 16
    %v6909 = vrot.slane %v6907, 5
    %v6910 = vrot.slane %v6168, 6
    %v6911 = vor.u32 %v6909, %v6910
    %v6912 = vsel %vm6447, %v6906, %v6911
    %v6913 = vrot.slane %v5103, 5
    %v6914 = vrot.slane %v5106, 6
    %v6915 = vor.u32 %v6913, %v6914
    %v6916 = vrot.slane %v6915, 4
    %v6917 = vrot.slane %v5113, 5
    %v6918 = vrot.slane %v5116, 6
    %v6919 = vor.u32 %v6917, %v6918
    %v6920 = vsel %vm6447, %v6916, %v6919
    %v6921 = vrot.slane %v6919, 4
    %v6922 = vshrl.u32 %v4222, 16
    %v6924 = vrot.slane %v6922, 5
    %v6925 = vrot.slane %v6182, 6
    %v6926 = vor.u32 %v6924, %v6925
    %v6927 = vsel %vm6447, %v6921, %v6926
    %v6928 = vunpack.c.l.b16 %v4242
    %v6929 = vunpack.c.l.b16 %v4252
    %v6930 = vunpack.c.l.b16 %v4270
    %v6931 = vunpack.c.l.b16 %v4280
    %v6932 = vunpack.c.l.b16 %v4298
    %v6933 = vunpack.c.l.b16 %v4308
    %v6934 = vunpack.c.l.b16 %v4326
    %v6935 = vunpack.c.l.b16 %v4336
    %v6936 = vunpack.c.l.b16 %v4354
    %v6937 = vunpack.c.l.b16 %v4364
    %v6938 = vunpack.c.l.b16 %v4382
    %v6939 = vunpack.c.l.b16 %v4392
    %v6940 = vunpack.c.l.b16 %v4410
    %v6941 = vunpack.c.l.b16 %v4420
    %v6942 = vunpack.c.l.b16 %v4438
    %v6943 = vunpack.c.l.b16 %v4448
    %v6944 = vunpack.c.l.b16 %v4466
    %v6945 = vunpack.c.l.b16 %v4476
    %v6946 = vunpack.c.l.b16 %v4494
    %v6947 = vunpack.c.l.b16 %v4504
    %v6948 = vunpack.c.l.b16 %v4522
    %v6949 = vunpack.c.l.b16 %v4532
    %v6950 = vunpack.c.l.b16 %v4550
    %v6951 = vunpack.c.l.b16 %v4560
    %v6952 = vunpack.c.l.b16 %v4578
    %v6953 = vunpack.c.l.b16 %v4588
    %v6954 = vunpack.c.l.b16 %v4606
    %v6955 = vunpack.c.l.b16 %v4616
    %v6956 = vunpack.c.l.b16 %v4634
    %v6957 = vunpack.c.l.b16 %v4644
    %v6958 = vunpack.c.l.b16 %v4662
    %v6959 = vunpack.c.l.b16 %v4672
    %v6960 = vunpack.c.l.b16 %v4690
    %v6961 = vunpack.c.l.b16 %v4700
    %v6962 = vunpack.c.l.b16 %v4718
    %v6963 = vunpack.c.l.b16 %v4728
    %v6964 = vunpack.c.l.b16 %v4746
    %v6965 = vunpack.c.l.b16 %v4756
    %v6966 = vunpack.c.l.b16 %v4774
    %v6967 = vunpack.c.l.b16 %v4784
    %v6968 = vunpack.c.l.b16 %v4802
    %v6969 = vunpack.c.l.b16 %v4812
    %v6970 = vunpack.c.l.b16 %v4830
    %v6971 = vunpack.c.l.b16 %v4840
    %v6972 = vunpack.c.l.b16 %v4858
    %v6973 = vunpack.c.l.b16 %v4868
    %v6974 = vunpack.c.l.b16 %v4886
    %v6975 = vunpack.c.l.b16 %v4896
    %v6976 = vunpack.c.l.b16 %v4914
    %v6977 = vunpack.c.l.b16 %v4924
    %v6978 = vunpack.c.l.b16 %v4942
    %v6979 = vunpack.c.l.b16 %v4952
    %v6980 = vunpack.c.l.b16 %v4970
    %v6981 = vunpack.c.l.b16 %v4980
    %v6982 = vunpack.c.l.b16 %v4998
    %v6983 = vunpack.c.l.b16 %v5008
    %v6984 = vunpack.c.l.b16 %v5026
    %v6985 = vunpack.c.l.b16 %v5036
    %v6986 = vunpack.c.l.b16 %v5054
    %v6987 = vunpack.c.l.b16 %v5064
    %v6988 = vunpack.c.l.b16 %v5082
    %v6989 = vunpack.c.l.b16 %v5092
    %v6990 = vunpack.c.l.b16 %v5110
    %v6991 = vunpack.c.l.b16 %v5120
    %v6992 = vpack.c.b16 %v6929, %v6928
    %v6993 = vpack.c.b16 %v6931, %v6930
    %v6994 = vpack.c.b16 %v6933, %v6932
    %v6995 = vpack.c.b16 %v6935, %v6934
    %v6996 = vpack.c.b16 %v6937, %v6936
    %v6997 = vpack.c.b16 %v6939, %v6938
    %v6998 = vpack.c.b16 %v6941, %v6940
    %v6999 = vpack.c.b16 %v6943, %v6942
    %v7000 = vpack.c.b16 %v6945, %v6944
    %v7001 = vpack.c.b16 %v6947, %v6946
    %v7002 = vpack.c.b16 %v6949, %v6948
    %v7003 = vpack.c.b16 %v6951, %v6950
    %v7004 = vpack.c.b16 %v6953, %v6952
    %v7005 = vpack.c.b16 %v6955, %v6954
    %v7006 = vpack.c.b16 %v6957, %v6956
    %v7007 = vpack.c.b16 %v6959, %v6958
    %v7008 = vpack.c.b16 %v6961, %v6960
    %v7009 = vpack.c.b16 %v6963, %v6962
    %v7010 = vpack.c.b16 %v6965, %v6964
    %v7011 = vpack.c.b16 %v6967, %v6966
    %v7012 = vpack.c.b16 %v6969, %v6968
    %v7013 = vpack.c.b16 %v6971, %v6970
    %v7014 = vpack.c.b16 %v6973, %v6972
    %v7015 = vpack.c.b16 %v6975, %v6974
    %v7016 = vpack.c.b16 %v6977, %v6976
    %v7017 = vpack.c.b16 %v6979, %v6978
    %v7018 = vpack.c.b16 %v6981, %v6980
    %v7019 = vpack.c.b16 %v6983, %v6982
    %v7020 = vpack.c.b16 %v6985, %v6984
    %v7021 = vpack.c.b16 %v6987, %v6986
    %v7022 = vpack.c.b16 %v6989, %v6988
    %v7023 = vpack.c.b16 %v6991, %v6990
    %v7024 = vunpack.c.l.b16 %v5223
    %v7025 = vunpack.c.l.b16 %v5226
    %v7026 = vunpack.c.l.b16 %v5230
    %v7027 = vunpack.c.l.b16 %v5233
    %v7028 = vunpack.c.l.b16 %v5237
    %v7029 = vunpack.c.l.b16 %v5240
    %v7030 = vunpack.c.l.b16 %v5244
    %v7031 = vunpack.c.l.b16 %v5247
    %v7032 = vunpack.c.l.b16 %v5251
    %v7033 = vunpack.c.l.b16 %v5254
    %v7034 = vunpack.c.l.b16 %v5258
    %v7035 = vunpack.c.l.b16 %v5261
    %v7036 = vunpack.c.l.b16 %v5265
    %v7037 = vunpack.c.l.b16 %v5268
    %v7038 = vunpack.c.l.b16 %v5272
    %v7039 = vunpack.c.l.b16 %v5275
    %v7040 = vunpack.c.l.b16 %v5279
    %v7041 = vunpack.c.l.b16 %v5282
    %v7042 = vunpack.c.l.b16 %v5286
    %v7043 = vunpack.c.l.b16 %v5289
    %v7044 = vunpack.c.l.b16 %v5293
    %v7045 = vunpack.c.l.b16 %v5296
    %v7046 = vunpack.c.l.b16 %v5300
    %v7047 = vunpack.c.l.b16 %v5303
    %v7048 = vunpack.c.l.b16 %v5307
    %v7049 = vunpack.c.l.b16 %v5310
    %v7050 = vunpack.c.l.b16 %v5314
    %v7051 = vunpack.c.l.b16 %v5317
    %v7052 = vunpack.c.l.b16 %v5321
    %v7053 = vunpack.c.l.b16 %v5324
    %v7054 = vunpack.c.l.b16 %v5328
    %v7055 = vunpack.c.l.b16 %v5331
    %v7056 = vunpack.c.l.b16 %v5335
    %v7057 = vunpack.c.l.b16 %v5338
    %v7058 = vunpack.c.l.b16 %v5342
    %v7059 = vunpack.c.l.b16 %v5345
    %v7060 = vunpack.c.l.b16 %v5349
    %v7061 = vunpack.c.l.b16 %v5352
    %v7062 = vunpack.c.l.b16 %v5356
    %v7063 = vunpack.c.l.b16 %v5359
    %v7064 = vunpack.c.l.b16 %v5363
    %v7065 = vunpack.c.l.b16 %v5366
    %v7066 = vunpack.c.l.b16 %v5370
    %v7067 = vunpack.c.l.b16 %v5373
    %v7068 = vunpack.c.l.b16 %v5377
    %v7069 = vunpack.c.l.b16 %v5380
    %v7070 = vunpack.c.l.b16 %v5384
    %v7071 = vunpack.c.l.b16 %v5387
    %v7072 = vunpack.c.l.b16 %v5391
    %v7073 = vunpack.c.l.b16 %v5394
    %v7074 = vunpack.c.l.b16 %v5398
    %v7075 = vunpack.c.l.b16 %v5401
    %v7076 = vunpack.c.l.b16 %v5405
    %v7077 = vunpack.c.l.b16 %v5408
    %v7078 = vunpack.c.l.b16 %v5412
    %v7079 = vunpack.c.l.b16 %v5415
    %v7080 = vunpack.c.l.b16 %v5419
    %v7081 = vunpack.c.l.b16 %v5422
    %v7082 = vunpack.c.l.b16 %v5426
    %v7083 = vunpack.c.l.b16 %v5429
    %v7084 = vunpack.c.l.b16 %v5433
    %v7085 = vunpack.c.l.b16 %v5436
    %v7086 = vunpack.c.l.b16 %v5440
    %v7087 = vunpack.c.l.b16 %v5443
    %v7088 = vpack.c.b16 %v7025, %v7024
    %v7089 = vpack.c.b16 %v7027, %v7026
    %v7090 = vpack.c.b16 %v7029, %v7028
    %v7091 = vpack.c.b16 %v7031, %v7030
    %v7092 = vpack.c.b16 %v7033, %v7032
    %v7093 = vpack.c.b16 %v7035, %v7034
    %v7094 = vpack.c.b16 %v7037, %v7036
    %v7095 = vpack.c.b16 %v7039, %v7038
    %v7096 = vpack.c.b16 %v7041, %v7040
    %v7097 = vpack.c.b16 %v7043, %v7042
    %v7098 = vpack.c.b16 %v7045, %v7044
    %v7099 = vpack.c.b16 %v7047, %v7046
    %v7100 = vpack.c.b16 %v7049, %v7048
    %v7101 = vpack.c.b16 %v7051, %v7050
    %v7102 = vpack.c.b16 %v7053, %v7052
    %v7103 = vpack.c.b16 %v7055, %v7054
    %v7104 = vpack.c.b16 %v7057, %v7056
    %v7105 = vpack.c.b16 %v7059, %v7058
    %v7106 = vpack.c.b16 %v7061, %v7060
    %v7107 = vpack.c.b16 %v7063, %v7062
    %v7108 = vpack.c.b16 %v7065, %v7064
    %v7109 = vpack.c.b16 %v7067, %v7066
    %v7110 = vpack.c.b16 %v7069, %v7068
    %v7111 = vpack.c.b16 %v7071, %v7070
    %v7112 = vpack.c.b16 %v7073, %v7072
    %v7113 = vpack.c.b16 %v7075, %v7074
    %v7114 = vpack.c.b16 %v7077, %v7076
    %v7115 = vpack.c.b16 %v7079, %v7078
    %v7116 = vpack.c.b16 %v7081, %v7080
    %v7117 = vpack.c.b16 %v7083, %v7082
    %v7118 = vpack.c.b16 %v7085, %v7084
    %v7119 = vpack.c.b16 %v7087, %v7086
    %7120 = vrot.lane.b32.xlu0 %v7088, 16
    %v7121 = vpop.permute.xlu0 %7120
    %7122 = vrot.lane.b32.xlu0 %v7089, 16
    %v7123 = vpop.permute.xlu0 %7122
    %7124 = vrot.lane.b32.xlu0 %v7090, 16
    %v7125 = vpop.permute.xlu0 %7124
    %7126 = vrot.lane.b32.xlu0 %v7091, 16
    %v7127 = vpop.permute.xlu0 %7126
    %7128 = vrot.lane.b32.xlu0 %v7092, 16
    %v7129 = vpop.permute.xlu0 %7128
    %7130 = vrot.lane.b32.xlu0 %v7093, 16
    %v7131 = vpop.permute.xlu0 %7130
    %7132 = vrot.lane.b32.xlu0 %v7094, 16
    %v7133 = vpop.permute.xlu0 %7132
    %7134 = vrot.lane.b32.xlu0 %v7095, 16
    %v7135 = vpop.permute.xlu0 %7134
    %7136 = vrot.lane.b32.xlu0 %v7096, 16
    %v7137 = vpop.permute.xlu0 %7136
    %7138 = vrot.lane.b32.xlu0 %v7097, 16
    %v7139 = vpop.permute.xlu0 %7138
    %7140 = vrot.lane.b32.xlu0 %v7098, 16
    %v7141 = vpop.permute.xlu0 %7140
    %7142 = vrot.lane.b32.xlu0 %v7099, 16
    %v7143 = vpop.permute.xlu0 %7142
    %7144 = vrot.lane.b32.xlu0 %v7100, 16
    %v7145 = vpop.permute.xlu0 %7144
    %7146 = vrot.lane.b32.xlu0 %v7101, 16
    %v7147 = vpop.permute.xlu0 %7146
    %7148 = vrot.lane.b32.xlu0 %v7102, 16
    %v7149 = vpop.permute.xlu0 %7148
    %7150 = vrot.lane.b32.xlu0 %v7103, 16
    %v7151 = vpop.permute.xlu0 %7150
    %7152 = vrot.lane.b32.xlu0 %v7104, 16
    %v7153 = vpop.permute.xlu0 %7152
    %7154 = vrot.lane.b32.xlu0 %v7105, 16
    %v7155 = vpop.permute.xlu0 %7154
    %7156 = vrot.lane.b32.xlu0 %v7106, 16
    %v7157 = vpop.permute.xlu0 %7156
    %7158 = vrot.lane.b32.xlu0 %v7107, 16
    %v7159 = vpop.permute.xlu0 %7158
    %7160 = vrot.lane.b32.xlu0 %v7108, 16
    %v7161 = vpop.permute.xlu0 %7160
    %7162 = vrot.lane.b32.xlu0 %v7109, 16
    %v7163 = vpop.permute.xlu0 %7162
    %7164 = vrot.lane.b32.xlu0 %v7110, 16
    %v7165 = vpop.permute.xlu0 %7164
    %7166 = vrot.lane.b32.xlu0 %v7111, 16
    %v7167 = vpop.permute.xlu0 %7166
    %7168 = vrot.lane.b32.xlu0 %v7112, 16
    %v7169 = vpop.permute.xlu0 %7168
    %7170 = vrot.lane.b32.xlu0 %v7113, 16
    %v7171 = vpop.permute.xlu0 %7170
    %7172 = vrot.lane.b32.xlu0 %v7114, 16
    %v7173 = vpop.permute.xlu0 %7172
    %7174 = vrot.lane.b32.xlu0 %v7115, 16
    %v7175 = vpop.permute.xlu0 %7174
    %7176 = vrot.lane.b32.xlu0 %v7116, 16
    %v7177 = vpop.permute.xlu0 %7176
    %7178 = vrot.lane.b32.xlu0 %v7117, 16
    %v7179 = vpop.permute.xlu0 %7178
    %7180 = vrot.lane.b32.xlu0 %v7118, 16
    %v7181 = vpop.permute.xlu0 %7180
    %7182 = vrot.lane.b32.xlu0 %v7119, 16
    %v7183 = vpop.permute.xlu0 %7182
    %v7184 = vunpack.c.l.b16 %v5451
    %v7185 = vunpack.c.l.b16 %v5455
    %v7186 = vunpack.c.l.b16 %v5460
    %v7187 = vunpack.c.l.b16 %v5464
    %v7188 = vunpack.c.l.b16 %v5469
    %v7189 = vunpack.c.l.b16 %v5473
    %v7190 = vunpack.c.l.b16 %v5478
    %v7191 = vunpack.c.l.b16 %v5482
    %v7192 = vunpack.c.l.b16 %v5487
    %v7193 = vunpack.c.l.b16 %v5491
    %v7194 = vunpack.c.l.b16 %v5496
    %v7195 = vunpack.c.l.b16 %v5500
    %v7196 = vunpack.c.l.b16 %v5505
    %v7197 = vunpack.c.l.b16 %v5509
    %v7198 = vunpack.c.l.b16 %v5514
    %v7199 = vunpack.c.l.b16 %v5518
    %v7200 = vunpack.c.l.b16 %v5523
    %v7201 = vunpack.c.l.b16 %v5527
    %v7202 = vunpack.c.l.b16 %v5532
    %v7203 = vunpack.c.l.b16 %v5536
    %v7204 = vunpack.c.l.b16 %v5541
    %v7205 = vunpack.c.l.b16 %v5545
    %v7206 = vunpack.c.l.b16 %v5550
    %v7207 = vunpack.c.l.b16 %v5554
    %v7208 = vunpack.c.l.b16 %v5559
    %v7209 = vunpack.c.l.b16 %v5563
    %v7210 = vunpack.c.l.b16 %v5568
    %v7211 = vunpack.c.l.b16 %v5572
    %v7212 = vunpack.c.l.b16 %v5577
    %v7213 = vunpack.c.l.b16 %v5581
    %v7214 = vunpack.c.l.b16 %v5586
    %v7215 = vunpack.c.l.b16 %v5590
    %v7216 = vunpack.c.l.b16 %v5595
    %v7217 = vunpack.c.l.b16 %v5599
    %v7218 = vunpack.c.l.b16 %v5604
    %v7219 = vunpack.c.l.b16 %v5608
    %v7220 = vunpack.c.l.b16 %v5613
    %v7221 = vunpack.c.l.b16 %v5617
    %v7222 = vunpack.c.l.b16 %v5622
    %v7223 = vunpack.c.l.b16 %v5626
    %v7224 = vunpack.c.l.b16 %v5631
    %v7225 = vunpack.c.l.b16 %v5635
    %v7226 = vunpack.c.l.b16 %v5640
    %v7227 = vunpack.c.l.b16 %v5644
    %v7228 = vunpack.c.l.b16 %v5649
    %v7229 = vunpack.c.l.b16 %v5653
    %v7230 = vunpack.c.l.b16 %v5658
    %v7231 = vunpack.c.l.b16 %v5662
    %v7232 = vunpack.c.l.b16 %v5667
    %v7233 = vunpack.c.l.b16 %v5671
    %v7234 = vunpack.c.l.b16 %v5676
    %v7235 = vunpack.c.l.b16 %v5680
    %v7236 = vunpack.c.l.b16 %v5685
    %v7237 = vunpack.c.l.b16 %v5689
    %v7238 = vunpack.c.l.b16 %v5694
    %v7239 = vunpack.c.l.b16 %v5698
    %v7240 = vunpack.c.l.b16 %v5703
    %v7241 = vunpack.c.l.b16 %v5707
    %v7242 = vunpack.c.l.b16 %v5712
    %v7243 = vunpack.c.l.b16 %v5716
    %v7244 = vunpack.c.l.b16 %v5721
    %v7245 = vunpack.c.l.b16 %v5725
    %v7246 = vunpack.c.l.b16 %v5730
    %v7247 = vunpack.c.l.b16 %v5734
    %v7248 = vpack.c.b16 %v7185, %v7184
    %v7249 = vpack.c.b16 %v7187, %v7186
    %v7250 = vpack.c.b16 %v7189, %v7188
    %v7251 = vpack.c.b16 %v7191, %v7190
    %v7252 = vpack.c.b16 %v7193, %v7192
    %v7253 = vpack.c.b16 %v7195, %v7194
    %v7254 = vpack.c.b16 %v7197, %v7196
    %v7255 = vpack.c.b16 %v7199, %v7198
    %v7256 = vpack.c.b16 %v7201, %v7200
    %v7257 = vpack.c.b16 %v7203, %v7202
    %v7258 = vpack.c.b16 %v7205, %v7204
    %v7259 = vpack.c.b16 %v7207, %v7206
    %v7260 = vpack.c.b16 %v7209, %v7208
    %v7261 = vpack.c.b16 %v7211, %v7210
    %v7262 = vpack.c.b16 %v7213, %v7212
    %v7263 = vpack.c.b16 %v7215, %v7214
    %v7264 = vpack.c.b16 %v7217, %v7216
    %v7265 = vpack.c.b16 %v7219, %v7218
    %v7266 = vpack.c.b16 %v7221, %v7220
    %v7267 = vpack.c.b16 %v7223, %v7222
    %v7268 = vpack.c.b16 %v7225, %v7224
    %v7269 = vpack.c.b16 %v7227, %v7226
    %v7270 = vpack.c.b16 %v7229, %v7228
    %v7271 = vpack.c.b16 %v7231, %v7230
    %v7272 = vpack.c.b16 %v7233, %v7232
    %v7273 = vpack.c.b16 %v7235, %v7234
    %v7274 = vpack.c.b16 %v7237, %v7236
    %v7275 = vpack.c.b16 %v7239, %v7238
    %v7276 = vpack.c.b16 %v7241, %v7240
    %v7277 = vpack.c.b16 %v7243, %v7242
    %v7278 = vpack.c.b16 %v7245, %v7244
    %v7279 = vpack.c.b16 %v7247, %v7246
    %7280 = vrot.lane.b32.xlu0 %v7248, 32
    %v7281 = vpop.permute.xlu0 %7280
    %7282 = vrot.lane.b32.xlu0 %v7249, 32
    %v7283 = vpop.permute.xlu0 %7282
    %7284 = vrot.lane.b32.xlu0 %v7250, 32
    %v7285 = vpop.permute.xlu0 %7284
    %7286 = vrot.lane.b32.xlu0 %v7251, 32
    %v7287 = vpop.permute.xlu0 %7286
    %7288 = vrot.lane.b32.xlu0 %v7252, 32
    %v7289 = vpop.permute.xlu0 %7288
    %7290 = vrot.lane.b32.xlu0 %v7253, 32
    %v7291 = vpop.permute.xlu0 %7290
    %7292 = vrot.lane.b32.xlu0 %v7254, 32
    %v7293 = vpop.permute.xlu0 %7292
    %7294 = vrot.lane.b32.xlu0 %v7255, 32
    %v7295 = vpop.permute.xlu0 %7294
    %7296 = vrot.lane.b32.xlu0 %v7256, 32
    %v7297 = vpop.permute.xlu0 %7296
    %7298 = vrot.lane.b32.xlu0 %v7257, 32
    %v7299 = vpop.permute.xlu0 %7298
    %7300 = vrot.lane.b32.xlu0 %v7258, 32
    %v7301 = vpop.permute.xlu0 %7300
    %7302 = vrot.lane.b32.xlu0 %v7259, 32
    %v7303 = vpop.permute.xlu0 %7302
    %7304 = vrot.lane.b32.xlu0 %v7260, 32
    %v7305 = vpop.permute.xlu0 %7304
    %7306 = vrot.lane.b32.xlu0 %v7261, 32
    %v7307 = vpop.permute.xlu0 %7306
    %7308 = vrot.lane.b32.xlu0 %v7262, 32
    %v7309 = vpop.permute.xlu0 %7308
    %7310 = vrot.lane.b32.xlu0 %v7263, 32
    %v7311 = vpop.permute.xlu0 %7310
    %7312 = vrot.lane.b32.xlu0 %v7264, 32
    %v7313 = vpop.permute.xlu0 %7312
    %7314 = vrot.lane.b32.xlu0 %v7265, 32
    %v7315 = vpop.permute.xlu0 %7314
    %7316 = vrot.lane.b32.xlu0 %v7266, 32
    %v7317 = vpop.permute.xlu0 %7316
    %7318 = vrot.lane.b32.xlu0 %v7267, 32
    %v7319 = vpop.permute.xlu0 %7318
    %7320 = vrot.lane.b32.xlu0 %v7268, 32
    %v7321 = vpop.permute.xlu0 %7320
    %7322 = vrot.lane.b32.xlu0 %v7269, 32
    %v7323 = vpop.permute.xlu0 %7322
    %7324 = vrot.lane.b32.xlu0 %v7270, 32
    %v7325 = vpop.permute.xlu0 %7324
    %7326 = vrot.lane.b32.xlu0 %v7271, 32
    %v7327 = vpop.permute.xlu0 %7326
    %7328 = vrot.lane.b32.xlu0 %v7272, 32
    %v7329 = vpop.permute.xlu0 %7328
    %7330 = vrot.lane.b32.xlu0 %v7273, 32
    %v7331 = vpop.permute.xlu0 %7330
    %7332 = vrot.lane.b32.xlu0 %v7274, 32
    %v7333 = vpop.permute.xlu0 %7332
    %7334 = vrot.lane.b32.xlu0 %v7275, 32
    %v7335 = vpop.permute.xlu0 %7334
    %7336 = vrot.lane.b32.xlu0 %v7276, 32
    %v7337 = vpop.permute.xlu0 %7336
    %7338 = vrot.lane.b32.xlu0 %v7277, 32
    %v7339 = vpop.permute.xlu0 %7338
    %7340 = vrot.lane.b32.xlu0 %v7278, 32
    %v7341 = vpop.permute.xlu0 %7340
    %7342 = vrot.lane.b32.xlu0 %v7279, 32
    %v7343 = vpop.permute.xlu0 %7342
    %v7344 = vunpack.c.l.b16 %v4096
    %v7345 = vunpack.c.l.b16 %v4097
    %v7346 = vunpack.c.l.b16 %v4100
    %v7347 = vunpack.c.l.b16 %v4101
    %v7348 = vunpack.c.l.b16 %v4104
    %v7349 = vunpack.c.l.b16 %v4105
    %v7350 = vunpack.c.l.b16 %v4108
    %v7351 = vunpack.c.l.b16 %v4109
    %v7352 = vunpack.c.l.b16 %v4112
    %v7353 = vunpack.c.l.b16 %v4113
    %v7354 = vunpack.c.l.b16 %v4116
    %v7355 = vunpack.c.l.b16 %v4117
    %v7356 = vunpack.c.l.b16 %v4120
    %v7357 = vunpack.c.l.b16 %v4121
    %v7358 = vunpack.c.l.b16 %v4124
    %v7359 = vunpack.c.l.b16 %v4125
    %v7360 = vunpack.c.l.b16 %v4128
    %v7361 = vunpack.c.l.b16 %v4129
    %v7362 = vunpack.c.l.b16 %v4132
    %v7363 = vunpack.c.l.b16 %v4133
    %v7364 = vunpack.c.l.b16 %v4136
    %v7365 = vunpack.c.l.b16 %v4137
    %v7366 = vunpack.c.l.b16 %v4140
    %v7367 = vunpack.c.l.b16 %v4141
    %v7368 = vunpack.c.l.b16 %v4144
    %v7369 = vunpack.c.l.b16 %v4145
    %v7370 = vunpack.c.l.b16 %v4148
    %v7371 = vunpack.c.l.b16 %v4149
    %v7372 = vunpack.c.l.b16 %v4152
    %v7373 = vunpack.c.l.b16 %v4153
    %v7374 = vunpack.c.l.b16 %v4156
    %v7375 = vunpack.c.l.b16 %v4157
    %v7376 = vunpack.c.l.b16 %v4160
    %v7377 = vunpack.c.l.b16 %v4161
    %v7378 = vunpack.c.l.b16 %v4164
    %v7379 = vunpack.c.l.b16 %v4165
    %v7380 = vunpack.c.l.b16 %v4168
    %v7381 = vunpack.c.l.b16 %v4169
    %v7382 = vunpack.c.l.b16 %v4172
    %v7383 = vunpack.c.l.b16 %v4173
    %v7384 = vunpack.c.l.b16 %v4176
    %v7385 = vunpack.c.l.b16 %v4177
    %v7386 = vunpack.c.l.b16 %v4180
    %v7387 = vunpack.c.l.b16 %v4181
    %v7388 = vunpack.c.l.b16 %v4184
    %v7389 = vunpack.c.l.b16 %v4185
    %v7390 = vunpack.c.l.b16 %v4188
    %v7391 = vunpack.c.l.b16 %v4189
    %v7392 = vunpack.c.l.b16 %v4192
    %v7393 = vunpack.c.l.b16 %v4193
    %v7394 = vunpack.c.l.b16 %v4196
    %v7395 = vunpack.c.l.b16 %v4197
    %v7396 = vunpack.c.l.b16 %v4200
    %v7397 = vunpack.c.l.b16 %v4201
    %v7398 = vunpack.c.l.b16 %v4204
    %v7399 = vunpack.c.l.b16 %v4205
    %v7400 = vunpack.c.l.b16 %v4208
    %v7401 = vunpack.c.l.b16 %v4209
    %v7402 = vunpack.c.l.b16 %v4212
    %v7403 = vunpack.c.l.b16 %v4213
    %v7404 = vunpack.c.l.b16 %v4216
    %v7405 = vunpack.c.l.b16 %v4217
    %v7406 = vunpack.c.l.b16 %v4220
    %v7407 = vunpack.c.l.b16 %v4221
    %v7408 = vpack.c.b16 %v7345, %v7344
    %v7409 = vpack.c.b16 %v7347, %v7346
    %v7410 = vpack.c.b16 %v7349, %v7348
    %v7411 = vpack.c.b16 %v7351, %v7350
    %v7412 = vpack.c.b16 %v7353, %v7352
    %v7413 = vpack.c.b16 %v7355, %v7354
    %v7414 = vpack.c.b16 %v7357, %v7356
    %v7415 = vpack.c.b16 %v7359, %v7358
    %v7416 = vpack.c.b16 %v7361, %v7360
    %v7417 = vpack.c.b16 %v7363, %v7362
    %v7418 = vpack.c.b16 %v7365, %v7364
    %v7419 = vpack.c.b16 %v7367, %v7366
    %v7420 = vpack.c.b16 %v7369, %v7368
    %v7421 = vpack.c.b16 %v7371, %v7370
    %v7422 = vpack.c.b16 %v7373, %v7372
    %v7423 = vpack.c.b16 %v7375, %v7374
    %v7424 = vpack.c.b16 %v7377, %v7376
    %v7425 = vpack.c.b16 %v7379, %v7378
    %v7426 = vpack.c.b16 %v7381, %v7380
    %v7427 = vpack.c.b16 %v7383, %v7382
    %v7428 = vpack.c.b16 %v7385, %v7384
    %v7429 = vpack.c.b16 %v7387, %v7386
    %v7430 = vpack.c.b16 %v7389, %v7388
    %v7431 = vpack.c.b16 %v7391, %v7390
    %v7432 = vpack.c.b16 %v7393, %v7392
    %v7433 = vpack.c.b16 %v7395, %v7394
    %v7434 = vpack.c.b16 %v7397, %v7396
    %v7435 = vpack.c.b16 %v7399, %v7398
    %v7436 = vpack.c.b16 %v7401, %v7400
    %v7437 = vpack.c.b16 %v7403, %v7402
    %v7438 = vpack.c.b16 %v7405, %v7404
    %v7439 = vpack.c.b16 %v7407, %v7406
    %7440 = vrot.lane.b32.xlu0 %v7408, 48
    %v7441 = vpop.permute.xlu0 %7440
    %7442 = vrot.lane.b32.xlu0 %v7409, 48
    %v7443 = vpop.permute.xlu0 %7442
    %7444 = vrot.lane.b32.xlu0 %v7410, 48
    %v7445 = vpop.permute.xlu0 %7444
    %7446 = vrot.lane.b32.xlu0 %v7411, 48
    %v7447 = vpop.permute.xlu0 %7446
    %7448 = vrot.lane.b32.xlu0 %v7412, 48
    %v7449 = vpop.permute.xlu0 %7448
    %7450 = vrot.lane.b32.xlu0 %v7413, 48
    %v7451 = vpop.permute.xlu0 %7450
    %7452 = vrot.lane.b32.xlu0 %v7414, 48
    %v7453 = vpop.permute.xlu0 %7452
    %7454 = vrot.lane.b32.xlu0 %v7415, 48
    %v7455 = vpop.permute.xlu0 %7454
    %7456 = vrot.lane.b32.xlu0 %v7416, 48
    %v7457 = vpop.permute.xlu0 %7456
    %7458 = vrot.lane.b32.xlu0 %v7417, 48
    %v7459 = vpop.permute.xlu0 %7458
    %7460 = vrot.lane.b32.xlu0 %v7418, 48
    %v7461 = vpop.permute.xlu0 %7460
    %7462 = vrot.lane.b32.xlu0 %v7419, 48
    %v7463 = vpop.permute.xlu0 %7462
    %7464 = vrot.lane.b32.xlu0 %v7420, 48
    %v7465 = vpop.permute.xlu0 %7464
    %7466 = vrot.lane.b32.xlu0 %v7421, 48
    %v7467 = vpop.permute.xlu0 %7466
    %7468 = vrot.lane.b32.xlu0 %v7422, 48
    %v7469 = vpop.permute.xlu0 %7468
    %7470 = vrot.lane.b32.xlu0 %v7423, 48
    %v7471 = vpop.permute.xlu0 %7470
    %7472 = vrot.lane.b32.xlu0 %v7424, 48
    %v7473 = vpop.permute.xlu0 %7472
    %7474 = vrot.lane.b32.xlu0 %v7425, 48
    %v7475 = vpop.permute.xlu0 %7474
    %7476 = vrot.lane.b32.xlu0 %v7426, 48
    %v7477 = vpop.permute.xlu0 %7476
    %7478 = vrot.lane.b32.xlu0 %v7427, 48
    %v7479 = vpop.permute.xlu0 %7478
    %7480 = vrot.lane.b32.xlu0 %v7428, 48
    %v7481 = vpop.permute.xlu0 %7480
    %7482 = vrot.lane.b32.xlu0 %v7429, 48
    %v7483 = vpop.permute.xlu0 %7482
    %7484 = vrot.lane.b32.xlu0 %v7430, 48
    %v7485 = vpop.permute.xlu0 %7484
    %7486 = vrot.lane.b32.xlu0 %v7431, 48
    %v7487 = vpop.permute.xlu0 %7486
    %7488 = vrot.lane.b32.xlu0 %v7432, 48
    %v7489 = vpop.permute.xlu0 %7488
    %7490 = vrot.lane.b32.xlu0 %v7433, 48
    %v7491 = vpop.permute.xlu0 %7490
    %7492 = vrot.lane.b32.xlu0 %v7434, 48
    %v7493 = vpop.permute.xlu0 %7492
    %7494 = vrot.lane.b32.xlu0 %v7435, 48
    %v7495 = vpop.permute.xlu0 %7494
    %7496 = vrot.lane.b32.xlu0 %v7436, 48
    %v7497 = vpop.permute.xlu0 %7496
    %7498 = vrot.lane.b32.xlu0 %v7437, 48
    %v7499 = vpop.permute.xlu0 %7498
    %7500 = vrot.lane.b32.xlu0 %v7438, 48
    %v7501 = vpop.permute.xlu0 %7500
    %7502 = vrot.lane.b32.xlu0 %v7439, 48
    %v7503 = vpop.permute.xlu0 %7502
    %v7504 = vunpack.c.l.b16 %v5743
    %v7505 = vunpack.c.l.b16 %v5751
    %v7506 = vunpack.c.l.b16 %v5757
    %v7507 = vunpack.c.l.b16 %v5765
    %v7508 = vunpack.c.l.b16 %v5771
    %v7509 = vunpack.c.l.b16 %v5779
    %v7510 = vunpack.c.l.b16 %v5785
    %v7511 = vunpack.c.l.b16 %v5793
    %v7512 = vunpack.c.l.b16 %v5799
    %v7513 = vunpack.c.l.b16 %v5807
    %v7514 = vunpack.c.l.b16 %v5813
    %v7515 = vunpack.c.l.b16 %v5821
    %v7516 = vunpack.c.l.b16 %v5827
    %v7517 = vunpack.c.l.b16 %v5835
    %v7518 = vunpack.c.l.b16 %v5841
    %v7519 = vunpack.c.l.b16 %v5849
    %v7520 = vunpack.c.l.b16 %v5855
    %v7521 = vunpack.c.l.b16 %v5863
    %v7522 = vunpack.c.l.b16 %v5869
    %v7523 = vunpack.c.l.b16 %v5877
    %v7524 = vunpack.c.l.b16 %v5883
    %v7525 = vunpack.c.l.b16 %v5891
    %v7526 = vunpack.c.l.b16 %v5897
    %v7527 = vunpack.c.l.b16 %v5905
    %v7528 = vunpack.c.l.b16 %v5911
    %v7529 = vunpack.c.l.b16 %v5919
    %v7530 = vunpack.c.l.b16 %v5925
    %v7531 = vunpack.c.l.b16 %v5933
    %v7532 = vunpack.c.l.b16 %v5939
    %v7533 = vunpack.c.l.b16 %v5947
    %v7534 = vunpack.c.l.b16 %v5953
    %v7535 = vunpack.c.l.b16 %v5961
    %v7536 = vunpack.c.l.b16 %v5967
    %v7537 = vunpack.c.l.b16 %v5975
    %v7538 = vunpack.c.l.b16 %v5981
    %v7539 = vunpack.c.l.b16 %v5989
    %v7540 = vunpack.c.l.b16 %v5995
    %v7541 = vunpack.c.l.b16 %v6003
    %v7542 = vunpack.c.l.b16 %v6009
    %v7543 = vunpack.c.l.b16 %v6017
    %v7544 = vunpack.c.l.b16 %v6023
    %v7545 = vunpack.c.l.b16 %v6031
    %v7546 = vunpack.c.l.b16 %v6037
    %v7547 = vunpack.c.l.b16 %v6045
    %v7548 = vunpack.c.l.b16 %v6051
    %v7549 = vunpack.c.l.b16 %v6059
    %v7550 = vunpack.c.l.b16 %v6065
    %v7551 = vunpack.c.l.b16 %v6073
    %v7552 = vunpack.c.l.b16 %v6079
    %v7553 = vunpack.c.l.b16 %v6087
    %v7554 = vunpack.c.l.b16 %v6093
    %v7555 = vunpack.c.l.b16 %v6101
    %v7556 = vunpack.c.l.b16 %v6107
    %v7557 = vunpack.c.l.b16 %v6115
    %v7558 = vunpack.c.l.b16 %v6121
    %v7559 = vunpack.c.l.b16 %v6129
    %v7560 = vunpack.c.l.b16 %v6135
    %v7561 = vunpack.c.l.b16 %v6143
    %v7562 = vunpack.c.l.b16 %v6149
    %v7563 = vunpack.c.l.b16 %v6157
    %v7564 = vunpack.c.l.b16 %v6163
    %v7565 = vunpack.c.l.b16 %v6171
    %v7566 = vunpack.c.l.b16 %v6177
    %v7567 = vunpack.c.l.b16 %v6185
    %v7568 = vpack.c.b16 %v7505, %v7504
    %v7569 = vpack.c.b16 %v7507, %v7506
    %v7570 = vpack.c.b16 %v7509, %v7508
    %v7571 = vpack.c.b16 %v7511, %v7510
    %v7572 = vpack.c.b16 %v7513, %v7512
    %v7573 = vpack.c.b16 %v7515, %v7514
    %v7574 = vpack.c.b16 %v7517, %v7516
    %v7575 = vpack.c.b16 %v7519, %v7518
    %v7576 = vpack.c.b16 %v7521, %v7520
    %v7577 = vpack.c.b16 %v7523, %v7522
    %v7578 = vpack.c.b16 %v7525, %v7524
    %v7579 = vpack.c.b16 %v7527, %v7526
    %v7580 = vpack.c.b16 %v7529, %v7528
    %v7581 = vpack.c.b16 %v7531, %v7530
    %v7582 = vpack.c.b16 %v7533, %v7532
    %v7583 = vpack.c.b16 %v7535, %v7534
    %v7584 = vpack.c.b16 %v7537, %v7536
    %v7585 = vpack.c.b16 %v7539, %v7538
    %v7586 = vpack.c.b16 %v7541, %v7540
    %v7587 = vpack.c.b16 %v7543, %v7542
    %v7588 = vpack.c.b16 %v7545, %v7544
    %v7589 = vpack.c.b16 %v7547, %v7546
    %v7590 = vpack.c.b16 %v7549, %v7548
    %v7591 = vpack.c.b16 %v7551, %v7550
    %v7592 = vpack.c.b16 %v7553, %v7552
    %v7593 = vpack.c.b16 %v7555, %v7554
    %v7594 = vpack.c.b16 %v7557, %v7556
    %v7595 = vpack.c.b16 %v7559, %v7558
    %v7596 = vpack.c.b16 %v7561, %v7560
    %v7597 = vpack.c.b16 %v7563, %v7562
    %v7598 = vpack.c.b16 %v7565, %v7564
    %v7599 = vpack.c.b16 %v7567, %v7566
    %7600 = vrot.lane.b32.xlu0 %v7568, 64
    %v7601 = vpop.permute.xlu0 %7600
    %7602 = vrot.lane.b32.xlu0 %v7569, 64
    %v7603 = vpop.permute.xlu0 %7602
    %7604 = vrot.lane.b32.xlu0 %v7570, 64
    %v7605 = vpop.permute.xlu0 %7604
    %7606 = vrot.lane.b32.xlu0 %v7571, 64
    %v7607 = vpop.permute.xlu0 %7606
    %7608 = vrot.lane.b32.xlu0 %v7572, 64
    %v7609 = vpop.permute.xlu0 %7608
    %7610 = vrot.lane.b32.xlu0 %v7573, 64
    %v7611 = vpop.permute.xlu0 %7610
    %7612 = vrot.lane.b32.xlu0 %v7574, 64
    %v7613 = vpop.permute.xlu0 %7612
    %7614 = vrot.lane.b32.xlu0 %v7575, 64
    %v7615 = vpop.permute.xlu0 %7614
    %7616 = vrot.lane.b32.xlu0 %v7576, 64
    %v7617 = vpop.permute.xlu0 %7616
    %7618 = vrot.lane.b32.xlu0 %v7577, 64
    %v7619 = vpop.permute.xlu0 %7618
    %7620 = vrot.lane.b32.xlu0 %v7578, 64
    %v7621 = vpop.permute.xlu0 %7620
    %7622 = vrot.lane.b32.xlu0 %v7579, 64
    %v7623 = vpop.permute.xlu0 %7622
    %7624 = vrot.lane.b32.xlu0 %v7580, 64
    %v7625 = vpop.permute.xlu0 %7624
    %7626 = vrot.lane.b32.xlu0 %v7581, 64
    %v7627 = vpop.permute.xlu0 %7626
    %7628 = vrot.lane.b32.xlu0 %v7582, 64
    %v7629 = vpop.permute.xlu0 %7628
    %7630 = vrot.lane.b32.xlu0 %v7583, 64
    %v7631 = vpop.permute.xlu0 %7630
    %7632 = vrot.lane.b32.xlu0 %v7584, 64
    %v7633 = vpop.permute.xlu0 %7632
    %7634 = vrot.lane.b32.xlu0 %v7585, 64
    %v7635 = vpop.permute.xlu0 %7634
    %7636 = vrot.lane.b32.xlu0 %v7586, 64
    %v7637 = vpop.permute.xlu0 %7636
    %7638 = vrot.lane.b32.xlu0 %v7587, 64
    %v7639 = vpop.permute.xlu0 %7638
    %7640 = vrot.lane.b32.xlu0 %v7588, 64
    %v7641 = vpop.permute.xlu0 %7640
    %7642 = vrot.lane.b32.xlu0 %v7589, 64
    %v7643 = vpop.permute.xlu0 %7642
    %7644 = vrot.lane.b32.xlu0 %v7590, 64
    %v7645 = vpop.permute.xlu0 %7644
    %7646 = vrot.lane.b32.xlu0 %v7591, 64
    %v7647 = vpop.permute.xlu0 %7646
    %7648 = vrot.lane.b32.xlu0 %v7592, 64
    %v7649 = vpop.permute.xlu0 %7648
    %7650 = vrot.lane.b32.xlu0 %v7593, 64
    %v7651 = vpop.permute.xlu0 %7650
    %7652 = vrot.lane.b32.xlu0 %v7594, 64
    %v7653 = vpop.permute.xlu0 %7652
    %7654 = vrot.lane.b32.xlu0 %v7595, 64
    %v7655 = vpop.permute.xlu0 %7654
    %7656 = vrot.lane.b32.xlu0 %v7596, 64
    %v7657 = vpop.permute.xlu0 %7656
    %7658 = vrot.lane.b32.xlu0 %v7597, 64
    %v7659 = vpop.permute.xlu0 %7658
    %7660 = vrot.lane.b32.xlu0 %v7598, 64
    %v7661 = vpop.permute.xlu0 %7660
    %7662 = vrot.lane.b32.xlu0 %v7599, 64
    %v7663 = vpop.permute.xlu0 %7662
    %v7664 = vunpack.c.l.b16 %v6224
    %v7665 = vunpack.c.l.b16 %v6227
    %v7666 = vunpack.c.l.b16 %v6231
    %v7667 = vunpack.c.l.b16 %v6234
    %v7668 = vunpack.c.l.b16 %v6238
    %v7669 = vunpack.c.l.b16 %v6241
    %v7670 = vunpack.c.l.b16 %v6245
    %v7671 = vunpack.c.l.b16 %v6248
    %v7672 = vunpack.c.l.b16 %v6252
    %v7673 = vunpack.c.l.b16 %v6255
    %v7674 = vunpack.c.l.b16 %v6259
    %v7675 = vunpack.c.l.b16 %v6262
    %v7676 = vunpack.c.l.b16 %v6266
    %v7677 = vunpack.c.l.b16 %v6269
    %v7678 = vunpack.c.l.b16 %v6273
    %v7679 = vunpack.c.l.b16 %v6276
    %v7680 = vunpack.c.l.b16 %v6280
    %v7681 = vunpack.c.l.b16 %v6283
    %v7682 = vunpack.c.l.b16 %v6287
    %v7683 = vunpack.c.l.b16 %v6290
    %v7684 = vunpack.c.l.b16 %v6294
    %v7685 = vunpack.c.l.b16 %v6297
    %v7686 = vunpack.c.l.b16 %v6301
    %v7687 = vunpack.c.l.b16 %v6304
    %v7688 = vunpack.c.l.b16 %v6308
    %v7689 = vunpack.c.l.b16 %v6311
    %v7690 = vunpack.c.l.b16 %v6315
    %v7691 = vunpack.c.l.b16 %v6318
    %v7692 = vunpack.c.l.b16 %v6322
    %v7693 = vunpack.c.l.b16 %v6325
    %v7694 = vunpack.c.l.b16 %v6329
    %v7695 = vunpack.c.l.b16 %v6332
    %v7696 = vunpack.c.l.b16 %v6336
    %v7697 = vunpack.c.l.b16 %v6339
    %v7698 = vunpack.c.l.b16 %v6343
    %v7699 = vunpack.c.l.b16 %v6346
    %v7700 = vunpack.c.l.b16 %v6350
    %v7701 = vunpack.c.l.b16 %v6353
    %v7702 = vunpack.c.l.b16 %v6357
    %v7703 = vunpack.c.l.b16 %v6360
    %v7704 = vunpack.c.l.b16 %v6364
    %v7705 = vunpack.c.l.b16 %v6367
    %v7706 = vunpack.c.l.b16 %v6371
    %v7707 = vunpack.c.l.b16 %v6374
    %v7708 = vunpack.c.l.b16 %v6378
    %v7709 = vunpack.c.l.b16 %v6381
    %v7710 = vunpack.c.l.b16 %v6385
    %v7711 = vunpack.c.l.b16 %v6388
    %v7712 = vunpack.c.l.b16 %v6392
    %v7713 = vunpack.c.l.b16 %v6395
    %v7714 = vunpack.c.l.b16 %v6399
    %v7715 = vunpack.c.l.b16 %v6402
    %v7716 = vunpack.c.l.b16 %v6406
    %v7717 = vunpack.c.l.b16 %v6409
    %v7718 = vunpack.c.l.b16 %v6413
    %v7719 = vunpack.c.l.b16 %v6416
    %v7720 = vunpack.c.l.b16 %v6420
    %v7721 = vunpack.c.l.b16 %v6423
    %v7722 = vunpack.c.l.b16 %v6427
    %v7723 = vunpack.c.l.b16 %v6430
    %v7724 = vunpack.c.l.b16 %v6434
    %v7725 = vunpack.c.l.b16 %v6437
    %v7726 = vunpack.c.l.b16 %v6441
    %v7727 = vunpack.c.l.b16 %v6444
    %v7728 = vpack.c.b16 %v7665, %v7664
    %v7729 = vpack.c.b16 %v7667, %v7666
    %v7730 = vpack.c.b16 %v7669, %v7668
    %v7731 = vpack.c.b16 %v7671, %v7670
    %v7732 = vpack.c.b16 %v7673, %v7672
    %v7733 = vpack.c.b16 %v7675, %v7674
    %v7734 = vpack.c.b16 %v7677, %v7676
    %v7735 = vpack.c.b16 %v7679, %v7678
    %v7736 = vpack.c.b16 %v7681, %v7680
    %v7737 = vpack.c.b16 %v7683, %v7682
    %v7738 = vpack.c.b16 %v7685, %v7684
    %v7739 = vpack.c.b16 %v7687, %v7686
    %v7740 = vpack.c.b16 %v7689, %v7688
    %v7741 = vpack.c.b16 %v7691, %v7690
    %v7742 = vpack.c.b16 %v7693, %v7692
    %v7743 = vpack.c.b16 %v7695, %v7694
    %v7744 = vpack.c.b16 %v7697, %v7696
    %v7745 = vpack.c.b16 %v7699, %v7698
    %v7746 = vpack.c.b16 %v7701, %v7700
    %v7747 = vpack.c.b16 %v7703, %v7702
    %v7748 = vpack.c.b16 %v7705, %v7704
    %v7749 = vpack.c.b16 %v7707, %v7706
    %v7750 = vpack.c.b16 %v7709, %v7708
    %v7751 = vpack.c.b16 %v7711, %v7710
    %v7752 = vpack.c.b16 %v7713, %v7712
    %v7753 = vpack.c.b16 %v7715, %v7714
    %v7754 = vpack.c.b16 %v7717, %v7716
    %v7755 = vpack.c.b16 %v7719, %v7718
    %v7756 = vpack.c.b16 %v7721, %v7720
    %v7757 = vpack.c.b16 %v7723, %v7722
    %v7758 = vpack.c.b16 %v7725, %v7724
    %v7759 = vpack.c.b16 %v7727, %v7726
    %7760 = vrot.lane.b32.xlu0 %v7728, 80
    %v7761 = vpop.permute.xlu0 %7760
    %7762 = vrot.lane.b32.xlu0 %v7729, 80
    %v7763 = vpop.permute.xlu0 %7762
    %7764 = vrot.lane.b32.xlu0 %v7730, 80
    %v7765 = vpop.permute.xlu0 %7764
    %7766 = vrot.lane.b32.xlu0 %v7731, 80
    %v7767 = vpop.permute.xlu0 %7766
    %7768 = vrot.lane.b32.xlu0 %v7732, 80
    %v7769 = vpop.permute.xlu0 %7768
    %7770 = vrot.lane.b32.xlu0 %v7733, 80
    %v7771 = vpop.permute.xlu0 %7770
    %7772 = vrot.lane.b32.xlu0 %v7734, 80
    %v7773 = vpop.permute.xlu0 %7772
    %7774 = vrot.lane.b32.xlu0 %v7735, 80
    %v7775 = vpop.permute.xlu0 %7774
    %7776 = vrot.lane.b32.xlu0 %v7736, 80
    %v7777 = vpop.permute.xlu0 %7776
    %7778 = vrot.lane.b32.xlu0 %v7737, 80
    %v7779 = vpop.permute.xlu0 %7778
    %7780 = vrot.lane.b32.xlu0 %v7738, 80
    %v7781 = vpop.permute.xlu0 %7780
    %7782 = vrot.lane.b32.xlu0 %v7739, 80
    %v7783 = vpop.permute.xlu0 %7782
    %7784 = vrot.lane.b32.xlu0 %v7740, 80
    %v7785 = vpop.permute.xlu0 %7784
    %7786 = vrot.lane.b32.xlu0 %v7741, 80
    %v7787 = vpop.permute.xlu0 %7786
    %7788 = vrot.lane.b32.xlu0 %v7742, 80
    %v7789 = vpop.permute.xlu0 %7788
    %7790 = vrot.lane.b32.xlu0 %v7743, 80
    %v7791 = vpop.permute.xlu0 %7790
    %7792 = vrot.lane.b32.xlu0 %v7744, 80
    %v7793 = vpop.permute.xlu0 %7792
    %7794 = vrot.lane.b32.xlu0 %v7745, 80
    %v7795 = vpop.permute.xlu0 %7794
    %7796 = vrot.lane.b32.xlu0 %v7746, 80
    %v7797 = vpop.permute.xlu0 %7796
    %7798 = vrot.lane.b32.xlu0 %v7747, 80
    %v7799 = vpop.permute.xlu0 %7798
    %7800 = vrot.lane.b32.xlu0 %v7748, 80
    %v7801 = vpop.permute.xlu0 %7800
    %7802 = vrot.lane.b32.xlu0 %v7749, 80
    %v7803 = vpop.permute.xlu0 %7802
    %7804 = vrot.lane.b32.xlu0 %v7750, 80
    %v7805 = vpop.permute.xlu0 %7804
    %7806 = vrot.lane.b32.xlu0 %v7751, 80
    %v7807 = vpop.permute.xlu0 %7806
    %7808 = vrot.lane.b32.xlu0 %v7752, 80
    %v7809 = vpop.permute.xlu0 %7808
    %7810 = vrot.lane.b32.xlu0 %v7753, 80
    %v7811 = vpop.permute.xlu0 %7810
    %7812 = vrot.lane.b32.xlu0 %v7754, 80
    %v7813 = vpop.permute.xlu0 %7812
    %7814 = vrot.lane.b32.xlu0 %v7755, 80
    %v7815 = vpop.permute.xlu0 %7814
    %7816 = vrot.lane.b32.xlu0 %v7756, 80
    %v7817 = vpop.permute.xlu0 %7816
    %7818 = vrot.lane.b32.xlu0 %v7757, 80
    %v7819 = vpop.permute.xlu0 %7818
    %7820 = vrot.lane.b32.xlu0 %v7758, 80
    %v7821 = vpop.permute.xlu0 %7820
    %7822 = vrot.lane.b32.xlu0 %v7759, 80
    %v7823 = vpop.permute.xlu0 %7822
    %v7824 = vunpack.c.l.b16 %v6455
    %v7825 = vunpack.c.l.b16 %v6462
    %v7826 = vunpack.c.l.b16 %v6470
    %v7827 = vunpack.c.l.b16 %v6477
    %v7828 = vunpack.c.l.b16 %v6485
    %v7829 = vunpack.c.l.b16 %v6492
    %v7830 = vunpack.c.l.b16 %v6500
    %v7831 = vunpack.c.l.b16 %v6507
    %v7832 = vunpack.c.l.b16 %v6515
    %v7833 = vunpack.c.l.b16 %v6522
    %v7834 = vunpack.c.l.b16 %v6530
    %v7835 = vunpack.c.l.b16 %v6537
    %v7836 = vunpack.c.l.b16 %v6545
    %v7837 = vunpack.c.l.b16 %v6552
    %v7838 = vunpack.c.l.b16 %v6560
    %v7839 = vunpack.c.l.b16 %v6567
    %v7840 = vunpack.c.l.b16 %v6575
    %v7841 = vunpack.c.l.b16 %v6582
    %v7842 = vunpack.c.l.b16 %v6590
    %v7843 = vunpack.c.l.b16 %v6597
    %v7844 = vunpack.c.l.b16 %v6605
    %v7845 = vunpack.c.l.b16 %v6612
    %v7846 = vunpack.c.l.b16 %v6620
    %v7847 = vunpack.c.l.b16 %v6627
    %v7848 = vunpack.c.l.b16 %v6635
    %v7849 = vunpack.c.l.b16 %v6642
    %v7850 = vunpack.c.l.b16 %v6650
    %v7851 = vunpack.c.l.b16 %v6657
    %v7852 = vunpack.c.l.b16 %v6665
    %v7853 = vunpack.c.l.b16 %v6672
    %v7854 = vunpack.c.l.b16 %v6680
    %v7855 = vunpack.c.l.b16 %v6687
    %v7856 = vunpack.c.l.b16 %v6695
    %v7857 = vunpack.c.l.b16 %v6702
    %v7858 = vunpack.c.l.b16 %v6710
    %v7859 = vunpack.c.l.b16 %v6717
    %v7860 = vunpack.c.l.b16 %v6725
    %v7861 = vunpack.c.l.b16 %v6732
    %v7862 = vunpack.c.l.b16 %v6740
    %v7863 = vunpack.c.l.b16 %v6747
    %v7864 = vunpack.c.l.b16 %v6755
    %v7865 = vunpack.c.l.b16 %v6762
    %v7866 = vunpack.c.l.b16 %v6770
    %v7867 = vunpack.c.l.b16 %v6777
    %v7868 = vunpack.c.l.b16 %v6785
    %v7869 = vunpack.c.l.b16 %v6792
    %v7870 = vunpack.c.l.b16 %v6800
    %v7871 = vunpack.c.l.b16 %v6807
    %v7872 = vunpack.c.l.b16 %v6815
    %v7873 = vunpack.c.l.b16 %v6822
    %v7874 = vunpack.c.l.b16 %v6830
    %v7875 = vunpack.c.l.b16 %v6837
    %v7876 = vunpack.c.l.b16 %v6845
    %v7877 = vunpack.c.l.b16 %v6852
    %v7878 = vunpack.c.l.b16 %v6860
    %v7879 = vunpack.c.l.b16 %v6867
    %v7880 = vunpack.c.l.b16 %v6875
    %v7881 = vunpack.c.l.b16 %v6882
    %v7882 = vunpack.c.l.b16 %v6890
    %v7883 = vunpack.c.l.b16 %v6897
    %v7884 = vunpack.c.l.b16 %v6905
    %v7885 = vunpack.c.l.b16 %v6912
    %v7886 = vunpack.c.l.b16 %v6920
    %v7887 = vunpack.c.l.b16 %v6927
    %v7888 = vpack.c.b16 %v7825, %v7824
    %v7889 = vpack.c.b16 %v7827, %v7826
    %v7890 = vpack.c.b16 %v7829, %v7828
    %v7891 = vpack.c.b16 %v7831, %v7830
    %v7892 = vpack.c.b16 %v7833, %v7832
    %v7893 = vpack.c.b16 %v7835, %v7834
    %v7894 = vpack.c.b16 %v7837, %v7836
    %v7895 = vpack.c.b16 %v7839, %v7838
    %v7896 = vpack.c.b16 %v7841, %v7840
    %v7897 = vpack.c.b16 %v7843, %v7842
    %v7898 = vpack.c.b16 %v7845, %v7844
    %v7899 = vpack.c.b16 %v7847, %v7846
    %v7900 = vpack.c.b16 %v7849, %v7848
    %v7901 = vpack.c.b16 %v7851, %v7850
    %v7902 = vpack.c.b16 %v7853, %v7852
    %v7903 = vpack.c.b16 %v7855, %v7854
    %v7904 = vpack.c.b16 %v7857, %v7856
    %v7905 = vpack.c.b16 %v7859, %v7858
    %v7906 = vpack.c.b16 %v7861, %v7860
    %v7907 = vpack.c.b16 %v7863, %v7862
    %v7908 = vpack.c.b16 %v7865, %v7864
    %v7909 = vpack.c.b16 %v7867, %v7866
    %v7910 = vpack.c.b16 %v7869, %v7868
    %v7911 = vpack.c.b16 %v7871, %v7870
    %v7912 = vpack.c.b16 %v7873, %v7872
    %v7913 = vpack.c.b16 %v7875, %v7874
    %v7914 = vpack.c.b16 %v7877, %v7876
    %v7915 = vpack.c.b16 %v7879, %v7878
    %v7916 = vpack.c.b16 %v7881, %v7880
    %v7917 = vpack.c.b16 %v7883, %v7882
    %v7918 = vpack.c.b16 %v7885, %v7884
    %v7919 = vpack.c.b16 %v7887, %v7886
    %7920 = vrot.lane.b32.xlu0 %v7888, 96
    %v7921 = vpop.permute.xlu0 %7920
    %7922 = vrot.lane.b32.xlu0 %v7889, 96
    %v7923 = vpop.permute.xlu0 %7922
    %7924 = vrot.lane.b32.xlu0 %v7890, 96
    %v7925 = vpop.permute.xlu0 %7924
    %7926 = vrot.lane.b32.xlu0 %v7891, 96
    %v7927 = vpop.permute.xlu0 %7926
    %7928 = vrot.lane.b32.xlu0 %v7892, 96
    %v7929 = vpop.permute.xlu0 %7928
    %7930 = vrot.lane.b32.xlu0 %v7893, 96
    %v7931 = vpop.permute.xlu0 %7930
    %7932 = vrot.lane.b32.xlu0 %v7894, 96
    %v7933 = vpop.permute.xlu0 %7932
    %7934 = vrot.lane.b32.xlu0 %v7895, 96
    %v7935 = vpop.permute.xlu0 %7934
    %7936 = vrot.lane.b32.xlu0 %v7896, 96
    %v7937 = vpop.permute.xlu0 %7936
    %7938 = vrot.lane.b32.xlu0 %v7897, 96
    %v7939 = vpop.permute.xlu0 %7938
    %7940 = vrot.lane.b32.xlu0 %v7898, 96
    %v7941 = vpop.permute.xlu0 %7940
    %7942 = vrot.lane.b32.xlu0 %v7899, 96
    %v7943 = vpop.permute.xlu0 %7942
    %7944 = vrot.lane.b32.xlu0 %v7900, 96
    %v7945 = vpop.permute.xlu0 %7944
    %7946 = vrot.lane.b32.xlu0 %v7901, 96
    %v7947 = vpop.permute.xlu0 %7946
    %7948 = vrot.lane.b32.xlu0 %v7902, 96
    %v7949 = vpop.permute.xlu0 %7948
    %7950 = vrot.lane.b32.xlu0 %v7903, 96
    %v7951 = vpop.permute.xlu0 %7950
    %7952 = vrot.lane.b32.xlu0 %v7904, 96
    %v7953 = vpop.permute.xlu0 %7952
    %7954 = vrot.lane.b32.xlu0 %v7905, 96
    %v7955 = vpop.permute.xlu0 %7954
    %7956 = vrot.lane.b32.xlu0 %v7906, 96
    %v7957 = vpop.permute.xlu0 %7956
    %7958 = vrot.lane.b32.xlu0 %v7907, 96
    %v7959 = vpop.permute.xlu0 %7958
    %7960 = vrot.lane.b32.xlu0 %v7908, 96
    %v7961 = vpop.permute.xlu0 %7960
    %7962 = vrot.lane.b32.xlu0 %v7909, 96
    %v7963 = vpop.permute.xlu0 %7962
    %7964 = vrot.lane.b32.xlu0 %v7910, 96
    %v7965 = vpop.permute.xlu0 %7964
    %7966 = vrot.lane.b32.xlu0 %v7911, 96
    %v7967 = vpop.permute.xlu0 %7966
    %7968 = vrot.lane.b32.xlu0 %v7912, 96
    %v7969 = vpop.permute.xlu0 %7968
    %7970 = vrot.lane.b32.xlu0 %v7913, 96
    %v7971 = vpop.permute.xlu0 %7970
    %7972 = vrot.lane.b32.xlu0 %v7914, 96
    %v7973 = vpop.permute.xlu0 %7972
    %7974 = vrot.lane.b32.xlu0 %v7915, 96
    %v7975 = vpop.permute.xlu0 %7974
    %7976 = vrot.lane.b32.xlu0 %v7916, 96
    %v7977 = vpop.permute.xlu0 %7976
    %7978 = vrot.lane.b32.xlu0 %v7917, 96
    %v7979 = vpop.permute.xlu0 %7978
    %7980 = vrot.lane.b32.xlu0 %v7918, 96
    %v7981 = vpop.permute.xlu0 %7980
    %7982 = vrot.lane.b32.xlu0 %v7919, 96
    %v7983 = vpop.permute.xlu0 %7982
    %v7986 = vsel %vm1796, %v6992, %v7121
    %v7989 = vsel %vm1796, %v6993, %v7123
    %v7992 = vsel %vm1796, %v6994, %v7125
    %v7995 = vsel %vm1796, %v6995, %v7127
    %v7998 = vsel %vm1796, %v6996, %v7129
    %v8001 = vsel %vm1796, %v6997, %v7131
    %v8004 = vsel %vm1796, %v6998, %v7133
    %v8007 = vsel %vm1796, %v6999, %v7135
    %v8010 = vsel %vm1796, %v7000, %v7137
    %v8013 = vsel %vm1796, %v7001, %v7139
    %v8016 = vsel %vm1796, %v7002, %v7141
    %v8019 = vsel %vm1796, %v7003, %v7143
    %v8022 = vsel %vm1796, %v7004, %v7145
    %v8025 = vsel %vm1796, %v7005, %v7147
    %v8028 = vsel %vm1796, %v7006, %v7149
    %v8031 = vsel %vm1796, %v7007, %v7151
    %v8034 = vsel %vm1796, %v7008, %v7153
    %v8037 = vsel %vm1796, %v7009, %v7155
    %v8040 = vsel %vm1796, %v7010, %v7157
    %v8043 = vsel %vm1796, %v7011, %v7159
    %v8046 = vsel %vm1796, %v7012, %v7161
    %v8049 = vsel %vm1796, %v7013, %v7163
    %v8052 = vsel %vm1796, %v7014, %v7165
    %v8055 = vsel %vm1796, %v7015, %v7167
    %v8058 = vsel %vm1796, %v7016, %v7169
    %v8061 = vsel %vm1796, %v7017, %v7171
    %v8064 = vsel %vm1796, %v7018, %v7173
    %v8067 = vsel %vm1796, %v7019, %v7175
    %v8070 = vsel %vm1796, %v7020, %v7177
    %v8073 = vsel %vm1796, %v7021, %v7179
    %v8076 = vsel %vm1796, %v7022, %v7181
    %v8079 = vsel %vm1796, %v7023, %v7183
    %vm8080 = vcmask 261120
    %v8082 = vsel %vm8080, %v7986, %v7281
    %v8084 = vsel %vm8080, %v7989, %v7283
    %v8086 = vsel %vm8080, %v7992, %v7285
    %v8088 = vsel %vm8080, %v7995, %v7287
    %v8090 = vsel %vm8080, %v7998, %v7289
    %v8092 = vsel %vm8080, %v8001, %v7291
    %v8094 = vsel %vm8080, %v8004, %v7293
    %v8096 = vsel %vm8080, %v8007, %v7295
    %v8098 = vsel %vm8080, %v8010, %v7297
    %v8100 = vsel %vm8080, %v8013, %v7299
    %v8102 = vsel %vm8080, %v8016, %v7301
    %v8104 = vsel %vm8080, %v8019, %v7303
    %v8106 = vsel %vm8080, %v8022, %v7305
    %v8108 = vsel %vm8080, %v8025, %v7307
    %v8110 = vsel %vm8080, %v8028, %v7309
    %v8112 = vsel %vm8080, %v8031, %v7311
    %v8114 = vsel %vm8080, %v8034, %v7313
    %v8116 = vsel %vm8080, %v8037, %v7315
    %v8118 = vsel %vm8080, %v8040, %v7317
    %v8120 = vsel %vm8080, %v8043, %v7319
    %v8122 = vsel %vm8080, %v8046, %v7321
    %v8124 = vsel %vm8080, %v8049, %v7323
    %v8126 = vsel %vm8080, %v8052, %v7325
    %v8128 = vsel %vm8080, %v8055, %v7327
    %v8130 = vsel %vm8080, %v8058, %v7329
    %v8132 = vsel %vm8080, %v8061, %v7331
    %v8134 = vsel %vm8080, %v8064, %v7333
    %v8136 = vsel %vm8080, %v8067, %v7335
    %v8138 = vsel %vm8080, %v8070, %v7337
    %v8140 = vsel %vm8080, %v8073, %v7339
    %v8142 = vsel %vm8080, %v8076, %v7341
    %v8144 = vsel %vm8080, %v8079, %v7343
    %vm8145 = vcmask 392192
    %v8147 = vsel %vm8145, %v8082, %v7441
    %v8149 = vsel %vm8145, %v8084, %v7443
    %v8151 = vsel %vm8145, %v8086, %v7445
    %v8153 = vsel %vm8145, %v8088, %v7447
    %v8155 = vsel %vm8145, %v8090, %v7449
    %v8157 = vsel %vm8145, %v8092, %v7451
    %v8159 = vsel %vm8145, %v8094, %v7453
    %v8161 = vsel %vm8145, %v8096, %v7455
    %v8163 = vsel %vm8145, %v8098, %v7457
    %v8165 = vsel %vm8145, %v8100, %v7459
    %v8167 = vsel %vm8145, %v8102, %v7461
    %v8169 = vsel %vm8145, %v8104, %v7463
    %v8171 = vsel %vm8145, %v8106, %v7465
    %v8173 = vsel %vm8145, %v8108, %v7467
    %v8175 = vsel %vm8145, %v8110, %v7469
    %v8177 = vsel %vm8145, %v8112, %v7471
    %v8179 = vsel %vm8145, %v8114, %v7473
    %v8181 = vsel %vm8145, %v8116, %v7475
    %v8183 = vsel %vm8145, %v8118, %v7477
    %v8185 = vsel %vm8145, %v8120, %v7479
    %v8187 = vsel %vm8145, %v8122, %v7481
    %v8189 = vsel %vm8145, %v8124, %v7483
    %v8191 = vsel %vm8145, %v8126, %v7485
    %v8193 = vsel %vm8145, %v8128, %v7487
    %v8195 = vsel %vm8145, %v8130, %v7489
    %v8197 = vsel %vm8145, %v8132, %v7491
    %v8199 = vsel %vm8145, %v8134, %v7493
    %v8201 = vsel %vm8145, %v8136, %v7495
    %v8203 = vsel %vm8145, %v8138, %v7497
    %v8205 = vsel %vm8145, %v8140, %v7499
    %v8207 = vsel %vm8145, %v8142, %v7501
    %v8209 = vsel %vm8145, %v8144, %v7503
    %vm8210 = vcmask 523264
    %v8212 = vsel %vm8210, %v8147, %v7601
    %v8214 = vsel %vm8210, %v8149, %v7603
    %v8216 = vsel %vm8210, %v8151, %v7605
    %v8218 = vsel %vm8210, %v8153, %v7607
    %v8220 = vsel %vm8210, %v8155, %v7609
    %v8222 = vsel %vm8210, %v8157, %v7611
    %v8224 = vsel %vm8210, %v8159, %v7613
    %v8226 = vsel %vm8210, %v8161, %v7615
    %v8228 = vsel %vm8210, %v8163, %v7617
    %v8230 = vsel %vm8210, %v8165, %v7619
    %v8232 = vsel %vm8210, %v8167, %v7621
    %v8234 = vsel %vm8210, %v8169, %v7623
    %v8236 = vsel %vm8210, %v8171, %v7625
    %v8238 = vsel %vm8210, %v8173, %v7627
    %v8240 = vsel %vm8210, %v8175, %v7629
    %v8242 = vsel %vm8210, %v8177, %v7631
    %v8244 = vsel %vm8210, %v8179, %v7633
    %v8246 = vsel %vm8210, %v8181, %v7635
    %v8248 = vsel %vm8210, %v8183, %v7637
    %v8250 = vsel %vm8210, %v8185, %v7639
    %v8252 = vsel %vm8210, %v8187, %v7641
    %v8254 = vsel %vm8210, %v8189, %v7643
    %v8256 = vsel %vm8210, %v8191, %v7645
    %v8258 = vsel %vm8210, %v8193, %v7647
    %v8260 = vsel %vm8210, %v8195, %v7649
    %v8262 = vsel %vm8210, %v8197, %v7651
    %v8264 = vsel %vm8210, %v8199, %v7653
    %v8266 = vsel %vm8210, %v8201, %v7655
    %v8268 = vsel %vm8210, %v8203, %v7657
    %v8270 = vsel %vm8210, %v8205, %v7659
    %v8272 = vsel %vm8210, %v8207, %v7661
    %v8274 = vsel %vm8210, %v8209, %v7663
    %vm8275 = vcmask 654336
    %v8277 = vsel %vm8275, %v8212, %v7761
    %v8279 = vsel %vm8275, %v8214, %v7763
    %v8281 = vsel %vm8275, %v8216, %v7765
    %v8283 = vsel %vm8275, %v8218, %v7767
    %v8285 = vsel %vm8275, %v8220, %v7769
    %v8287 = vsel %vm8275, %v8222, %v7771
    %v8289 = vsel %vm8275, %v8224, %v7773
    %v8291 = vsel %vm8275, %v8226, %v7775
    %v8293 = vsel %vm8275, %v8228, %v7777
    %v8295 = vsel %vm8275, %v8230, %v7779
    %v8297 = vsel %vm8275, %v8232, %v7781
    %v8299 = vsel %vm8275, %v8234, %v7783
    %v8301 = vsel %vm8275, %v8236, %v7785
    %v8303 = vsel %vm8275, %v8238, %v7787
    %v8305 = vsel %vm8275, %v8240, %v7789
    %v8307 = vsel %vm8275, %v8242, %v7791
    %v8309 = vsel %vm8275, %v8244, %v7793
    %v8311 = vsel %vm8275, %v8246, %v7795
    %v8313 = vsel %vm8275, %v8248, %v7797
    %v8315 = vsel %vm8275, %v8250, %v7799
    %v8317 = vsel %vm8275, %v8252, %v7801
    %v8319 = vsel %vm8275, %v8254, %v7803
    %v8321 = vsel %vm8275, %v8256, %v7805
    %v8323 = vsel %vm8275, %v8258, %v7807
    %v8325 = vsel %vm8275, %v8260, %v7809
    %v8327 = vsel %vm8275, %v8262, %v7811
    %v8329 = vsel %vm8275, %v8264, %v7813
    %v8331 = vsel %vm8275, %v8266, %v7815
    %v8333 = vsel %vm8275, %v8268, %v7817
    %v8335 = vsel %vm8275, %v8270, %v7819
    %v8337 = vsel %vm8275, %v8272, %v7821
    %v8339 = vsel %vm8275, %v8274, %v7823
    %vm8340 = vcmask 785408
    %v8342 = vsel %vm8340, %v8277, %v7921
    %v8344 = vsel %vm8340, %v8279, %v7923
    %v8346 = vsel %vm8340, %v8281, %v7925
    %v8348 = vsel %vm8340, %v8283, %v7927
    %v8350 = vsel %vm8340, %v8285, %v7929
    %v8352 = vsel %vm8340, %v8287, %v7931
    %v8354 = vsel %vm8340, %v8289, %v7933
    %v8356 = vsel %vm8340, %v8291, %v7935
    %v8358 = vsel %vm8340, %v8293, %v7937
    %v8360 = vsel %vm8340, %v8295, %v7939
    %v8362 = vsel %vm8340, %v8297, %v7941
    %v8364 = vsel %vm8340, %v8299, %v7943
    %v8366 = vsel %vm8340, %v8301, %v7945
    %v8368 = vsel %vm8340, %v8303, %v7947
    %v8370 = vsel %vm8340, %v8305, %v7949
    %v8372 = vsel %vm8340, %v8307, %v7951
    %v8374 = vsel %vm8340, %v8309, %v7953
    %v8376 = vsel %vm8340, %v8311, %v7955
    %v8378 = vsel %vm8340, %v8313, %v7957
    %v8380 = vsel %vm8340, %v8315, %v7959
    %v8382 = vsel %vm8340, %v8317, %v7961
    %v8384 = vsel %vm8340, %v8319, %v7963
    %v8386 = vsel %vm8340, %v8321, %v7965
    %v8388 = vsel %vm8340, %v8323, %v7967
    %v8390 = vsel %vm8340, %v8325, %v7969
    %v8392 = vsel %vm8340, %v8327, %v7971
    %v8394 = vsel %vm8340, %v8329, %v7973
    %v8396 = vsel %vm8340, %v8331, %v7975
    %v8398 = vsel %vm8340, %v8333, %v7977
    %v8400 = vsel %vm8340, %v8335, %v7979
    %v8402 = vsel %vm8340, %v8337, %v7981
    %v8404 = vsel %vm8340, %v8339, %v7983
    %s8405 = smul.u32 %s4023, 14
    %s8406 = smul.addr %s8405, 4
    %s8407 = scalar_lea.vmem %s3, %s8406
    %v8408 = vld [vmem:[%s8407] sm:$0xf]
    %v8409 = vld [vmem:[%s8407 + $0x4] sm:$0xf]
    %v8410 = vld [vmem:[%s8407 + $0x8] sm:$0xf]
    %v8411 = vld [vmem:[%s8407 + $0xc] sm:$0xf]
    %v8412 = vld [vmem:[%s8407 + $0x10] sm:$0xf]
    %v8413 = vld [vmem:[%s8407 + $0x14] sm:$0xf]
    %v8414 = vld [vmem:[%s8407 + $0x18] sm:$0xf]
    %v8415 = vld [vmem:[%s8407 + $0x1c] sm:$0xf]
    %v8416 = vld [vmem:[%s8407 + $0x20] sm:$0xf]
    %v8417 = vld [vmem:[%s8407 + $0x24] sm:$0xf]
    %v8418 = vld [vmem:[%s8407 + $0x28] sm:$0xf]
    %v8419 = vld [vmem:[%s8407 + $0x2c] sm:$0xf]
    %v8420 = vld [vmem:[%s8407 + $0x30] sm:$0xf]
    %v8421 = vld [vmem:[%s8407 + $0x34] sm:$0xf]
    %v8436 = vunpack.c.l.b16 %v8408
    %v8437 = vunpack.c.l.b16 %v8409
    %v8438 = vunpack.c.l.b16 %v8410
    %v8439 = vunpack.c.l.b16 %v8411
    %v8440 = vunpack.c.l.b16 %v8412
    %v8441 = vunpack.c.l.b16 %v8413
    %v8442 = vunpack.c.l.b16 %v8414
    %v8443 = vunpack.c.l.b16 %v8415
    %v8444 = vunpack.c.l.b16 %v8416
    %v8445 = vunpack.c.l.b16 %v8417
    %v8446 = vunpack.c.l.b16 %v8418
    %v8447 = vunpack.c.l.b16 %v8419
    %v8448 = vunpack.c.l.b16 %v8420
    %v8449 = vunpack.c.l.b16 %v8421
    %v8450 = vpack.c.b16 %v8437, %v8436
    %v8451 = vpack.c.b16 %v8439, %v8438
    %v8452 = vpack.c.b16 %v8441, %v8440
    %v8453 = vpack.c.b16 %v8443, %v8442
    %v8454 = vpack.c.b16 %v8445, %v8444
    %v8455 = vpack.c.b16 %v8447, %v8446
    %v8456 = vpack.c.b16 %v8449, %v8448
    %vm8464 = vcmask 916480
    %v8465 = vsel %vm8464, %v8342, 0
    %v8467 = vsel %vm8464, %v8344, 0
    %v8469 = vsel %vm8464, %v8346, 0
    %v8471 = vsel %vm8464, %v8348, 0
    %v8473 = vsel %vm8464, %v8350, 0
    %v8475 = vsel %vm8464, %v8352, 0
    %v8477 = vsel %vm8464, %v8354, 0
    %v8479 = vsel %vm8464, %v8356, 0
    %v8481 = vsel %vm8464, %v8358, 0
    %v8483 = vsel %vm8464, %v8360, 0
    %v8485 = vsel %vm8464, %v8362, 0
    %v8487 = vsel %vm8464, %v8364, 0
    %v8489 = vsel %vm8464, %v8366, 0
    %v8491 = vsel %vm8464, %v8368, 0
    %v8493 = vsel %vm8464, %v8370, 0
    %v8495 = vsel %vm8464, %v8372, 0
    %v8497 = vsel %vm8464, %v8374, 0
    %v8499 = vsel %vm8464, %v8376, 0
    %v8501 = vsel %vm8464, %v8378, 0
    %v8503 = vsel %vm8464, %v8380, 0
    %v8505 = vsel %vm8464, %v8382, 0
    %v8507 = vsel %vm8464, %v8384, 0
    %v8509 = vsel %vm8464, %v8386, 0
    %v8511 = vsel %vm8464, %v8388, 0
    %v8513 = vsel %vm8464, %v8390, 0
    %v8515 = vsel %vm8464, %v8392, 0
    %v8517 = vsel %vm8464, %v8394, 0
    %v8519 = vsel %vm8464, %v8396, 0
    %v8521 = vsel %vm8464, %v8398, 0
    %v8523 = vsel %vm8464, %v8400, 0
    %v8525 = vsel %vm8464, %v8402, 0
    %v8527 = vsel %vm8464, %v8404, 0
    %8529 = vmatprep.subr.bf16.mxu0 0
    %8530 = vmatpush1.bf16.msra.mxu0 %v8450
    %8531 = vmatprep.subr.bf16.mxu0 0
    %8532 = vmatpush1.bf16.msra.mxu0 %v8451
    %8533 = vmatprep.subr.bf16.mxu0 0
    %8534 = vmatpush1.bf16.msra.mxu0 %v8452
    %8535 = vmatprep.subr.bf16.mxu0 0
    %8536 = vmatpush1.bf16.msra.mxu0 %v8453
    %8537 = vmatprep.subr.bf16.mxu0 0
    %8538 = vmatpush1.bf16.msra.mxu0 %v8454
    %8539 = vmatprep.subr.bf16.mxu0 0
    %8540 = vmatpush1.bf16.msra.mxu0 %v8455
    %8541 = vmatprep.subr.bf16.mxu0 0
    %8542 = vmatpush1.bf16.msra.mxu0 %v8456
    %8543 = vmatprep.subr.bf16.mxu0 0
    %8544 = vmatpush1.bf16.msra.mxu0 0
    %8545 = vmatprep.subr.bf16.mxu0 0
    %8546 = vmatpush1.bf16.msra.mxu0 0
    %8547 = vmatprep.subr.bf16.mxu0 0
    %8548 = vmatpush1.bf16.msra.mxu0 0
    %8549 = vmatprep.subr.bf16.mxu0 0
    %8550 = vmatpush1.bf16.msra.mxu0 0
    %8551 = vmatprep.subr.bf16.mxu0 0
    %8552 = vmatpush1.bf16.msra.mxu0 0
    %8553 = vmatprep.subr.bf16.mxu0 0
    %8554 = vmatpush1.bf16.msra.mxu0 0
    %8555 = vmatprep.subr.bf16.mxu0 0
    %8556 = vmatpush1.bf16.msra.mxu0 0
    %8557 = vmatprep.subr.bf16.mxu0 0
    %8558 = vmatpush1.bf16.msra.mxu0 0
    %8559 = vmatprep.subr.bf16.mxu0 0
    %8560 = vmatpush1.bf16.msra.mxu0 0
    %8561 = vmatprep.mubr.bf16.mxu0 0
    %8562 = vmatmul.mubr.bf16.gmra.mrb[0].mxu0 %v8465
    %v8563 = vpop.f32.mrb[0].mxu0
    %v8564 = vadd.f32 0.0, %v8563
    %v8565 = vpop.f32.mrb[0].mxu0
    %v8566 = vpop.f32.mrb[0].mxu0
    %v8567 = vadd.f32 0.0, %v8566
    %v8568 = vpop.f32.mrb[0].mxu0
    %8569 = vmatprep.mubr.bf16.mxu0 0
    %8570 = vmatmul.mubr.bf16.gmra.mrb[0].mxu0 %v8467
    %v8571 = vpop.f32.mrb[0].mxu0
    %v8572 = vadd.f32 0.0, %v8571
    %v8573 = vpop.f32.mrb[0].mxu0
    %v8574 = vpop.f32.mrb[0].mxu0
    %v8575 = vadd.f32 0.0, %v8574
    %v8576 = vpop.f32.mrb[0].mxu0
    %8577 = vmatprep.mubr.bf16.mxu0 0
    %8578 = vmatmul.mubr.bf16.gmra.mrb[0].mxu0 %v8469
    %v8579 = vpop.f32.mrb[0].mxu0
    %v8580 = vadd.f32 0.0, %v8579
    %v8581 = vpop.f32.mrb[0].mxu0
    %v8582 = vpop.f32.mrb[0].mxu0
    %v8583 = vadd.f32 0.0, %v8582
    %v8584 = vpop.f32.mrb[0].mxu0
    %8585 = vmatprep.mubr.bf16.mxu0 0
    %8586 = vmatmul.mubr.bf16.gmra.mrb[0].mxu0 %v8471
    %v8587 = vpop.f32.mrb[0].mxu0
    %v8588 = vadd.f32 0.0, %v8587
    %v8589 = vpop.f32.mrb[0].mxu0
    %v8590 = vpop.f32.mrb[0].mxu0
    %v8591 = vadd.f32 0.0, %v8590
    %v8592 = vpop.f32.mrb[0].mxu0
    %8593 = vmatprep.mubr.bf16.mxu0 0
    %8594 = vmatmul.mubr.bf16.gmra.mrb[0].mxu0 %v8473
    %v8595 = vpop.f32.mrb[0].mxu0
    %v8596 = vadd.f32 0.0, %v8595
    %v8597 = vpop.f32.mrb[0].mxu0
    %v8598 = vpop.f32.mrb[0].mxu0
    %v8599 = vadd.f32 0.0, %v8598
    %v8600 = vpop.f32.mrb[0].mxu0
    %8601 = vmatprep.mubr.bf16.mxu0 0
    %8602 = vmatmul.mubr.bf16.gmra.mrb[0].mxu0 %v8475
    %v8603 = vpop.f32.mrb[0].mxu0
    %v8604 = vadd.f32 0.0, %v8603
    %v8605 = vpop.f32.mrb[0].mxu0
    %v8606 = vpop.f32.mrb[0].mxu0
    %v8607 = vadd.f32 0.0, %v8606
    %v8608 = vpop.f32.mrb[0].mxu0
    %8609 = vmatprep.mubr.bf16.mxu0 0
    %8610 = vmatmul.mubr.bf16.gmra.mrb[0].mxu0 %v8477
    %v8611 = vpop.f32.mrb[0].mxu0
    %v8612 = vadd.f32 0.0, %v8611
    %v8613 = vpop.f32.mrb[0].mxu0
    %v8614 = vpop.f32.mrb[0].mxu0
    %v8615 = vadd.f32 0.0, %v8614
    %v8616 = vpop.f32.mrb[0].mxu0
    %8617 = vmatprep.mubr.bf16.mxu0 0
    %8618 = vmatmul.mubr.bf16.gmra.mrb[0].mxu0 %v8479
    %v8619 = vpop.f32.mrb[0].mxu0
    %v8620 = vadd.f32 0.0, %v8619
    %v8621 = vpop.f32.mrb[0].mxu0
    %v8622 = vpop.f32.mrb[0].mxu0
    %v8623 = vadd.f32 0.0, %v8622
    %v8624 = vpop.f32.mrb[0].mxu0
    %8625 = vmatprep.mubr.bf16.mxu0 0
    %8626 = vmatmul.mubr.bf16.gmra.mrb[0].mxu0 %v8481
    %v8627 = vpop.f32.mrb[0].mxu0
    %v8628 = vadd.f32 0.0, %v8627
    %v8629 = vpop.f32.mrb[0].mxu0
    %v8630 = vpop.f32.mrb[0].mxu0
    %v8631 = vadd.f32 0.0, %v8630
    %v8632 = vpop.f32.mrb[0].mxu0
    %8633 = vmatprep.mubr.bf16.mxu0 0
    %8634 = vmatmul.mubr.bf16.gmra.mrb[0].mxu0 %v8483
    %v8635 = vpop.f32.mrb[0].mxu0
    %v8636 = vadd.f32 0.0, %v8635
    %v8637 = vpop.f32.mrb[0].mxu0
    %v8638 = vpop.f32.mrb[0].mxu0
    %v8639 = vadd.f32 0.0, %v8638
    %v8640 = vpop.f32.mrb[0].mxu0
    %8641 = vmatprep.mubr.bf16.mxu0 0
    %8642 = vmatmul.mubr.bf16.gmra.mrb[0].mxu0 %v8485
    %v8643 = vpop.f32.mrb[0].mxu0
    %v8644 = vadd.f32 0.0, %v8643
    %v8645 = vpop.f32.mrb[0].mxu0
    %v8646 = vpop.f32.mrb[0].mxu0
    %v8647 = vadd.f32 0.0, %v8646
    %v8648 = vpop.f32.mrb[0].mxu0
    %8649 = vmatprep.mubr.bf16.mxu0 0
    %8650 = vmatmul.mubr.bf16.gmra.mrb[0].mxu0 %v8487
    %v8651 = vpop.f32.mrb[0].mxu0
    %v8652 = vadd.f32 0.0, %v8651
    %v8653 = vpop.f32.mrb[0].mxu0
    %v8654 = vpop.f32.mrb[0].mxu0
    %v8655 = vadd.f32 0.0, %v8654
    %v8656 = vpop.f32.mrb[0].mxu0
    %8657 = vmatprep.mubr.bf16.mxu0 0
    %8658 = vmatmul.mubr.bf16.gmra.mrb[0].mxu0 %v8489
    %v8659 = vpop.f32.mrb[0].mxu0
    %v8660 = vadd.f32 0.0, %v8659
    %v8661 = vpop.f32.mrb[0].mxu0
    %v8662 = vpop.f32.mrb[0].mxu0
    %v8663 = vadd.f32 0.0, %v8662
    %v8664 = vpop.f32.mrb[0].mxu0
    %8665 = vmatprep.mubr.bf16.mxu0 0
    %8666 = vmatmul.mubr.bf16.gmra.mrb[0].mxu0 %v8491
    %v8667 = vpop.f32.mrb[0].mxu0
    %v8668 = vadd.f32 0.0, %v8667
    %v8669 = vpop.f32.mrb[0].mxu0
    %v8670 = vpop.f32.mrb[0].mxu0
    %v8671 = vadd.f32 0.0, %v8670
    %v8672 = vpop.f32.mrb[0].mxu0
    %8673 = vmatprep.mubr.bf16.mxu0 0
    %8674 = vmatmul.mubr.bf16.gmra.mrb[0].mxu0 %v8493
    %v8675 = vpop.f32.mrb[0].mxu0
    %v8676 = vadd.f32 0.0, %v8675
    %v8677 = vpop.f32.mrb[0].mxu0
    %v8678 = vpop.f32.mrb[0].mxu0
    %v8679 = vadd.f32 0.0, %v8678
    %v8680 = vpop.f32.mrb[0].mxu0
    %8681 = vmatprep.mubr.bf16.mxu0 0
    %8682 = vmatmul.mubr.bf16.gmra.mrb[0].mxu0 %v8495
    %v8683 = vpop.f32.mrb[0].mxu0
    %v8684 = vadd.f32 0.0, %v8683
    %v8685 = vpop.f32.mrb[0].mxu0
    %v8686 = vpop.f32.mrb[0].mxu0
    %v8687 = vadd.f32 0.0, %v8686
    %v8688 = vpop.f32.mrb[0].mxu0
    %8689 = vmatprep.mubr.bf16.mxu0 0
    %8690 = vmatmul.mubr.bf16.gmra.mrb[0].mxu0 %v8497
    %v8691 = vpop.f32.mrb[0].mxu0
    %v8692 = vadd.f32 0.0, %v8691
    %v8693 = vpop.f32.mrb[0].mxu0
    %v8694 = vpop.f32.mrb[0].mxu0
    %v8695 = vadd.f32 0.0, %v8694
    %v8696 = vpop.f32.mrb[0].mxu0
    %8697 = vmatprep.mubr.bf16.mxu0 0
    %8698 = vmatmul.mubr.bf16.gmra.mrb[0].mxu0 %v8499
    %v8699 = vpop.f32.mrb[0].mxu0
    %v8700 = vadd.f32 0.0, %v8699
    %v8701 = vpop.f32.mrb[0].mxu0
    %v8702 = vpop.f32.mrb[0].mxu0
    %v8703 = vadd.f32 0.0, %v8702
    %v8704 = vpop.f32.mrb[0].mxu0
    %8705 = vmatprep.mubr.bf16.mxu0 0
    %8706 = vmatmul.mubr.bf16.gmra.mrb[0].mxu0 %v8501
    %v8707 = vpop.f32.mrb[0].mxu0
    %v8708 = vadd.f32 0.0, %v8707
    %v8709 = vpop.f32.mrb[0].mxu0
    %v8710 = vpop.f32.mrb[0].mxu0
    %v8711 = vadd.f32 0.0, %v8710
    %v8712 = vpop.f32.mrb[0].mxu0
    %8713 = vmatprep.mubr.bf16.mxu0 0
    %8714 = vmatmul.mubr.bf16.gmra.mrb[0].mxu0 %v8503
    %v8715 = vpop.f32.mrb[0].mxu0
    %v8716 = vadd.f32 0.0, %v8715
    %v8717 = vpop.f32.mrb[0].mxu0
    %v8718 = vpop.f32.mrb[0].mxu0
    %v8719 = vadd.f32 0.0, %v8718
    %v8720 = vpop.f32.mrb[0].mxu0
    %8721 = vmatprep.mubr.bf16.mxu0 0
    %8722 = vmatmul.mubr.bf16.gmra.mrb[0].mxu0 %v8505
    %v8723 = vpop.f32.mrb[0].mxu0
    %v8724 = vadd.f32 0.0, %v8723
    %v8725 = vpop.f32.mrb[0].mxu0
    %v8726 = vpop.f32.mrb[0].mxu0
    %v8727 = vadd.f32 0.0, %v8726
    %v8728 = vpop.f32.mrb[0].mxu0
    %8729 = vmatprep.mubr.bf16.mxu0 0
    %8730 = vmatmul.mubr.bf16.gmra.mrb[0].mxu0 %v8507
    %v8731 = vpop.f32.mrb[0].mxu0
    %v8732 = vadd.f32 0.0, %v8731
    %v8733 = vpop.f32.mrb[0].mxu0
    %v8734 = vpop.f32.mrb[0].mxu0
    %v8735 = vadd.f32 0.0, %v8734
    %v8736 = vpop.f32.mrb[0].mxu0
    %8737 = vmatprep.mubr.bf16.mxu0 0
    %8738 = vmatmul.mubr.bf16.gmra.mrb[0].mxu0 %v8509
    %v8739 = vpop.f32.mrb[0].mxu0
    %v8740 = vadd.f32 0.0, %v8739
    %v8741 = vpop.f32.mrb[0].mxu0
    %v8742 = vpop.f32.mrb[0].mxu0
    %v8743 = vadd.f32 0.0, %v8742
    %v8744 = vpop.f32.mrb[0].mxu0
    %8745 = vmatprep.mubr.bf16.mxu0 0
    %8746 = vmatmul.mubr.bf16.gmra.mrb[0].mxu0 %v8511
    %v8747 = vpop.f32.mrb[0].mxu0
    %v8748 = vadd.f32 0.0, %v8747
    %v8749 = vpop.f32.mrb[0].mxu0
    %v8750 = vpop.f32.mrb[0].mxu0
    %v8751 = vadd.f32 0.0, %v8750
    %v8752 = vpop.f32.mrb[0].mxu0
    %8753 = vmatprep.mubr.bf16.mxu0 0
    %8754 = vmatmul.mubr.bf16.gmra.mrb[0].mxu0 %v8513
    %v8755 = vpop.f32.mrb[0].mxu0
    %v8756 = vadd.f32 0.0, %v8755
    %v8757 = vpop.f32.mrb[0].mxu0
    %v8758 = vpop.f32.mrb[0].mxu0
    %v8759 = vadd.f32 0.0, %v8758
    %v8760 = vpop.f32.mrb[0].mxu0
    %8761 = vmatprep.mubr.bf16.mxu0 0
    %8762 = vmatmul.mubr.bf16.gmra.mrb[0].mxu0 %v8515
    %v8763 = vpop.f32.mrb[0].mxu0
    %v8764 = vadd.f32 0.0, %v8763
    %v8765 = vpop.f32.mrb[0].mxu0
    %v8766 = vpop.f32.mrb[0].mxu0
    %v8767 = vadd.f32 0.0, %v8766
    %v8768 = vpop.f32.mrb[0].mxu0
    %8769 = vmatprep.mubr.bf16.mxu0 0
    %8770 = vmatmul.mubr.bf16.gmra.mrb[0].mxu0 %v8517
    %v8771 = vpop.f32.mrb[0].mxu0
    %v8772 = vadd.f32 0.0, %v8771
    %v8773 = vpop.f32.mrb[0].mxu0
    %v8774 = vpop.f32.mrb[0].mxu0
    %v8775 = vadd.f32 0.0, %v8774
    %v8776 = vpop.f32.mrb[0].mxu0
    %8777 = vmatprep.mubr.bf16.mxu0 0
    %8778 = vmatmul.mubr.bf16.gmra.mrb[0].mxu0 %v8519
    %v8779 = vpop.f32.mrb[0].mxu0
    %v8780 = vadd.f32 0.0, %v8779
    %v8781 = vpop.f32.mrb[0].mxu0
    %v8782 = vpop.f32.mrb[0].mxu0
    %v8783 = vadd.f32 0.0, %v8782
    %v8784 = vpop.f32.mrb[0].mxu0
    %8785 = vmatprep.mubr.bf16.mxu0 0
    %8786 = vmatmul.mubr.bf16.gmra.mrb[0].mxu0 %v8521
    %v8787 = vpop.f32.mrb[0].mxu0
    %v8788 = vadd.f32 0.0, %v8787
    %v8789 = vpop.f32.mrb[0].mxu0
    %v8790 = vpop.f32.mrb[0].mxu0
    %v8791 = vadd.f32 0.0, %v8790
    %v8792 = vpop.f32.mrb[0].mxu0
    %8793 = vmatprep.mubr.bf16.mxu0 0
    %8794 = vmatmul.mubr.bf16.gmra.mrb[0].mxu0 %v8523
    %v8795 = vpop.f32.mrb[0].mxu0
    %v8796 = vadd.f32 0.0, %v8795
    %v8797 = vpop.f32.mrb[0].mxu0
    %v8798 = vpop.f32.mrb[0].mxu0
    %v8799 = vadd.f32 0.0, %v8798
    %v8800 = vpop.f32.mrb[0].mxu0
    %8801 = vmatprep.mubr.bf16.mxu0 0
    %8802 = vmatmul.mubr.bf16.gmra.mrb[0].mxu0 %v8525
    %v8803 = vpop.f32.mrb[0].mxu0
    %v8804 = vadd.f32 0.0, %v8803
    %v8805 = vpop.f32.mrb[0].mxu0
    %v8806 = vpop.f32.mrb[0].mxu0
    %v8807 = vadd.f32 0.0, %v8806
    %v8808 = vpop.f32.mrb[0].mxu0
    %8809 = vmatprep.mubr.bf16.mxu0 0
    %8810 = vmatmul.mubr.bf16.gmra.mrb[0].mxu0 %v8527
    %v8811 = vpop.f32.mrb[0].mxu0
    %v8812 = vadd.f32 0.0, %v8811
    %v8813 = vpop.f32.mrb[0].mxu0
    %v8814 = vpop.f32.mrb[0].mxu0
    %v8815 = vadd.f32 0.0, %v8814
    %v8816 = vpop.f32.mrb[0].mxu0
    %8817 = vdwg.mxu0
    %v8818 = vadd.f32 %v4028, %v8564
    %v8819 = vadd.f32 %v4029, %v8567
    %v8820 = vadd.f32 %v4030, %v8572
    %v8821 = vadd.f32 %v4031, %v8575
    %v8822 = vadd.f32 %v4032, %v8580
    %v8823 = vadd.f32 %v4033, %v8583
    %v8824 = vadd.f32 %v4034, %v8588
    %v8825 = vadd.f32 %v4035, %v8591
    %v8826 = vadd.f32 %v4036, %v8596
    %v8827 = vadd.f32 %v4037, %v8599
    %v8828 = vadd.f32 %v4038, %v8604
    %v8829 = vadd.f32 %v4039, %v8607
    %v8830 = vadd.f32 %v4040, %v8612
    %v8831 = vadd.f32 %v4041, %v8615
    %v8832 = vadd.f32 %v4042, %v8620
    %v8833 = vadd.f32 %v4043, %v8623
    %v8834 = vadd.f32 %v4044, %v8628
    %v8835 = vadd.f32 %v4045, %v8631
    %v8836 = vadd.f32 %v4046, %v8636
    %v8837 = vadd.f32 %v4047, %v8639
    %v8838 = vadd.f32 %v4048, %v8644
    %v8839 = vadd.f32 %v4049, %v8647
    %v8840 = vadd.f32 %v4050, %v8652
    %v8841 = vadd.f32 %v4051, %v8655
    %v8842 = vadd.f32 %v4052, %v8660
    %v8843 = vadd.f32 %v4053, %v8663
    %v8844 = vadd.f32 %v4054, %v8668
    %v8845 = vadd.f32 %v4055, %v8671
    %v8846 = vadd.f32 %v4056, %v8676
    %v8847 = vadd.f32 %v4057, %v8679
    %v8848 = vadd.f32 %v4058, %v8684
    %v8849 = vadd.f32 %v4059, %v8687
    %v8850 = vadd.f32 %v4060, %v8692
    %v8851 = vadd.f32 %v4061, %v8695
    %v8852 = vadd.f32 %v4062, %v8700
    %v8853 = vadd.f32 %v4063, %v8703
    %v8854 = vadd.f32 %v4064, %v8708
    %v8855 = vadd.f32 %v4065, %v8711
    %v8856 = vadd.f32 %v4066, %v8716
    %v8857 = vadd.f32 %v4067, %v8719
    %v8858 = vadd.f32 %v4068, %v8724
    %v8859 = vadd.f32 %v4069, %v8727
    %v8860 = vadd.f32 %v4070, %v8732
    %v8861 = vadd.f32 %v4071, %v8735
    %v8862 = vadd.f32 %v4072, %v8740
    %v8863 = vadd.f32 %v4073, %v8743
    %v8864 = vadd.f32 %v4074, %v8748
    %v8865 = vadd.f32 %v4075, %v8751
    %v8866 = vadd.f32 %v4076, %v8756
    %v8867 = vadd.f32 %v4077, %v8759
    %v8868 = vadd.f32 %v4078, %v8764
    %v8869 = vadd.f32 %v4079, %v8767
    %v8870 = vadd.f32 %v4080, %v8772
    %v8871 = vadd.f32 %v4081, %v8775
    %v8872 = vadd.f32 %v4082, %v8780
    %v8873 = vadd.f32 %v4083, %v8783
    %v8874 = vadd.f32 %v4084, %v8788
    %v8875 = vadd.f32 %v4085, %v8791
    %v8876 = vadd.f32 %v4086, %v8796
    %v8877 = vadd.f32 %v4087, %v8799
    %v8878 = vadd.f32 %v4088, %v8804
    %v8879 = vadd.f32 %v4089, %v8807
    %v8880 = vadd.f32 %v4090, %v8812
    %v8881 = vadd.f32 %v4091, %v8815
  $region26: #{model_forward.1} parent=0 // loop_footer
    %s4027 = sadd.s32 1, %s4023
  $region27: #{model_forward.1} parent=0 // loop_footer_branch
    %4022 = sbr.rel target = $region23
  $region28: #{model_forward.1} parent=0 // loop_exit
    _
  %v8882 = vld [vmem:[%s4] sm:$0x1]
  %v8884 = vlaneseq
  %v8885 = vshrl.u32 %v8884, 7
  %v8886 = vsub.s32 0, %v8885
  %v8887 = vrot.slane %v8882, %v8886
  %v8889 = vadd.f32 %v4028, %v8887
  %v8890 = vadd.f32 %v4029, %v8887
  %v8891 = vadd.f32 %v4030, %v8887
  %v8892 = vadd.f32 %v4031, %v8887
  %v8893 = vadd.f32 %v4032, %v8887
  %v8894 = vadd.f32 %v4033, %v8887
  %v8895 = vadd.f32 %v4034, %v8887
  %v8896 = vadd.f32 %v4035, %v8887
  %v8897 = vadd.f32 %v4036, %v8887
  %v8898 = vadd.f32 %v4037, %v8887
  %v8899 = vadd.f32 %v4038, %v8887
  %v8900 = vadd.f32 %v4039, %v8887
  %v8901 = vadd.f32 %v4040, %v8887
  %v8902 = vadd.f32 %v4041, %v8887
  %v8903 = vadd.f32 %v4042, %v8887
  %v8904 = vadd.f32 %v4043, %v8887
  %v8905 = vadd.f32 %v4044, %v8887
  %v8906 = vadd.f32 %v4045, %v8887
  %v8907 = vadd.f32 %v4046, %v8887
  %v8908 = vadd.f32 %v4047, %v8887
  %v8909 = vadd.f32 %v4048, %v8887
  %v8910 = vadd.f32 %v4049, %v8887
  %v8911 = vadd.f32 %v4050, %v8887
  %v8912 = vadd.f32 %v4051, %v8887
  %v8913 = vadd.f32 %v4052, %v8887
  %v8914 = vadd.f32 %v4053, %v8887
  %v8915 = vadd.f32 %v4054, %v8887
  %v8916 = vadd.f32 %v4055, %v8887
  %v8917 = vadd.f32 %v4056, %v8887
  %v8918 = vadd.f32 %v4057, %v8887
  %v8919 = vadd.f32 %v4058, %v8887
  %v8920 = vadd.f32 %v4059, %v8887
  %v8921 = vadd.f32 %v4060, %v8887
  %v8922 = vadd.f32 %v4061, %v8887
  %v8923 = vadd.f32 %v4062, %v8887
  %v8924 = vadd.f32 %v4063, %v8887
  %v8925 = vadd.f32 %v4064, %v8887
  %v8926 = vadd.f32 %v4065, %v8887
  %v8927 = vadd.f32 %v4066, %v8887
  %v8928 = vadd.f32 %v4067, %v8887
  %v8929 = vadd.f32 %v4068, %v8887
  %v8930 = vadd.f32 %v4069, %v8887
  %v8931 = vadd.f32 %v4070, %v8887
  %v8932 = vadd.f32 %v4071, %v8887
  %v8933 = vadd.f32 %v4072, %v8887
  %v8934 = vadd.f32 %v4073, %v8887
  %v8935 = vadd.f32 %v4074, %v8887
  %v8936 = vadd.f32 %v4075, %v8887
  %v8937 = vadd.f32 %v4076, %v8887
  %v8938 = vadd.f32 %v4077, %v8887
  %v8939 = vadd.f32 %v4078, %v8887
  %v8940 = vadd.f32 %v4079, %v8887
  %v8941 = vadd.f32 %v4080, %v8887
  %v8942 = vadd.f32 %v4081, %v8887
  %v8943 = vadd.f32 %v4082, %v8887
  %v8944 = vadd.f32 %v4083, %v8887
  %v8945 = vadd.f32 %v4084, %v8887
  %v8946 = vadd.f32 %v4085, %v8887
  %v8947 = vadd.f32 %v4086, %v8887
  %v8948 = vadd.f32 %v4087, %v8887
  %v8949 = vadd.f32 %v4088, %v8887
  %v8950 = vadd.f32 %v4089, %v8887
  %v8951 = vadd.f32 %v4090, %v8887
  %v8952 = vadd.f32 %v4091, %v8887
  %8953 = vst.msk [vmem:[%s5] sm:$0xff] %vm1796, %v8889
  %8954 = vst.msk [vmem:[%s5 + $0x8] sm:$0xff] %vm1796, %v8890
  %8955 = vst.msk [vmem:[%s5 + $0x10] sm:$0xff] %vm1796, %v8891
  %8956 = vst.msk [vmem:[%s5 + $0x18] sm:$0xff] %vm1796, %v8892
  %8957 = vst.msk [vmem:[%s5 + $0x20] sm:$0xff] %vm1796, %v8893
  %8958 = vst.msk [vmem:[%s5 + $0x28] sm:$0xff] %vm1796, %v8894
  %8959 = vst.msk [vmem:[%s5 + $0x30] sm:$0xff] %vm1796, %v8895
  %8960 = vst.msk [vmem:[%s5 + $0x38] sm:$0xff] %vm1796, %v8896
  %8961 = vst.msk [vmem:[%s5 + $0x40] sm:$0xff] %vm1796, %v8897
  %8962 = vst.msk [vmem:[%s5 + $0x48] sm:$0xff] %vm1796, %v8898
  %8963 = vst.msk [vmem:[%s5 + $0x50] sm:$0xff] %vm1796, %v8899
  %8964 = vst.msk [vmem:[%s5 + $0x58] sm:$0xff] %vm1796, %v8900
  %8965 = vst.msk [vmem:[%s5 + $0x60] sm:$0xff] %vm1796, %v8901
  %8966 = vst.msk [vmem:[%s5 + $0x68] sm:$0xff] %vm1796, %v8902
  %8967 = vst.msk [vmem:[%s5 + $0x70] sm:$0xff] %vm1796, %v8903
  %8968 = vst.msk [vmem:[%s5 + $0x78] sm:$0xff] %vm1796, %v8904
  %8969 = vst.msk [vmem:[%s5 + $0x80] sm:$0xff] %vm1796, %v8905
  %8970 = vst.msk [vmem:[%s5 + $0x88] sm:$0xff] %vm1796, %v8906
  %8971 = vst.msk [vmem:[%s5 + $0x90] sm:$0xff] %vm1796, %v8907
  %8972 = vst.msk [vmem:[%s5 + $0x98] sm:$0xff] %vm1796, %v8908
  %8973 = vst.msk [vmem:[%s5 + $0xa0] sm:$0xff] %vm1796, %v8909
  %8974 = vst.msk [vmem:[%s5 + $0xa8] sm:$0xff] %vm1796, %v8910
  %8975 = vst.msk [vmem:[%s5 + $0xb0] sm:$0xff] %vm1796, %v8911
  %8976 = vst.msk [vmem:[%s5 + $0xb8] sm:$0xff] %vm1796, %v8912
  %8977 = vst.msk [vmem:[%s5 + $0xc0] sm:$0xff] %vm1796, %v8913
  %8978 = vst.msk [vmem:[%s5 + $0xc8] sm:$0xff] %vm1796, %v8914
  %8979 = vst.msk [vmem:[%s5 + $0xd0] sm:$0xff] %vm1796, %v8915
  %8980 = vst.msk [vmem:[%s5 + $0xd8] sm:$0xff] %vm1796, %v8916
  %8981 = vst.msk [vmem:[%s5 + $0xe0] sm:$0xff] %vm1796, %v8917
  %8982 = vst.msk [vmem:[%s5 + $0xe8] sm:$0xff] %vm1796, %v8918
  %8983 = vst.msk [vmem:[%s5 + $0xf0] sm:$0xff] %vm1796, %v8919
  %8984 = vst.msk [vmem:[%s5 + $0xf8] sm:$0xff] %vm1796, %v8920
  %8985 = vst.msk [vmem:[%s5 + $0x100] sm:$0xff] %vm1796, %v8921
  %8986 = vst.msk [vmem:[%s5 + $0x108] sm:$0xff] %vm1796, %v8922
  %8987 = vst.msk [vmem:[%s5 + $0x110] sm:$0xff] %vm1796, %v8923
  %8988 = vst.msk [vmem:[%s5 + $0x118] sm:$0xff] %vm1796, %v8924
  %8989 = vst.msk [vmem:[%s5 + $0x120] sm:$0xff] %vm1796, %v8925
  %8990 = vst.msk [vmem:[%s5 + $0x128] sm:$0xff] %vm1796, %v8926
  %8991 = vst.msk [vmem:[%s5 + $0x130] sm:$0xff] %vm1796, %v8927
  %8992 = vst.msk [vmem:[%s5 + $0x138] sm:$0xff] %vm1796, %v8928
  %8993 = vst.msk [vmem:[%s5 + $0x140] sm:$0xff] %vm1796, %v8929
  %8994 = vst.msk [vmem:[%s5 + $0x148] sm:$0xff] %vm1796, %v8930
  %8995 = vst.msk [vmem:[%s5 + $0x150] sm:$0xff] %vm1796, %v8931
  %8996 = vst.msk [vmem:[%s5 + $0x158] sm:$0xff] %vm1796, %v8932
  %8997 = vst.msk [vmem:[%s5 + $0x160] sm:$0xff] %vm1796, %v8933
  %8998 = vst.msk [vmem:[%s5 + $0x168] sm:$0xff] %vm1796, %v8934
  %8999 = vst.msk [vmem:[%s5 + $0x170] sm:$0xff] %vm1796, %v8935
  %9000 = vst.msk [vmem:[%s5 + $0x178] sm:$0xff] %vm1796, %v8936
  %9001 = vst.msk [vmem:[%s5 + $0x180] sm:$0xff] %vm1796, %v8937
  %9002 = vst.msk [vmem:[%s5 + $0x188] sm:$0xff] %vm1796, %v8938
  %9003 = vst.msk [vmem:[%s5 + $0x190] sm:$0xff] %vm1796, %v8939
  %9004 = vst.msk [vmem:[%s5 + $0x198] sm:$0xff] %vm1796, %v8940
  %9005 = vst.msk [vmem:[%s5 + $0x1a0] sm:$0xff] %vm1796, %v8941
  %9006 = vst.msk [vmem:[%s5 + $0x1a8] sm:$0xff] %vm1796, %v8942
  %9007 = vst.msk [vmem:[%s5 + $0x1b0] sm:$0xff] %vm1796, %v8943
  %9008 = vst.msk [vmem:[%s5 + $0x1b8] sm:$0xff] %vm1796, %v8944
  %9009 = vst.msk [vmem:[%s5 + $0x1c0] sm:$0xff] %vm1796, %v8945
  %9010 = vst.msk [vmem:[%s5 + $0x1c8] sm:$0xff] %vm1796, %v8946
  %9011 = vst.msk [vmem:[%s5 + $0x1d0] sm:$0xff] %vm1796, %v8947
  %9012 = vst.msk [vmem:[%s5 + $0x1d8] sm:$0xff] %vm1796, %v8948
  %9013 = vst.msk [vmem:[%s5 + $0x1e0] sm:$0xff] %vm1796, %v8949
  %9014 = vst.msk [vmem:[%s5 + $0x1e8] sm:$0xff] %vm1796, %v8950
  %9015 = vst.msk [vmem:[%s5 + $0x1f0] sm:$0xff] %vm1796, %v8951
  %9016 = vst.msk [vmem:[%s5 + $0x1f8] sm:$0xff] %vm1796, %v8952
  // Predicated region
  $region29: #{model_forward.1} parent=0 // pred_check
    _
  $region30: #{model_forward.1} parent=0 // pred_check_branch
    %9018 = sbr.rel (0) target = $region32
  $region31: #{model_forward.1} parent=0 // pred_region
    _
  $region32: #{model_forward.1} parent=0 // pred_fallthru
    _
  // Predicated region
  $region33: #{model_forward.1} parent=0 // pred_check
    _
  $region34: #{model_forward.1} parent=0 // pred_check_branch
    %9020 = sbr.rel (0) target = $region36
  $region35: #{model_forward.1} parent=0 // pred_region
    _
  $region36: #{model_forward.1} parent=0 // pred_fallthru
    _

</llo_original>
